<compile_context>
chip_gen: v6e
topology: v6e:2x2x1
jax: 0.10.0
libtpu: 0.0.40
codegen_flags: <defaults>
</compile_context>

<pallas_src>
import functools

import jax
import jax.numpy as jnp
from jax import lax
from jax.experimental import pallas as pl
from jax.experimental.pallas import tpu as pltpu


# ---------------------------------------------------------------------------
# Fused kernel: conv1+bn1+relu -> conv2+bn2 (+QKV) -> attention -> residual+relu
# ---------------------------------------------------------------------------
def fused_block_kernel(x_ref, w1_ref, b1_ref, w2qkv_ref, b2qkv_ref,
                       wo_ref, bo_ref, o_ref, pad_ref, *, bb, H, W, C, Cr):
    HW = H * W
    rows = bb * HW
    n2 = 2 * C + 2 * Cr                       # [ y | q | k | v ] output width

    # Zero only the 1-pixel halo of the padded-activation scratch (conv
    # padding=1); the (H, W) interior is fully overwritten before every use.
    # Done unconditionally per grid step so the batch axis stays safely
    # "parallel" across TensorCores (each core has its own scratch).
    zrow = jnp.zeros((bb, 1, W + 2, C), jnp.bfloat16)
    zcol = jnp.zeros((bb, H, 1, C), jnp.bfloat16)
    pad_ref[:, 0:1, :, :] = zrow
    pad_ref[:, H + 1:H + 2, :, :] = zrow
    pad_ref[:, 1:H + 1, 0:1, :] = zcol
    pad_ref[:, 1:H + 1, W + 1:W + 2, :] = zcol

    def conv3x3(w_ref, b_ref, n_out):
        # 3x3 conv (padding=1) as 9 shifted-tap (rows, C) @ (C, n_out) MXU
        # passes accumulated in f32.  For small C (<= 64) this avoids the
        # lane-misaligned scatter an im2col slab would need.
        # TODO(synk): for C >= 128 switch to a single (rows, 9C) @ (9C, n_out)
        # im2col contraction on a bf16 slab for better MXU depth utilisation.
        acc = jnp.zeros((rows, n_out), jnp.float32)
        for dy in range(3):
            for dx in range(3):
                idx = dy * 3 + dx
                tap = pad_ref[:, dy:dy + H, dx:dx + W, :].reshape(rows, C)
                acc = acc + jnp.dot(tap, w_ref[idx * C:(idx + 1) * C, :],
                                    preferred_element_type=jnp.float32)
        return acc + b_ref[...]

    x = x_ref[...]                                            # (bb, HW, C) f32

    # conv1 + folded bn1 + relu
    pad_ref[:, 1:H + 1, 1:W + 1, :] = (
        x.reshape(bb, H, W, C).astype(jnp.bfloat16))
    y1 = jnp.maximum(conv3x3(w1_ref, b1_ref, C), 0.0)         # (rows, C) f32

    # conv2 + folded bn2, fused with the 1x1 Q/K/V projections:
    #   z = [ y | q | k | v ] = taps @ [w2 | w2@wqkv] + [b2 | b2@wqkv + bqkv]
    pad_ref[:, 1:H + 1, 1:W + 1, :] = (
        y1.reshape(bb, H, W, C).astype(jnp.bfloat16))
    z = conv3x3(w2qkv_ref, b2qkv_ref, n2)                     # (rows, n2) f32

    y = z[:, :C]                                              # bn2(conv2(.))
    q = z[:, C:C + Cr].reshape(bb, HW, Cr)
    k = z[:, C + Cr:C + 2 * Cr].reshape(bb, HW, Cr)
    v = z[:, C + 2 * Cr:].reshape(bb, HW, C)

    # Attention logits att[b,i,j] = sum_c q[b,i,c] * k[b,j,c].
    if Cr <= 8:
        # Tiny reduction depth: Cr broadcast-FMA outer products on the VPU
        # instead of a K=Cr systolic pass (~1% MXU depth, mostly fill/drain).
        att = None
        for c in range(Cr):
            qc = q[:, :, c:c + 1]                             # (bb, HW, 1)
            kc = jnp.swapaxes(k[:, :, c:c + 1], 1, 2)         # (bb, 1, HW)
            term = qc * kc
            att = term if att is None else att + term
    else:
        att = lax.dot_general(q.astype(jnp.bfloat16), k.astype(jnp.bfloat16),
                              (((2,), (2,)), ((0,), (0,))),
                              preferred_element_type=jnp.float32)

    # Row softmax (f32).
    # TODO(synk): KV-tile this flash-style (online softmax) once HW is large
    # enough that the (bb, HW, HW) buffer pressures v7x's 64 MiB VMEM.
    att = att - jnp.max(att, axis=-1, keepdims=True)
    e = jnp.exp(att)
    p = e * pl.reciprocal(jnp.sum(e, axis=-1, keepdims=True), approx=True)

    # ctx[b,i,c] = sum_j p[b,i,j] * v[b,j,c]     (== torch.bmm(V, A^T))
    ctx = lax.dot_general(p.astype(jnp.bfloat16), v.astype(jnp.bfloat16),
                          (((2,), (1,)), ((0,), (0,))),
                          preferred_element_type=jnp.float32)  # (bb, HW, C)

    # Output 1x1 conv (gamma pre-folded into wo/bo) + attention residual (+y)
    # + block residual (+x) + final relu.
    att_out = jnp.dot(ctx.reshape(rows, C).astype(jnp.bfloat16), wo_ref[...],
                      preferred_element_type=jnp.float32) + bo_ref[...]
    res = jnp.maximum(att_out + y + x.reshape(rows, C), 0.0)
    o_ref[...] = res.reshape(bb, HW, C)


# ---------------------------------------------------------------------------
# Parameter construction (deterministic, synthetic)
# ---------------------------------------------------------------------------
def make_params(key, inplanes, planes, reduction_ratio=16):
    cr = planes // reduction_ratio
    ks = jax.random.split(key, 11)

    def kaiming(k, shape, fan_out):
        std = (2.0 / fan_out) ** 0.5
        return std * jax.random.normal(k, shape, jnp.float32)

    p = {}
    # 3x3 convs, stored as (kh, kw, Cin, Cout) for NHWC kernels
    p["w1"] = kaiming(ks[0], (3, 3, inplanes, planes), fan_out=9 * planes)
    p["w2"] = kaiming(ks[1], (3, 3, planes, planes), fan_out=9 * planes)
    # BatchNorm (inference) params; folded into the convs in prepare_params
    p["bn1_w"] = 1.0 + 0.1 * jax.random.normal(ks[2], (planes,), jnp.float32)
    p["bn1_b"] = 0.1 * jax.random.normal(ks[3], (planes,), jnp.float32)
    p["bn1_mean"] = 0.1 * jax.random.normal(ks[4], (planes,), jnp.float32)
    p["bn1_var"] = 1.0 + 0.1 * jnp.abs(jax.random.normal(ks[5], (planes,), jnp.float32))
    p["bn2_w"] = 1.0 + 0.1 * jax.random.normal(ks[6], (planes,), jnp.float32)
    p["bn2_b"] = 0.1 * jax.random.normal(ks[7], (planes,), jnp.float32)
    p["bn2_mean"] = 0.1 * jax.random.normal(ks[8], (planes,), jnp.float32)
    p["bn2_var"] = 1.0 + 0.1 * jnp.abs(jax.random.normal(ks[9], (planes,), jnp.float32))
    # 1x1 attention convs as (Cin, Cout) matmul weights; biases init 0
    kq, kk, kv, ko = jax.random.split(ks[10], 4)
    p["wq"] = kaiming(kq, (planes, cr), fan_out=cr)
    p["bq"] = jnp.zeros((cr,), jnp.float32)
    p["wk"] = kaiming(kk, (planes, cr), fan_out=cr)
    p["bk"] = jnp.zeros((cr,), jnp.float32)
    p["wv"] = kaiming(kv, (planes, planes), fan_out=planes)
    p["bv"] = jnp.zeros((planes,), jnp.float32)
    p["wo"] = kaiming(ko, (planes, planes), fan_out=planes)
    p["bo"] = jnp.zeros((planes,), jnp.float32)
    # gamma: PyTorch inits to 0; use a nonzero value so the attention path
    # actually contributes in this synthetic setting (intentional divergence).
    p["gamma"] = jnp.array([0.5], jnp.float32)
    return p


def fold_bn(w, b, mean, var, eps=1e-5):
    scale = w / jnp.sqrt(var + eps)
    return scale, b - mean * scale


def prepare_params(params):
    """One-time (model-load) weight folding: BN -> conv, QKV -> conv2, gamma -> wo.

    Hoisted out of the per-call forward so no folding XLA ops run per step.
    """
    cin, C = params["w1"].shape[2], params["w1"].shape[3]
    assert cin == C, "stride=1 / downsample=None path requires inplanes == planes"

    s1, b1 = fold_bn(params["bn1_w"], params["bn1_b"],
                     params["bn1_mean"], params["bn1_var"])
    s2, b2 = fold_bn(params["bn2_w"], params["bn2_b"],
                     params["bn2_mean"], params["bn2_var"])
    w1 = (params["w1"] * s1).reshape(9 * C, C)
    w2 = (params["w2"] * s2).reshape(9 * C, C)

    # Fuse the 1x1 Q/K/V projections into the conv2 contraction:
    #   [ y | qkv ] = taps @ [w2 | w2 @ wqkv] + [b2 | b2 @ wqkv + bqkv]
    wqkv = jnp.concatenate([params["wq"], params["wk"], params["wv"]], axis=1)
    bqkv = jnp.concatenate([params["bq"], params["bk"], params["bv"]])
    w2qkv = jnp.concatenate([w2, w2 @ wqkv], axis=1)
    b2qkv = jnp.concatenate([b2, b2 @ wqkv + bqkv])

    gamma = params["gamma"][0]
    n2 = w2qkv.shape[1]
    return {
        "w1": w1.astype(jnp.bfloat16),
        "b1": b1.reshape(1, C),
        "w2qkv": w2qkv.astype(jnp.bfloat16),
        "b2qkv": b2qkv.reshape(1, n2),
        "wo": (gamma * params["wo"]).astype(jnp.bfloat16),
        "bo": (gamma * params["bo"]).reshape(1, C),
    }


# ---------------------------------------------------------------------------
# Forward wrappers
# ---------------------------------------------------------------------------
@jax.jit
def self_attention_basic_block_nhwc(x_nhwc, prep):
    B, H, W, C = x_nhwc.shape
    HW = H * W
    n2 = prep["w2qkv"].shape[1]
    Cr = (n2 - 2 * C) // 2
    assert prep["w1"].shape == (9 * C, C), "channel mismatch between x and weights"

    # Batch-block size: keep >= ~256 matmul rows per grid step when possible
    # (MXU occupancy on v6e/v7x); otherwise split per image so the parallel
    # grid axis can be sharded across v7x's two TensorCores.
    bb = min(B, max(1, -(-256 // HW)))
    while B % bb:
        bb -= 1
    grid = (B // bb,)

    x3 = x_nhwc.reshape(B, HW, C).astype(jnp.float32)
    kernel = functools.partial(fused_block_kernel, bb=bb, H=H, W=W, C=C, Cr=Cr)
    const2 = lambda i: (0, 0)            # weights: resident across the grid

    # Explicit VMEM budget: activation blocks are double-buffered and the
    # in-kernel f32 temporaries (logits / probs / z) live alongside.  Capped
    # well under v7x's 64 MiB physical ceiling.
    est = (4 * bb * HW * C * 4 * 2
           + 2 * sum(int(v.size) * v.dtype.itemsize for v in prep.values())
           + bb * (H + 2) * (W + 2) * C * 2
           + 3 * bb * HW * HW * 4
           + 4 * bb * HW * n2 * 4)
    vmem_bytes = int(min(max(2 * est, 16 * 1024 * 1024), 56 * 1024 * 1024))

    out = pl.pallas_call(
        kernel,
        out_shape=jax.ShapeDtypeStruct((B, HW, C), jnp.float32),
        grid_spec=pltpu.PrefetchScalarGridSpec(
            num_scalar_prefetch=0,
            grid=grid,
            in_specs=[
                pl.BlockSpec((bb, HW, C), lambda i: (i, 0, 0)),
                pl.BlockSpec(prep["w1"].shape, const2),
                pl.BlockSpec(prep["b1"].shape, const2),
                pl.BlockSpec(prep["w2qkv"].shape, const2),
                pl.BlockSpec(prep["b2qkv"].shape, const2),
                pl.BlockSpec(prep["wo"].shape, const2),
                pl.BlockSpec(prep["bo"].shape, const2),
            ],
            out_specs=pl.BlockSpec((bb, HW, C), lambda i: (i, 0, 0)),
            scratch_shapes=[pltpu.VMEM((bb, H + 2, W + 2, C), jnp.bfloat16)],
        ),
        compiler_params=pltpu.CompilerParams(
            dimension_semantics=("parallel",),
            vmem_limit_bytes=vmem_bytes),
    )(x3, prep["w1"], prep["b1"], prep["w2qkv"], prep["b2qkv"],
      prep["wo"], prep["bo"])
    return out.reshape(B, H, W, C)


def self_attention_basic_block(x_nchw, prep):
    # NCHW facade matching the PyTorch module.  Production models should stay
    # NHWC end-to-end; these two transposes are extra HBM passes.
    x = jnp.transpose(x_nchw, (0, 2, 3, 1))
    out = self_attention_basic_block_nhwc(x, prep)
    return jnp.transpose(out, (0, 3, 1, 2))


if __name__ == "__main__":
    key = jax.random.PRNGKey(0)
    k_x, k_p = jax.random.split(key)

    inplanes = planes = 32          # reduction_ratio=16 -> reduced channels = 2
    B, H, W = 2, 16, 16
    x = jax.random.normal(k_x, (B, inplanes, H, W), jnp.float32)   # NCHW input
    params = make_params(k_p, inplanes, planes)
    prep = prepare_params(params)   # BN fold / QKV+gamma fusion, done once

    out = self_attention_basic_block(x, prep)
    jax.block_until_ready(out)

    assert out.shape == (B, planes, H, W)
    assert bool(jnp.all(out >= 0.0))   # final ReLU
    print("KERNEL_OK")
</pallas_src>

<mosaic_0001>
module attributes {stable_mosaic.version = 11 : i64} {
  func.func @fused_block_kernel(%arg0: i32, %arg1: memref<1x256x32xf32, #tpu.memory_space<vmem>>, %arg2: memref<288x32xbf16, #tpu.memory_space<vmem>>, %arg3: memref<1x32xf32, #tpu.memory_space<vmem>>, %arg4: memref<288x68xbf16, #tpu.memory_space<vmem>>, %arg5: memref<1x68xf32, #tpu.memory_space<vmem>>, %arg6: memref<32x32xbf16, #tpu.memory_space<vmem>>, %arg7: memref<1x32xf32, #tpu.memory_space<vmem>>, %arg8: memref<1x256x32xf32, #tpu.memory_space<vmem>>, %arg9: memref<1x18x18x32xbf16, #tpu.memory_space<vmem>>) attributes {dimension_semantics = [#tpu.dimension_semantics<parallel>], iteration_bounds = array<i64: 2>, scalar_prefetch = 0 : i64, scratch_operands = 1 : i64, tpu.core_type = #tpu.core_type<tc>, window_params = [{transform_indices = @transform_0, window_bounds = array<i64: 1, 256, 32>}, {pipeline_mode = #tpu.pipeline_mode<synchronous>, transform_indices = @transform_1, window_bounds = array<i64: 288, 32>}, {pipeline_mode = #tpu.pipeline_mode<synchronous>, transform_indices = @transform_2, window_bounds = array<i64: 1, 32>}, {pipeline_mode = #tpu.pipeline_mode<synchronous>, transform_indices = @transform_3, window_bounds = array<i64: 288, 68>}, {pipeline_mode = #tpu.pipeline_mode<synchronous>, transform_indices = @transform_4, window_bounds = array<i64: 1, 68>}, {pipeline_mode = #tpu.pipeline_mode<synchronous>, transform_indices = @transform_5, window_bounds = array<i64: 32, 32>}, {pipeline_mode = #tpu.pipeline_mode<synchronous>, transform_indices = @transform_6, window_bounds = array<i64: 1, 32>}, {transform_indices = @transform_7, window_bounds = array<i64: 1, 256, 32>}]} {
    %cst = arith.constant 0.000000e+00 : bf16
    %0 = vector.broadcast %cst : bf16 to vector<1x1x18x32xbf16>
    %cst_0 = arith.constant 0.000000e+00 : bf16
    %1 = vector.broadcast %cst_0 : bf16 to vector<1x16x1x32xbf16>
    %c0 = arith.constant 0 : index
    %c0_1 = arith.constant 0 : index
    %c0_2 = arith.constant 0 : index
    %c0_3 = arith.constant 0 : index
    %2 = vector.load %arg9[%c0, %c0_1, %c0_2, %c0_3] : memref<1x18x18x32xbf16, #tpu.memory_space<vmem>>, vector<1x1x18x32xbf16>
    tpu.vector_store %arg9[%c0, %c0_1, %c0_2, %c0_3], %0 {strides = array<i32>} : memref<1x18x18x32xbf16, #tpu.memory_space<vmem>>, vector<1x1x18x32xbf16>,
    %c0_4 = arith.constant 0 : index
    %c17 = arith.constant 17 : index
    %c0_5 = arith.constant 0 : index
    %c0_6 = arith.constant 0 : index
    %3 = vector.load %arg9[%c0_4, %c17, %c0_5, %c0_6] : memref<1x18x18x32xbf16, #tpu.memory_space<vmem>>, vector<1x1x18x32xbf16>
    tpu.vector_store %arg9[%c0_4, %c17, %c0_5, %c0_6], %0 {strides = array<i32>} : memref<1x18x18x32xbf16, #tpu.memory_space<vmem>>, vector<1x1x18x32xbf16>,
    %c0_7 = arith.constant 0 : index
    %c1 = arith.constant 1 : index
    %c0_8 = arith.constant 0 : index
    %c0_9 = arith.constant 0 : index
    %4 = vector.load %arg9[%c0_7, %c1, %c0_8, %c0_9] : memref<1x18x18x32xbf16, #tpu.memory_space<vmem>>, vector<1x16x1x32xbf16>
    tpu.vector_store %arg9[%c0_7, %c1, %c0_8, %c0_9], %1 {strides = array<i32>} : memref<1x18x18x32xbf16, #tpu.memory_space<vmem>>, vector<1x16x1x32xbf16>,
    %c0_10 = arith.constant 0 : index
    %c1_11 = arith.constant 1 : index
    %c17_12 = arith.constant 17 : index
    %c0_13 = arith.constant 0 : index
    %5 = vector.load %arg9[%c0_10, %c1_11, %c17_12, %c0_13] : memref<1x18x18x32xbf16, #tpu.memory_space<vmem>>, vector<1x16x1x32xbf16>
    tpu.vector_store %arg9[%c0_10, %c1_11, %c17_12, %c0_13], %1 {strides = array<i32>} : memref<1x18x18x32xbf16, #tpu.memory_space<vmem>>, vector<1x16x1x32xbf16>,
    %c0_14 = arith.constant 0 : index
    %c0_15 = arith.constant 0 : index
    %c0_16 = arith.constant 0 : index
    %6 = vector.load %arg1[%c0_14, %c0_15, %c0_16] : memref<1x256x32xf32, #tpu.memory_space<vmem>>, vector<1x256x32xf32>
    %7 = vector.shape_cast %6 : vector<1x256x32xf32> to vector<1x16x16x32xf32>
    %8 = arith.truncf %7 : vector<1x16x16x32xf32> to vector<1x16x16x32xbf16>
    %c0_17 = arith.constant 0 : index
    %c1_18 = arith.constant 1 : index
    %c1_19 = arith.constant 1 : index
    %c0_20 = arith.constant 0 : index
    %9 = vector.load %arg9[%c0_17, %c1_18, %c1_19, %c0_20] : memref<1x18x18x32xbf16, #tpu.memory_space<vmem>>, vector<1x16x16x32xbf16>
    tpu.vector_store %arg9[%c0_17, %c1_18, %c1_19, %c0_20], %8 {strides = array<i32>} : memref<1x18x18x32xbf16, #tpu.memory_space<vmem>>, vector<1x16x16x32xbf16>,
    %cst_21 = arith.constant 0.000000e+00 : f32
    %10 = vector.broadcast %cst_21 : f32 to vector<256x32xf32>
    %c0_22 = arith.constant 0 : index
    %c0_23 = arith.constant 0 : index
    %c0_24 = arith.constant 0 : index
    %c0_25 = arith.constant 0 : index
    %11 = vector.load %arg9[%c0_22, %c0_23, %c0_24, %c0_25] : memref<1x18x18x32xbf16, #tpu.memory_space<vmem>>, vector<1x16x16x32xbf16>
    %12 = vector.shape_cast %11 : vector<1x16x16x32xbf16> to vector<256x32xbf16>
    %c0_26 = arith.constant 0 : index
    %c0_27 = arith.constant 0 : index
    %13 = vector.load %arg2[%c0_26, %c0_27] : memref<288x32xbf16, #tpu.memory_space<vmem>>, vector<32x32xbf16>
    %cst_28 = arith.constant dense<0.000000e+00> : vector<256x32xf32>
    %14 = tpu.matmul %12, %13, %cst_28 {dimension_numbers = #tpu.dot_dimension_numbers<[1], [0], [0], [1], [0, 0, 1, 1], [], []>} : vector<256x32xbf16>, vector<32x32xbf16>, vector<256x32xf32> -> vector<256x32xf32>
    %15 = arith.addf %10, %14 : vector<256x32xf32>
    %c0_29 = arith.constant 0 : index
    %c0_30 = arith.constant 0 : index
    %c1_31 = arith.constant 1 : index
    %c0_32 = arith.constant 0 : index
    %16 = vector.load %arg9[%c0_29, %c0_30, %c1_31, %c0_32] : memref<1x18x18x32xbf16, #tpu.memory_space<vmem>>, vector<1x16x16x32xbf16>
    %17 = vector.shape_cast %16 : vector<1x16x16x32xbf16> to vector<256x32xbf16>
    %c32 = arith.constant 32 : index
    %c0_33 = arith.constant 0 : index
    %18 = vector.load %arg2[%c32, %c0_33] : memref<288x32xbf16, #tpu.memory_space<vmem>>, vector<32x32xbf16>
    %cst_34 = arith.constant dense<0.000000e+00> : vector<256x32xf32>
    %19 = tpu.matmul %17, %18, %cst_34 {dimension_numbers = #tpu.dot_dimension_numbers<[1], [0], [0], [1], [0, 0, 1, 1], [], []>} : vector<256x32xbf16>, vector<32x32xbf16>, vector<256x32xf32> -> vector<256x32xf32>
    %20 = arith.addf %15, %19 : vector<256x32xf32>
    %c0_35 = arith.constant 0 : index
    %c0_36 = arith.constant 0 : index
    %c2 = arith.constant 2 : index
    %c0_37 = arith.constant 0 : index
    %21 = vector.load %arg9[%c0_35, %c0_36, %c2, %c0_37] : memref<1x18x18x32xbf16, #tpu.memory_space<vmem>>, vector<1x16x16x32xbf16>
    %22 = vector.shape_cast %21 : vector<1x16x16x32xbf16> to vector<256x32xbf16>
    %c64 = arith.constant 64 : index
    %c0_38 = arith.constant 0 : index
    %23 = vector.load %arg2[%c64, %c0_38] : memref<288x32xbf16, #tpu.memory_space<vmem>>, vector<32x32xbf16>
    %cst_39 = arith.constant dense<0.000000e+00> : vector<256x32xf32>
    %24 = tpu.matmul %22, %23, %cst_39 {dimension_numbers = #tpu.dot_dimension_numbers<[1], [0], [0], [1], [0, 0, 1, 1], [], []>} : vector<256x32xbf16>, vector<32x32xbf16>, vector<256x32xf32> -> vector<256x32xf32>
    %25 = arith.addf %20, %24 : vector<256x32xf32>
    %c0_40 = arith.constant 0 : index
    %c1_41 = arith.constant 1 : index
    %c0_42 = arith.constant 0 : index
    %c0_43 = arith.constant 0 : index
    %26 = vector.load %arg9[%c0_40, %c1_41, %c0_42, %c0_43] : memref<1x18x18x32xbf16, #tpu.memory_space<vmem>>, vector<1x16x16x32xbf16>
    %27 = vector.shape_cast %26 : vector<1x16x16x32xbf16> to vector<256x32xbf16>
    %c96 = arith.constant 96 : index
    %c0_44 = arith.constant 0 : index
    %28 = vector.load %arg2[%c96, %c0_44] : memref<288x32xbf16, #tpu.memory_space<vmem>>, vector<32x32xbf16>
    %cst_45 = arith.constant dense<0.000000e+00> : vector<256x32xf32>
    %29 = tpu.matmul %27, %28, %cst_45 {dimension_numbers = #tpu.dot_dimension_numbers<[1], [0], [0], [1], [0, 0, 1, 1], [], []>} : vector<256x32xbf16>, vector<32x32xbf16>, vector<256x32xf32> -> vector<256x32xf32>
    %30 = arith.addf %25, %29 : vector<256x32xf32>
    %c0_46 = arith.constant 0 : index
    %c1_47 = arith.constant 1 : index
    %c1_48 = arith.constant 1 : index
    %c0_49 = arith.constant 0 : index
    %31 = vector.load %arg9[%c0_46, %c1_47, %c1_48, %c0_49] : memref<1x18x18x32xbf16, #tpu.memory_space<vmem>>, vector<1x16x16x32xbf16>
    %32 = vector.shape_cast %31 : vector<1x16x16x32xbf16> to vector<256x32xbf16>
    %c128 = arith.constant 128 : index
    %c0_50 = arith.constant 0 : index
    %33 = vector.load %arg2[%c128, %c0_50] : memref<288x32xbf16, #tpu.memory_space<vmem>>, vector<32x32xbf16>
    %cst_51 = arith.constant dense<0.000000e+00> : vector<256x32xf32>
    %34 = tpu.matmul %32, %33, %cst_51 {dimension_numbers = #tpu.dot_dimension_numbers<[1], [0], [0], [1], [0, 0, 1, 1], [], []>} : vector<256x32xbf16>, vector<32x32xbf16>, vector<256x32xf32> -> vector<256x32xf32>
    %35 = arith.addf %30, %34 : vector<256x32xf32>
    %c0_52 = arith.constant 0 : index
    %c1_53 = arith.constant 1 : index
    %c2_54 = arith.constant 2 : index
    %c0_55 = arith.constant 0 : index
    %36 = vector.load %arg9[%c0_52, %c1_53, %c2_54, %c0_55] : memref<1x18x18x32xbf16, #tpu.memory_space<vmem>>, vector<1x16x16x32xbf16>
    %37 = vector.shape_cast %36 : vector<1x16x16x32xbf16> to vector<256x32xbf16>
    %c160 = arith.constant 160 : index
    %c0_56 = arith.constant 0 : index
    %38 = vector.load %arg2[%c160, %c0_56] : memref<288x32xbf16, #tpu.memory_space<vmem>>, vector<32x32xbf16>
    %cst_57 = arith.constant dense<0.000000e+00> : vector<256x32xf32>
    %39 = tpu.matmul %37, %38, %cst_57 {dimension_numbers = #tpu.dot_dimension_numbers<[1], [0], [0], [1], [0, 0, 1, 1], [], []>} : vector<256x32xbf16>, vector<32x32xbf16>, vector<256x32xf32> -> vector<256x32xf32>
    %40 = arith.addf %35, %39 : vector<256x32xf32>
    %c0_58 = arith.constant 0 : index
    %c2_59 = arith.constant 2 : index
    %c0_60 = arith.constant 0 : index
    %c0_61 = arith.constant 0 : index
    %41 = vector.load %arg9[%c0_58, %c2_59, %c0_60, %c0_61] : memref<1x18x18x32xbf16, #tpu.memory_space<vmem>>, vector<1x16x16x32xbf16>
    %42 = vector.shape_cast %41 : vector<1x16x16x32xbf16> to vector<256x32xbf16>
    %c192 = arith.constant 192 : index
    %c0_62 = arith.constant 0 : index
    %43 = vector.load %arg2[%c192, %c0_62] : memref<288x32xbf16, #tpu.memory_space<vmem>>, vector<32x32xbf16>
    %cst_63 = arith.constant dense<0.000000e+00> : vector<256x32xf32>
    %44 = tpu.matmul %42, %43, %cst_63 {dimension_numbers = #tpu.dot_dimension_numbers<[1], [0], [0], [1], [0, 0, 1, 1], [], []>} : vector<256x32xbf16>, vector<32x32xbf16>, vector<256x32xf32> -> vector<256x32xf32>
    %45 = arith.addf %40, %44 : vector<256x32xf32>
    %c0_64 = arith.constant 0 : index
    %c2_65 = arith.constant 2 : index
    %c1_66 = arith.constant 1 : index
    %c0_67 = arith.constant 0 : index
    %46 = vector.load %arg9[%c0_64, %c2_65, %c1_66, %c0_67] : memref<1x18x18x32xbf16, #tpu.memory_space<vmem>>, vector<1x16x16x32xbf16>
    %47 = vector.shape_cast %46 : vector<1x16x16x32xbf16> to vector<256x32xbf16>
    %c224 = arith.constant 224 : index
    %c0_68 = arith.constant 0 : index
    %48 = vector.load %arg2[%c224, %c0_68] : memref<288x32xbf16, #tpu.memory_space<vmem>>, vector<32x32xbf16>
    %cst_69 = arith.constant dense<0.000000e+00> : vector<256x32xf32>
    %49 = tpu.matmul %47, %48, %cst_69 {dimension_numbers = #tpu.dot_dimension_numbers<[1], [0], [0], [1], [0, 0, 1, 1], [], []>} : vector<256x32xbf16>, vector<32x32xbf16>, vector<256x32xf32> -> vector<256x32xf32>
    %50 = arith.addf %45, %49 : vector<256x32xf32>
    %c0_70 = arith.constant 0 : index
    %c2_71 = arith.constant 2 : index
    %c2_72 = arith.constant 2 : index
    %c0_73 = arith.constant 0 : index
    %51 = vector.load %arg9[%c0_70, %c2_71, %c2_72, %c0_73] : memref<1x18x18x32xbf16, #tpu.memory_space<vmem>>, vector<1x16x16x32xbf16>
    %52 = vector.shape_cast %51 : vector<1x16x16x32xbf16> to vector<256x32xbf16>
    %c256 = arith.constant 256 : index
    %c0_74 = arith.constant 0 : index
    %53 = vector.load %arg2[%c256, %c0_74] : memref<288x32xbf16, #tpu.memory_space<vmem>>, vector<32x32xbf16>
    %cst_75 = arith.constant dense<0.000000e+00> : vector<256x32xf32>
    %54 = tpu.matmul %52, %53, %cst_75 {dimension_numbers = #tpu.dot_dimension_numbers<[1], [0], [0], [1], [0, 0, 1, 1], [], []>} : vector<256x32xbf16>, vector<32x32xbf16>, vector<256x32xf32> -> vector<256x32xf32>
    %55 = arith.addf %50, %54 : vector<256x32xf32>
    %c0_76 = arith.constant 0 : index
    %c0_77 = arith.constant 0 : index
    %56 = vector.load %arg3[%c0_76, %c0_77] : memref<1x32xf32, #tpu.memory_space<vmem>>, vector<1x32xf32>
    %57 = vector.broadcast %56 : vector<1x32xf32> to vector<256x32xf32>
    %58 = arith.addf %55, %57 : vector<256x32xf32>
    %cst_78 = arith.constant 0.000000e+00 : f32
    %59 = vector.broadcast %cst_78 : f32 to vector<256x32xf32>
    %60 = arith.maximumf %58, %59 : vector<256x32xf32>
    %61 = vector.shape_cast %60 : vector<256x32xf32> to vector<1x16x16x32xf32>
    %62 = arith.truncf %61 : vector<1x16x16x32xf32> to vector<1x16x16x32xbf16>
    %c0_79 = arith.constant 0 : index
    %c1_80 = arith.constant 1 : index
    %c1_81 = arith.constant 1 : index
    %c0_82 = arith.constant 0 : index
    %63 = vector.load %arg9[%c0_79, %c1_80, %c1_81, %c0_82] : memref<1x18x18x32xbf16, #tpu.memory_space<vmem>>, vector<1x16x16x32xbf16>
    tpu.vector_store %arg9[%c0_79, %c1_80, %c1_81, %c0_82], %62 {strides = array<i32>} : memref<1x18x18x32xbf16, #tpu.memory_space<vmem>>, vector<1x16x16x32xbf16>,
    %cst_83 = arith.constant 0.000000e+00 : f32
    %64 = vector.broadcast %cst_83 : f32 to vector<256x68xf32>
    %c0_84 = arith.constant 0 : index
    %c0_85 = arith.constant 0 : index
    %c0_86 = arith.constant 0 : index
    %c0_87 = arith.constant 0 : index
    %65 = vector.load %arg9[%c0_84, %c0_85, %c0_86, %c0_87] : memref<1x18x18x32xbf16, #tpu.memory_space<vmem>>, vector<1x16x16x32xbf16>
    %66 = vector.shape_cast %65 : vector<1x16x16x32xbf16> to vector<256x32xbf16>
    %c0_88 = arith.constant 0 : index
    %c0_89 = arith.constant 0 : index
    %67 = vector.load %arg4[%c0_88, %c0_89] : memref<288x68xbf16, #tpu.memory_space<vmem>>, vector<32x68xbf16>
    %cst_90 = arith.constant dense<0.000000e+00> : vector<256x68xf32>
    %68 = tpu.matmul %66, %67, %cst_90 {dimension_numbers = #tpu.dot_dimension_numbers<[1], [0], [0], [1], [0, 0, 1, 1], [], []>} : vector<256x32xbf16>, vector<32x68xbf16>, vector<256x68xf32> -> vector<256x68xf32>
    %69 = arith.addf %64, %68 : vector<256x68xf32>
    %c0_91 = arith.constant 0 : index
    %c0_92 = arith.constant 0 : index
    %c1_93 = arith.constant 1 : index
    %c0_94 = arith.constant 0 : index
    %70 = vector.load %arg9[%c0_91, %c0_92, %c1_93, %c0_94] : memref<1x18x18x32xbf16, #tpu.memory_space<vmem>>, vector<1x16x16x32xbf16>
    %71 = vector.shape_cast %70 : vector<1x16x16x32xbf16> to vector<256x32xbf16>
    %c32_95 = arith.constant 32 : index
    %c0_96 = arith.constant 0 : index
    %72 = vector.load %arg4[%c32_95, %c0_96] : memref<288x68xbf16, #tpu.memory_space<vmem>>, vector<32x68xbf16>
    %cst_97 = arith.constant dense<0.000000e+00> : vector<256x68xf32>
    %73 = tpu.matmul %71, %72, %cst_97 {dimension_numbers = #tpu.dot_dimension_numbers<[1], [0], [0], [1], [0, 0, 1, 1], [], []>} : vector<256x32xbf16>, vector<32x68xbf16>, vector<256x68xf32> -> vector<256x68xf32>
    %74 = arith.addf %69, %73 : vector<256x68xf32>
    %c0_98 = arith.constant 0 : index
    %c0_99 = arith.constant 0 : index
    %c2_100 = arith.constant 2 : index
    %c0_101 = arith.constant 0 : index
    %75 = vector.load %arg9[%c0_98, %c0_99, %c2_100, %c0_101] : memref<1x18x18x32xbf16, #tpu.memory_space<vmem>>, vector<1x16x16x32xbf16>
    %76 = vector.shape_cast %75 : vector<1x16x16x32xbf16> to vector<256x32xbf16>
    %c64_102 = arith.constant 64 : index
    %c0_103 = arith.constant 0 : index
    %77 = vector.load %arg4[%c64_102, %c0_103] : memref<288x68xbf16, #tpu.memory_space<vmem>>, vector<32x68xbf16>
    %cst_104 = arith.constant dense<0.000000e+00> : vector<256x68xf32>
    %78 = tpu.matmul %76, %77, %cst_104 {dimension_numbers = #tpu.dot_dimension_numbers<[1], [0], [0], [1], [0, 0, 1, 1], [], []>} : vector<256x32xbf16>, vector<32x68xbf16>, vector<256x68xf32> -> vector<256x68xf32>
    %79 = arith.addf %74, %78 : vector<256x68xf32>
    %c0_105 = arith.constant 0 : index
    %c1_106 = arith.constant 1 : index
    %c0_107 = arith.constant 0 : index
    %c0_108 = arith.constant 0 : index
    %80 = vector.load %arg9[%c0_105, %c1_106, %c0_107, %c0_108] : memref<1x18x18x32xbf16, #tpu.memory_space<vmem>>, vector<1x16x16x32xbf16>
    %81 = vector.shape_cast %80 : vector<1x16x16x32xbf16> to vector<256x32xbf16>
    %c96_109 = arith.constant 96 : index
    %c0_110 = arith.constant 0 : index
    %82 = vector.load %arg4[%c96_109, %c0_110] : memref<288x68xbf16, #tpu.memory_space<vmem>>, vector<32x68xbf16>
    %cst_111 = arith.constant dense<0.000000e+00> : vector<256x68xf32>
    %83 = tpu.matmul %81, %82, %cst_111 {dimension_numbers = #tpu.dot_dimension_numbers<[1], [0], [0], [1], [0, 0, 1, 1], [], []>} : vector<256x32xbf16>, vector<32x68xbf16>, vector<256x68xf32> -> vector<256x68xf32>
    %84 = arith.addf %79, %83 : vector<256x68xf32>
    %c0_112 = arith.constant 0 : index
    %c1_113 = arith.constant 1 : index
    %c1_114 = arith.constant 1 : index
    %c0_115 = arith.constant 0 : index
    %85 = vector.load %arg9[%c0_112, %c1_113, %c1_114, %c0_115] : memref<1x18x18x32xbf16, #tpu.memory_space<vmem>>, vector<1x16x16x32xbf16>
    %86 = vector.shape_cast %85 : vector<1x16x16x32xbf16> to vector<256x32xbf16>
    %c128_116 = arith.constant 128 : index
    %c0_117 = arith.constant 0 : index
    %87 = vector.load %arg4[%c128_116, %c0_117] : memref<288x68xbf16, #tpu.memory_space<vmem>>, vector<32x68xbf16>
    %cst_118 = arith.constant dense<0.000000e+00> : vector<256x68xf32>
    %88 = tpu.matmul %86, %87, %cst_118 {dimension_numbers = #tpu.dot_dimension_numbers<[1], [0], [0], [1], [0, 0, 1, 1], [], []>} : vector<256x32xbf16>, vector<32x68xbf16>, vector<256x68xf32> -> vector<256x68xf32>
    %89 = arith.addf %84, %88 : vector<256x68xf32>
    %c0_119 = arith.constant 0 : index
    %c1_120 = arith.constant 1 : index
    %c2_121 = arith.constant 2 : index
    %c0_122 = arith.constant 0 : index
    %90 = vector.load %arg9[%c0_119, %c1_120, %c2_121, %c0_122] : memref<1x18x18x32xbf16, #tpu.memory_space<vmem>>, vector<1x16x16x32xbf16>
    %91 = vector.shape_cast %90 : vector<1x16x16x32xbf16> to vector<256x32xbf16>
    %c160_123 = arith.constant 160 : index
    %c0_124 = arith.constant 0 : index
    %92 = vector.load %arg4[%c160_123, %c0_124] : memref<288x68xbf16, #tpu.memory_space<vmem>>, vector<32x68xbf16>
    %cst_125 = arith.constant dense<0.000000e+00> : vector<256x68xf32>
    %93 = tpu.matmul %91, %92, %cst_125 {dimension_numbers = #tpu.dot_dimension_numbers<[1], [0], [0], [1], [0, 0, 1, 1], [], []>} : vector<256x32xbf16>, vector<32x68xbf16>, vector<256x68xf32> -> vector<256x68xf32>
    %94 = arith.addf %89, %93 : vector<256x68xf32>
    %c0_126 = arith.constant 0 : index
    %c2_127 = arith.constant 2 : index
    %c0_128 = arith.constant 0 : index
    %c0_129 = arith.constant 0 : index
    %95 = vector.load %arg9[%c0_126, %c2_127, %c0_128, %c0_129] : memref<1x18x18x32xbf16, #tpu.memory_space<vmem>>, vector<1x16x16x32xbf16>
    %96 = vector.shape_cast %95 : vector<1x16x16x32xbf16> to vector<256x32xbf16>
    %c192_130 = arith.constant 192 : index
    %c0_131 = arith.constant 0 : index
    %97 = vector.load %arg4[%c192_130, %c0_131] : memref<288x68xbf16, #tpu.memory_space<vmem>>, vector<32x68xbf16>
    %cst_132 = arith.constant dense<0.000000e+00> : vector<256x68xf32>
    %98 = tpu.matmul %96, %97, %cst_132 {dimension_numbers = #tpu.dot_dimension_numbers<[1], [0], [0], [1], [0, 0, 1, 1], [], []>} : vector<256x32xbf16>, vector<32x68xbf16>, vector<256x68xf32> -> vector<256x68xf32>
    %99 = arith.addf %94, %98 : vector<256x68xf32>
    %c0_133 = arith.constant 0 : index
    %c2_134 = arith.constant 2 : index
    %c1_135 = arith.constant 1 : index
    %c0_136 = arith.constant 0 : index
    %100 = vector.load %arg9[%c0_133, %c2_134, %c1_135, %c0_136] : memref<1x18x18x32xbf16, #tpu.memory_space<vmem>>, vector<1x16x16x32xbf16>
    %101 = vector.shape_cast %100 : vector<1x16x16x32xbf16> to vector<256x32xbf16>
    %c224_137 = arith.constant 224 : index
    %c0_138 = arith.constant 0 : index
    %102 = vector.load %arg4[%c224_137, %c0_138] : memref<288x68xbf16, #tpu.memory_space<vmem>>, vector<32x68xbf16>
    %cst_139 = arith.constant dense<0.000000e+00> : vector<256x68xf32>
    %103 = tpu.matmul %101, %102, %cst_139 {dimension_numbers = #tpu.dot_dimension_numbers<[1], [0], [0], [1], [0, 0, 1, 1], [], []>} : vector<256x32xbf16>, vector<32x68xbf16>, vector<256x68xf32> -> vector<256x68xf32>
    %104 = arith.addf %99, %103 : vector<256x68xf32>
    %c0_140 = arith.constant 0 : index
    %c2_141 = arith.constant 2 : index
    %c2_142 = arith.constant 2 : index
    %c0_143 = arith.constant 0 : index
    %105 = vector.load %arg9[%c0_140, %c2_141, %c2_142, %c0_143] : memref<1x18x18x32xbf16, #tpu.memory_space<vmem>>, vector<1x16x16x32xbf16>
    %106 = vector.shape_cast %105 : vector<1x16x16x32xbf16> to vector<256x32xbf16>
    %c256_144 = arith.constant 256 : index
    %c0_145 = arith.constant 0 : index
    %107 = vector.load %arg4[%c256_144, %c0_145] : memref<288x68xbf16, #tpu.memory_space<vmem>>, vector<32x68xbf16>
    %cst_146 = arith.constant dense<0.000000e+00> : vector<256x68xf32>
    %108 = tpu.matmul %106, %107, %cst_146 {dimension_numbers = #tpu.dot_dimension_numbers<[1], [0], [0], [1], [0, 0, 1, 1], [], []>} : vector<256x32xbf16>, vector<32x68xbf16>, vector<256x68xf32> -> vector<256x68xf32>
    %109 = arith.addf %104, %108 : vector<256x68xf32>
    %c0_147 = arith.constant 0 : index
    %c0_148 = arith.constant 0 : index
    %110 = vector.load %arg5[%c0_147, %c0_148] : memref<1x68xf32, #tpu.memory_space<vmem>>, vector<1x68xf32>
    %111 = vector.broadcast %110 : vector<1x68xf32> to vector<256x68xf32>
    %112 = arith.addf %109, %111 : vector<256x68xf32>
    %113 = vector.extract_strided_slice %112 {offsets = [0, 0], sizes = [256, 32], strides = [1, 1]} : vector<256x68xf32> to vector<256x32xf32>
    %114 = vector.extract_strided_slice %112 {offsets = [0, 32], sizes = [256, 2], strides = [1, 1]} : vector<256x68xf32> to vector<256x2xf32>
    %115 = vector.shape_cast %114 : vector<256x2xf32> to vector<1x256x2xf32>
    %116 = vector.extract_strided_slice %112 {offsets = [0, 34], sizes = [256, 2], strides = [1, 1]} : vector<256x68xf32> to vector<256x2xf32>
    %117 = vector.shape_cast %116 : vector<256x2xf32> to vector<1x256x2xf32>
    %118 = vector.extract_strided_slice %112 {offsets = [0, 36], sizes = [256, 32], strides = [1, 1]} : vector<256x68xf32> to vector<256x32xf32>
    %119 = vector.shape_cast %118 : vector<256x32xf32> to vector<1x256x32xf32>
    %120 = vector.extract_strided_slice %115 {offsets = [0, 0, 0], sizes = [1, 256, 1], strides = [1, 1, 1]} : vector<1x256x2xf32> to vector<1x256x1xf32>
    %121 = vector.extract_strided_slice %117 {offsets = [0, 0, 0], sizes = [1, 256, 1], strides = [1, 1, 1]} : vector<1x256x2xf32> to vector<1x256x1xf32>
    %122 = tpu.transpose %121, [0, 2, 1] : vector<1x256x1xf32> -> vector<1x1x256xf32>
    %123 = vector.broadcast %120 : vector<1x256x1xf32> to vector<1x256x256xf32>
    %124 = vector.broadcast %122 : vector<1x1x256xf32> to vector<1x256x256xf32>
    %125 = arith.mulf %123, %124 : vector<1x256x256xf32>
    %126 = vector.extract_strided_slice %115 {offsets = [0, 0, 1], sizes = [1, 256, 1], strides = [1, 1, 1]} : vector<1x256x2xf32> to vector<1x256x1xf32>
    %127 = vector.extract_strided_slice %117 {offsets = [0, 0, 1], sizes = [1, 256, 1], strides = [1, 1, 1]} : vector<1x256x2xf32> to vector<1x256x1xf32>
    %128 = tpu.transpose %127, [0, 2, 1] : vector<1x256x1xf32> -> vector<1x1x256xf32>
    %129 = vector.broadcast %126 : vector<1x256x1xf32> to vector<1x256x256xf32>
    %130 = vector.broadcast %128 : vector<1x1x256xf32> to vector<1x256x256xf32>
    %131 = arith.mulf %129, %130 : vector<1x256x256xf32>
    %132 = arith.addf %125, %131 : vector<1x256x256xf32>
    %cst_149 = arith.constant dense<0xFF800000> : vector<1x256xf32>
    %133 = vector.multi_reduction <maximumf>, %132, %cst_149 [2] : vector<1x256x256xf32> to vector<1x256xf32>
    %134 = vector.shape_cast %133 : vector<1x256xf32> to vector<1x256x1xf32>
    %135 = vector.broadcast %134 : vector<1x256x1xf32> to vector<1x256x256xf32>
    %136 = arith.subf %132, %135 : vector<1x256x256xf32>
    %137 = math.exp %136 : vector<1x256x256xf32>
    %cst_150 = arith.constant dense<0.000000e+00> : vector<1x256xf32>
    %138 = vector.multi_reduction <add>, %137, %cst_150 [2] : vector<1x256x256xf32> to vector<1x256xf32>
    %139 = vector.shape_cast %138 : vector<1x256xf32> to vector<1x256x1xf32>
    %140 = tpu.reciprocal %139 {approx = true} : vector<1x256x1xf32> -> vector<1x256x1xf32>
    %141 = vector.broadcast %140 : vector<1x256x1xf32> to vector<1x256x256xf32>
    %142 = arith.mulf %137, %141 : vector<1x256x256xf32>
    %143 = arith.truncf %142 : vector<1x256x256xf32> to vector<1x256x256xbf16>
    %144 = arith.truncf %119 : vector<1x256x32xf32> to vector<1x256x32xbf16>
    %cst_151 = arith.constant dense<0.000000e+00> : vector<1x256x32xf32>
    %145 = tpu.matmul %143, %144, %cst_151 {dimension_numbers = #tpu.dot_dimension_numbers<[2], [1], [1], [2], [0, 0, 0, 1, 1, 2], [0], [0]>} : vector<1x256x256xbf16>, vector<1x256x32xbf16>, vector<1x256x32xf32> -> vector<1x256x32xf32>
    %146 = vector.shape_cast %145 : vector<1x256x32xf32> to vector<256x32xf32>
    %147 = arith.truncf %146 : vector<256x32xf32> to vector<256x32xbf16>
    %c0_152 = arith.constant 0 : index
    %c0_153 = arith.constant 0 : index
    %148 = vector.load %arg6[%c0_152, %c0_153] : memref<32x32xbf16, #tpu.memory_space<vmem>>, vector<32x32xbf16>
    %cst_154 = arith.constant dense<0.000000e+00> : vector<256x32xf32>
    %149 = tpu.matmul %147, %148, %cst_154 {dimension_numbers = #tpu.dot_dimension_numbers<[1], [0], [0], [1], [0, 0, 1, 1], [], []>} : vector<256x32xbf16>, vector<32x32xbf16>, vector<256x32xf32> -> vector<256x32xf32>
    %c0_155 = arith.constant 0 : index
    %c0_156 = arith.constant 0 : index
    %150 = vector.load %arg7[%c0_155, %c0_156] : memref<1x32xf32, #tpu.memory_space<vmem>>, vector<1x32xf32>
    %151 = vector.broadcast %150 : vector<1x32xf32> to vector<256x32xf32>
    %152 = arith.addf %149, %151 : vector<256x32xf32>
    %153 = arith.addf %152, %113 : vector<256x32xf32>
    %154 = vector.shape_cast %6 : vector<1x256x32xf32> to vector<256x32xf32>
    %155 = arith.addf %153, %154 : vector<256x32xf32>
    %cst_157 = arith.constant 0.000000e+00 : f32
    %156 = vector.broadcast %cst_157 : f32 to vector<256x32xf32>
    %157 = arith.maximumf %155, %156 : vector<256x32xf32>
    %158 = vector.shape_cast %157 : vector<256x32xf32> to vector<1x256x32xf32>
    %c0_158 = arith.constant 0 : index
    %c0_159 = arith.constant 0 : index
    %c0_160 = arith.constant 0 : index
    %159 = vector.load %arg8[%c0_158, %c0_159, %c0_160] : memref<1x256x32xf32, #tpu.memory_space<vmem>>, vector<1x256x32xf32>
    tpu.vector_store %arg8[%c0_158, %c0_159, %c0_160], %158 {strides = array<i32>} : memref<1x256x32xf32, #tpu.memory_space<vmem>>, vector<1x256x32xf32>,
    return
  }
  func.func @transform_0(%arg0: i32) -> (i32, i32, i32) {
    %c0_i32 = arith.constant 0 : i32
    %c0_i32_0 = arith.constant 0 : i32
    %c0_i32_1 = arith.constant 0 : i32
    return %arg0, %c0_i32, %c0_i32_0 : i32, i32, i32
  }
  func.func @transform_1(%arg0: i32) -> (i32, i32) {
    %c0_i32 = arith.constant 0 : i32
    %c0_i32_0 = arith.constant 0 : i32
    %c0_i32_1 = arith.constant 0 : i32
    return %c0_i32, %c0_i32_0 : i32, i32
  }
  func.func @transform_2(%arg0: i32) -> (i32, i32) {
    %c0_i32 = arith.constant 0 : i32
    %c0_i32_0 = arith.constant 0 : i32
    %c0_i32_1 = arith.constant 0 : i32
    return %c0_i32, %c0_i32_0 : i32, i32
  }
  func.func @transform_3(%arg0: i32) -> (i32, i32) {
    %c0_i32 = arith.constant 0 : i32
    %c0_i32_0 = arith.constant 0 : i32
    %c0_i32_1 = arith.constant 0 : i32
    return %c0_i32, %c0_i32_0 : i32, i32
  }
  func.func @transform_4(%arg0: i32) -> (i32, i32) {
    %c0_i32 = arith.constant 0 : i32
    %c0_i32_0 = arith.constant 0 : i32
    %c0_i32_1 = arith.constant 0 : i32
    return %c0_i32, %c0_i32_0 : i32, i32
  }
  func.func @transform_5(%arg0: i32) -> (i32, i32) {
    %c0_i32 = arith.constant 0 : i32
    %c0_i32_0 = arith.constant 0 : i32
    %c0_i32_1 = arith.constant 0 : i32
    return %c0_i32, %c0_i32_0 : i32, i32
  }
  func.func @transform_6(%arg0: i32) -> (i32, i32) {
    %c0_i32 = arith.constant 0 : i32
    %c0_i32_0 = arith.constant 0 : i32
    %c0_i32_1 = arith.constant 0 : i32
    return %c0_i32, %c0_i32_0 : i32, i32
  }
  func.func @transform_7(%arg0: i32) -> (i32, i32, i32) {
    %c0_i32 = arith.constant 0 : i32
    %c0_i32_0 = arith.constant 0 : i32
    %c0_i32_1 = arith.constant 0 : i32
    return %arg0, %c0_i32, %c0_i32_0 : i32, i32, i32
  }
}

</mosaic_0001>

<llo_original>
// kernel: self_attention_basic_block_nhwc.1
$region0: #{self_attention_basic_block_nhwc.1}
  #allocation0 [shape = 'u32[]', space=smem, size = 0x4, offset = 0x4, fixed_abs, tag = 'smem constant byte address 0x4 - core index']
  #allocation1 [shape = 'u32[144,128]{1,0:T(1,128)}', space=vmem, size = 0x12000, scoped, tag = 'internal scratch']
  #allocation2 [shape = 'bf16[1,18,18,32]{3,2,1,0:T(8,128)(2,1)}', space=vmem, size = 0x1b000, scoped, tag = 'scratch operand']
  %s0 = inlined_call_operand.hbm [shape: f32[2,256,32], index: 0, kind: input, shape index: {}]
  %s1 = inlined_call_operand.vmem [shape: bf16[288,32], index: 1, kind: input, shape index: {}]
  %s2 = inlined_call_operand.vmem [shape: f32[1,32], index: 2, kind: input, shape index: {}]
  %s3 = inlined_call_operand.vmem [shape: bf16[288,68], index: 3, kind: input, shape index: {}]
  %s4 = inlined_call_operand.vmem [shape: f32[1,68], index: 4, kind: input, shape index: {}]
  %s5 = inlined_call_operand.vmem [shape: bf16[32,32], index: 5, kind: input, shape index: {}]
  %s6 = inlined_call_operand.vmem [shape: f32[1,32], index: 6, kind: input, shape index: {}]
  %s7 = inlined_call_operand.hbm [shape: f32[2,256,32], index: 7, kind: output, shape index: {}]
  %s8 = sld [smem:[#allocation0]]
  $region65: #{self_attention_basic_block_nhwc.1} parent=0
    _
  %s10 = ssub.s32 1, %s8
  %s11 = scalar_select 0, %s10, %s8
  $region1: #{self_attention_basic_block_nhwc.1} parent=0
    #allocation3 [shape = 'u8[262144]{0}', space=vmem, size = 0x40000, scoped, tag = 'input window, operand 0']
    #allocation4 [shape = 's32[2]{0}', space=sflag, size = 0x8, scoped, tag = 'scoped memory for self_attention_basic_block_nhwc.1']
    #allocation5 [shape = 's32[2]{0}', space=sflag, size = 0x8, scoped, tag = 'scoped memory for self_attention_basic_block_nhwc.1']
    #allocation6 [shape = 'u8[262144]{0}', space=vmem, size = 0x40000, scoped, tag = 'output window, operand 0']
    %12 = vsyncpa [#allocation4], 0
    %s13 = scalar_lea.sflag [#allocation4], 1
    %14 = vsyncpa %s13, 0
    %15 = vsyncpa [#allocation5], 0
    %s16 = scalar_lea.sflag [#allocation5], 1
    %17 = vsyncpa %s16, 0
    loop: start=0, step=1, limit=4
    $region2: #{self_attention_basic_block_nhwc.1} parent=1 // loop_pre_header
      _
    $region3: #{self_attention_basic_block_nhwc.1} parent=1 // loop_header
      %s19 = sphi 0, %s23
      %p20 = scmp.ge.s32.totalorder %s19, 4
      %s29 = sphi 0, %s31
      %s32 = sphi 0, %s29
      %s33 = sphi 0, %s32
      %s49 = sphi 0, %s33
      %s53 = sphi 0, %s53
      %s55 = sphi 0, %s53
      %s56 = sphi 0, %s55
      %s70 = sphi 0, %s56
      %s74 = sphi 0, %s74
      %s76 = sphi 0, %s74
      %s77 = sphi 0, %s76
      %s91 = sphi 0, %s77
      %s95 = sphi 0, %s95
      %s97 = sphi 0, %s95
      %s98 = sphi 0, %s97
      %s112 = sphi 0, %s98
      %s116 = sphi 0, %s116
      %s118 = sphi 0, %s116
      %s119 = sphi 0, %s118
      %s133 = sphi 0, %s119
      %s137 = sphi 0, %s137
      %s139 = sphi 0, %s137
      %s140 = sphi 0, %s139
      %s154 = sphi 0, %s140
      %s158 = sphi 0, %s158
      %s160 = sphi 0, %s158
      %s161 = sphi 0, %s160
      %s175 = sphi 0, %s161
      %s181 = sphi 0, %s183
      %s184 = sphi 0, %s181
      %s185 = sphi 0, %s184
      %s201 = sphi 0, %s185
    $region4: #{self_attention_basic_block_nhwc.1} parent=1 // loop_header_branch
      %22 = sbr.rel (%p20) target = $region8
    $region5: #{self_attention_basic_block_nhwc.1} parent=1 // loop_body
      %s24 = ssub.s32 %s19, 1
      %s25 = ssub.s32 %s19, 2
      %s26 = sadd.s32 %s19, 1
      %s27 = ssub.s32 %s19, %s26
      %p28 = scmp.eq.s32.totalorder %s27, 0
      %s30 = sadd.s32 %s29, 1
      %s31 = scalar_select %p28, %s29, %s30
      %p34 = pneg %p28
      %p35 = scmp.eq.s32.totalorder %s19, 1
      %p36 = por %p34, %p35
      %p37 = scmp.ne.s32.totalorder %s29, %s32
      %p38 = scmp.eq.s32.totalorder %s19, 0
      %p39 = por %p37, %p38
      %p40 = scmp.ne.s32.totalorder %s29, %s32
      %p41 = scmp.eq.s32.totalorder %s24, 1
      %p42 = por %p40, %p41
      %p43 = scmp.ne.s32.totalorder %s32, %s33
      %p44 = scmp.eq.s32.totalorder %s24, 0
      %p45 = por %p43, %p44
      %p46 = scmp.ne.s32.totalorder %s32, %s33
      %p47 = scmp.eq.s32.totalorder %s25, 1
      %p48 = por %p46, %p47
      %p50 = scmp.ne.s32.totalorder %s33, %s49
      %p51 = scmp.eq.s32.totalorder %s25, 0
      %p52 = por %p50, %p51
      %s54 = sadd.s32 %s53, 1
      %p57 = scmp.eq.s32.totalorder %s19, 1
      %p58 = scmp.ne.s32.totalorder %s53, %s55
      %p59 = scmp.eq.s32.totalorder %s19, 0
      %p60 = por %p58, %p59
      %p61 = scmp.ne.s32.totalorder %s53, %s55
      %p62 = scmp.eq.s32.totalorder %s24, 1
      %p63 = por %p61, %p62
      %p64 = scmp.ne.s32.totalorder %s55, %s56
      %p65 = scmp.eq.s32.totalorder %s24, 0
      %p66 = por %p64, %p65
      %p67 = scmp.ne.s32.totalorder %s55, %s56
      %p68 = scmp.eq.s32.totalorder %s25, 1
      %p69 = por %p67, %p68
      %p71 = scmp.ne.s32.totalorder %s56, %s70
      %p72 = scmp.eq.s32.totalorder %s25, 0
      %p73 = por %p71, %p72
      %s75 = sadd.s32 %s74, 1
      %p78 = scmp.eq.s32.totalorder %s19, 1
      %p79 = scmp.ne.s32.totalorder %s74, %s76
      %p80 = scmp.eq.s32.totalorder %s19, 0
      %p81 = por %p79, %p80
      %p82 = scmp.ne.s32.totalorder %s74, %s76
      %p83 = scmp.eq.s32.totalorder %s24, 1
      %p84 = por %p82, %p83
      %p85 = scmp.ne.s32.totalorder %s76, %s77
      %p86 = scmp.eq.s32.totalorder %s24, 0
      %p87 = por %p85, %p86
      %p88 = scmp.ne.s32.totalorder %s76, %s77
      %p89 = scmp.eq.s32.totalorder %s25, 1
      %p90 = por %p88, %p89
      %p92 = scmp.ne.s32.totalorder %s77, %s91
      %p93 = scmp.eq.s32.totalorder %s25, 0
      %p94 = por %p92, %p93
      %s96 = sadd.s32 %s95, 1
      %p99 = scmp.eq.s32.totalorder %s19, 1
      %p100 = scmp.ne.s32.totalorder %s95, %s97
      %p101 = scmp.eq.s32.totalorder %s19, 0
      %p102 = por %p100, %p101
      %p103 = scmp.ne.s32.totalorder %s95, %s97
      %p104 = scmp.eq.s32.totalorder %s24, 1
      %p105 = por %p103, %p104
      %p106 = scmp.ne.s32.totalorder %s97, %s98
      %p107 = scmp.eq.s32.totalorder %s24, 0
      %p108 = por %p106, %p107
      %p109 = scmp.ne.s32.totalorder %s97, %s98
      %p110 = scmp.eq.s32.totalorder %s25, 1
      %p111 = por %p109, %p110
      %p113 = scmp.ne.s32.totalorder %s98, %s112
      %p114 = scmp.eq.s32.totalorder %s25, 0
      %p115 = por %p113, %p114
      %s117 = sadd.s32 %s116, 1
      %p120 = scmp.eq.s32.totalorder %s19, 1
      %p121 = scmp.ne.s32.totalorder %s116, %s118
      %p122 = scmp.eq.s32.totalorder %s19, 0
      %p123 = por %p121, %p122
      %p124 = scmp.ne.s32.totalorder %s116, %s118
      %p125 = scmp.eq.s32.totalorder %s24, 1
      %p126 = por %p124, %p125
      %p127 = scmp.ne.s32.totalorder %s118, %s119
      %p128 = scmp.eq.s32.totalorder %s24, 0
      %p129 = por %p127, %p128
      %p130 = scmp.ne.s32.totalorder %s118, %s119
      %p131 = scmp.eq.s32.totalorder %s25, 1
      %p132 = por %p130, %p131
      %p134 = scmp.ne.s32.totalorder %s119, %s133
      %p135 = scmp.eq.s32.totalorder %s25, 0
      %p136 = por %p134, %p135
      %s138 = sadd.s32 %s137, 1
      %p141 = scmp.eq.s32.totalorder %s19, 1
      %p142 = scmp.ne.s32.totalorder %s137, %s139
      %p143 = scmp.eq.s32.totalorder %s19, 0
      %p144 = por %p142, %p143
      %p145 = scmp.ne.s32.totalorder %s137, %s139
      %p146 = scmp.eq.s32.totalorder %s24, 1
      %p147 = por %p145, %p146
      %p148 = scmp.ne.s32.totalorder %s139, %s140
      %p149 = scmp.eq.s32.totalorder %s24, 0
      %p150 = por %p148, %p149
      %p151 = scmp.ne.s32.totalorder %s139, %s140
      %p152 = scmp.eq.s32.totalorder %s25, 1
      %p153 = por %p151, %p152
      %p155 = scmp.ne.s32.totalorder %s140, %s154
      %p156 = scmp.eq.s32.totalorder %s25, 0
      %p157 = por %p155, %p156
      %s159 = sadd.s32 %s158, 1
      %p162 = scmp.eq.s32.totalorder %s19, 1
      %p163 = scmp.ne.s32.totalorder %s158, %s160
      %p164 = scmp.eq.s32.totalorder %s19, 0
      %p165 = por %p163, %p164
      %p166 = scmp.ne.s32.totalorder %s158, %s160
      %p167 = scmp.eq.s32.totalorder %s24, 1
      %p168 = por %p166, %p167
      %p169 = scmp.ne.s32.totalorder %s160, %s161
      %p170 = scmp.eq.s32.totalorder %s24, 0
      %p171 = por %p169, %p170
      %p172 = scmp.ne.s32.totalorder %s160, %s161
      %p173 = scmp.eq.s32.totalorder %s25, 1
      %p174 = por %p172, %p173
      %p176 = scmp.ne.s32.totalorder %s161, %s175
      %p177 = scmp.eq.s32.totalorder %s25, 0
      %p178 = por %p176, %p177
      %s179 = ssub.s32 %s19, %s26
      %p180 = scmp.eq.s32.totalorder %s179, 0
      %s182 = sadd.s32 %s181, 1
      %s183 = scalar_select %p180, %s181, %s182
      %p186 = pneg %p180
      %p187 = scmp.eq.s32.totalorder %s19, 1
      %p188 = por %p186, %p187
      %p189 = scmp.ne.s32.totalorder %s181, %s184
      %p190 = scmp.eq.s32.totalorder %s19, 0
      %p191 = por %p189, %p190
      %p192 = scmp.ne.s32.totalorder %s181, %s184
      %p193 = scmp.eq.s32.totalorder %s24, 1
      %p194 = por %p192, %p193
      %p195 = scmp.ne.s32.totalorder %s184, %s185
      %p196 = scmp.eq.s32.totalorder %s24, 0
      %p197 = por %p195, %p196
      %p198 = scmp.ne.s32.totalorder %s184, %s185
      %p199 = scmp.eq.s32.totalorder %s25, 1
      %p200 = por %p198, %p199
      %p202 = scmp.ne.s32.totalorder %s185, %s201
      %p203 = scmp.eq.s32.totalorder %s25, 0
      %p204 = por %p202, %p203
      %p205 = scmp.le.s32.totalorder 1, %s19
      %p206 = scmp.lt.s32.totalorder %s19, 3
      %p207 = pnand %p205, %p206
      %p208 = pneg %p207
      // Predicated region
      $region9: #{self_attention_basic_block_nhwc.1} parent=5 // pred_check
        _
      $region10: #{self_attention_basic_block_nhwc.1} parent=5 // pred_check_branch
        %210 = sbr.rel (%p207) target = $region12
      $region11: #{self_attention_basic_block_nhwc.1} parent=5 // pred_region
        %s211 = ssub.s32 %s19, 1
        // Predicated region
        $region13: #{self_attention_basic_block_nhwc.1} parent=11 // pred_check
          %p212 = pneg %p66
        $region14: #{self_attention_basic_block_nhwc.1} parent=11 // pred_check_branch
          %214 = sbr.rel (%p212) target = $region16
        $region15: #{self_attention_basic_block_nhwc.1} parent=11 // pred_region
          _
        $region16: #{self_attention_basic_block_nhwc.1} parent=11 // pred_fallthru
          _
        // Predicated region
        $region17: #{self_attention_basic_block_nhwc.1} parent=11 // pred_check
          %p215 = pneg %p87
        $region18: #{self_attention_basic_block_nhwc.1} parent=11 // pred_check_branch
          %217 = sbr.rel (%p215) target = $region20
        $region19: #{self_attention_basic_block_nhwc.1} parent=11 // pred_region
          _
        $region20: #{self_attention_basic_block_nhwc.1} parent=11 // pred_fallthru
          _
        // Predicated region
        $region21: #{self_attention_basic_block_nhwc.1} parent=11 // pred_check
          %p218 = pneg %p108
        $region22: #{self_attention_basic_block_nhwc.1} parent=11 // pred_check_branch
          %220 = sbr.rel (%p218) target = $region24
        $region23: #{self_attention_basic_block_nhwc.1} parent=11 // pred_region
          _
        $region24: #{self_attention_basic_block_nhwc.1} parent=11 // pred_fallthru
          _
        // Predicated region
        $region25: #{self_attention_basic_block_nhwc.1} parent=11 // pred_check
          %p221 = pneg %p129
        $region26: #{self_attention_basic_block_nhwc.1} parent=11 // pred_check_branch
          %223 = sbr.rel (%p221) target = $region28
        $region27: #{self_attention_basic_block_nhwc.1} parent=11 // pred_region
          _
        $region28: #{self_attention_basic_block_nhwc.1} parent=11 // pred_fallthru
          _
        // Predicated region
        $region29: #{self_attention_basic_block_nhwc.1} parent=11 // pred_check
          %p224 = pneg %p150
        $region30: #{self_attention_basic_block_nhwc.1} parent=11 // pred_check_branch
          %226 = sbr.rel (%p224) target = $region32
        $region31: #{self_attention_basic_block_nhwc.1} parent=11 // pred_region
          _
        $region32: #{self_attention_basic_block_nhwc.1} parent=11 // pred_fallthru
          _
        // Predicated region
        $region33: #{self_attention_basic_block_nhwc.1} parent=11 // pred_check
          %p227 = pneg %p171
        $region34: #{self_attention_basic_block_nhwc.1} parent=11 // pred_check_branch
          %229 = sbr.rel (%p227) target = $region36
        $region35: #{self_attention_basic_block_nhwc.1} parent=11 // pred_region
          _
        $region36: #{self_attention_basic_block_nhwc.1} parent=11 // pred_fallthru
          _
      $region12: #{self_attention_basic_block_nhwc.1} parent=5 // pred_fallthru
        _
      %p230 = scmp.lt.s32.totalorder %s19, 2
      // Predicated region
      $region37: #{self_attention_basic_block_nhwc.1} parent=5 // pred_check
        %p231 = pneg %p230
      $region38: #{self_attention_basic_block_nhwc.1} parent=5 // pred_check_branch
        %233 = sbr.rel (%p231) target = $region40
      $region39: #{self_attention_basic_block_nhwc.1} parent=5 // pred_region
        // Predicated region
        $region41: #{self_attention_basic_block_nhwc.1} parent=39 // pred_check
          %p234 = pneg %p39
        $region42: #{self_attention_basic_block_nhwc.1} parent=39 // pred_check_branch
          %236 = sbr.rel (%p234) target = $region44
        $region43: #{self_attention_basic_block_nhwc.1} parent=39 // pred_region
          %s237 = sand.u32 %s29, 1
          %s238 = scalar_lea.sflag [#allocation4], %s237
          %s239 = sand.u32 %s29, 1
          %s240 = smul.addr %s239, 256
          %s241 = scalar_lea.vmem [#allocation3], %s240
          %s243 = ssub.s32 4096, 4096
          %244 = vsyncadd %s238, %s243
          %s245 = smul.addr %s19, 32
          %s246 = smul.addr %s245, 128
          %s247 = scalar_lea.hbm %s0, %s246
          %s248 = sshll.u32 %s241, 4
          %s249 = int_to_ptr.vmem [resolvable:$true] %s248
          %254 = dma.hbm_to_vmem [thread:$0]  %s247, 4096, %s249, %s238, 128, 128, 8
        $region44: #{self_attention_basic_block_nhwc.1} parent=39 // pred_fallthru
          _
      $region40: #{self_attention_basic_block_nhwc.1} parent=5 // pred_fallthru
        _
      %p255 = scmp.le.s32.totalorder 1, %s19
      %p256 = scmp.lt.s32.totalorder %s19, 3
      %p257 = pnand %p255, %p256
      %p258 = pneg %p257
      // Predicated region
      $region45: #{self_attention_basic_block_nhwc.1} parent=5 // pred_check
        _
      $region46: #{self_attention_basic_block_nhwc.1} parent=5 // pred_check_branch
        %260 = sbr.rel (%p257) target = $region48
      $region47: #{self_attention_basic_block_nhwc.1} parent=5 // pred_region
        %s261 = ssub.s32 %s19, 1
        %s262 = sand.u32 %s32, 1
        %s263 = scalar_lea.sflag [#allocation4], %s262
        %s264 = sand.u32 %s32, 1
        %s265 = smul.addr %s264, 256
        %s266 = scalar_lea.vmem [#allocation3], %s265
        // Predicated region
        $region49: #{self_attention_basic_block_nhwc.1} parent=47 // pred_check
          %p267 = pneg %p45
        $region50: #{self_attention_basic_block_nhwc.1} parent=47 // pred_check_branch
          %269 = sbr.rel (%p267) target = $region52
        $region51: #{self_attention_basic_block_nhwc.1} parent=47 // pred_region
          %270 = dma.done %s263, 4096
        $region52: #{self_attention_basic_block_nhwc.1} parent=47 // pred_fallthru
          _
        %s271 = sand.u32 %s32, 1
        %s272 = scalar_lea.sflag [#allocation4], %s271
        %s273 = sand.u32 %s32, 1
        %s274 = smul.addr %s273, 256
        %s275 = scalar_lea.vmem [#allocation3], %s274
        %p276 = pneg %p45
        %p277 = pneg %p42
        %p278 = pneg %p66
        %p279 = pneg %p63
        %p280 = pneg %p87
        %p281 = pneg %p84
        %p282 = pneg %p108
        %p283 = pneg %p105
        %p284 = pneg %p129
        %p285 = pneg %p126
        %p286 = pneg %p150
        %p287 = pneg %p147
        %p288 = pneg %p171
        %p289 = pneg %p168
        %p290 = pneg %p197
        %p291 = pneg %p194
        %s292 = sand.u32 %s184, 1
        %s293 = scalar_lea.sflag [#allocation5], %s292
        %s294 = sand.u32 %s184, 1
        %s295 = smul.addr %s294, 256
        %s296 = scalar_lea.vmem [#allocation6], %s295
        %vm298 = vcmask 257024
        %299 = vst.msk [vmem:[#allocation2] sm:$0xf] %vm298, 0
        %300 = vst.msk [vmem:[#allocation2 + $0x4] sm:$0xf] %vm298, 0
        %vm301 = vcmask 253952
        %302 = vst.msk [vmem:[#allocation2 + $0x8] sm:$0x1] %vm301, 0
        %s303 = scalar_lea.vmem [#allocation2], 204
        %304 = vst.msk [vmem:[%s303] sm:$0xf] %vm298, 0
        %305 = vst.msk [vmem:[%s303 + $0x4] sm:$0xf] %vm298, 0
        %306 = vst.msk [vmem:[%s303 + $0x8] sm:$0x1] %vm301, 0
        %s307 = scalar_lea.vmem [#allocation2], 12
        %vm308 = vcmask 253952
        %vm309 = vsmask.f32 256
        %vm310 = vmand %vm308, %vm309
        %v311 = vld [vmem:[%s307] sm:$0x1]
        %v312 = vsel %vm310, 0, %v311
        %313 = vst [vmem:[%s307] sm:$0x1] %v312
        %v314 = vld [vmem:[%s307 + $0xc] sm:$0x1]
        %v315 = vsel %vm310, 0, %v314
        %316 = vst [vmem:[%s307 + $0xc] sm:$0x1] %v315
        %v317 = vld [vmem:[%s307 + $0x18] sm:$0x1]
        %v318 = vsel %vm310, 0, %v317
        %319 = vst [vmem:[%s307 + $0x18] sm:$0x1] %v318
        %v320 = vld [vmem:[%s307 + $0x24] sm:$0x1]
        %v321 = vsel %vm310, 0, %v320
        %322 = vst [vmem:[%s307 + $0x24] sm:$0x1] %v321
        %v323 = vld [vmem:[%s307 + $0x30] sm:$0x1]
        %v324 = vsel %vm310, 0, %v323
        %325 = vst [vmem:[%s307 + $0x30] sm:$0x1] %v324
        %v326 = vld [vmem:[%s307 + $0x3c] sm:$0x1]
        %v327 = vsel %vm310, 0, %v326
        %328 = vst [vmem:[%s307 + $0x3c] sm:$0x1] %v327
        %v329 = vld [vmem:[%s307 + $0x48] sm:$0x1]
        %v330 = vsel %vm310, 0, %v329
        %331 = vst [vmem:[%s307 + $0x48] sm:$0x1] %v330
        %v332 = vld [vmem:[%s307 + $0x54] sm:$0x1]
        %v333 = vsel %vm310, 0, %v332
        %334 = vst [vmem:[%s307 + $0x54] sm:$0x1] %v333
        %v335 = vld [vmem:[%s307 + $0x60] sm:$0x1]
        %v336 = vsel %vm310, 0, %v335
        %337 = vst [vmem:[%s307 + $0x60] sm:$0x1] %v336
        %v338 = vld [vmem:[%s307 + $0x6c] sm:$0x1]
        %v339 = vsel %vm310, 0, %v338
        %340 = vst [vmem:[%s307 + $0x6c] sm:$0x1] %v339
        %v341 = vld [vmem:[%s307 + $0x78] sm:$0x1]
        %v342 = vsel %vm310, 0, %v341
        %343 = vst [vmem:[%s307 + $0x78] sm:$0x1] %v342
        %v344 = vld [vmem:[%s307 + $0x84] sm:$0x1]
        %v345 = vsel %vm310, 0, %v344
        %346 = vst [vmem:[%s307 + $0x84] sm:$0x1] %v345
        %v347 = vld [vmem:[%s307 + $0x90] sm:$0x1]
        %v348 = vsel %vm310, 0, %v347
        %349 = vst [vmem:[%s307 + $0x90] sm:$0x1] %v348
        %v350 = vld [vmem:[%s307 + $0x9c] sm:$0x1]
        %v351 = vsel %vm310, 0, %v350
        %352 = vst [vmem:[%s307 + $0x9c] sm:$0x1] %v351
        %v353 = vld [vmem:[%s307 + $0xa8] sm:$0x1]
        %v354 = vsel %vm310, 0, %v353
        %355 = vst [vmem:[%s307 + $0xa8] sm:$0x1] %v354
        %v356 = vld [vmem:[%s307 + $0xb4] sm:$0x1]
        %v357 = vsel %vm310, 0, %v356
        %358 = vst [vmem:[%s307 + $0xb4] sm:$0x1] %v357
        %vm359 = vsmask.f32 7938
        %vm360 = vmand %vm308, %vm359
        %v361 = vld [vmem:[%s307 + $0x8] sm:$0x1]
        %v362 = vsel %vm360, 0, %v361
        %363 = vst [vmem:[%s307 + $0x8] sm:$0x1] %v362
        %v364 = vld [vmem:[%s307 + $0x14] sm:$0x1]
        %v365 = vsel %vm360, 0, %v364
        %366 = vst [vmem:[%s307 + $0x14] sm:$0x1] %v365
        %v367 = vld [vmem:[%s307 + $0x20] sm:$0x1]
        %v368 = vsel %vm360, 0, %v367
        %369 = vst [vmem:[%s307 + $0x20] sm:$0x1] %v368
        %v370 = vld [vmem:[%s307 + $0x2c] sm:$0x1]
        %v371 = vsel %vm360, 0, %v370
        %372 = vst [vmem:[%s307 + $0x2c] sm:$0x1] %v371
        %v373 = vld [vmem:[%s307 + $0x38] sm:$0x1]
        %v374 = vsel %vm360, 0, %v373
        %375 = vst [vmem:[%s307 + $0x38] sm:$0x1] %v374
        %v376 = vld [vmem:[%s307 + $0x44] sm:$0x1]
        %v377 = vsel %vm360, 0, %v376
        %378 = vst [vmem:[%s307 + $0x44] sm:$0x1] %v377
        %v379 = vld [vmem:[%s307 + $0x50] sm:$0x1]
        %v380 = vsel %vm360, 0, %v379
        %381 = vst [vmem:[%s307 + $0x50] sm:$0x1] %v380
        %v382 = vld [vmem:[%s307 + $0x5c] sm:$0x1]
        %v383 = vsel %vm360, 0, %v382
        %384 = vst [vmem:[%s307 + $0x5c] sm:$0x1] %v383
        %v385 = vld [vmem:[%s307 + $0x68] sm:$0x1]
        %v386 = vsel %vm360, 0, %v385
        %387 = vst [vmem:[%s307 + $0x68] sm:$0x1] %v386
        %v388 = vld [vmem:[%s307 + $0x74] sm:$0x1]
        %v389 = vsel %vm360, 0, %v388
        %390 = vst [vmem:[%s307 + $0x74] sm:$0x1] %v389
        %v391 = vld [vmem:[%s307 + $0x80] sm:$0x1]
        %v392 = vsel %vm360, 0, %v391
        %393 = vst [vmem:[%s307 + $0x80] sm:$0x1] %v392
        %v394 = vld [vmem:[%s307 + $0x8c] sm:$0x1]
        %v395 = vsel %vm360, 0, %v394
        %396 = vst [vmem:[%s307 + $0x8c] sm:$0x1] %v395
        %v397 = vld [vmem:[%s307 + $0x98] sm:$0x1]
        %v398 = vsel %vm360, 0, %v397
        %399 = vst [vmem:[%s307 + $0x98] sm:$0x1] %v398
        %v400 = vld [vmem:[%s307 + $0xa4] sm:$0x1]
        %v401 = vsel %vm360, 0, %v400
        %402 = vst [vmem:[%s307 + $0xa4] sm:$0x1] %v401
        %v403 = vld [vmem:[%s307 + $0xb0] sm:$0x1]
        %v404 = vsel %vm360, 0, %v403
        %405 = vst [vmem:[%s307 + $0xb0] sm:$0x1] %v404
        %v406 = vld [vmem:[%s307 + $0xbc] sm:$0x1]
        %v407 = vsel %vm360, 0, %v406
        %408 = vst [vmem:[%s307 + $0xbc] sm:$0x1] %v407
        %v409 = vld [vmem:[%s266] sm:$0xff]
        %v410 = vld [vmem:[%s266 + $0x8] sm:$0xff]
        %v411 = vld [vmem:[%s266 + $0x10] sm:$0xff]
        %v412 = vld [vmem:[%s266 + $0x18] sm:$0xff]
        %v413 = vld [vmem:[%s266 + $0x20] sm:$0xff]
        %v414 = vld [vmem:[%s266 + $0x28] sm:$0xff]
        %v415 = vld [vmem:[%s266 + $0x30] sm:$0xff]
        %v416 = vld [vmem:[%s266 + $0x38] sm:$0xff]
        %v417 = vld [vmem:[%s266 + $0x40] sm:$0xff]
        %v418 = vld [vmem:[%s266 + $0x48] sm:$0xff]
        %v419 = vld [vmem:[%s266 + $0x50] sm:$0xff]
        %v420 = vld [vmem:[%s266 + $0x58] sm:$0xff]
        %v421 = vld [vmem:[%s266 + $0x60] sm:$0xff]
        %v422 = vld [vmem:[%s266 + $0x68] sm:$0xff]
        %v423 = vld [vmem:[%s266 + $0x70] sm:$0xff]
        %v424 = vld [vmem:[%s266 + $0x78] sm:$0xff]
        %v425 = vld [vmem:[%s266 + $0x80] sm:$0xff]
        %v426 = vld [vmem:[%s266 + $0x88] sm:$0xff]
        %v427 = vld [vmem:[%s266 + $0x90] sm:$0xff]
        %v428 = vld [vmem:[%s266 + $0x98] sm:$0xff]
        %v429 = vld [vmem:[%s266 + $0xa0] sm:$0xff]
        %v430 = vld [vmem:[%s266 + $0xa8] sm:$0xff]
        %v431 = vld [vmem:[%s266 + $0xb0] sm:$0xff]
        %v432 = vld [vmem:[%s266 + $0xb8] sm:$0xff]
        %v433 = vld [vmem:[%s266 + $0xc0] sm:$0xff]
        %v434 = vld [vmem:[%s266 + $0xc8] sm:$0xff]
        %v435 = vld [vmem:[%s266 + $0xd0] sm:$0xff]
        %v436 = vld [vmem:[%s266 + $0xd8] sm:$0xff]
        %v437 = vld [vmem:[%s266 + $0xe0] sm:$0xff]
        %v438 = vld [vmem:[%s266 + $0xe8] sm:$0xff]
        %v439 = vld [vmem:[%s266 + $0xf0] sm:$0xff]
        %v440 = vld [vmem:[%s266 + $0xf8] sm:$0xff]
        %v441 = vpack.c.bf16 %v410, %v409
        %v442 = vpack.c.bf16 %v412, %v411
        %v443 = vpack.c.bf16 %v414, %v413
        %v444 = vpack.c.bf16 %v416, %v415
        %v445 = vpack.c.bf16 %v418, %v417
        %v446 = vpack.c.bf16 %v420, %v419
        %v447 = vpack.c.bf16 %v422, %v421
        %v448 = vpack.c.bf16 %v424, %v423
        %v449 = vpack.c.bf16 %v426, %v425
        %v450 = vpack.c.bf16 %v428, %v427
        %v451 = vpack.c.bf16 %v430, %v429
        %v452 = vpack.c.bf16 %v432, %v431
        %v453 = vpack.c.bf16 %v434, %v433
        %v454 = vpack.c.bf16 %v436, %v435
        %v455 = vpack.c.bf16 %v438, %v437
        %v456 = vpack.c.bf16 %v440, %v439
        %v473 = vunpack.c.l.b16 %v441
        %v474 = vunpack.c.h.b16 %v441
        %v475 = vunpack.c.l.b16 %v442
        %v476 = vunpack.c.h.b16 %v442
        %v477 = vunpack.c.l.b16 %v443
        %v478 = vunpack.c.h.b16 %v443
        %v479 = vunpack.c.l.b16 %v444
        %v480 = vunpack.c.h.b16 %v444
        %v481 = vunpack.c.l.b16 %v445
        %v482 = vunpack.c.h.b16 %v445
        %v483 = vunpack.c.l.b16 %v446
        %v484 = vunpack.c.h.b16 %v446
        %v485 = vunpack.c.l.b16 %v447
        %v486 = vunpack.c.h.b16 %v447
        %v487 = vunpack.c.l.b16 %v448
        %v488 = vunpack.c.h.b16 %v448
        %v489 = vunpack.c.l.b16 %v449
        %v490 = vunpack.c.h.b16 %v449
        %v491 = vunpack.c.l.b16 %v450
        %v492 = vunpack.c.h.b16 %v450
        %v493 = vunpack.c.l.b16 %v451
        %v494 = vunpack.c.h.b16 %v451
        %v495 = vunpack.c.l.b16 %v452
        %v496 = vunpack.c.h.b16 %v452
        %v497 = vunpack.c.l.b16 %v453
        %v498 = vunpack.c.h.b16 %v453
        %v499 = vunpack.c.l.b16 %v454
        %v500 = vunpack.c.h.b16 %v454
        %v501 = vunpack.c.l.b16 %v455
        %v502 = vunpack.c.h.b16 %v455
        %v503 = vunpack.c.l.b16 %v456
        %v504 = vunpack.c.h.b16 %v456
        %v505 = vpack.c.b16 %v473, %v473
        %v506 = vpack.c.b16 %v474, %v474
        %v507 = vpack.c.b16 %v475, %v475
        %v508 = vpack.c.b16 %v476, %v476
        %v509 = vpack.c.b16 %v477, %v477
        %v510 = vpack.c.b16 %v478, %v478
        %v511 = vpack.c.b16 %v479, %v479
        %v512 = vpack.c.b16 %v480, %v480
        %v513 = vpack.c.b16 %v481, %v481
        %v514 = vpack.c.b16 %v482, %v482
        %v515 = vpack.c.b16 %v483, %v483
        %v516 = vpack.c.b16 %v484, %v484
        %v517 = vpack.c.b16 %v485, %v485
        %v518 = vpack.c.b16 %v486, %v486
        %v519 = vpack.c.b16 %v487, %v487
        %v520 = vpack.c.b16 %v488, %v488
        %v521 = vpack.c.b16 %v489, %v489
        %v522 = vpack.c.b16 %v490, %v490
        %v523 = vpack.c.b16 %v491, %v491
        %v524 = vpack.c.b16 %v492, %v492
        %v525 = vpack.c.b16 %v493, %v493
        %v526 = vpack.c.b16 %v494, %v494
        %v527 = vpack.c.b16 %v495, %v495
        %v528 = vpack.c.b16 %v496, %v496
        %v529 = vpack.c.b16 %v497, %v497
        %v530 = vpack.c.b16 %v498, %v498
        %v531 = vpack.c.b16 %v499, %v499
        %v532 = vpack.c.b16 %v500, %v500
        %v533 = vpack.c.b16 %v501, %v501
        %v534 = vpack.c.b16 %v502, %v502
        %v535 = vpack.c.b16 %v503, %v503
        %v536 = vpack.c.b16 %v504, %v504
        %vm537 = vsmask.f32 4368
        %vm538 = vmor %vm309, %vm537
        %v540 = vshrl.u32 %v505, 16
        %v542 = vrot.slane %v540, 7
        %v543 = vshll.u32 %v505, 16
        %v545 = vor.u32 %v542, %v543
        %v546 = vrot.slane %v542, 4
        %v548 = vshrl.u32 %v506, 16
        %v550 = vrot.slane %v548, 7
        %v551 = vshll.u32 %v506, 16
        %v553 = vor.u32 %v550, %v551
        %v554 = vsel %vm538, %v546, %v553
        %v555 = vrot.slane %v550, 4
        %v557 = vshrl.u32 %v507, 16
        %v559 = vrot.slane %v557, 7
        %v560 = vshll.u32 %v507, 16
        %v562 = vor.u32 %v559, %v560
        %v563 = vrot.slane %v559, 4
        %v565 = vshrl.u32 %v508, 16
        %v567 = vrot.slane %v565, 7
        %v568 = vshll.u32 %v508, 16
        %v570 = vor.u32 %v567, %v568
        %v571 = vsel %vm538, %v563, %v570
        %v572 = vrot.slane %v567, 4
        %v574 = vshrl.u32 %v509, 16
        %v576 = vrot.slane %v574, 7
        %v577 = vshll.u32 %v509, 16
        %v579 = vor.u32 %v576, %v577
        %v580 = vrot.slane %v576, 4
        %v582 = vshrl.u32 %v510, 16
        %v584 = vrot.slane %v582, 7
        %v585 = vshll.u32 %v510, 16
        %v587 = vor.u32 %v584, %v585
        %v588 = vsel %vm538, %v580, %v587
        %v589 = vrot.slane %v584, 4
        %v591 = vshrl.u32 %v511, 16
        %v593 = vrot.slane %v591, 7
        %v594 = vshll.u32 %v511, 16
        %v596 = vor.u32 %v593, %v594
        %v597 = vrot.slane %v593, 4
        %v599 = vshrl.u32 %v512, 16
        %v601 = vrot.slane %v599, 7
        %v602 = vshll.u32 %v512, 16
        %v604 = vor.u32 %v601, %v602
        %v605 = vsel %vm538, %v597, %v604
        %v606 = vrot.slane %v601, 4
        %v608 = vshrl.u32 %v513, 16
        %v610 = vrot.slane %v608, 7
        %v611 = vshll.u32 %v513, 16
        %v613 = vor.u32 %v610, %v611
        %v614 = vrot.slane %v610, 4
        %v616 = vshrl.u32 %v514, 16
        %v618 = vrot.slane %v616, 7
        %v619 = vshll.u32 %v514, 16
        %v621 = vor.u32 %v618, %v619
        %v622 = vsel %vm538, %v614, %v621
        %v623 = vrot.slane %v618, 4
        %v625 = vshrl.u32 %v515, 16
        %v627 = vrot.slane %v625, 7
        %v628 = vshll.u32 %v515, 16
        %v630 = vor.u32 %v627, %v628
        %v631 = vrot.slane %v627, 4
        %v633 = vshrl.u32 %v516, 16
        %v635 = vrot.slane %v633, 7
        %v636 = vshll.u32 %v516, 16
        %v638 = vor.u32 %v635, %v636
        %v639 = vsel %vm538, %v631, %v638
        %v640 = vrot.slane %v635, 4
        %v642 = vshrl.u32 %v517, 16
        %v644 = vrot.slane %v642, 7
        %v645 = vshll.u32 %v517, 16
        %v647 = vor.u32 %v644, %v645
        %v648 = vrot.slane %v644, 4
        %v650 = vshrl.u32 %v518, 16
        %v652 = vrot.slane %v650, 7
        %v653 = vshll.u32 %v518, 16
        %v655 = vor.u32 %v652, %v653
        %v656 = vsel %vm538, %v648, %v655
        %v657 = vrot.slane %v652, 4
        %v659 = vshrl.u32 %v519, 16
        %v661 = vrot.slane %v659, 7
        %v662 = vshll.u32 %v519, 16
        %v664 = vor.u32 %v661, %v662
        %v665 = vrot.slane %v661, 4
        %v667 = vshrl.u32 %v520, 16
        %v669 = vrot.slane %v667, 7
        %v670 = vshll.u32 %v520, 16
        %v672 = vor.u32 %v669, %v670
        %v673 = vsel %vm538, %v665, %v672
        %v674 = vrot.slane %v669, 4
        %v676 = vshrl.u32 %v521, 16
        %v678 = vrot.slane %v676, 7
        %v679 = vshll.u32 %v521, 16
        %v681 = vor.u32 %v678, %v679
        %v682 = vrot.slane %v678, 4
        %v684 = vshrl.u32 %v522, 16
        %v686 = vrot.slane %v684, 7
        %v687 = vshll.u32 %v522, 16
        %v689 = vor.u32 %v686, %v687
        %v690 = vsel %vm538, %v682, %v689
        %v691 = vrot.slane %v686, 4
        %v693 = vshrl.u32 %v523, 16
        %v695 = vrot.slane %v693, 7
        %v696 = vshll.u32 %v523, 16
        %v698 = vor.u32 %v695, %v696
        %v699 = vrot.slane %v695, 4
        %v701 = vshrl.u32 %v524, 16
        %v703 = vrot.slane %v701, 7
        %v704 = vshll.u32 %v524, 16
        %v706 = vor.u32 %v703, %v704
        %v707 = vsel %vm538, %v699, %v706
        %v708 = vrot.slane %v703, 4
        %v710 = vshrl.u32 %v525, 16
        %v712 = vrot.slane %v710, 7
        %v713 = vshll.u32 %v525, 16
        %v715 = vor.u32 %v712, %v713
        %v716 = vrot.slane %v712, 4
        %v718 = vshrl.u32 %v526, 16
        %v720 = vrot.slane %v718, 7
        %v721 = vshll.u32 %v526, 16
        %v723 = vor.u32 %v720, %v721
        %v724 = vsel %vm538, %v716, %v723
        %v725 = vrot.slane %v720, 4
        %v727 = vshrl.u32 %v527, 16
        %v729 = vrot.slane %v727, 7
        %v730 = vshll.u32 %v527, 16
        %v732 = vor.u32 %v729, %v730
        %v733 = vrot.slane %v729, 4
        %v735 = vshrl.u32 %v528, 16
        %v737 = vrot.slane %v735, 7
        %v738 = vshll.u32 %v528, 16
        %v740 = vor.u32 %v737, %v738
        %v741 = vsel %vm538, %v733, %v740
        %v742 = vrot.slane %v737, 4
        %v744 = vshrl.u32 %v529, 16
        %v746 = vrot.slane %v744, 7
        %v747 = vshll.u32 %v529, 16
        %v749 = vor.u32 %v746, %v747
        %v750 = vrot.slane %v746, 4
        %v752 = vshrl.u32 %v530, 16
        %v754 = vrot.slane %v752, 7
        %v755 = vshll.u32 %v530, 16
        %v757 = vor.u32 %v754, %v755
        %v758 = vsel %vm538, %v750, %v757
        %v759 = vrot.slane %v754, 4
        %v761 = vshrl.u32 %v531, 16
        %v763 = vrot.slane %v761, 7
        %v764 = vshll.u32 %v531, 16
        %v766 = vor.u32 %v763, %v764
        %v767 = vrot.slane %v763, 4
        %v769 = vshrl.u32 %v532, 16
        %v771 = vrot.slane %v769, 7
        %v772 = vshll.u32 %v532, 16
        %v774 = vor.u32 %v771, %v772
        %v775 = vsel %vm538, %v767, %v774
        %v776 = vrot.slane %v771, 4
        %v778 = vshrl.u32 %v533, 16
        %v780 = vrot.slane %v778, 7
        %v781 = vshll.u32 %v533, 16
        %v783 = vor.u32 %v780, %v781
        %v784 = vrot.slane %v780, 4
        %v786 = vshrl.u32 %v534, 16
        %v788 = vrot.slane %v786, 7
        %v789 = vshll.u32 %v534, 16
        %v791 = vor.u32 %v788, %v789
        %v792 = vsel %vm538, %v784, %v791
        %v793 = vrot.slane %v788, 4
        %v795 = vshrl.u32 %v535, 16
        %v797 = vrot.slane %v795, 7
        %v798 = vshll.u32 %v535, 16
        %v800 = vor.u32 %v797, %v798
        %v801 = vrot.slane %v797, 4
        %v803 = vshrl.u32 %v536, 16
        %v805 = vrot.slane %v803, 7
        %v806 = vshll.u32 %v536, 16
        %v808 = vor.u32 %v805, %v806
        %v809 = vsel %vm538, %v801, %v808
        %v810 = vrot.slane %v805, 4
        %vm859 = vcmask 257024
        %vm860 = vmand %vm859, %vm359
        %v861 = vld [vmem:[%s307] sm:$0xf]
        %v862 = vsel %vm860, %v545, %v861
        %863 = vst [vmem:[%s307] sm:$0xf] %v862
        %864 = vst.msk [vmem:[%s307 + $0x4] sm:$0xf] %vm298, %v554
        %v865 = vld [vmem:[%s307 + $0x8] sm:$0x1]
        %v866 = vsel %vm310, %v555, %v865
        %867 = vst [vmem:[%s307 + $0x8] sm:$0x1] %v866
        %v868 = vld [vmem:[%s307 + $0xc] sm:$0xf]
        %v869 = vsel %vm860, %v562, %v868
        %870 = vst [vmem:[%s307 + $0xc] sm:$0xf] %v869
        %871 = vst.msk [vmem:[%s307 + $0x10] sm:$0xf] %vm298, %v571
        %v872 = vld [vmem:[%s307 + $0x14] sm:$0x1]
        %v873 = vsel %vm310, %v572, %v872
        %874 = vst [vmem:[%s307 + $0x14] sm:$0x1] %v873
        %v875 = vld [vmem:[%s307 + $0x18] sm:$0xf]
        %v876 = vsel %vm860, %v579, %v875
        %877 = vst [vmem:[%s307 + $0x18] sm:$0xf] %v876
        %878 = vst.msk [vmem:[%s307 + $0x1c] sm:$0xf] %vm298, %v588
        %v879 = vld [vmem:[%s307 + $0x20] sm:$0x1]
        %v880 = vsel %vm310, %v589, %v879
        %881 = vst [vmem:[%s307 + $0x20] sm:$0x1] %v880
        %v882 = vld [vmem:[%s307 + $0x24] sm:$0xf]
        %v883 = vsel %vm860, %v596, %v882
        %884 = vst [vmem:[%s307 + $0x24] sm:$0xf] %v883
        %885 = vst.msk [vmem:[%s307 + $0x28] sm:$0xf] %vm298, %v605
        %v886 = vld [vmem:[%s307 + $0x2c] sm:$0x1]
        %v887 = vsel %vm310, %v606, %v886
        %888 = vst [vmem:[%s307 + $0x2c] sm:$0x1] %v887
        %v889 = vld [vmem:[%s307 + $0x30] sm:$0xf]
        %v890 = vsel %vm860, %v613, %v889
        %891 = vst [vmem:[%s307 + $0x30] sm:$0xf] %v890
        %892 = vst.msk [vmem:[%s307 + $0x34] sm:$0xf] %vm298, %v622
        %v893 = vld [vmem:[%s307 + $0x38] sm:$0x1]
        %v894 = vsel %vm310, %v623, %v893
        %895 = vst [vmem:[%s307 + $0x38] sm:$0x1] %v894
        %v896 = vld [vmem:[%s307 + $0x3c] sm:$0xf]
        %v897 = vsel %vm860, %v630, %v896
        %898 = vst [vmem:[%s307 + $0x3c] sm:$0xf] %v897
        %899 = vst.msk [vmem:[%s307 + $0x40] sm:$0xf] %vm298, %v639
        %v900 = vld [vmem:[%s307 + $0x44] sm:$0x1]
        %v901 = vsel %vm310, %v640, %v900
        %902 = vst [vmem:[%s307 + $0x44] sm:$0x1] %v901
        %v903 = vld [vmem:[%s307 + $0x48] sm:$0xf]
        %v904 = vsel %vm860, %v647, %v903
        %905 = vst [vmem:[%s307 + $0x48] sm:$0xf] %v904
        %906 = vst.msk [vmem:[%s307 + $0x4c] sm:$0xf] %vm298, %v656
        %v907 = vld [vmem:[%s307 + $0x50] sm:$0x1]
        %v908 = vsel %vm310, %v657, %v907
        %909 = vst [vmem:[%s307 + $0x50] sm:$0x1] %v908
        %v910 = vld [vmem:[%s307 + $0x54] sm:$0xf]
        %v911 = vsel %vm860, %v664, %v910
        %912 = vst [vmem:[%s307 + $0x54] sm:$0xf] %v911
        %913 = vst.msk [vmem:[%s307 + $0x58] sm:$0xf] %vm298, %v673
        %v914 = vld [vmem:[%s307 + $0x5c] sm:$0x1]
        %v915 = vsel %vm310, %v674, %v914
        %916 = vst [vmem:[%s307 + $0x5c] sm:$0x1] %v915
        %v917 = vld [vmem:[%s307 + $0x60] sm:$0xf]
        %v918 = vsel %vm860, %v681, %v917
        %919 = vst [vmem:[%s307 + $0x60] sm:$0xf] %v918
        %920 = vst.msk [vmem:[%s307 + $0x64] sm:$0xf] %vm298, %v690
        %v921 = vld [vmem:[%s307 + $0x68] sm:$0x1]
        %v922 = vsel %vm310, %v691, %v921
        %923 = vst [vmem:[%s307 + $0x68] sm:$0x1] %v922
        %v924 = vld [vmem:[%s307 + $0x6c] sm:$0xf]
        %v925 = vsel %vm860, %v698, %v924
        %926 = vst [vmem:[%s307 + $0x6c] sm:$0xf] %v925
        %927 = vst.msk [vmem:[%s307 + $0x70] sm:$0xf] %vm298, %v707
        %v928 = vld [vmem:[%s307 + $0x74] sm:$0x1]
        %v929 = vsel %vm310, %v708, %v928
        %930 = vst [vmem:[%s307 + $0x74] sm:$0x1] %v929
        %v931 = vld [vmem:[%s307 + $0x78] sm:$0xf]
        %v932 = vsel %vm860, %v715, %v931
        %933 = vst [vmem:[%s307 + $0x78] sm:$0xf] %v932
        %934 = vst.msk [vmem:[%s307 + $0x7c] sm:$0xf] %vm298, %v724
        %v935 = vld [vmem:[%s307 + $0x80] sm:$0x1]
        %v936 = vsel %vm310, %v725, %v935
        %937 = vst [vmem:[%s307 + $0x80] sm:$0x1] %v936
        %v938 = vld [vmem:[%s307 + $0x84] sm:$0xf]
        %v939 = vsel %vm860, %v732, %v938
        %940 = vst [vmem:[%s307 + $0x84] sm:$0xf] %v939
        %941 = vst.msk [vmem:[%s307 + $0x88] sm:$0xf] %vm298, %v741
        %v942 = vld [vmem:[%s307 + $0x8c] sm:$0x1]
        %v943 = vsel %vm310, %v742, %v942
        %944 = vst [vmem:[%s307 + $0x8c] sm:$0x1] %v943
        %v945 = vld [vmem:[%s307 + $0x90] sm:$0xf]
        %v946 = vsel %vm860, %v749, %v945
        %947 = vst [vmem:[%s307 + $0x90] sm:$0xf] %v946
        %948 = vst.msk [vmem:[%s307 + $0x94] sm:$0xf] %vm298, %v758
        %v949 = vld [vmem:[%s307 + $0x98] sm:$0x1]
        %v950 = vsel %vm310, %v759, %v949
        %951 = vst [vmem:[%s307 + $0x98] sm:$0x1] %v950
        %v952 = vld [vmem:[%s307 + $0x9c] sm:$0xf]
        %v953 = vsel %vm860, %v766, %v952
        %954 = vst [vmem:[%s307 + $0x9c] sm:$0xf] %v953
        %955 = vst.msk [vmem:[%s307 + $0xa0] sm:$0xf] %vm298, %v775
        %v956 = vld [vmem:[%s307 + $0xa4] sm:$0x1]
        %v957 = vsel %vm310, %v776, %v956
        %958 = vst [vmem:[%s307 + $0xa4] sm:$0x1] %v957
        %v959 = vld [vmem:[%s307 + $0xa8] sm:$0xf]
        %v960 = vsel %vm860, %v783, %v959
        %961 = vst [vmem:[%s307 + $0xa8] sm:$0xf] %v960
        %962 = vst.msk [vmem:[%s307 + $0xac] sm:$0xf] %vm298, %v792
        %v963 = vld [vmem:[%s307 + $0xb0] sm:$0x1]
        %v964 = vsel %vm310, %v793, %v963
        %965 = vst [vmem:[%s307 + $0xb0] sm:$0x1] %v964
        %v966 = vld [vmem:[%s307 + $0xb4] sm:$0xf]
        %v967 = vsel %vm860, %v800, %v966
        %968 = vst [vmem:[%s307 + $0xb4] sm:$0xf] %v967
        %969 = vst.msk [vmem:[%s307 + $0xb8] sm:$0xf] %vm298, %v809
        %v970 = vld [vmem:[%s307 + $0xbc] sm:$0x1]
        %v971 = vsel %vm310, %v810, %v970
        %972 = vst [vmem:[%s307 + $0xbc] sm:$0x1] %v971
        %v973 = vld [vmem:[#allocation2] sm:$0xf]
        %v974 = vld [vmem:[#allocation2 + $0x4] sm:$0xf]
        %v975 = vld [vmem:[#allocation2 + $0xc] sm:$0xf]
        %v976 = vld [vmem:[#allocation2 + $0x10] sm:$0xf]
        %v977 = vld [vmem:[#allocation2 + $0x18] sm:$0xf]
        %v978 = vld [vmem:[#allocation2 + $0x1c] sm:$0xf]
        %v979 = vld [vmem:[#allocation2 + $0x24] sm:$0xf]
        %v980 = vld [vmem:[#allocation2 + $0x28] sm:$0xf]
        %v981 = vld [vmem:[#allocation2 + $0x30] sm:$0xf]
        %v982 = vld [vmem:[#allocation2 + $0x34] sm:$0xf]
        %v983 = vld [vmem:[#allocation2 + $0x3c] sm:$0xf]
        %v984 = vld [vmem:[#allocation2 + $0x40] sm:$0xf]
        %v985 = vld [vmem:[#allocation2 + $0x48] sm:$0xf]
        %v986 = vld [vmem:[#allocation2 + $0x4c] sm:$0xf]
        %v987 = vld [vmem:[#allocation2 + $0x54] sm:$0xf]
        %v988 = vld [vmem:[#allocation2 + $0x58] sm:$0xf]
        %v989 = vld [vmem:[#allocation2 + $0x60] sm:$0xf]
        %v990 = vld [vmem:[#allocation2 + $0x64] sm:$0xf]
        %v991 = vld [vmem:[#allocation2 + $0x6c] sm:$0xf]
        %v992 = vld [vmem:[#allocation2 + $0x70] sm:$0xf]
        %v993 = vld [vmem:[#allocation2 + $0x78] sm:$0xf]
        %v994 = vld [vmem:[#allocation2 + $0x7c] sm:$0xf]
        %v995 = vld [vmem:[#allocation2 + $0x84] sm:$0xf]
        %v996 = vld [vmem:[#allocation2 + $0x88] sm:$0xf]
        %v997 = vld [vmem:[#allocation2 + $0x90] sm:$0xf]
        %v998 = vld [vmem:[#allocation2 + $0x94] sm:$0xf]
        %v999 = vld [vmem:[#allocation2 + $0x9c] sm:$0xf]
        %v1000 = vld [vmem:[#allocation2 + $0xa0] sm:$0xf]
        %v1001 = vld [vmem:[#allocation2 + $0xa8] sm:$0xf]
        %v1002 = vld [vmem:[#allocation2 + $0xac] sm:$0xf]
        %v1003 = vld [vmem:[#allocation2 + $0xb4] sm:$0xf]
        %v1004 = vld [vmem:[#allocation2 + $0xb8] sm:$0xf]
        %v1005 = vld [vmem:[%s1] sm:$0xf]
        %v1006 = vld [vmem:[%s1 + $0x4] sm:$0xf]
        %v1007 = vld [vmem:[%s1 + $0x8] sm:$0xf]
        %v1008 = vld [vmem:[%s1 + $0xc] sm:$0xf]
        %v1009 = vld [vmem:[#allocation2 + $0x8] sm:$0x1]
        %v1010 = vld [vmem:[#allocation2 + $0x14] sm:$0x1]
        %v1011 = vld [vmem:[#allocation2 + $0x20] sm:$0x1]
        %v1012 = vld [vmem:[#allocation2 + $0x2c] sm:$0x1]
        %v1013 = vld [vmem:[#allocation2 + $0x38] sm:$0x1]
        %v1014 = vld [vmem:[#allocation2 + $0x44] sm:$0x1]
        %v1015 = vld [vmem:[#allocation2 + $0x50] sm:$0x1]
        %v1016 = vld [vmem:[#allocation2 + $0x5c] sm:$0x1]
        %v1017 = vld [vmem:[#allocation2 + $0x68] sm:$0x1]
        %v1018 = vld [vmem:[#allocation2 + $0x74] sm:$0x1]
        %v1019 = vld [vmem:[#allocation2 + $0x80] sm:$0x1]
        %v1020 = vld [vmem:[#allocation2 + $0x8c] sm:$0x1]
        %v1021 = vld [vmem:[#allocation2 + $0x98] sm:$0x1]
        %v1022 = vld [vmem:[#allocation2 + $0xa4] sm:$0x1]
        %v1023 = vld [vmem:[#allocation2 + $0xb0] sm:$0x1]
        %v1024 = vld [vmem:[#allocation2 + $0xbc] sm:$0x1]
        %vm1025 = vsmask.f32 3328
        %vm1026 = vsmask.f32 7440
        %vm1027 = vmor %vm1025, %vm1026
        %v1029 = vshrl.u32 %v973, 16
        %v1031 = vrot.slane %v1029, 4
        %v1032 = vshll.u32 %v973, 16
        %v1034 = vrot.slane %v1032, 5
        %v1035 = vor.u32 %v1031, %v1034
        %v1036 = vrot.slane %v1035, 4
        %v1038 = vshll.u32 %v974, 16
        %v1040 = vrot.slane %v1038, 5
        %v1041 = vsel %vm1027, %v1036, %v1040
        %v1042 = vshrl.u32 %v974, 16
        %v1044 = vrot.slane %v1042, 4
        %v1045 = vor.u32 %v1044, %v1040
        %v1046 = vrot.slane %v1045, 4
        %v1048 = vshll.u32 %v1009, 16
        %v1050 = vrot.slane %v1048, 5
        %v1051 = vsel %vm1027, %v1046, %v1050
        %v1053 = vshrl.u32 %v975, 16
        %v1055 = vrot.slane %v1053, 4
        %v1056 = vshll.u32 %v975, 16
        %v1058 = vrot.slane %v1056, 5
        %v1059 = vor.u32 %v1055, %v1058
        %v1060 = vrot.slane %v1059, 4
        %v1062 = vshll.u32 %v976, 16
        %v1064 = vrot.slane %v1062, 5
        %v1065 = vsel %vm1027, %v1060, %v1064
        %v1066 = vshrl.u32 %v976, 16
        %v1068 = vrot.slane %v1066, 4
        %v1069 = vor.u32 %v1068, %v1064
        %v1070 = vrot.slane %v1069, 4
        %v1072 = vshll.u32 %v1010, 16
        %v1074 = vrot.slane %v1072, 5
        %v1075 = vsel %vm1027, %v1070, %v1074
        %v1077 = vshrl.u32 %v977, 16
        %v1079 = vrot.slane %v1077, 4
        %v1080 = vshll.u32 %v977, 16
        %v1082 = vrot.slane %v1080, 5
        %v1083 = vor.u32 %v1079, %v1082
        %v1084 = vrot.slane %v1083, 4
        %v1086 = vshll.u32 %v978, 16
        %v1088 = vrot.slane %v1086, 5
        %v1089 = vsel %vm1027, %v1084, %v1088
        %v1090 = vshrl.u32 %v978, 16
        %v1092 = vrot.slane %v1090, 4
        %v1093 = vor.u32 %v1092, %v1088
        %v1094 = vrot.slane %v1093, 4
        %v1096 = vshll.u32 %v1011, 16
        %v1098 = vrot.slane %v1096, 5
        %v1099 = vsel %vm1027, %v1094, %v1098
        %v1101 = vshrl.u32 %v979, 16
        %v1103 = vrot.slane %v1101, 4
        %v1104 = vshll.u32 %v979, 16
        %v1106 = vrot.slane %v1104, 5
        %v1107 = vor.u32 %v1103, %v1106
        %v1108 = vrot.slane %v1107, 4
        %v1110 = vshll.u32 %v980, 16
        %v1112 = vrot.slane %v1110, 5
        %v1113 = vsel %vm1027, %v1108, %v1112
        %v1114 = vshrl.u32 %v980, 16
        %v1116 = vrot.slane %v1114, 4
        %v1117 = vor.u32 %v1116, %v1112
        %v1118 = vrot.slane %v1117, 4
        %v1120 = vshll.u32 %v1012, 16
        %v1122 = vrot.slane %v1120, 5
        %v1123 = vsel %vm1027, %v1118, %v1122
        %v1125 = vshrl.u32 %v981, 16
        %v1127 = vrot.slane %v1125, 4
        %v1128 = vshll.u32 %v981, 16
        %v1130 = vrot.slane %v1128, 5
        %v1131 = vor.u32 %v1127, %v1130
        %v1132 = vrot.slane %v1131, 4
        %v1134 = vshll.u32 %v982, 16
        %v1136 = vrot.slane %v1134, 5
        %v1137 = vsel %vm1027, %v1132, %v1136
        %v1138 = vshrl.u32 %v982, 16
        %v1140 = vrot.slane %v1138, 4
        %v1141 = vor.u32 %v1140, %v1136
        %v1142 = vrot.slane %v1141, 4
        %v1144 = vshll.u32 %v1013, 16
        %v1146 = vrot.slane %v1144, 5
        %v1147 = vsel %vm1027, %v1142, %v1146
        %v1149 = vshrl.u32 %v983, 16
        %v1151 = vrot.slane %v1149, 4
        %v1152 = vshll.u32 %v983, 16
        %v1154 = vrot.slane %v1152, 5
        %v1155 = vor.u32 %v1151, %v1154
        %v1156 = vrot.slane %v1155, 4
        %v1158 = vshll.u32 %v984, 16
        %v1160 = vrot.slane %v1158, 5
        %v1161 = vsel %vm1027, %v1156, %v1160
        %v1162 = vshrl.u32 %v984, 16
        %v1164 = vrot.slane %v1162, 4
        %v1165 = vor.u32 %v1164, %v1160
        %v1166 = vrot.slane %v1165, 4
        %v1168 = vshll.u32 %v1014, 16
        %v1170 = vrot.slane %v1168, 5
        %v1171 = vsel %vm1027, %v1166, %v1170
        %v1173 = vshrl.u32 %v985, 16
        %v1175 = vrot.slane %v1173, 4
        %v1176 = vshll.u32 %v985, 16
        %v1178 = vrot.slane %v1176, 5
        %v1179 = vor.u32 %v1175, %v1178
        %v1180 = vrot.slane %v1179, 4
        %v1182 = vshll.u32 %v986, 16
        %v1184 = vrot.slane %v1182, 5
        %v1185 = vsel %vm1027, %v1180, %v1184
        %v1186 = vshrl.u32 %v986, 16
        %v1188 = vrot.slane %v1186, 4
        %v1189 = vor.u32 %v1188, %v1184
        %v1190 = vrot.slane %v1189, 4
        %v1192 = vshll.u32 %v1015, 16
        %v1194 = vrot.slane %v1192, 5
        %v1195 = vsel %vm1027, %v1190, %v1194
        %v1197 = vshrl.u32 %v987, 16
        %v1199 = vrot.slane %v1197, 4
        %v1200 = vshll.u32 %v987, 16
        %v1202 = vrot.slane %v1200, 5
        %v1203 = vor.u32 %v1199, %v1202
        %v1204 = vrot.slane %v1203, 4
        %v1206 = vshll.u32 %v988, 16
        %v1208 = vrot.slane %v1206, 5
        %v1209 = vsel %vm1027, %v1204, %v1208
        %v1210 = vshrl.u32 %v988, 16
        %v1212 = vrot.slane %v1210, 4
        %v1213 = vor.u32 %v1212, %v1208
        %v1214 = vrot.slane %v1213, 4
        %v1216 = vshll.u32 %v1016, 16
        %v1218 = vrot.slane %v1216, 5
        %v1219 = vsel %vm1027, %v1214, %v1218
        %v1221 = vshrl.u32 %v989, 16
        %v1223 = vrot.slane %v1221, 4
        %v1224 = vshll.u32 %v989, 16
        %v1226 = vrot.slane %v1224, 5
        %v1227 = vor.u32 %v1223, %v1226
        %v1228 = vrot.slane %v1227, 4
        %v1230 = vshll.u32 %v990, 16
        %v1232 = vrot.slane %v1230, 5
        %v1233 = vsel %vm1027, %v1228, %v1232
        %v1234 = vshrl.u32 %v990, 16
        %v1236 = vrot.slane %v1234, 4
        %v1237 = vor.u32 %v1236, %v1232
        %v1238 = vrot.slane %v1237, 4
        %v1240 = vshll.u32 %v1017, 16
        %v1242 = vrot.slane %v1240, 5
        %v1243 = vsel %vm1027, %v1238, %v1242
        %v1245 = vshrl.u32 %v991, 16
        %v1247 = vrot.slane %v1245, 4
        %v1248 = vshll.u32 %v991, 16
        %v1250 = vrot.slane %v1248, 5
        %v1251 = vor.u32 %v1247, %v1250
        %v1252 = vrot.slane %v1251, 4
        %v1254 = vshll.u32 %v992, 16
        %v1256 = vrot.slane %v1254, 5
        %v1257 = vsel %vm1027, %v1252, %v1256
        %v1258 = vshrl.u32 %v992, 16
        %v1260 = vrot.slane %v1258, 4
        %v1261 = vor.u32 %v1260, %v1256
        %v1262 = vrot.slane %v1261, 4
        %v1264 = vshll.u32 %v1018, 16
        %v1266 = vrot.slane %v1264, 5
        %v1267 = vsel %vm1027, %v1262, %v1266
        %v1269 = vshrl.u32 %v993, 16
        %v1271 = vrot.slane %v1269, 4
        %v1272 = vshll.u32 %v993, 16
        %v1274 = vrot.slane %v1272, 5
        %v1275 = vor.u32 %v1271, %v1274
        %v1276 = vrot.slane %v1275, 4
        %v1278 = vshll.u32 %v994, 16
        %v1280 = vrot.slane %v1278, 5
        %v1281 = vsel %vm1027, %v1276, %v1280
        %v1282 = vshrl.u32 %v994, 16
        %v1284 = vrot.slane %v1282, 4
        %v1285 = vor.u32 %v1284, %v1280
        %v1286 = vrot.slane %v1285, 4
        %v1288 = vshll.u32 %v1019, 16
        %v1290 = vrot.slane %v1288, 5
        %v1291 = vsel %vm1027, %v1286, %v1290
        %v1293 = vshrl.u32 %v995, 16
        %v1295 = vrot.slane %v1293, 4
        %v1296 = vshll.u32 %v995, 16
        %v1298 = vrot.slane %v1296, 5
        %v1299 = vor.u32 %v1295, %v1298
        %v1300 = vrot.slane %v1299, 4
        %v1302 = vshll.u32 %v996, 16
        %v1304 = vrot.slane %v1302, 5
        %v1305 = vsel %vm1027, %v1300, %v1304
        %v1306 = vshrl.u32 %v996, 16
        %v1308 = vrot.slane %v1306, 4
        %v1309 = vor.u32 %v1308, %v1304
        %v1310 = vrot.slane %v1309, 4
        %v1312 = vshll.u32 %v1020, 16
        %v1314 = vrot.slane %v1312, 5
        %v1315 = vsel %vm1027, %v1310, %v1314
        %v1317 = vshrl.u32 %v997, 16
        %v1319 = vrot.slane %v1317, 4
        %v1320 = vshll.u32 %v997, 16
        %v1322 = vrot.slane %v1320, 5
        %v1323 = vor.u32 %v1319, %v1322
        %v1324 = vrot.slane %v1323, 4
        %v1326 = vshll.u32 %v998, 16
        %v1328 = vrot.slane %v1326, 5
        %v1329 = vsel %vm1027, %v1324, %v1328
        %v1330 = vshrl.u32 %v998, 16
        %v1332 = vrot.slane %v1330, 4
        %v1333 = vor.u32 %v1332, %v1328
        %v1334 = vrot.slane %v1333, 4
        %v1336 = vshll.u32 %v1021, 16
        %v1338 = vrot.slane %v1336, 5
        %v1339 = vsel %vm1027, %v1334, %v1338
        %v1341 = vshrl.u32 %v999, 16
        %v1343 = vrot.slane %v1341, 4
        %v1344 = vshll.u32 %v999, 16
        %v1346 = vrot.slane %v1344, 5
        %v1347 = vor.u32 %v1343, %v1346
        %v1348 = vrot.slane %v1347, 4
        %v1350 = vshll.u32 %v1000, 16
        %v1352 = vrot.slane %v1350, 5
        %v1353 = vsel %vm1027, %v1348, %v1352
        %v1354 = vshrl.u32 %v1000, 16
        %v1356 = vrot.slane %v1354, 4
        %v1357 = vor.u32 %v1356, %v1352
        %v1358 = vrot.slane %v1357, 4
        %v1360 = vshll.u32 %v1022, 16
        %v1362 = vrot.slane %v1360, 5
        %v1363 = vsel %vm1027, %v1358, %v1362
        %v1365 = vshrl.u32 %v1001, 16
        %v1367 = vrot.slane %v1365, 4
        %v1368 = vshll.u32 %v1001, 16
        %v1370 = vrot.slane %v1368, 5
        %v1371 = vor.u32 %v1367, %v1370
        %v1372 = vrot.slane %v1371, 4
        %v1374 = vshll.u32 %v1002, 16
        %v1376 = vrot.slane %v1374, 5
        %v1377 = vsel %vm1027, %v1372, %v1376
        %v1378 = vshrl.u32 %v1002, 16
        %v1380 = vrot.slane %v1378, 4
        %v1381 = vor.u32 %v1380, %v1376
        %v1382 = vrot.slane %v1381, 4
        %v1384 = vshll.u32 %v1023, 16
        %v1386 = vrot.slane %v1384, 5
        %v1387 = vsel %vm1027, %v1382, %v1386
        %v1389 = vshrl.u32 %v1003, 16
        %v1391 = vrot.slane %v1389, 4
        %v1392 = vshll.u32 %v1003, 16
        %v1394 = vrot.slane %v1392, 5
        %v1395 = vor.u32 %v1391, %v1394
        %v1396 = vrot.slane %v1395, 4
        %v1398 = vshll.u32 %v1004, 16
        %v1400 = vrot.slane %v1398, 5
        %v1401 = vsel %vm1027, %v1396, %v1400
        %v1402 = vshrl.u32 %v1004, 16
        %v1404 = vrot.slane %v1402, 4
        %v1405 = vor.u32 %v1404, %v1400
        %v1406 = vrot.slane %v1405, 4
        %v1408 = vshll.u32 %v1024, 16
        %v1410 = vrot.slane %v1408, 5
        %v1411 = vsel %vm1027, %v1406, %v1410
        %v1412 = vld [vmem:[%s1 + $0x10] sm:$0xf]
        %v1413 = vld [vmem:[%s1 + $0x14] sm:$0xf]
        %v1414 = vld [vmem:[%s1 + $0x18] sm:$0xf]
        %v1415 = vld [vmem:[%s1 + $0x1c] sm:$0xf]
        %v1416 = vunpack.c.l.b16 %v1041
        %v1417 = vunpack.c.l.b16 %v1051
        %v1418 = vunpack.c.l.b16 %v1065
        %v1419 = vunpack.c.l.b16 %v1075
        %v1420 = vunpack.c.l.b16 %v1089
        %v1421 = vunpack.c.l.b16 %v1099
        %v1422 = vunpack.c.l.b16 %v1113
        %v1423 = vunpack.c.l.b16 %v1123
        %v1424 = vunpack.c.l.b16 %v1137
        %v1425 = vunpack.c.l.b16 %v1147
        %v1426 = vunpack.c.l.b16 %v1161
        %v1427 = vunpack.c.l.b16 %v1171
        %v1428 = vunpack.c.l.b16 %v1185
        %v1429 = vunpack.c.l.b16 %v1195
        %v1430 = vunpack.c.l.b16 %v1209
        %v1431 = vunpack.c.l.b16 %v1219
        %v1432 = vunpack.c.l.b16 %v1233
        %v1433 = vunpack.c.l.b16 %v1243
        %v1434 = vunpack.c.l.b16 %v1257
        %v1435 = vunpack.c.l.b16 %v1267
        %v1436 = vunpack.c.l.b16 %v1281
        %v1437 = vunpack.c.l.b16 %v1291
        %v1438 = vunpack.c.l.b16 %v1305
        %v1439 = vunpack.c.l.b16 %v1315
        %v1440 = vunpack.c.l.b16 %v1329
        %v1441 = vunpack.c.l.b16 %v1339
        %v1442 = vunpack.c.l.b16 %v1353
        %v1443 = vunpack.c.l.b16 %v1363
        %v1444 = vunpack.c.l.b16 %v1377
        %v1445 = vunpack.c.l.b16 %v1387
        %v1446 = vunpack.c.l.b16 %v1401
        %v1447 = vunpack.c.l.b16 %v1411
        %v1448 = vpack.c.b16 %v1417, %v1416
        %v1449 = vpack.c.b16 %v1419, %v1418
        %v1450 = vpack.c.b16 %v1421, %v1420
        %v1451 = vpack.c.b16 %v1423, %v1422
        %v1452 = vpack.c.b16 %v1425, %v1424
        %v1453 = vpack.c.b16 %v1427, %v1426
        %v1454 = vpack.c.b16 %v1429, %v1428
        %v1455 = vpack.c.b16 %v1431, %v1430
        %v1456 = vpack.c.b16 %v1433, %v1432
        %v1457 = vpack.c.b16 %v1435, %v1434
        %v1458 = vpack.c.b16 %v1437, %v1436
        %v1459 = vpack.c.b16 %v1439, %v1438
        %v1460 = vpack.c.b16 %v1441, %v1440
        %v1461 = vpack.c.b16 %v1443, %v1442
        %v1462 = vpack.c.b16 %v1445, %v1444
        %v1463 = vpack.c.b16 %v1447, %v1446
        %v1468 = vunpack.c.l.b16 %v1412
        %v1469 = vunpack.c.l.b16 %v1413
        %v1470 = vunpack.c.l.b16 %v1414
        %v1471 = vunpack.c.l.b16 %v1415
        %v1472 = vpack.c.b16 %v1469, %v1468
        %v1473 = vpack.c.b16 %v1471, %v1470
        %vm1476 = vcmask 261120
        %v1478 = vsel %vm1476, %v1448, 0
        %v1481 = vsel %vm1476, %v1449, 0
        %v1484 = vsel %vm1476, %v1450, 0
        %v1487 = vsel %vm1476, %v1451, 0
        %v1490 = vsel %vm1476, %v1452, 0
        %v1493 = vsel %vm1476, %v1453, 0
        %v1496 = vsel %vm1476, %v1454, 0
        %v1499 = vsel %vm1476, %v1455, 0
        %v1502 = vsel %vm1476, %v1456, 0
        %v1505 = vsel %vm1476, %v1457, 0
        %v1508 = vsel %vm1476, %v1458, 0
        %v1511 = vsel %vm1476, %v1459, 0
        %v1514 = vsel %vm1476, %v1460, 0
        %v1517 = vsel %vm1476, %v1461, 0
        %v1520 = vsel %vm1476, %v1462, 0
        %v1523 = vsel %vm1476, %v1463, 0
        %1525 = vmatprep.subr.bf16.mxu0 0
        %1526 = vmatpush1.bf16.msra.mxu0 0
        %1527 = vmatprep.subr.bf16.mxu0 0
        %1528 = vmatpush1.bf16.msra.mxu0 0
        %1529 = vmatprep.subr.bf16.mxu0 0
        %1530 = vmatpush1.bf16.msra.mxu0 0
        %1531 = vmatprep.subr.bf16.mxu0 0
        %1532 = vmatpush1.bf16.msra.mxu0 0
        %1533 = vmatprep.subr.bf16.mxu0 0
        %1534 = vmatpush1.bf16.msra.mxu0 0
        %1535 = vmatprep.subr.bf16.mxu0 0
        %1536 = vmatpush1.bf16.msra.mxu0 0
        %1537 = vmatprep.subr.bf16.mxu0 0
        %1538 = vmatpush1.bf16.msra.mxu0 %v1473
        %1539 = vmatprep.subr.bf16.mxu0 0
        %1540 = vmatpush1.bf16.msra.mxu0 %v1472
        %1541 = vmatprep.subr.bf16.mxu0 0
        %1542 = vmatpush2.bf16.msra.mxu0 0
        %1543 = vmatprep.subr.bf16.mxu0 0
        %1544 = vmatpush2.bf16.msra.mxu0 0
        %1545 = vmatprep.subr.bf16.mxu0 0
        %1546 = vmatpush2.bf16.msra.mxu0 0
        %1547 = vmatprep.subr.bf16.mxu0 0
        %1548 = vmatpush2.bf16.msra.mxu0 0
        %1549 = vmatprep.subr.bf16.mxu0 0
        %1550 = vmatpush2.bf16.msra.mxu0 0
        %1551 = vmatprep.subr.bf16.mxu0 0
        %1552 = vmatpush2.bf16.msra.mxu0 0
        %1553 = vmatprep.subr.bf16.mxu0 0
        %1554 = vmatpush2.bf16.msra.mxu0 0
        %1555 = vmatprep.subr.bf16.mxu0 0
        %1556 = vmatpush2.bf16.msra.mxu0 0
        %1557 = vmatprep.mubr.bf16.mxu0 0
        %1558 = vmatmul.mubr.bf16.gmra.mxu0 %v1478
        %v1559 = vpop.f32.mrf.mxu0
        %v1560 = vadd.f32 0.0, %v1559
        %v1561 = vpop.f32.mrf.mxu0
        %v1562 = vpop.f32.mrf.mxu0
        %v1563 = vadd.f32 0.0, %v1562
        %v1564 = vpop.f32.mrf.mxu0
        %1565 = vmatprep.mubr.bf16.mxu0 0
        %1566 = vmatmul.mubr.bf16.gmra.mxu0 %v1481
        %v1567 = vpop.f32.mrf.mxu0
        %v1568 = vadd.f32 0.0, %v1567
        %v1569 = vpop.f32.mrf.mxu0
        %v1570 = vpop.f32.mrf.mxu0
        %v1571 = vadd.f32 0.0, %v1570
        %v1572 = vpop.f32.mrf.mxu0
        %1573 = vmatprep.mubr.bf16.mxu0 0
        %1574 = vmatmul.mubr.bf16.gmra.mxu0 %v1484
        %v1575 = vpop.f32.mrf.mxu0
        %v1576 = vadd.f32 0.0, %v1575
        %v1577 = vpop.f32.mrf.mxu0
        %v1578 = vpop.f32.mrf.mxu0
        %v1579 = vadd.f32 0.0, %v1578
        %v1580 = vpop.f32.mrf.mxu0
        %1581 = vmatprep.mubr.bf16.mxu0 0
        %1582 = vmatmul.mubr.bf16.gmra.mxu0 %v1487
        %v1583 = vpop.f32.mrf.mxu0
        %v1584 = vadd.f32 0.0, %v1583
        %v1585 = vpop.f32.mrf.mxu0
        %v1586 = vpop.f32.mrf.mxu0
        %v1587 = vadd.f32 0.0, %v1586
        %v1588 = vpop.f32.mrf.mxu0
        %1589 = vmatprep.mubr.bf16.mxu0 0
        %1590 = vmatmul.mubr.bf16.gmra.mxu0 %v1490
        %v1591 = vpop.f32.mrf.mxu0
        %v1592 = vadd.f32 0.0, %v1591
        %v1593 = vpop.f32.mrf.mxu0
        %v1594 = vpop.f32.mrf.mxu0
        %v1595 = vadd.f32 0.0, %v1594
        %v1596 = vpop.f32.mrf.mxu0
        %1597 = vmatprep.mubr.bf16.mxu0 0
        %1598 = vmatmul.mubr.bf16.gmra.mxu0 %v1493
        %v1599 = vpop.f32.mrf.mxu0
        %v1600 = vadd.f32 0.0, %v1599
        %v1601 = vpop.f32.mrf.mxu0
        %v1602 = vpop.f32.mrf.mxu0
        %v1603 = vadd.f32 0.0, %v1602
        %v1604 = vpop.f32.mrf.mxu0
        %1605 = vmatprep.mubr.bf16.mxu0 0
        %1606 = vmatmul.mubr.bf16.gmra.mxu0 %v1496
        %v1607 = vpop.f32.mrf.mxu0
        %v1608 = vadd.f32 0.0, %v1607
        %v1609 = vpop.f32.mrf.mxu0
        %v1610 = vpop.f32.mrf.mxu0
        %v1611 = vadd.f32 0.0, %v1610
        %v1612 = vpop.f32.mrf.mxu0
        %1613 = vmatprep.mubr.bf16.mxu0 0
        %1614 = vmatmul.mubr.bf16.gmra.mxu0 %v1499
        %v1615 = vpop.f32.mrf.mxu0
        %v1616 = vadd.f32 0.0, %v1615
        %v1617 = vpop.f32.mrf.mxu0
        %v1618 = vpop.f32.mrf.mxu0
        %v1619 = vadd.f32 0.0, %v1618
        %v1620 = vpop.f32.mrf.mxu0
        %1621 = vmatprep.mubr.bf16.mxu0 0
        %1622 = vmatmul.mubr.bf16.gmra.mxu0 %v1502
        %v1623 = vpop.f32.mrf.mxu0
        %v1624 = vadd.f32 0.0, %v1623
        %v1625 = vpop.f32.mrf.mxu0
        %v1626 = vpop.f32.mrf.mxu0
        %v1627 = vadd.f32 0.0, %v1626
        %v1628 = vpop.f32.mrf.mxu0
        %1629 = vmatprep.mubr.bf16.mxu0 0
        %1630 = vmatmul.mubr.bf16.gmra.mxu0 %v1505
        %v1631 = vpop.f32.mrf.mxu0
        %v1632 = vadd.f32 0.0, %v1631
        %v1633 = vpop.f32.mrf.mxu0
        %v1634 = vpop.f32.mrf.mxu0
        %v1635 = vadd.f32 0.0, %v1634
        %v1636 = vpop.f32.mrf.mxu0
        %1637 = vmatprep.mubr.bf16.mxu0 0
        %1638 = vmatmul.mubr.bf16.gmra.mxu0 %v1508
        %v1639 = vpop.f32.mrf.mxu0
        %v1640 = vadd.f32 0.0, %v1639
        %v1641 = vpop.f32.mrf.mxu0
        %v1642 = vpop.f32.mrf.mxu0
        %v1643 = vadd.f32 0.0, %v1642
        %v1644 = vpop.f32.mrf.mxu0
        %1645 = vmatprep.mubr.bf16.mxu0 0
        %1646 = vmatmul.mubr.bf16.gmra.mxu0 %v1511
        %v1647 = vpop.f32.mrf.mxu0
        %v1648 = vadd.f32 0.0, %v1647
        %v1649 = vpop.f32.mrf.mxu0
        %v1650 = vpop.f32.mrf.mxu0
        %v1651 = vadd.f32 0.0, %v1650
        %v1652 = vpop.f32.mrf.mxu0
        %1653 = vmatprep.mubr.bf16.mxu0 0
        %1654 = vmatmul.mubr.bf16.gmra.mxu0 %v1514
        %v1655 = vpop.f32.mrf.mxu0
        %v1656 = vadd.f32 0.0, %v1655
        %v1657 = vpop.f32.mrf.mxu0
        %v1658 = vpop.f32.mrf.mxu0
        %v1659 = vadd.f32 0.0, %v1658
        %v1660 = vpop.f32.mrf.mxu0
        %1661 = vmatprep.mubr.bf16.mxu0 0
        %1662 = vmatmul.mubr.bf16.gmra.mxu0 %v1517
        %v1663 = vpop.f32.mrf.mxu0
        %v1664 = vadd.f32 0.0, %v1663
        %v1665 = vpop.f32.mrf.mxu0
        %v1666 = vpop.f32.mrf.mxu0
        %v1667 = vadd.f32 0.0, %v1666
        %v1668 = vpop.f32.mrf.mxu0
        %1669 = vmatprep.mubr.bf16.mxu0 0
        %1670 = vmatmul.mubr.bf16.gmra.mxu0 %v1520
        %v1671 = vpop.f32.mrf.mxu0
        %v1672 = vadd.f32 0.0, %v1671
        %v1673 = vpop.f32.mrf.mxu0
        %v1674 = vpop.f32.mrf.mxu0
        %v1675 = vadd.f32 0.0, %v1674
        %v1676 = vpop.f32.mrf.mxu0
        %1677 = vmatprep.mubr.bf16.mxu0 0
        %1678 = vmatmul.mubr.bf16.gmra.mxu0 %v1523
        %v1679 = vpop.f32.mrf.mxu0
        %v1680 = vadd.f32 0.0, %v1679
        %v1681 = vpop.f32.mrf.mxu0
        %v1682 = vpop.f32.mrf.mxu0
        %v1683 = vadd.f32 0.0, %v1682
        %v1684 = vpop.f32.mrf.mxu0
        %1685 = vdwg.mxu0
        %v1718 = vunpack.c.l.b16 %v973
        %v1719 = vunpack.c.l.b16 %v974
        %v1720 = vunpack.c.l.b16 %v975
        %v1721 = vunpack.c.l.b16 %v976
        %v1722 = vunpack.c.l.b16 %v977
        %v1723 = vunpack.c.l.b16 %v978
        %v1724 = vunpack.c.l.b16 %v979
        %v1725 = vunpack.c.l.b16 %v980
        %v1726 = vunpack.c.l.b16 %v981
        %v1727 = vunpack.c.l.b16 %v982
        %v1728 = vunpack.c.l.b16 %v983
        %v1729 = vunpack.c.l.b16 %v984
        %v1730 = vunpack.c.l.b16 %v985
        %v1731 = vunpack.c.l.b16 %v986
        %v1732 = vunpack.c.l.b16 %v987
        %v1733 = vunpack.c.l.b16 %v988
        %v1734 = vunpack.c.l.b16 %v989
        %v1735 = vunpack.c.l.b16 %v990
        %v1736 = vunpack.c.l.b16 %v991
        %v1737 = vunpack.c.l.b16 %v992
        %v1738 = vunpack.c.l.b16 %v993
        %v1739 = vunpack.c.l.b16 %v994
        %v1740 = vunpack.c.l.b16 %v995
        %v1741 = vunpack.c.l.b16 %v996
        %v1742 = vunpack.c.l.b16 %v997
        %v1743 = vunpack.c.l.b16 %v998
        %v1744 = vunpack.c.l.b16 %v999
        %v1745 = vunpack.c.l.b16 %v1000
        %v1746 = vunpack.c.l.b16 %v1001
        %v1747 = vunpack.c.l.b16 %v1002
        %v1748 = vunpack.c.l.b16 %v1003
        %v1749 = vunpack.c.l.b16 %v1004
        %v1750 = vpack.c.b16 %v1719, %v1718
        %v1751 = vpack.c.b16 %v1721, %v1720
        %v1752 = vpack.c.b16 %v1723, %v1722
        %v1753 = vpack.c.b16 %v1725, %v1724
        %v1754 = vpack.c.b16 %v1727, %v1726
        %v1755 = vpack.c.b16 %v1729, %v1728
        %v1756 = vpack.c.b16 %v1731, %v1730
        %v1757 = vpack.c.b16 %v1733, %v1732
        %v1758 = vpack.c.b16 %v1735, %v1734
        %v1759 = vpack.c.b16 %v1737, %v1736
        %v1760 = vpack.c.b16 %v1739, %v1738
        %v1761 = vpack.c.b16 %v1741, %v1740
        %v1762 = vpack.c.b16 %v1743, %v1742
        %v1763 = vpack.c.b16 %v1745, %v1744
        %v1764 = vpack.c.b16 %v1747, %v1746
        %v1765 = vpack.c.b16 %v1749, %v1748
        %v1770 = vunpack.c.l.b16 %v1005
        %v1771 = vunpack.c.l.b16 %v1006
        %v1772 = vunpack.c.l.b16 %v1007
        %v1773 = vunpack.c.l.b16 %v1008
        %v1774 = vpack.c.b16 %v1771, %v1770
        %v1775 = vpack.c.b16 %v1773, %v1772
        %v1779 = vsel %vm1476, %v1750, 0
        %v1782 = vsel %vm1476, %v1751, 0
        %v1785 = vsel %vm1476, %v1752, 0
        %v1788 = vsel %vm1476, %v1753, 0
        %v1791 = vsel %vm1476, %v1754, 0
        %v1794 = vsel %vm1476, %v1755, 0
        %v1797 = vsel %vm1476, %v1756, 0
        %v1800 = vsel %vm1476, %v1757, 0
        %v1803 = vsel %vm1476, %v1758, 0
        %v1806 = vsel %vm1476, %v1759, 0
        %v1809 = vsel %vm1476, %v1760, 0
        %v1812 = vsel %vm1476, %v1761, 0
        %v1815 = vsel %vm1476, %v1762, 0
        %v1818 = vsel %vm1476, %v1763, 0
        %v1821 = vsel %vm1476, %v1764, 0
        %v1824 = vsel %vm1476, %v1765, 0
        %1826 = vmatprep.subr.bf16.mxu0 0
        %1827 = vmatpush1.bf16.msra.mxu0 0
        %1828 = vmatprep.subr.bf16.mxu0 0
        %1829 = vmatpush1.bf16.msra.mxu0 0
        %1830 = vmatprep.subr.bf16.mxu0 0
        %1831 = vmatpush1.bf16.msra.mxu0 0
        %1832 = vmatprep.subr.bf16.mxu0 0
        %1833 = vmatpush1.bf16.msra.mxu0 0
        %1834 = vmatprep.subr.bf16.mxu0 0
        %1835 = vmatpush1.bf16.msra.mxu0 0
        %1836 = vmatprep.subr.bf16.mxu0 0
        %1837 = vmatpush1.bf16.msra.mxu0 0
        %1838 = vmatprep.subr.bf16.mxu0 0
        %1839 = vmatpush1.bf16.msra.mxu0 %v1775
        %1840 = vmatprep.subr.bf16.mxu0 0
        %1841 = vmatpush1.bf16.msra.mxu0 %v1774
        %1842 = vmatprep.subr.bf16.mxu0 0
        %1843 = vmatpush2.bf16.msra.mxu0 0
        %1844 = vmatprep.subr.bf16.mxu0 0
        %1845 = vmatpush2.bf16.msra.mxu0 0
        %1846 = vmatprep.subr.bf16.mxu0 0
        %1847 = vmatpush2.bf16.msra.mxu0 0
        %1848 = vmatprep.subr.bf16.mxu0 0
        %1849 = vmatpush2.bf16.msra.mxu0 0
        %1850 = vmatprep.subr.bf16.mxu0 0
        %1851 = vmatpush2.bf16.msra.mxu0 0
        %1852 = vmatprep.subr.bf16.mxu0 0
        %1853 = vmatpush2.bf16.msra.mxu0 0
        %1854 = vmatprep.subr.bf16.mxu0 0
        %1855 = vmatpush2.bf16.msra.mxu0 0
        %1856 = vmatprep.subr.bf16.mxu0 0
        %1857 = vmatpush2.bf16.msra.mxu0 0
        %1858 = vmatprep.mubr.bf16.mxu0 0
        %1859 = vmatmul.mubr.bf16.gmra.mxu0 %v1779
        %v1860 = vpop.f32.mrf.mxu0
        %v1861 = vadd.f32 %v1560, %v1860
        %v1862 = vpop.f32.mrf.mxu0
        %v1863 = vpop.f32.mrf.mxu0
        %v1864 = vadd.f32 %v1563, %v1863
        %v1865 = vpop.f32.mrf.mxu0
        %1866 = vmatprep.mubr.bf16.mxu0 0
        %1867 = vmatmul.mubr.bf16.gmra.mxu0 %v1782
        %v1868 = vpop.f32.mrf.mxu0
        %v1869 = vadd.f32 %v1568, %v1868
        %v1870 = vpop.f32.mrf.mxu0
        %v1871 = vpop.f32.mrf.mxu0
        %v1872 = vadd.f32 %v1571, %v1871
        %v1873 = vpop.f32.mrf.mxu0
        %1874 = vmatprep.mubr.bf16.mxu0 0
        %1875 = vmatmul.mubr.bf16.gmra.mxu0 %v1785
        %v1876 = vpop.f32.mrf.mxu0
        %v1877 = vadd.f32 %v1576, %v1876
        %v1878 = vpop.f32.mrf.mxu0
        %v1879 = vpop.f32.mrf.mxu0
        %v1880 = vadd.f32 %v1579, %v1879
        %v1881 = vpop.f32.mrf.mxu0
        %1882 = vmatprep.mubr.bf16.mxu0 0
        %1883 = vmatmul.mubr.bf16.gmra.mxu0 %v1788
        %v1884 = vpop.f32.mrf.mxu0
        %v1885 = vadd.f32 %v1584, %v1884
        %v1886 = vpop.f32.mrf.mxu0
        %v1887 = vpop.f32.mrf.mxu0
        %v1888 = vadd.f32 %v1587, %v1887
        %v1889 = vpop.f32.mrf.mxu0
        %1890 = vmatprep.mubr.bf16.mxu0 0
        %1891 = vmatmul.mubr.bf16.gmra.mxu0 %v1791
        %v1892 = vpop.f32.mrf.mxu0
        %v1893 = vadd.f32 %v1592, %v1892
        %v1894 = vpop.f32.mrf.mxu0
        %v1895 = vpop.f32.mrf.mxu0
        %v1896 = vadd.f32 %v1595, %v1895
        %v1897 = vpop.f32.mrf.mxu0
        %1898 = vmatprep.mubr.bf16.mxu0 0
        %1899 = vmatmul.mubr.bf16.gmra.mxu0 %v1794
        %v1900 = vpop.f32.mrf.mxu0
        %v1901 = vadd.f32 %v1600, %v1900
        %v1902 = vpop.f32.mrf.mxu0
        %v1903 = vpop.f32.mrf.mxu0
        %v1904 = vadd.f32 %v1603, %v1903
        %v1905 = vpop.f32.mrf.mxu0
        %1906 = vmatprep.mubr.bf16.mxu0 0
        %1907 = vmatmul.mubr.bf16.gmra.mxu0 %v1797
        %v1908 = vpop.f32.mrf.mxu0
        %v1909 = vadd.f32 %v1608, %v1908
        %v1910 = vpop.f32.mrf.mxu0
        %v1911 = vpop.f32.mrf.mxu0
        %v1912 = vadd.f32 %v1611, %v1911
        %v1913 = vpop.f32.mrf.mxu0
        %1914 = vmatprep.mubr.bf16.mxu0 0
        %1915 = vmatmul.mubr.bf16.gmra.mxu0 %v1800
        %v1916 = vpop.f32.mrf.mxu0
        %v1917 = vadd.f32 %v1616, %v1916
        %v1918 = vpop.f32.mrf.mxu0
        %v1919 = vpop.f32.mrf.mxu0
        %v1920 = vadd.f32 %v1619, %v1919
        %v1921 = vpop.f32.mrf.mxu0
        %1922 = vmatprep.mubr.bf16.mxu0 0
        %1923 = vmatmul.mubr.bf16.gmra.mxu0 %v1803
        %v1924 = vpop.f32.mrf.mxu0
        %v1925 = vadd.f32 %v1624, %v1924
        %v1926 = vpop.f32.mrf.mxu0
        %v1927 = vpop.f32.mrf.mxu0
        %v1928 = vadd.f32 %v1627, %v1927
        %v1929 = vpop.f32.mrf.mxu0
        %1930 = vmatprep.mubr.bf16.mxu0 0
        %1931 = vmatmul.mubr.bf16.gmra.mxu0 %v1806
        %v1932 = vpop.f32.mrf.mxu0
        %v1933 = vadd.f32 %v1632, %v1932
        %v1934 = vpop.f32.mrf.mxu0
        %v1935 = vpop.f32.mrf.mxu0
        %v1936 = vadd.f32 %v1635, %v1935
        %v1937 = vpop.f32.mrf.mxu0
        %1938 = vmatprep.mubr.bf16.mxu0 0
        %1939 = vmatmul.mubr.bf16.gmra.mxu0 %v1809
        %v1940 = vpop.f32.mrf.mxu0
        %v1941 = vadd.f32 %v1640, %v1940
        %v1942 = vpop.f32.mrf.mxu0
        %v1943 = vpop.f32.mrf.mxu0
        %v1944 = vadd.f32 %v1643, %v1943
        %v1945 = vpop.f32.mrf.mxu0
        %1946 = vmatprep.mubr.bf16.mxu0 0
        %1947 = vmatmul.mubr.bf16.gmra.mxu0 %v1812
        %v1948 = vpop.f32.mrf.mxu0
        %v1949 = vadd.f32 %v1648, %v1948
        %v1950 = vpop.f32.mrf.mxu0
        %v1951 = vpop.f32.mrf.mxu0
        %v1952 = vadd.f32 %v1651, %v1951
        %v1953 = vpop.f32.mrf.mxu0
        %1954 = vmatprep.mubr.bf16.mxu0 0
        %1955 = vmatmul.mubr.bf16.gmra.mxu0 %v1815
        %v1956 = vpop.f32.mrf.mxu0
        %v1957 = vadd.f32 %v1656, %v1956
        %v1958 = vpop.f32.mrf.mxu0
        %v1959 = vpop.f32.mrf.mxu0
        %v1960 = vadd.f32 %v1659, %v1959
        %v1961 = vpop.f32.mrf.mxu0
        %1962 = vmatprep.mubr.bf16.mxu0 0
        %1963 = vmatmul.mubr.bf16.gmra.mxu0 %v1818
        %v1964 = vpop.f32.mrf.mxu0
        %v1965 = vadd.f32 %v1664, %v1964
        %v1966 = vpop.f32.mrf.mxu0
        %v1967 = vpop.f32.mrf.mxu0
        %v1968 = vadd.f32 %v1667, %v1967
        %v1969 = vpop.f32.mrf.mxu0
        %1970 = vmatprep.mubr.bf16.mxu0 0
        %1971 = vmatmul.mubr.bf16.gmra.mxu0 %v1821
        %v1972 = vpop.f32.mrf.mxu0
        %v1973 = vadd.f32 %v1672, %v1972
        %v1974 = vpop.f32.mrf.mxu0
        %v1975 = vpop.f32.mrf.mxu0
        %v1976 = vadd.f32 %v1675, %v1975
        %v1977 = vpop.f32.mrf.mxu0
        %1978 = vmatprep.mubr.bf16.mxu0 0
        %1979 = vmatmul.mubr.bf16.gmra.mxu0 %v1824
        %v1980 = vpop.f32.mrf.mxu0
        %v1981 = vadd.f32 %v1680, %v1980
        %v1982 = vpop.f32.mrf.mxu0
        %v1983 = vpop.f32.mrf.mxu0
        %v1984 = vadd.f32 %v1683, %v1983
        %v1985 = vpop.f32.mrf.mxu0
        %1986 = vdwg.mxu0
        %v1987 = vld [vmem:[#allocation2] sm:$0xe]
        %v1988 = vld [vmem:[#allocation2 + $0xc] sm:$0xe]
        %v1989 = vld [vmem:[#allocation2 + $0x18] sm:$0xe]
        %v1990 = vld [vmem:[#allocation2 + $0x24] sm:$0xe]
        %v1991 = vld [vmem:[#allocation2 + $0x30] sm:$0xe]
        %v1992 = vld [vmem:[#allocation2 + $0x3c] sm:$0xe]
        %v1993 = vld [vmem:[#allocation2 + $0x48] sm:$0xe]
        %v1994 = vld [vmem:[#allocation2 + $0x54] sm:$0xe]
        %v1995 = vld [vmem:[#allocation2 + $0x60] sm:$0xe]
        %v1996 = vld [vmem:[#allocation2 + $0x6c] sm:$0xe]
        %v1997 = vld [vmem:[#allocation2 + $0x78] sm:$0xe]
        %v1998 = vld [vmem:[#allocation2 + $0x84] sm:$0xe]
        %v1999 = vld [vmem:[#allocation2 + $0x90] sm:$0xe]
        %v2000 = vld [vmem:[#allocation2 + $0x9c] sm:$0xe]
        %v2001 = vld [vmem:[#allocation2 + $0xa8] sm:$0xe]
        %v2002 = vld [vmem:[#allocation2 + $0xb4] sm:$0xe]
        %vm2035 = vcmask 1042432
        %vm2036 = vcmask 1046532
        %vm2037 = vmor %vm2035, %vm2036
        %v2038 = vrot.slane %v1987, 5
        %v2039 = vrot.slane %v2038, 4
        %v2040 = vrot.slane %v974, 5
        %v2041 = vsel %vm2037, %v2039, %v2040
        %v2042 = vrot.slane %v2040, 4
        %v2043 = vrot.slane %v1009, 5
        %v2044 = vsel %vm2037, %v2042, %v2043
        %v2045 = vrot.slane %v1988, 5
        %v2046 = vrot.slane %v2045, 4
        %v2047 = vrot.slane %v976, 5
        %v2048 = vsel %vm2037, %v2046, %v2047
        %v2049 = vrot.slane %v2047, 4
        %v2050 = vrot.slane %v1010, 5
        %v2051 = vsel %vm2037, %v2049, %v2050
        %v2052 = vrot.slane %v1989, 5
        %v2053 = vrot.slane %v2052, 4
        %v2054 = vrot.slane %v978, 5
        %v2055 = vsel %vm2037, %v2053, %v2054
        %v2056 = vrot.slane %v2054, 4
        %v2057 = vrot.slane %v1011, 5
        %v2058 = vsel %vm2037, %v2056, %v2057
        %v2059 = vrot.slane %v1990, 5
        %v2060 = vrot.slane %v2059, 4
        %v2061 = vrot.slane %v980, 5
        %v2062 = vsel %vm2037, %v2060, %v2061
        %v2063 = vrot.slane %v2061, 4
        %v2064 = vrot.slane %v1012, 5
        %v2065 = vsel %vm2037, %v2063, %v2064
        %v2066 = vrot.slane %v1991, 5
        %v2067 = vrot.slane %v2066, 4
        %v2068 = vrot.slane %v982, 5
        %v2069 = vsel %vm2037, %v2067, %v2068
        %v2070 = vrot.slane %v2068, 4
        %v2071 = vrot.slane %v1013, 5
        %v2072 = vsel %vm2037, %v2070, %v2071
        %v2073 = vrot.slane %v1992, 5
        %v2074 = vrot.slane %v2073, 4
        %v2075 = vrot.slane %v984, 5
        %v2076 = vsel %vm2037, %v2074, %v2075
        %v2077 = vrot.slane %v2075, 4
        %v2078 = vrot.slane %v1014, 5
        %v2079 = vsel %vm2037, %v2077, %v2078
        %v2080 = vrot.slane %v1993, 5
        %v2081 = vrot.slane %v2080, 4
        %v2082 = vrot.slane %v986, 5
        %v2083 = vsel %vm2037, %v2081, %v2082
        %v2084 = vrot.slane %v2082, 4
        %v2085 = vrot.slane %v1015, 5
        %v2086 = vsel %vm2037, %v2084, %v2085
        %v2087 = vrot.slane %v1994, 5
        %v2088 = vrot.slane %v2087, 4
        %v2089 = vrot.slane %v988, 5
        %v2090 = vsel %vm2037, %v2088, %v2089
        %v2091 = vrot.slane %v2089, 4
        %v2092 = vrot.slane %v1016, 5
        %v2093 = vsel %vm2037, %v2091, %v2092
        %v2094 = vrot.slane %v1995, 5
        %v2095 = vrot.slane %v2094, 4
        %v2096 = vrot.slane %v990, 5
        %v2097 = vsel %vm2037, %v2095, %v2096
        %v2098 = vrot.slane %v2096, 4
        %v2099 = vrot.slane %v1017, 5
        %v2100 = vsel %vm2037, %v2098, %v2099
        %v2101 = vrot.slane %v1996, 5
        %v2102 = vrot.slane %v2101, 4
        %v2103 = vrot.slane %v992, 5
        %v2104 = vsel %vm2037, %v2102, %v2103
        %v2105 = vrot.slane %v2103, 4
        %v2106 = vrot.slane %v1018, 5
        %v2107 = vsel %vm2037, %v2105, %v2106
        %v2108 = vrot.slane %v1997, 5
        %v2109 = vrot.slane %v2108, 4
        %v2110 = vrot.slane %v994, 5
        %v2111 = vsel %vm2037, %v2109, %v2110
        %v2112 = vrot.slane %v2110, 4
        %v2113 = vrot.slane %v1019, 5
        %v2114 = vsel %vm2037, %v2112, %v2113
        %v2115 = vrot.slane %v1998, 5
        %v2116 = vrot.slane %v2115, 4
        %v2117 = vrot.slane %v996, 5
        %v2118 = vsel %vm2037, %v2116, %v2117
        %v2119 = vrot.slane %v2117, 4
        %v2120 = vrot.slane %v1020, 5
        %v2121 = vsel %vm2037, %v2119, %v2120
        %v2122 = vrot.slane %v1999, 5
        %v2123 = vrot.slane %v2122, 4
        %v2124 = vrot.slane %v998, 5
        %v2125 = vsel %vm2037, %v2123, %v2124
        %v2126 = vrot.slane %v2124, 4
        %v2127 = vrot.slane %v1021, 5
        %v2128 = vsel %vm2037, %v2126, %v2127
        %v2129 = vrot.slane %v2000, 5
        %v2130 = vrot.slane %v2129, 4
        %v2131 = vrot.slane %v1000, 5
        %v2132 = vsel %vm2037, %v2130, %v2131
        %v2133 = vrot.slane %v2131, 4
        %v2134 = vrot.slane %v1022, 5
        %v2135 = vsel %vm2037, %v2133, %v2134
        %v2136 = vrot.slane %v2001, 5
        %v2137 = vrot.slane %v2136, 4
        %v2138 = vrot.slane %v1002, 5
        %v2139 = vsel %vm2037, %v2137, %v2138
        %v2140 = vrot.slane %v2138, 4
        %v2141 = vrot.slane %v1023, 5
        %v2142 = vsel %vm2037, %v2140, %v2141
        %v2143 = vrot.slane %v2002, 5
        %v2144 = vrot.slane %v2143, 4
        %v2145 = vrot.slane %v1004, 5
        %v2146 = vsel %vm2037, %v2144, %v2145
        %v2147 = vrot.slane %v2145, 4
        %v2148 = vrot.slane %v1024, 5
        %v2149 = vsel %vm2037, %v2147, %v2148
        %v2150 = vld [vmem:[%s1 + $0x20] sm:$0xf]
        %v2151 = vld [vmem:[%s1 + $0x24] sm:$0xf]
        %v2152 = vld [vmem:[%s1 + $0x28] sm:$0xf]
        %v2153 = vld [vmem:[%s1 + $0x2c] sm:$0xf]
        %v2154 = vunpack.c.l.b16 %v2041
        %v2155 = vunpack.c.l.b16 %v2044
        %v2156 = vunpack.c.l.b16 %v2048
        %v2157 = vunpack.c.l.b16 %v2051
        %v2158 = vunpack.c.l.b16 %v2055
        %v2159 = vunpack.c.l.b16 %v2058
        %v2160 = vunpack.c.l.b16 %v2062
        %v2161 = vunpack.c.l.b16 %v2065
        %v2162 = vunpack.c.l.b16 %v2069
        %v2163 = vunpack.c.l.b16 %v2072
        %v2164 = vunpack.c.l.b16 %v2076
        %v2165 = vunpack.c.l.b16 %v2079
        %v2166 = vunpack.c.l.b16 %v2083
        %v2167 = vunpack.c.l.b16 %v2086
        %v2168 = vunpack.c.l.b16 %v2090
        %v2169 = vunpack.c.l.b16 %v2093
        %v2170 = vunpack.c.l.b16 %v2097
        %v2171 = vunpack.c.l.b16 %v2100
        %v2172 = vunpack.c.l.b16 %v2104
        %v2173 = vunpack.c.l.b16 %v2107
        %v2174 = vunpack.c.l.b16 %v2111
        %v2175 = vunpack.c.l.b16 %v2114
        %v2176 = vunpack.c.l.b16 %v2118
        %v2177 = vunpack.c.l.b16 %v2121
        %v2178 = vunpack.c.l.b16 %v2125
        %v2179 = vunpack.c.l.b16 %v2128
        %v2180 = vunpack.c.l.b16 %v2132
        %v2181 = vunpack.c.l.b16 %v2135
        %v2182 = vunpack.c.l.b16 %v2139
        %v2183 = vunpack.c.l.b16 %v2142
        %v2184 = vunpack.c.l.b16 %v2146
        %v2185 = vunpack.c.l.b16 %v2149
        %v2186 = vpack.c.b16 %v2155, %v2154
        %v2187 = vpack.c.b16 %v2157, %v2156
        %v2188 = vpack.c.b16 %v2159, %v2158
        %v2189 = vpack.c.b16 %v2161, %v2160
        %v2190 = vpack.c.b16 %v2163, %v2162
        %v2191 = vpack.c.b16 %v2165, %v2164
        %v2192 = vpack.c.b16 %v2167, %v2166
        %v2193 = vpack.c.b16 %v2169, %v2168
        %v2194 = vpack.c.b16 %v2171, %v2170
        %v2195 = vpack.c.b16 %v2173, %v2172
        %v2196 = vpack.c.b16 %v2175, %v2174
        %v2197 = vpack.c.b16 %v2177, %v2176
        %v2198 = vpack.c.b16 %v2179, %v2178
        %v2199 = vpack.c.b16 %v2181, %v2180
        %v2200 = vpack.c.b16 %v2183, %v2182
        %v2201 = vpack.c.b16 %v2185, %v2184
        %v2206 = vunpack.c.l.b16 %v2150
        %v2207 = vunpack.c.l.b16 %v2151
        %v2208 = vunpack.c.l.b16 %v2152
        %v2209 = vunpack.c.l.b16 %v2153
        %v2210 = vpack.c.b16 %v2207, %v2206
        %v2211 = vpack.c.b16 %v2209, %v2208
        %v2215 = vsel %vm1476, %v2186, 0
        %v2218 = vsel %vm1476, %v2187, 0
        %v2221 = vsel %vm1476, %v2188, 0
        %v2224 = vsel %vm1476, %v2189, 0
        %v2227 = vsel %vm1476, %v2190, 0
        %v2230 = vsel %vm1476, %v2191, 0
        %v2233 = vsel %vm1476, %v2192, 0
        %v2236 = vsel %vm1476, %v2193, 0
        %v2239 = vsel %vm1476, %v2194, 0
        %v2242 = vsel %vm1476, %v2195, 0
        %v2245 = vsel %vm1476, %v2196, 0
        %v2248 = vsel %vm1476, %v2197, 0
        %v2251 = vsel %vm1476, %v2198, 0
        %v2254 = vsel %vm1476, %v2199, 0
        %v2257 = vsel %vm1476, %v2200, 0
        %v2260 = vsel %vm1476, %v2201, 0
        %2262 = vmatprep.subr.bf16.mxu0 0
        %2263 = vmatpush1.bf16.msra.mxu0 0
        %2264 = vmatprep.subr.bf16.mxu0 0
        %2265 = vmatpush1.bf16.msra.mxu0 0
        %2266 = vmatprep.subr.bf16.mxu0 0
        %2267 = vmatpush1.bf16.msra.mxu0 0
        %2268 = vmatprep.subr.bf16.mxu0 0
        %2269 = vmatpush1.bf16.msra.mxu0 0
        %2270 = vmatprep.subr.bf16.mxu0 0
        %2271 = vmatpush1.bf16.msra.mxu0 0
        %2272 = vmatprep.subr.bf16.mxu0 0
        %2273 = vmatpush1.bf16.msra.mxu0 0
        %2274 = vmatprep.subr.bf16.mxu0 0
        %2275 = vmatpush1.bf16.msra.mxu0 %v2211
        %2276 = vmatprep.subr.bf16.mxu0 0
        %2277 = vmatpush1.bf16.msra.mxu0 %v2210
        %2278 = vmatprep.subr.bf16.mxu0 0
        %2279 = vmatpush2.bf16.msra.mxu0 0
        %2280 = vmatprep.subr.bf16.mxu0 0
        %2281 = vmatpush2.bf16.msra.mxu0 0
        %2282 = vmatprep.subr.bf16.mxu0 0
        %2283 = vmatpush2.bf16.msra.mxu0 0
        %2284 = vmatprep.subr.bf16.mxu0 0
        %2285 = vmatpush2.bf16.msra.mxu0 0
        %2286 = vmatprep.subr.bf16.mxu0 0
        %2287 = vmatpush2.bf16.msra.mxu0 0
        %2288 = vmatprep.subr.bf16.mxu0 0
        %2289 = vmatpush2.bf16.msra.mxu0 0
        %2290 = vmatprep.subr.bf16.mxu0 0
        %2291 = vmatpush2.bf16.msra.mxu0 0
        %2292 = vmatprep.subr.bf16.mxu0 0
        %2293 = vmatpush2.bf16.msra.mxu0 0
        %2294 = vmatprep.mubr.bf16.mxu0 0
        %2295 = vmatmul.mubr.bf16.gmra.mxu0 %v2215
        %v2296 = vpop.f32.mrf.mxu0
        %v2297 = vadd.f32 0.0, %v2296
        %v2298 = vpop.f32.mrf.mxu0
        %v2299 = vpop.f32.mrf.mxu0
        %v2300 = vadd.f32 0.0, %v2299
        %v2301 = vpop.f32.mrf.mxu0
        %2302 = vmatprep.mubr.bf16.mxu0 0
        %2303 = vmatmul.mubr.bf16.gmra.mxu0 %v2218
        %v2304 = vpop.f32.mrf.mxu0
        %v2305 = vadd.f32 0.0, %v2304
        %v2306 = vpop.f32.mrf.mxu0
        %v2307 = vpop.f32.mrf.mxu0
        %v2308 = vadd.f32 0.0, %v2307
        %v2309 = vpop.f32.mrf.mxu0
        %2310 = vmatprep.mubr.bf16.mxu0 0
        %2311 = vmatmul.mubr.bf16.gmra.mxu0 %v2221
        %v2312 = vpop.f32.mrf.mxu0
        %v2313 = vadd.f32 0.0, %v2312
        %v2314 = vpop.f32.mrf.mxu0
        %v2315 = vpop.f32.mrf.mxu0
        %v2316 = vadd.f32 0.0, %v2315
        %v2317 = vpop.f32.mrf.mxu0
        %2318 = vmatprep.mubr.bf16.mxu0 0
        %2319 = vmatmul.mubr.bf16.gmra.mxu0 %v2224
        %v2320 = vpop.f32.mrf.mxu0
        %v2321 = vadd.f32 0.0, %v2320
        %v2322 = vpop.f32.mrf.mxu0
        %v2323 = vpop.f32.mrf.mxu0
        %v2324 = vadd.f32 0.0, %v2323
        %v2325 = vpop.f32.mrf.mxu0
        %2326 = vmatprep.mubr.bf16.mxu0 0
        %2327 = vmatmul.mubr.bf16.gmra.mxu0 %v2227
        %v2328 = vpop.f32.mrf.mxu0
        %v2329 = vadd.f32 0.0, %v2328
        %v2330 = vpop.f32.mrf.mxu0
        %v2331 = vpop.f32.mrf.mxu0
        %v2332 = vadd.f32 0.0, %v2331
        %v2333 = vpop.f32.mrf.mxu0
        %2334 = vmatprep.mubr.bf16.mxu0 0
        %2335 = vmatmul.mubr.bf16.gmra.mxu0 %v2230
        %v2336 = vpop.f32.mrf.mxu0
        %v2337 = vadd.f32 0.0, %v2336
        %v2338 = vpop.f32.mrf.mxu0
        %v2339 = vpop.f32.mrf.mxu0
        %v2340 = vadd.f32 0.0, %v2339
        %v2341 = vpop.f32.mrf.mxu0
        %2342 = vmatprep.mubr.bf16.mxu0 0
        %2343 = vmatmul.mubr.bf16.gmra.mxu0 %v2233
        %v2344 = vpop.f32.mrf.mxu0
        %v2345 = vadd.f32 0.0, %v2344
        %v2346 = vpop.f32.mrf.mxu0
        %v2347 = vpop.f32.mrf.mxu0
        %v2348 = vadd.f32 0.0, %v2347
        %v2349 = vpop.f32.mrf.mxu0
        %2350 = vmatprep.mubr.bf16.mxu0 0
        %2351 = vmatmul.mubr.bf16.gmra.mxu0 %v2236
        %v2352 = vpop.f32.mrf.mxu0
        %v2353 = vadd.f32 0.0, %v2352
        %v2354 = vpop.f32.mrf.mxu0
        %v2355 = vpop.f32.mrf.mxu0
        %v2356 = vadd.f32 0.0, %v2355
        %v2357 = vpop.f32.mrf.mxu0
        %2358 = vmatprep.mubr.bf16.mxu0 0
        %2359 = vmatmul.mubr.bf16.gmra.mxu0 %v2239
        %v2360 = vpop.f32.mrf.mxu0
        %v2361 = vadd.f32 0.0, %v2360
        %v2362 = vpop.f32.mrf.mxu0
        %v2363 = vpop.f32.mrf.mxu0
        %v2364 = vadd.f32 0.0, %v2363
        %v2365 = vpop.f32.mrf.mxu0
        %2366 = vmatprep.mubr.bf16.mxu0 0
        %2367 = vmatmul.mubr.bf16.gmra.mxu0 %v2242
        %v2368 = vpop.f32.mrf.mxu0
        %v2369 = vadd.f32 0.0, %v2368
        %v2370 = vpop.f32.mrf.mxu0
        %v2371 = vpop.f32.mrf.mxu0
        %v2372 = vadd.f32 0.0, %v2371
        %v2373 = vpop.f32.mrf.mxu0
        %2374 = vmatprep.mubr.bf16.mxu0 0
        %2375 = vmatmul.mubr.bf16.gmra.mxu0 %v2245
        %v2376 = vpop.f32.mrf.mxu0
        %v2377 = vadd.f32 0.0, %v2376
        %v2378 = vpop.f32.mrf.mxu0
        %v2379 = vpop.f32.mrf.mxu0
        %v2380 = vadd.f32 0.0, %v2379
        %v2381 = vpop.f32.mrf.mxu0
        %2382 = vmatprep.mubr.bf16.mxu0 0
        %2383 = vmatmul.mubr.bf16.gmra.mxu0 %v2248
        %v2384 = vpop.f32.mrf.mxu0
        %v2385 = vadd.f32 0.0, %v2384
        %v2386 = vpop.f32.mrf.mxu0
        %v2387 = vpop.f32.mrf.mxu0
        %v2388 = vadd.f32 0.0, %v2387
        %v2389 = vpop.f32.mrf.mxu0
        %2390 = vmatprep.mubr.bf16.mxu0 0
        %2391 = vmatmul.mubr.bf16.gmra.mxu0 %v2251
        %v2392 = vpop.f32.mrf.mxu0
        %v2393 = vadd.f32 0.0, %v2392
        %v2394 = vpop.f32.mrf.mxu0
        %v2395 = vpop.f32.mrf.mxu0
        %v2396 = vadd.f32 0.0, %v2395
        %v2397 = vpop.f32.mrf.mxu0
        %2398 = vmatprep.mubr.bf16.mxu0 0
        %2399 = vmatmul.mubr.bf16.gmra.mxu0 %v2254
        %v2400 = vpop.f32.mrf.mxu0
        %v2401 = vadd.f32 0.0, %v2400
        %v2402 = vpop.f32.mrf.mxu0
        %v2403 = vpop.f32.mrf.mxu0
        %v2404 = vadd.f32 0.0, %v2403
        %v2405 = vpop.f32.mrf.mxu0
        %2406 = vmatprep.mubr.bf16.mxu0 0
        %2407 = vmatmul.mubr.bf16.gmra.mxu0 %v2257
        %v2408 = vpop.f32.mrf.mxu0
        %v2409 = vadd.f32 0.0, %v2408
        %v2410 = vpop.f32.mrf.mxu0
        %v2411 = vpop.f32.mrf.mxu0
        %v2412 = vadd.f32 0.0, %v2411
        %v2413 = vpop.f32.mrf.mxu0
        %2414 = vmatprep.mubr.bf16.mxu0 0
        %2415 = vmatmul.mubr.bf16.gmra.mxu0 %v2260
        %v2416 = vpop.f32.mrf.mxu0
        %v2417 = vadd.f32 0.0, %v2416
        %v2418 = vpop.f32.mrf.mxu0
        %v2419 = vpop.f32.mrf.mxu0
        %v2420 = vadd.f32 0.0, %v2419
        %v2421 = vpop.f32.mrf.mxu0
        %2422 = vdwg.mxu0
        %v2423 = vadd.f32 %v1861, %v2297
        %v2424 = vadd.f32 %v1864, %v2300
        %v2425 = vadd.f32 %v1869, %v2305
        %v2426 = vadd.f32 %v1872, %v2308
        %v2427 = vadd.f32 %v1877, %v2313
        %v2428 = vadd.f32 %v1880, %v2316
        %v2429 = vadd.f32 %v1885, %v2321
        %v2430 = vadd.f32 %v1888, %v2324
        %v2431 = vadd.f32 %v1893, %v2329
        %v2432 = vadd.f32 %v1896, %v2332
        %v2433 = vadd.f32 %v1901, %v2337
        %v2434 = vadd.f32 %v1904, %v2340
        %v2435 = vadd.f32 %v1909, %v2345
        %v2436 = vadd.f32 %v1912, %v2348
        %v2437 = vadd.f32 %v1917, %v2353
        %v2438 = vadd.f32 %v1920, %v2356
        %v2439 = vadd.f32 %v1925, %v2361
        %v2440 = vadd.f32 %v1928, %v2364
        %v2441 = vadd.f32 %v1933, %v2369
        %v2442 = vadd.f32 %v1936, %v2372
        %v2443 = vadd.f32 %v1941, %v2377
        %v2444 = vadd.f32 %v1944, %v2380
        %v2445 = vadd.f32 %v1949, %v2385
        %v2446 = vadd.f32 %v1952, %v2388
        %v2447 = vadd.f32 %v1957, %v2393
        %v2448 = vadd.f32 %v1960, %v2396
        %v2449 = vadd.f32 %v1965, %v2401
        %v2450 = vadd.f32 %v1968, %v2404
        %v2451 = vadd.f32 %v1973, %v2409
        %v2452 = vadd.f32 %v1976, %v2412
        %v2453 = vadd.f32 %v1981, %v2417
        %v2454 = vadd.f32 %v1984, %v2420
        %v2455 = vld [vmem:[%s307] sm:$0xf]
        %v2456 = vld [vmem:[%s307 + $0x4] sm:$0xf]
        %v2457 = vld [vmem:[%s307 + $0xc] sm:$0xf]
        %v2458 = vld [vmem:[%s307 + $0x10] sm:$0xf]
        %v2459 = vld [vmem:[%s307 + $0x18] sm:$0xf]
        %v2460 = vld [vmem:[%s307 + $0x1c] sm:$0xf]
        %v2461 = vld [vmem:[%s307 + $0x24] sm:$0xf]
        %v2462 = vld [vmem:[%s307 + $0x28] sm:$0xf]
        %v2463 = vld [vmem:[%s307 + $0x30] sm:$0xf]
        %v2464 = vld [vmem:[%s307 + $0x34] sm:$0xf]
        %v2465 = vld [vmem:[%s307 + $0x3c] sm:$0xf]
        %v2466 = vld [vmem:[%s307 + $0x40] sm:$0xf]
        %v2467 = vld [vmem:[%s307 + $0x48] sm:$0xf]
        %v2468 = vld [vmem:[%s307 + $0x4c] sm:$0xf]
        %v2469 = vld [vmem:[%s307 + $0x54] sm:$0xf]
        %v2470 = vld [vmem:[%s307 + $0x58] sm:$0xf]
        %v2471 = vld [vmem:[%s307 + $0x60] sm:$0xf]
        %v2472 = vld [vmem:[%s307 + $0x64] sm:$0xf]
        %v2473 = vld [vmem:[%s307 + $0x6c] sm:$0xf]
        %v2474 = vld [vmem:[%s307 + $0x70] sm:$0xf]
        %v2475 = vld [vmem:[%s307 + $0x78] sm:$0xf]
        %v2476 = vld [vmem:[%s307 + $0x7c] sm:$0xf]
        %v2477 = vld [vmem:[%s307 + $0x84] sm:$0xf]
        %v2478 = vld [vmem:[%s307 + $0x88] sm:$0xf]
        %v2479 = vld [vmem:[%s307 + $0x90] sm:$0xf]
        %v2480 = vld [vmem:[%s307 + $0x94] sm:$0xf]
        %v2481 = vld [vmem:[%s307 + $0x9c] sm:$0xf]
        %v2482 = vld [vmem:[%s307 + $0xa0] sm:$0xf]
        %v2483 = vld [vmem:[%s307 + $0xa8] sm:$0xf]
        %v2484 = vld [vmem:[%s307 + $0xac] sm:$0xf]
        %v2485 = vld [vmem:[%s307 + $0xb4] sm:$0xf]
        %v2486 = vld [vmem:[%s307 + $0xb8] sm:$0xf]
        %v2487 = vld [vmem:[%s1 + $0x30] sm:$0xf]
        %v2488 = vld [vmem:[%s1 + $0x34] sm:$0xf]
        %v2489 = vld [vmem:[%s1 + $0x38] sm:$0xf]
        %v2490 = vld [vmem:[%s1 + $0x3c] sm:$0xf]
        %v2523 = vunpack.c.l.b16 %v2455
        %v2524 = vunpack.c.l.b16 %v2456
        %v2525 = vunpack.c.l.b16 %v2457
        %v2526 = vunpack.c.l.b16 %v2458
        %v2527 = vunpack.c.l.b16 %v2459
        %v2528 = vunpack.c.l.b16 %v2460
        %v2529 = vunpack.c.l.b16 %v2461
        %v2530 = vunpack.c.l.b16 %v2462
        %v2531 = vunpack.c.l.b16 %v2463
        %v2532 = vunpack.c.l.b16 %v2464
        %v2533 = vunpack.c.l.b16 %v2465
        %v2534 = vunpack.c.l.b16 %v2466
        %v2535 = vunpack.c.l.b16 %v2467
        %v2536 = vunpack.c.l.b16 %v2468
        %v2537 = vunpack.c.l.b16 %v2469
        %v2538 = vunpack.c.l.b16 %v2470
        %v2539 = vunpack.c.l.b16 %v2471
        %v2540 = vunpack.c.l.b16 %v2472
        %v2541 = vunpack.c.l.b16 %v2473
        %v2542 = vunpack.c.l.b16 %v2474
        %v2543 = vunpack.c.l.b16 %v2475
        %v2544 = vunpack.c.l.b16 %v2476
        %v2545 = vunpack.c.l.b16 %v2477
        %v2546 = vunpack.c.l.b16 %v2478
        %v2547 = vunpack.c.l.b16 %v2479
        %v2548 = vunpack.c.l.b16 %v2480
        %v2549 = vunpack.c.l.b16 %v2481
        %v2550 = vunpack.c.l.b16 %v2482
        %v2551 = vunpack.c.l.b16 %v2483
        %v2552 = vunpack.c.l.b16 %v2484
        %v2553 = vunpack.c.l.b16 %v2485
        %v2554 = vunpack.c.l.b16 %v2486
        %v2555 = vpack.c.b16 %v2524, %v2523
        %v2556 = vpack.c.b16 %v2526, %v2525
        %v2557 = vpack.c.b16 %v2528, %v2527
        %v2558 = vpack.c.b16 %v2530, %v2529
        %v2559 = vpack.c.b16 %v2532, %v2531
        %v2560 = vpack.c.b16 %v2534, %v2533
        %v2561 = vpack.c.b16 %v2536, %v2535
        %v2562 = vpack.c.b16 %v2538, %v2537
        %v2563 = vpack.c.b16 %v2540, %v2539
        %v2564 = vpack.c.b16 %v2542, %v2541
        %v2565 = vpack.c.b16 %v2544, %v2543
        %v2566 = vpack.c.b16 %v2546, %v2545
        %v2567 = vpack.c.b16 %v2548, %v2547
        %v2568 = vpack.c.b16 %v2550, %v2549
        %v2569 = vpack.c.b16 %v2552, %v2551
        %v2570 = vpack.c.b16 %v2554, %v2553
        %v2575 = vunpack.c.l.b16 %v2487
        %v2576 = vunpack.c.l.b16 %v2488
        %v2577 = vunpack.c.l.b16 %v2489
        %v2578 = vunpack.c.l.b16 %v2490
        %v2579 = vpack.c.b16 %v2576, %v2575
        %v2580 = vpack.c.b16 %v2578, %v2577
        %v2584 = vsel %vm1476, %v2555, 0
        %v2587 = vsel %vm1476, %v2556, 0
        %v2590 = vsel %vm1476, %v2557, 0
        %v2593 = vsel %vm1476, %v2558, 0
        %v2596 = vsel %vm1476, %v2559, 0
        %v2599 = vsel %vm1476, %v2560, 0
        %v2602 = vsel %vm1476, %v2561, 0
        %v2605 = vsel %vm1476, %v2562, 0
        %v2608 = vsel %vm1476, %v2563, 0
        %v2611 = vsel %vm1476, %v2564, 0
        %v2614 = vsel %vm1476, %v2565, 0
        %v2617 = vsel %vm1476, %v2566, 0
        %v2620 = vsel %vm1476, %v2567, 0
        %v2623 = vsel %vm1476, %v2568, 0
        %v2626 = vsel %vm1476, %v2569, 0
        %v2629 = vsel %vm1476, %v2570, 0
        %2631 = vmatprep.subr.bf16.mxu0 0
        %2632 = vmatpush1.bf16.msra.mxu0 0
        %2633 = vmatprep.subr.bf16.mxu0 0
        %2634 = vmatpush1.bf16.msra.mxu0 0
        %2635 = vmatprep.subr.bf16.mxu0 0
        %2636 = vmatpush1.bf16.msra.mxu0 0
        %2637 = vmatprep.subr.bf16.mxu0 0
        %2638 = vmatpush1.bf16.msra.mxu0 0
        %2639 = vmatprep.subr.bf16.mxu0 0
        %2640 = vmatpush1.bf16.msra.mxu0 0
        %2641 = vmatprep.subr.bf16.mxu0 0
        %2642 = vmatpush1.bf16.msra.mxu0 0
        %2643 = vmatprep.subr.bf16.mxu0 0
        %2644 = vmatpush1.bf16.msra.mxu0 %v2580
        %2645 = vmatprep.subr.bf16.mxu0 0
        %2646 = vmatpush1.bf16.msra.mxu0 %v2579
        %2647 = vmatprep.subr.bf16.mxu0 0
        %2648 = vmatpush2.bf16.msra.mxu0 0
        %2649 = vmatprep.subr.bf16.mxu0 0
        %2650 = vmatpush2.bf16.msra.mxu0 0
        %2651 = vmatprep.subr.bf16.mxu0 0
        %2652 = vmatpush2.bf16.msra.mxu0 0
        %2653 = vmatprep.subr.bf16.mxu0 0
        %2654 = vmatpush2.bf16.msra.mxu0 0
        %2655 = vmatprep.subr.bf16.mxu0 0
        %2656 = vmatpush2.bf16.msra.mxu0 0
        %2657 = vmatprep.subr.bf16.mxu0 0
        %2658 = vmatpush2.bf16.msra.mxu0 0
        %2659 = vmatprep.subr.bf16.mxu0 0
        %2660 = vmatpush2.bf16.msra.mxu0 0
        %2661 = vmatprep.subr.bf16.mxu0 0
        %2662 = vmatpush2.bf16.msra.mxu0 0
        %2663 = vmatprep.mubr.bf16.mxu0 0
        %2664 = vmatmul.mubr.bf16.gmra.mxu0 %v2584
        %v2665 = vpop.f32.mrf.mxu0
        %v2666 = vadd.f32 0.0, %v2665
        %v2667 = vpop.f32.mrf.mxu0
        %v2668 = vpop.f32.mrf.mxu0
        %v2669 = vadd.f32 0.0, %v2668
        %v2670 = vpop.f32.mrf.mxu0
        %2671 = vmatprep.mubr.bf16.mxu0 0
        %2672 = vmatmul.mubr.bf16.gmra.mxu0 %v2587
        %v2673 = vpop.f32.mrf.mxu0
        %v2674 = vadd.f32 0.0, %v2673
        %v2675 = vpop.f32.mrf.mxu0
        %v2676 = vpop.f32.mrf.mxu0
        %v2677 = vadd.f32 0.0, %v2676
        %v2678 = vpop.f32.mrf.mxu0
        %2679 = vmatprep.mubr.bf16.mxu0 0
        %2680 = vmatmul.mubr.bf16.gmra.mxu0 %v2590
        %v2681 = vpop.f32.mrf.mxu0
        %v2682 = vadd.f32 0.0, %v2681
        %v2683 = vpop.f32.mrf.mxu0
        %v2684 = vpop.f32.mrf.mxu0
        %v2685 = vadd.f32 0.0, %v2684
        %v2686 = vpop.f32.mrf.mxu0
        %2687 = vmatprep.mubr.bf16.mxu0 0
        %2688 = vmatmul.mubr.bf16.gmra.mxu0 %v2593
        %v2689 = vpop.f32.mrf.mxu0
        %v2690 = vadd.f32 0.0, %v2689
        %v2691 = vpop.f32.mrf.mxu0
        %v2692 = vpop.f32.mrf.mxu0
        %v2693 = vadd.f32 0.0, %v2692
        %v2694 = vpop.f32.mrf.mxu0
        %2695 = vmatprep.mubr.bf16.mxu0 0
        %2696 = vmatmul.mubr.bf16.gmra.mxu0 %v2596
        %v2697 = vpop.f32.mrf.mxu0
        %v2698 = vadd.f32 0.0, %v2697
        %v2699 = vpop.f32.mrf.mxu0
        %v2700 = vpop.f32.mrf.mxu0
        %v2701 = vadd.f32 0.0, %v2700
        %v2702 = vpop.f32.mrf.mxu0
        %2703 = vmatprep.mubr.bf16.mxu0 0
        %2704 = vmatmul.mubr.bf16.gmra.mxu0 %v2599
        %v2705 = vpop.f32.mrf.mxu0
        %v2706 = vadd.f32 0.0, %v2705
        %v2707 = vpop.f32.mrf.mxu0
        %v2708 = vpop.f32.mrf.mxu0
        %v2709 = vadd.f32 0.0, %v2708
        %v2710 = vpop.f32.mrf.mxu0
        %2711 = vmatprep.mubr.bf16.mxu0 0
        %2712 = vmatmul.mubr.bf16.gmra.mxu0 %v2602
        %v2713 = vpop.f32.mrf.mxu0
        %v2714 = vadd.f32 0.0, %v2713
        %v2715 = vpop.f32.mrf.mxu0
        %v2716 = vpop.f32.mrf.mxu0
        %v2717 = vadd.f32 0.0, %v2716
        %v2718 = vpop.f32.mrf.mxu0
        %2719 = vmatprep.mubr.bf16.mxu0 0
        %2720 = vmatmul.mubr.bf16.gmra.mxu0 %v2605
        %v2721 = vpop.f32.mrf.mxu0
        %v2722 = vadd.f32 0.0, %v2721
        %v2723 = vpop.f32.mrf.mxu0
        %v2724 = vpop.f32.mrf.mxu0
        %v2725 = vadd.f32 0.0, %v2724
        %v2726 = vpop.f32.mrf.mxu0
        %2727 = vmatprep.mubr.bf16.mxu0 0
        %2728 = vmatmul.mubr.bf16.gmra.mxu0 %v2608
        %v2729 = vpop.f32.mrf.mxu0
        %v2730 = vadd.f32 0.0, %v2729
        %v2731 = vpop.f32.mrf.mxu0
        %v2732 = vpop.f32.mrf.mxu0
        %v2733 = vadd.f32 0.0, %v2732
        %v2734 = vpop.f32.mrf.mxu0
        %2735 = vmatprep.mubr.bf16.mxu0 0
        %2736 = vmatmul.mubr.bf16.gmra.mxu0 %v2611
        %v2737 = vpop.f32.mrf.mxu0
        %v2738 = vadd.f32 0.0, %v2737
        %v2739 = vpop.f32.mrf.mxu0
        %v2740 = vpop.f32.mrf.mxu0
        %v2741 = vadd.f32 0.0, %v2740
        %v2742 = vpop.f32.mrf.mxu0
        %2743 = vmatprep.mubr.bf16.mxu0 0
        %2744 = vmatmul.mubr.bf16.gmra.mxu0 %v2614
        %v2745 = vpop.f32.mrf.mxu0
        %v2746 = vadd.f32 0.0, %v2745
        %v2747 = vpop.f32.mrf.mxu0
        %v2748 = vpop.f32.mrf.mxu0
        %v2749 = vadd.f32 0.0, %v2748
        %v2750 = vpop.f32.mrf.mxu0
        %2751 = vmatprep.mubr.bf16.mxu0 0
        %2752 = vmatmul.mubr.bf16.gmra.mxu0 %v2617
        %v2753 = vpop.f32.mrf.mxu0
        %v2754 = vadd.f32 0.0, %v2753
        %v2755 = vpop.f32.mrf.mxu0
        %v2756 = vpop.f32.mrf.mxu0
        %v2757 = vadd.f32 0.0, %v2756
        %v2758 = vpop.f32.mrf.mxu0
        %2759 = vmatprep.mubr.bf16.mxu0 0
        %2760 = vmatmul.mubr.bf16.gmra.mxu0 %v2620
        %v2761 = vpop.f32.mrf.mxu0
        %v2762 = vadd.f32 0.0, %v2761
        %v2763 = vpop.f32.mrf.mxu0
        %v2764 = vpop.f32.mrf.mxu0
        %v2765 = vadd.f32 0.0, %v2764
        %v2766 = vpop.f32.mrf.mxu0
        %2767 = vmatprep.mubr.bf16.mxu0 0
        %2768 = vmatmul.mubr.bf16.gmra.mxu0 %v2623
        %v2769 = vpop.f32.mrf.mxu0
        %v2770 = vadd.f32 0.0, %v2769
        %v2771 = vpop.f32.mrf.mxu0
        %v2772 = vpop.f32.mrf.mxu0
        %v2773 = vadd.f32 0.0, %v2772
        %v2774 = vpop.f32.mrf.mxu0
        %2775 = vmatprep.mubr.bf16.mxu0 0
        %2776 = vmatmul.mubr.bf16.gmra.mxu0 %v2626
        %v2777 = vpop.f32.mrf.mxu0
        %v2778 = vadd.f32 0.0, %v2777
        %v2779 = vpop.f32.mrf.mxu0
        %v2780 = vpop.f32.mrf.mxu0
        %v2781 = vadd.f32 0.0, %v2780
        %v2782 = vpop.f32.mrf.mxu0
        %2783 = vmatprep.mubr.bf16.mxu0 0
        %2784 = vmatmul.mubr.bf16.gmra.mxu0 %v2629
        %v2785 = vpop.f32.mrf.mxu0
        %v2786 = vadd.f32 0.0, %v2785
        %v2787 = vpop.f32.mrf.mxu0
        %v2788 = vpop.f32.mrf.mxu0
        %v2789 = vadd.f32 0.0, %v2788
        %v2790 = vpop.f32.mrf.mxu0
        %2791 = vdwg.mxu0
        %v2792 = vadd.f32 %v2423, %v2666
        %v2793 = vadd.f32 %v2424, %v2669
        %v2794 = vadd.f32 %v2425, %v2674
        %v2795 = vadd.f32 %v2426, %v2677
        %v2796 = vadd.f32 %v2427, %v2682
        %v2797 = vadd.f32 %v2428, %v2685
        %v2798 = vadd.f32 %v2429, %v2690
        %v2799 = vadd.f32 %v2430, %v2693
        %v2800 = vadd.f32 %v2431, %v2698
        %v2801 = vadd.f32 %v2432, %v2701
        %v2802 = vadd.f32 %v2433, %v2706
        %v2803 = vadd.f32 %v2434, %v2709
        %v2804 = vadd.f32 %v2435, %v2714
        %v2805 = vadd.f32 %v2436, %v2717
        %v2806 = vadd.f32 %v2437, %v2722
        %v2807 = vadd.f32 %v2438, %v2725
        %v2808 = vadd.f32 %v2439, %v2730
        %v2809 = vadd.f32 %v2440, %v2733
        %v2810 = vadd.f32 %v2441, %v2738
        %v2811 = vadd.f32 %v2442, %v2741
        %v2812 = vadd.f32 %v2443, %v2746
        %v2813 = vadd.f32 %v2444, %v2749
        %v2814 = vadd.f32 %v2445, %v2754
        %v2815 = vadd.f32 %v2446, %v2757
        %v2816 = vadd.f32 %v2447, %v2762
        %v2817 = vadd.f32 %v2448, %v2765
        %v2818 = vadd.f32 %v2449, %v2770
        %v2819 = vadd.f32 %v2450, %v2773
        %v2820 = vadd.f32 %v2451, %v2778
        %v2821 = vadd.f32 %v2452, %v2781
        %v2822 = vadd.f32 %v2453, %v2786
        %v2823 = vadd.f32 %v2454, %v2789
        %v2824 = vld [vmem:[%s307] sm:$0xf]
        %v2825 = vld [vmem:[%s307 + $0x4] sm:$0xf]
        %v2826 = vld [vmem:[%s307 + $0x8] sm:$0x1]
        %v2827 = vld [vmem:[%s307 + $0xc] sm:$0xf]
        %v2828 = vld [vmem:[%s307 + $0x10] sm:$0xf]
        %v2829 = vld [vmem:[%s307 + $0x14] sm:$0x1]
        %v2830 = vld [vmem:[%s307 + $0x18] sm:$0xf]
        %v2831 = vld [vmem:[%s307 + $0x1c] sm:$0xf]
        %v2832 = vld [vmem:[%s307 + $0x20] sm:$0x1]
        %v2833 = vld [vmem:[%s307 + $0x24] sm:$0xf]
        %v2834 = vld [vmem:[%s307 + $0x28] sm:$0xf]
        %v2835 = vld [vmem:[%s307 + $0x2c] sm:$0x1]
        %v2836 = vld [vmem:[%s307 + $0x30] sm:$0xf]
        %v2837 = vld [vmem:[%s307 + $0x34] sm:$0xf]
        %v2838 = vld [vmem:[%s307 + $0x38] sm:$0x1]
        %v2839 = vld [vmem:[%s307 + $0x3c] sm:$0xf]
        %v2840 = vld [vmem:[%s307 + $0x40] sm:$0xf]
        %v2841 = vld [vmem:[%s307 + $0x44] sm:$0x1]
        %v2842 = vld [vmem:[%s307 + $0x48] sm:$0xf]
        %v2843 = vld [vmem:[%s307 + $0x4c] sm:$0xf]
        %v2844 = vld [vmem:[%s307 + $0x50] sm:$0x1]
        %v2845 = vld [vmem:[%s307 + $0x54] sm:$0xf]
        %v2846 = vld [vmem:[%s307 + $0x58] sm:$0xf]
        %v2847 = vld [vmem:[%s307 + $0x5c] sm:$0x1]
        %v2848 = vld [vmem:[%s307 + $0x60] sm:$0xf]
        %v2849 = vld [vmem:[%s307 + $0x64] sm:$0xf]
        %v2850 = vld [vmem:[%s307 + $0x68] sm:$0x1]
        %v2851 = vld [vmem:[%s307 + $0x6c] sm:$0xf]
        %v2852 = vld [vmem:[%s307 + $0x70] sm:$0xf]
        %v2853 = vld [vmem:[%s307 + $0x74] sm:$0x1]
        %v2854 = vld [vmem:[%s307 + $0x78] sm:$0xf]
        %v2855 = vld [vmem:[%s307 + $0x7c] sm:$0xf]
        %v2856 = vld [vmem:[%s307 + $0x80] sm:$0x1]
        %v2857 = vld [vmem:[%s307 + $0x84] sm:$0xf]
        %v2858 = vld [vmem:[%s307 + $0x88] sm:$0xf]
        %v2859 = vld [vmem:[%s307 + $0x8c] sm:$0x1]
        %v2860 = vld [vmem:[%s307 + $0x90] sm:$0xf]
        %v2861 = vld [vmem:[%s307 + $0x94] sm:$0xf]
        %v2862 = vld [vmem:[%s307 + $0x98] sm:$0x1]
        %v2863 = vld [vmem:[%s307 + $0x9c] sm:$0xf]
        %v2864 = vld [vmem:[%s307 + $0xa0] sm:$0xf]
        %v2865 = vld [vmem:[%s307 + $0xa4] sm:$0x1]
        %v2866 = vld [vmem:[%s307 + $0xa8] sm:$0xf]
        %v2867 = vld [vmem:[%s307 + $0xac] sm:$0xf]
        %v2868 = vld [vmem:[%s307 + $0xb0] sm:$0x1]
        %v2869 = vld [vmem:[%s307 + $0xb4] sm:$0xf]
        %v2870 = vld [vmem:[%s307 + $0xb8] sm:$0xf]
        %v2871 = vld [vmem:[%s307 + $0xbc] sm:$0x1]
        %v2873 = vshrl.u32 %v2824, 16
        %v2875 = vrot.slane %v2873, 4
        %v2876 = vshll.u32 %v2824, 16
        %v2878 = vrot.slane %v2876, 5
        %v2879 = vor.u32 %v2875, %v2878
        %v2880 = vrot.slane %v2879, 4
        %v2882 = vshll.u32 %v2825, 16
        %v2884 = vrot.slane %v2882, 5
        %v2885 = vsel %vm1027, %v2880, %v2884
        %v2886 = vshrl.u32 %v2825, 16
        %v2888 = vrot.slane %v2886, 4
        %v2889 = vor.u32 %v2888, %v2884
        %v2890 = vrot.slane %v2889, 4
        %v2892 = vshll.u32 %v2826, 16
        %v2894 = vrot.slane %v2892, 5
        %v2895 = vsel %vm1027, %v2890, %v2894
        %v2897 = vshrl.u32 %v2827, 16
        %v2899 = vrot.slane %v2897, 4
        %v2900 = vshll.u32 %v2827, 16
        %v2902 = vrot.slane %v2900, 5
        %v2903 = vor.u32 %v2899, %v2902
        %v2904 = vrot.slane %v2903, 4
        %v2906 = vshll.u32 %v2828, 16
        %v2908 = vrot.slane %v2906, 5
        %v2909 = vsel %vm1027, %v2904, %v2908
        %v2910 = vshrl.u32 %v2828, 16
        %v2912 = vrot.slane %v2910, 4
        %v2913 = vor.u32 %v2912, %v2908
        %v2914 = vrot.slane %v2913, 4
        %v2916 = vshll.u32 %v2829, 16
        %v2918 = vrot.slane %v2916, 5
        %v2919 = vsel %vm1027, %v2914, %v2918
        %v2921 = vshrl.u32 %v2830, 16
        %v2923 = vrot.slane %v2921, 4
        %v2924 = vshll.u32 %v2830, 16
        %v2926 = vrot.slane %v2924, 5
        %v2927 = vor.u32 %v2923, %v2926
        %v2928 = vrot.slane %v2927, 4
        %v2930 = vshll.u32 %v2831, 16
        %v2932 = vrot.slane %v2930, 5
        %v2933 = vsel %vm1027, %v2928, %v2932
        %v2934 = vshrl.u32 %v2831, 16
        %v2936 = vrot.slane %v2934, 4
        %v2937 = vor.u32 %v2936, %v2932
        %v2938 = vrot.slane %v2937, 4
        %v2940 = vshll.u32 %v2832, 16
        %v2942 = vrot.slane %v2940, 5
        %v2943 = vsel %vm1027, %v2938, %v2942
        %v2945 = vshrl.u32 %v2833, 16
        %v2947 = vrot.slane %v2945, 4
        %v2948 = vshll.u32 %v2833, 16
        %v2950 = vrot.slane %v2948, 5
        %v2951 = vor.u32 %v2947, %v2950
        %v2952 = vrot.slane %v2951, 4
        %v2954 = vshll.u32 %v2834, 16
        %v2956 = vrot.slane %v2954, 5
        %v2957 = vsel %vm1027, %v2952, %v2956
        %v2958 = vshrl.u32 %v2834, 16
        %v2960 = vrot.slane %v2958, 4
        %v2961 = vor.u32 %v2960, %v2956
        %v2962 = vrot.slane %v2961, 4
        %v2964 = vshll.u32 %v2835, 16
        %v2966 = vrot.slane %v2964, 5
        %v2967 = vsel %vm1027, %v2962, %v2966
        %v2969 = vshrl.u32 %v2836, 16
        %v2971 = vrot.slane %v2969, 4
        %v2972 = vshll.u32 %v2836, 16
        %v2974 = vrot.slane %v2972, 5
        %v2975 = vor.u32 %v2971, %v2974
        %v2976 = vrot.slane %v2975, 4
        %v2978 = vshll.u32 %v2837, 16
        %v2980 = vrot.slane %v2978, 5
        %v2981 = vsel %vm1027, %v2976, %v2980
        %v2982 = vshrl.u32 %v2837, 16
        %v2984 = vrot.slane %v2982, 4
        %v2985 = vor.u32 %v2984, %v2980
        %v2986 = vrot.slane %v2985, 4
        %v2988 = vshll.u32 %v2838, 16
        %v2990 = vrot.slane %v2988, 5
        %v2991 = vsel %vm1027, %v2986, %v2990
        %v2993 = vshrl.u32 %v2839, 16
        %v2995 = vrot.slane %v2993, 4
        %v2996 = vshll.u32 %v2839, 16
        %v2998 = vrot.slane %v2996, 5
        %v2999 = vor.u32 %v2995, %v2998
        %v3000 = vrot.slane %v2999, 4
        %v3002 = vshll.u32 %v2840, 16
        %v3004 = vrot.slane %v3002, 5
        %v3005 = vsel %vm1027, %v3000, %v3004
        %v3006 = vshrl.u32 %v2840, 16
        %v3008 = vrot.slane %v3006, 4
        %v3009 = vor.u32 %v3008, %v3004
        %v3010 = vrot.slane %v3009, 4
        %v3012 = vshll.u32 %v2841, 16
        %v3014 = vrot.slane %v3012, 5
        %v3015 = vsel %vm1027, %v3010, %v3014
        %v3017 = vshrl.u32 %v2842, 16
        %v3019 = vrot.slane %v3017, 4
        %v3020 = vshll.u32 %v2842, 16
        %v3022 = vrot.slane %v3020, 5
        %v3023 = vor.u32 %v3019, %v3022
        %v3024 = vrot.slane %v3023, 4
        %v3026 = vshll.u32 %v2843, 16
        %v3028 = vrot.slane %v3026, 5
        %v3029 = vsel %vm1027, %v3024, %v3028
        %v3030 = vshrl.u32 %v2843, 16
        %v3032 = vrot.slane %v3030, 4
        %v3033 = vor.u32 %v3032, %v3028
        %v3034 = vrot.slane %v3033, 4
        %v3036 = vshll.u32 %v2844, 16
        %v3038 = vrot.slane %v3036, 5
        %v3039 = vsel %vm1027, %v3034, %v3038
        %v3041 = vshrl.u32 %v2845, 16
        %v3043 = vrot.slane %v3041, 4
        %v3044 = vshll.u32 %v2845, 16
        %v3046 = vrot.slane %v3044, 5
        %v3047 = vor.u32 %v3043, %v3046
        %v3048 = vrot.slane %v3047, 4
        %v3050 = vshll.u32 %v2846, 16
        %v3052 = vrot.slane %v3050, 5
        %v3053 = vsel %vm1027, %v3048, %v3052
        %v3054 = vshrl.u32 %v2846, 16
        %v3056 = vrot.slane %v3054, 4
        %v3057 = vor.u32 %v3056, %v3052
        %v3058 = vrot.slane %v3057, 4
        %v3060 = vshll.u32 %v2847, 16
        %v3062 = vrot.slane %v3060, 5
        %v3063 = vsel %vm1027, %v3058, %v3062
        %v3065 = vshrl.u32 %v2848, 16
        %v3067 = vrot.slane %v3065, 4
        %v3068 = vshll.u32 %v2848, 16
        %v3070 = vrot.slane %v3068, 5
        %v3071 = vor.u32 %v3067, %v3070
        %v3072 = vrot.slane %v3071, 4
        %v3074 = vshll.u32 %v2849, 16
        %v3076 = vrot.slane %v3074, 5
        %v3077 = vsel %vm1027, %v3072, %v3076
        %v3078 = vshrl.u32 %v2849, 16
        %v3080 = vrot.slane %v3078, 4
        %v3081 = vor.u32 %v3080, %v3076
        %v3082 = vrot.slane %v3081, 4
        %v3084 = vshll.u32 %v2850, 16
        %v3086 = vrot.slane %v3084, 5
        %v3087 = vsel %vm1027, %v3082, %v3086
        %v3089 = vshrl.u32 %v2851, 16
        %v3091 = vrot.slane %v3089, 4
        %v3092 = vshll.u32 %v2851, 16
        %v3094 = vrot.slane %v3092, 5
        %v3095 = vor.u32 %v3091, %v3094
        %v3096 = vrot.slane %v3095, 4
        %v3098 = vshll.u32 %v2852, 16
        %v3100 = vrot.slane %v3098, 5
        %v3101 = vsel %vm1027, %v3096, %v3100
        %v3102 = vshrl.u32 %v2852, 16
        %v3104 = vrot.slane %v3102, 4
        %v3105 = vor.u32 %v3104, %v3100
        %v3106 = vrot.slane %v3105, 4
        %v3108 = vshll.u32 %v2853, 16
        %v3110 = vrot.slane %v3108, 5
        %v3111 = vsel %vm1027, %v3106, %v3110
        %v3113 = vshrl.u32 %v2854, 16
        %v3115 = vrot.slane %v3113, 4
        %v3116 = vshll.u32 %v2854, 16
        %v3118 = vrot.slane %v3116, 5
        %v3119 = vor.u32 %v3115, %v3118
        %v3120 = vrot.slane %v3119, 4
        %v3122 = vshll.u32 %v2855, 16
        %v3124 = vrot.slane %v3122, 5
        %v3125 = vsel %vm1027, %v3120, %v3124
        %v3126 = vshrl.u32 %v2855, 16
        %v3128 = vrot.slane %v3126, 4
        %v3129 = vor.u32 %v3128, %v3124
        %v3130 = vrot.slane %v3129, 4
        %v3132 = vshll.u32 %v2856, 16
        %v3134 = vrot.slane %v3132, 5
        %v3135 = vsel %vm1027, %v3130, %v3134
        %v3137 = vshrl.u32 %v2857, 16
        %v3139 = vrot.slane %v3137, 4
        %v3140 = vshll.u32 %v2857, 16
        %v3142 = vrot.slane %v3140, 5
        %v3143 = vor.u32 %v3139, %v3142
        %v3144 = vrot.slane %v3143, 4
        %v3146 = vshll.u32 %v2858, 16
        %v3148 = vrot.slane %v3146, 5
        %v3149 = vsel %vm1027, %v3144, %v3148
        %v3150 = vshrl.u32 %v2858, 16
        %v3152 = vrot.slane %v3150, 4
        %v3153 = vor.u32 %v3152, %v3148
        %v3154 = vrot.slane %v3153, 4
        %v3156 = vshll.u32 %v2859, 16
        %v3158 = vrot.slane %v3156, 5
        %v3159 = vsel %vm1027, %v3154, %v3158
        %v3161 = vshrl.u32 %v2860, 16
        %v3163 = vrot.slane %v3161, 4
        %v3164 = vshll.u32 %v2860, 16
        %v3166 = vrot.slane %v3164, 5
        %v3167 = vor.u32 %v3163, %v3166
        %v3168 = vrot.slane %v3167, 4
        %v3170 = vshll.u32 %v2861, 16
        %v3172 = vrot.slane %v3170, 5
        %v3173 = vsel %vm1027, %v3168, %v3172
        %v3174 = vshrl.u32 %v2861, 16
        %v3176 = vrot.slane %v3174, 4
        %v3177 = vor.u32 %v3176, %v3172
        %v3178 = vrot.slane %v3177, 4
        %v3180 = vshll.u32 %v2862, 16
        %v3182 = vrot.slane %v3180, 5
        %v3183 = vsel %vm1027, %v3178, %v3182
        %v3185 = vshrl.u32 %v2863, 16
        %v3187 = vrot.slane %v3185, 4
        %v3188 = vshll.u32 %v2863, 16
        %v3190 = vrot.slane %v3188, 5
        %v3191 = vor.u32 %v3187, %v3190
        %v3192 = vrot.slane %v3191, 4
        %v3194 = vshll.u32 %v2864, 16
        %v3196 = vrot.slane %v3194, 5
        %v3197 = vsel %vm1027, %v3192, %v3196
        %v3198 = vshrl.u32 %v2864, 16
        %v3200 = vrot.slane %v3198, 4
        %v3201 = vor.u32 %v3200, %v3196
        %v3202 = vrot.slane %v3201, 4
        %v3204 = vshll.u32 %v2865, 16
        %v3206 = vrot.slane %v3204, 5
        %v3207 = vsel %vm1027, %v3202, %v3206
        %v3209 = vshrl.u32 %v2866, 16
        %v3211 = vrot.slane %v3209, 4
        %v3212 = vshll.u32 %v2866, 16
        %v3214 = vrot.slane %v3212, 5
        %v3215 = vor.u32 %v3211, %v3214
        %v3216 = vrot.slane %v3215, 4
        %v3218 = vshll.u32 %v2867, 16
        %v3220 = vrot.slane %v3218, 5
        %v3221 = vsel %vm1027, %v3216, %v3220
        %v3222 = vshrl.u32 %v2867, 16
        %v3224 = vrot.slane %v3222, 4
        %v3225 = vor.u32 %v3224, %v3220
        %v3226 = vrot.slane %v3225, 4
        %v3228 = vshll.u32 %v2868, 16
        %v3230 = vrot.slane %v3228, 5
        %v3231 = vsel %vm1027, %v3226, %v3230
        %v3233 = vshrl.u32 %v2869, 16
        %v3235 = vrot.slane %v3233, 4
        %v3236 = vshll.u32 %v2869, 16
        %v3238 = vrot.slane %v3236, 5
        %v3239 = vor.u32 %v3235, %v3238
        %v3240 = vrot.slane %v3239, 4
        %v3242 = vshll.u32 %v2870, 16
        %v3244 = vrot.slane %v3242, 5
        %v3245 = vsel %vm1027, %v3240, %v3244
        %v3246 = vshrl.u32 %v2870, 16
        %v3248 = vrot.slane %v3246, 4
        %v3249 = vor.u32 %v3248, %v3244
        %v3250 = vrot.slane %v3249, 4
        %v3252 = vshll.u32 %v2871, 16
        %v3254 = vrot.slane %v3252, 5
        %v3255 = vsel %vm1027, %v3250, %v3254
        %v3256 = vld [vmem:[%s1 + $0x40] sm:$0xf]
        %v3257 = vld [vmem:[%s1 + $0x44] sm:$0xf]
        %v3258 = vld [vmem:[%s1 + $0x48] sm:$0xf]
        %v3259 = vld [vmem:[%s1 + $0x4c] sm:$0xf]
        %v3260 = vunpack.c.l.b16 %v2885
        %v3261 = vunpack.c.l.b16 %v2895
        %v3262 = vunpack.c.l.b16 %v2909
        %v3263 = vunpack.c.l.b16 %v2919
        %v3264 = vunpack.c.l.b16 %v2933
        %v3265 = vunpack.c.l.b16 %v2943
        %v3266 = vunpack.c.l.b16 %v2957
        %v3267 = vunpack.c.l.b16 %v2967
        %v3268 = vunpack.c.l.b16 %v2981
        %v3269 = vunpack.c.l.b16 %v2991
        %v3270 = vunpack.c.l.b16 %v3005
        %v3271 = vunpack.c.l.b16 %v3015
        %v3272 = vunpack.c.l.b16 %v3029
        %v3273 = vunpack.c.l.b16 %v3039
        %v3274 = vunpack.c.l.b16 %v3053
        %v3275 = vunpack.c.l.b16 %v3063
        %v3276 = vunpack.c.l.b16 %v3077
        %v3277 = vunpack.c.l.b16 %v3087
        %v3278 = vunpack.c.l.b16 %v3101
        %v3279 = vunpack.c.l.b16 %v3111
        %v3280 = vunpack.c.l.b16 %v3125
        %v3281 = vunpack.c.l.b16 %v3135
        %v3282 = vunpack.c.l.b16 %v3149
        %v3283 = vunpack.c.l.b16 %v3159
        %v3284 = vunpack.c.l.b16 %v3173
        %v3285 = vunpack.c.l.b16 %v3183
        %v3286 = vunpack.c.l.b16 %v3197
        %v3287 = vunpack.c.l.b16 %v3207
        %v3288 = vunpack.c.l.b16 %v3221
        %v3289 = vunpack.c.l.b16 %v3231
        %v3290 = vunpack.c.l.b16 %v3245
        %v3291 = vunpack.c.l.b16 %v3255
        %v3292 = vpack.c.b16 %v3261, %v3260
        %v3293 = vpack.c.b16 %v3263, %v3262
        %v3294 = vpack.c.b16 %v3265, %v3264
        %v3295 = vpack.c.b16 %v3267, %v3266
        %v3296 = vpack.c.b16 %v3269, %v3268
        %v3297 = vpack.c.b16 %v3271, %v3270
        %v3298 = vpack.c.b16 %v3273, %v3272
        %v3299 = vpack.c.b16 %v3275, %v3274
        %v3300 = vpack.c.b16 %v3277, %v3276
        %v3301 = vpack.c.b16 %v3279, %v3278
        %v3302 = vpack.c.b16 %v3281, %v3280
        %v3303 = vpack.c.b16 %v3283, %v3282
        %v3304 = vpack.c.b16 %v3285, %v3284
        %v3305 = vpack.c.b16 %v3287, %v3286
        %v3306 = vpack.c.b16 %v3289, %v3288
        %v3307 = vpack.c.b16 %v3291, %v3290
        %v3312 = vunpack.c.l.b16 %v3256
        %v3313 = vunpack.c.l.b16 %v3257
        %v3314 = vunpack.c.l.b16 %v3258
        %v3315 = vunpack.c.l.b16 %v3259
        %v3316 = vpack.c.b16 %v3313, %v3312
        %v3317 = vpack.c.b16 %v3315, %v3314
        %v3321 = vsel %vm1476, %v3292, 0
        %v3324 = vsel %vm1476, %v3293, 0
        %v3327 = vsel %vm1476, %v3294, 0
        %v3330 = vsel %vm1476, %v3295, 0
        %v3333 = vsel %vm1476, %v3296, 0
        %v3336 = vsel %vm1476, %v3297, 0
        %v3339 = vsel %vm1476, %v3298, 0
        %v3342 = vsel %vm1476, %v3299, 0
        %v3345 = vsel %vm1476, %v3300, 0
        %v3348 = vsel %vm1476, %v3301, 0
        %v3351 = vsel %vm1476, %v3302, 0
        %v3354 = vsel %vm1476, %v3303, 0
        %v3357 = vsel %vm1476, %v3304, 0
        %v3360 = vsel %vm1476, %v3305, 0
        %v3363 = vsel %vm1476, %v3306, 0
        %v3366 = vsel %vm1476, %v3307, 0
        %3368 = vmatprep.subr.bf16.mxu0 0
        %3369 = vmatpush1.bf16.msra.mxu0 0
        %3370 = vmatprep.subr.bf16.mxu0 0
        %3371 = vmatpush1.bf16.msra.mxu0 0
        %3372 = vmatprep.subr.bf16.mxu0 0
        %3373 = vmatpush1.bf16.msra.mxu0 0
        %3374 = vmatprep.subr.bf16.mxu0 0
        %3375 = vmatpush1.bf16.msra.mxu0 0
        %3376 = vmatprep.subr.bf16.mxu0 0
        %3377 = vmatpush1.bf16.msra.mxu0 0
        %3378 = vmatprep.subr.bf16.mxu0 0
        %3379 = vmatpush1.bf16.msra.mxu0 0
        %3380 = vmatprep.subr.bf16.mxu0 0
        %3381 = vmatpush1.bf16.msra.mxu0 %v3317
        %3382 = vmatprep.subr.bf16.mxu0 0
        %3383 = vmatpush1.bf16.msra.mxu0 %v3316
        %3384 = vmatprep.subr.bf16.mxu0 0
        %3385 = vmatpush2.bf16.msra.mxu0 0
        %3386 = vmatprep.subr.bf16.mxu0 0
        %3387 = vmatpush2.bf16.msra.mxu0 0
        %3388 = vmatprep.subr.bf16.mxu0 0
        %3389 = vmatpush2.bf16.msra.mxu0 0
        %3390 = vmatprep.subr.bf16.mxu0 0
        %3391 = vmatpush2.bf16.msra.mxu0 0
        %3392 = vmatprep.subr.bf16.mxu0 0
        %3393 = vmatpush2.bf16.msra.mxu0 0
        %3394 = vmatprep.subr.bf16.mxu0 0
        %3395 = vmatpush2.bf16.msra.mxu0 0
        %3396 = vmatprep.subr.bf16.mxu0 0
        %3397 = vmatpush2.bf16.msra.mxu0 0
        %3398 = vmatprep.subr.bf16.mxu0 0
        %3399 = vmatpush2.bf16.msra.mxu0 0
        %3400 = vmatprep.mubr.bf16.mxu0 0
        %3401 = vmatmul.mubr.bf16.gmra.mxu0 %v3321
        %v3402 = vpop.f32.mrf.mxu0
        %v3403 = vadd.f32 0.0, %v3402
        %v3404 = vpop.f32.mrf.mxu0
        %v3405 = vpop.f32.mrf.mxu0
        %v3406 = vadd.f32 0.0, %v3405
        %v3407 = vpop.f32.mrf.mxu0
        %3408 = vmatprep.mubr.bf16.mxu0 0
        %3409 = vmatmul.mubr.bf16.gmra.mxu0 %v3324
        %v3410 = vpop.f32.mrf.mxu0
        %v3411 = vadd.f32 0.0, %v3410
        %v3412 = vpop.f32.mrf.mxu0
        %v3413 = vpop.f32.mrf.mxu0
        %v3414 = vadd.f32 0.0, %v3413
        %v3415 = vpop.f32.mrf.mxu0
        %3416 = vmatprep.mubr.bf16.mxu0 0
        %3417 = vmatmul.mubr.bf16.gmra.mxu0 %v3327
        %v3418 = vpop.f32.mrf.mxu0
        %v3419 = vadd.f32 0.0, %v3418
        %v3420 = vpop.f32.mrf.mxu0
        %v3421 = vpop.f32.mrf.mxu0
        %v3422 = vadd.f32 0.0, %v3421
        %v3423 = vpop.f32.mrf.mxu0
        %3424 = vmatprep.mubr.bf16.mxu0 0
        %3425 = vmatmul.mubr.bf16.gmra.mxu0 %v3330
        %v3426 = vpop.f32.mrf.mxu0
        %v3427 = vadd.f32 0.0, %v3426
        %v3428 = vpop.f32.mrf.mxu0
        %v3429 = vpop.f32.mrf.mxu0
        %v3430 = vadd.f32 0.0, %v3429
        %v3431 = vpop.f32.mrf.mxu0
        %3432 = vmatprep.mubr.bf16.mxu0 0
        %3433 = vmatmul.mubr.bf16.gmra.mxu0 %v3333
        %v3434 = vpop.f32.mrf.mxu0
        %v3435 = vadd.f32 0.0, %v3434
        %v3436 = vpop.f32.mrf.mxu0
        %v3437 = vpop.f32.mrf.mxu0
        %v3438 = vadd.f32 0.0, %v3437
        %v3439 = vpop.f32.mrf.mxu0
        %3440 = vmatprep.mubr.bf16.mxu0 0
        %3441 = vmatmul.mubr.bf16.gmra.mxu0 %v3336
        %v3442 = vpop.f32.mrf.mxu0
        %v3443 = vadd.f32 0.0, %v3442
        %v3444 = vpop.f32.mrf.mxu0
        %v3445 = vpop.f32.mrf.mxu0
        %v3446 = vadd.f32 0.0, %v3445
        %v3447 = vpop.f32.mrf.mxu0
        %3448 = vmatprep.mubr.bf16.mxu0 0
        %3449 = vmatmul.mubr.bf16.gmra.mxu0 %v3339
        %v3450 = vpop.f32.mrf.mxu0
        %v3451 = vadd.f32 0.0, %v3450
        %v3452 = vpop.f32.mrf.mxu0
        %v3453 = vpop.f32.mrf.mxu0
        %v3454 = vadd.f32 0.0, %v3453
        %v3455 = vpop.f32.mrf.mxu0
        %3456 = vmatprep.mubr.bf16.mxu0 0
        %3457 = vmatmul.mubr.bf16.gmra.mxu0 %v3342
        %v3458 = vpop.f32.mrf.mxu0
        %v3459 = vadd.f32 0.0, %v3458
        %v3460 = vpop.f32.mrf.mxu0
        %v3461 = vpop.f32.mrf.mxu0
        %v3462 = vadd.f32 0.0, %v3461
        %v3463 = vpop.f32.mrf.mxu0
        %3464 = vmatprep.mubr.bf16.mxu0 0
        %3465 = vmatmul.mubr.bf16.gmra.mxu0 %v3345
        %v3466 = vpop.f32.mrf.mxu0
        %v3467 = vadd.f32 0.0, %v3466
        %v3468 = vpop.f32.mrf.mxu0
        %v3469 = vpop.f32.mrf.mxu0
        %v3470 = vadd.f32 0.0, %v3469
        %v3471 = vpop.f32.mrf.mxu0
        %3472 = vmatprep.mubr.bf16.mxu0 0
        %3473 = vmatmul.mubr.bf16.gmra.mxu0 %v3348
        %v3474 = vpop.f32.mrf.mxu0
        %v3475 = vadd.f32 0.0, %v3474
        %v3476 = vpop.f32.mrf.mxu0
        %v3477 = vpop.f32.mrf.mxu0
        %v3478 = vadd.f32 0.0, %v3477
        %v3479 = vpop.f32.mrf.mxu0
        %3480 = vmatprep.mubr.bf16.mxu0 0
        %3481 = vmatmul.mubr.bf16.gmra.mxu0 %v3351
        %v3482 = vpop.f32.mrf.mxu0
        %v3483 = vadd.f32 0.0, %v3482
        %v3484 = vpop.f32.mrf.mxu0
        %v3485 = vpop.f32.mrf.mxu0
        %v3486 = vadd.f32 0.0, %v3485
        %v3487 = vpop.f32.mrf.mxu0
        %3488 = vmatprep.mubr.bf16.mxu0 0
        %3489 = vmatmul.mubr.bf16.gmra.mxu0 %v3354
        %v3490 = vpop.f32.mrf.mxu0
        %v3491 = vadd.f32 0.0, %v3490
        %v3492 = vpop.f32.mrf.mxu0
        %v3493 = vpop.f32.mrf.mxu0
        %v3494 = vadd.f32 0.0, %v3493
        %v3495 = vpop.f32.mrf.mxu0
        %3496 = vmatprep.mubr.bf16.mxu0 0
        %3497 = vmatmul.mubr.bf16.gmra.mxu0 %v3357
        %v3498 = vpop.f32.mrf.mxu0
        %v3499 = vadd.f32 0.0, %v3498
        %v3500 = vpop.f32.mrf.mxu0
        %v3501 = vpop.f32.mrf.mxu0
        %v3502 = vadd.f32 0.0, %v3501
        %v3503 = vpop.f32.mrf.mxu0
        %3504 = vmatprep.mubr.bf16.mxu0 0
        %3505 = vmatmul.mubr.bf16.gmra.mxu0 %v3360
        %v3506 = vpop.f32.mrf.mxu0
        %v3507 = vadd.f32 0.0, %v3506
        %v3508 = vpop.f32.mrf.mxu0
        %v3509 = vpop.f32.mrf.mxu0
        %v3510 = vadd.f32 0.0, %v3509
        %v3511 = vpop.f32.mrf.mxu0
        %3512 = vmatprep.mubr.bf16.mxu0 0
        %3513 = vmatmul.mubr.bf16.gmra.mxu0 %v3363
        %v3514 = vpop.f32.mrf.mxu0
        %v3515 = vadd.f32 0.0, %v3514
        %v3516 = vpop.f32.mrf.mxu0
        %v3517 = vpop.f32.mrf.mxu0
        %v3518 = vadd.f32 0.0, %v3517
        %v3519 = vpop.f32.mrf.mxu0
        %3520 = vmatprep.mubr.bf16.mxu0 0
        %3521 = vmatmul.mubr.bf16.gmra.mxu0 %v3366
        %v3522 = vpop.f32.mrf.mxu0
        %v3523 = vadd.f32 0.0, %v3522
        %v3524 = vpop.f32.mrf.mxu0
        %v3525 = vpop.f32.mrf.mxu0
        %v3526 = vadd.f32 0.0, %v3525
        %v3527 = vpop.f32.mrf.mxu0
        %3528 = vdwg.mxu0
        %v3529 = vadd.f32 %v2792, %v3403
        %v3530 = vadd.f32 %v2793, %v3406
        %v3531 = vadd.f32 %v2794, %v3411
        %v3532 = vadd.f32 %v2795, %v3414
        %v3533 = vadd.f32 %v2796, %v3419
        %v3534 = vadd.f32 %v2797, %v3422
        %v3535 = vadd.f32 %v2798, %v3427
        %v3536 = vadd.f32 %v2799, %v3430
        %v3537 = vadd.f32 %v2800, %v3435
        %v3538 = vadd.f32 %v2801, %v3438
        %v3539 = vadd.f32 %v2802, %v3443
        %v3540 = vadd.f32 %v2803, %v3446
        %v3541 = vadd.f32 %v2804, %v3451
        %v3542 = vadd.f32 %v2805, %v3454
        %v3543 = vadd.f32 %v2806, %v3459
        %v3544 = vadd.f32 %v2807, %v3462
        %v3545 = vadd.f32 %v2808, %v3467
        %v3546 = vadd.f32 %v2809, %v3470
        %v3547 = vadd.f32 %v2810, %v3475
        %v3548 = vadd.f32 %v2811, %v3478
        %v3549 = vadd.f32 %v2812, %v3483
        %v3550 = vadd.f32 %v2813, %v3486
        %v3551 = vadd.f32 %v2814, %v3491
        %v3552 = vadd.f32 %v2815, %v3494
        %v3553 = vadd.f32 %v2816, %v3499
        %v3554 = vadd.f32 %v2817, %v3502
        %v3555 = vadd.f32 %v2818, %v3507
        %v3556 = vadd.f32 %v2819, %v3510
        %v3557 = vadd.f32 %v2820, %v3515
        %v3558 = vadd.f32 %v2821, %v3518
        %v3559 = vadd.f32 %v2822, %v3523
        %v3560 = vadd.f32 %v2823, %v3526
        %v3561 = vld [vmem:[%s307] sm:$0xe]
        %v3562 = vld [vmem:[%s307 + $0xc] sm:$0xe]
        %v3563 = vld [vmem:[%s307 + $0x18] sm:$0xe]
        %v3564 = vld [vmem:[%s307 + $0x24] sm:$0xe]
        %v3565 = vld [vmem:[%s307 + $0x30] sm:$0xe]
        %v3566 = vld [vmem:[%s307 + $0x3c] sm:$0xe]
        %v3567 = vld [vmem:[%s307 + $0x48] sm:$0xe]
        %v3568 = vld [vmem:[%s307 + $0x54] sm:$0xe]
        %v3569 = vld [vmem:[%s307 + $0x60] sm:$0xe]
        %v3570 = vld [vmem:[%s307 + $0x6c] sm:$0xe]
        %v3571 = vld [vmem:[%s307 + $0x78] sm:$0xe]
        %v3572 = vld [vmem:[%s307 + $0x84] sm:$0xe]
        %v3573 = vld [vmem:[%s307 + $0x90] sm:$0xe]
        %v3574 = vld [vmem:[%s307 + $0x9c] sm:$0xe]
        %v3575 = vld [vmem:[%s307 + $0xa8] sm:$0xe]
        %v3576 = vld [vmem:[%s307 + $0xb4] sm:$0xe]
        %v3625 = vrot.slane %v3561, 5
        %v3626 = vrot.slane %v3625, 4
        %v3627 = vrot.slane %v2825, 5
        %v3628 = vsel %vm2037, %v3626, %v3627
        %v3629 = vrot.slane %v3627, 4
        %v3630 = vrot.slane %v2826, 5
        %v3631 = vsel %vm2037, %v3629, %v3630
        %v3632 = vrot.slane %v3562, 5
        %v3633 = vrot.slane %v3632, 4
        %v3634 = vrot.slane %v2828, 5
        %v3635 = vsel %vm2037, %v3633, %v3634
        %v3636 = vrot.slane %v3634, 4
        %v3637 = vrot.slane %v2829, 5
        %v3638 = vsel %vm2037, %v3636, %v3637
        %v3639 = vrot.slane %v3563, 5
        %v3640 = vrot.slane %v3639, 4
        %v3641 = vrot.slane %v2831, 5
        %v3642 = vsel %vm2037, %v3640, %v3641
        %v3643 = vrot.slane %v3641, 4
        %v3644 = vrot.slane %v2832, 5
        %v3645 = vsel %vm2037, %v3643, %v3644
        %v3646 = vrot.slane %v3564, 5
        %v3647 = vrot.slane %v3646, 4
        %v3648 = vrot.slane %v2834, 5
        %v3649 = vsel %vm2037, %v3647, %v3648
        %v3650 = vrot.slane %v3648, 4
        %v3651 = vrot.slane %v2835, 5
        %v3652 = vsel %vm2037, %v3650, %v3651
        %v3653 = vrot.slane %v3565, 5
        %v3654 = vrot.slane %v3653, 4
        %v3655 = vrot.slane %v2837, 5
        %v3656 = vsel %vm2037, %v3654, %v3655
        %v3657 = vrot.slane %v3655, 4
        %v3658 = vrot.slane %v2838, 5
        %v3659 = vsel %vm2037, %v3657, %v3658
        %v3660 = vrot.slane %v3566, 5
        %v3661 = vrot.slane %v3660, 4
        %v3662 = vrot.slane %v2840, 5
        %v3663 = vsel %vm2037, %v3661, %v3662
        %v3664 = vrot.slane %v3662, 4
        %v3665 = vrot.slane %v2841, 5
        %v3666 = vsel %vm2037, %v3664, %v3665
        %v3667 = vrot.slane %v3567, 5
        %v3668 = vrot.slane %v3667, 4
        %v3669 = vrot.slane %v2843, 5
        %v3670 = vsel %vm2037, %v3668, %v3669
        %v3671 = vrot.slane %v3669, 4
        %v3672 = vrot.slane %v2844, 5
        %v3673 = vsel %vm2037, %v3671, %v3672
        %v3674 = vrot.slane %v3568, 5
        %v3675 = vrot.slane %v3674, 4
        %v3676 = vrot.slane %v2846, 5
        %v3677 = vsel %vm2037, %v3675, %v3676
        %v3678 = vrot.slane %v3676, 4
        %v3679 = vrot.slane %v2847, 5
        %v3680 = vsel %vm2037, %v3678, %v3679
        %v3681 = vrot.slane %v3569, 5
        %v3682 = vrot.slane %v3681, 4
        %v3683 = vrot.slane %v2849, 5
        %v3684 = vsel %vm2037, %v3682, %v3683
        %v3685 = vrot.slane %v3683, 4
        %v3686 = vrot.slane %v2850, 5
        %v3687 = vsel %vm2037, %v3685, %v3686
        %v3688 = vrot.slane %v3570, 5
        %v3689 = vrot.slane %v3688, 4
        %v3690 = vrot.slane %v2852, 5
        %v3691 = vsel %vm2037, %v3689, %v3690
        %v3692 = vrot.slane %v3690, 4
        %v3693 = vrot.slane %v2853, 5
        %v3694 = vsel %vm2037, %v3692, %v3693
        %v3695 = vrot.slane %v3571, 5
        %v3696 = vrot.slane %v3695, 4
        %v3697 = vrot.slane %v2855, 5
        %v3698 = vsel %vm2037, %v3696, %v3697
        %v3699 = vrot.slane %v3697, 4
        %v3700 = vrot.slane %v2856, 5
        %v3701 = vsel %vm2037, %v3699, %v3700
        %v3702 = vrot.slane %v3572, 5
        %v3703 = vrot.slane %v3702, 4
        %v3704 = vrot.slane %v2858, 5
        %v3705 = vsel %vm2037, %v3703, %v3704
        %v3706 = vrot.slane %v3704, 4
        %v3707 = vrot.slane %v2859, 5
        %v3708 = vsel %vm2037, %v3706, %v3707
        %v3709 = vrot.slane %v3573, 5
        %v3710 = vrot.slane %v3709, 4
        %v3711 = vrot.slane %v2861, 5
        %v3712 = vsel %vm2037, %v3710, %v3711
        %v3713 = vrot.slane %v3711, 4
        %v3714 = vrot.slane %v2862, 5
        %v3715 = vsel %vm2037, %v3713, %v3714
        %v3716 = vrot.slane %v3574, 5
        %v3717 = vrot.slane %v3716, 4
        %v3718 = vrot.slane %v2864, 5
        %v3719 = vsel %vm2037, %v3717, %v3718
        %v3720 = vrot.slane %v3718, 4
        %v3721 = vrot.slane %v2865, 5
        %v3722 = vsel %vm2037, %v3720, %v3721
        %v3723 = vrot.slane %v3575, 5
        %v3724 = vrot.slane %v3723, 4
        %v3725 = vrot.slane %v2867, 5
        %v3726 = vsel %vm2037, %v3724, %v3725
        %v3727 = vrot.slane %v3725, 4
        %v3728 = vrot.slane %v2868, 5
        %v3729 = vsel %vm2037, %v3727, %v3728
        %v3730 = vrot.slane %v3576, 5
        %v3731 = vrot.slane %v3730, 4
        %v3732 = vrot.slane %v2870, 5
        %v3733 = vsel %vm2037, %v3731, %v3732
        %v3734 = vrot.slane %v3732, 4
        %v3735 = vrot.slane %v2871, 5
        %v3736 = vsel %vm2037, %v3734, %v3735
        %v3737 = vld [vmem:[%s1 + $0x50] sm:$0xf]
        %v3738 = vld [vmem:[%s1 + $0x54] sm:$0xf]
        %v3739 = vld [vmem:[%s1 + $0x58] sm:$0xf]
        %v3740 = vld [vmem:[%s1 + $0x5c] sm:$0xf]
        %v3741 = vunpack.c.l.b16 %v3628
        %v3742 = vunpack.c.l.b16 %v3631
        %v3743 = vunpack.c.l.b16 %v3635
        %v3744 = vunpack.c.l.b16 %v3638
        %v3745 = vunpack.c.l.b16 %v3642
        %v3746 = vunpack.c.l.b16 %v3645
        %v3747 = vunpack.c.l.b16 %v3649
        %v3748 = vunpack.c.l.b16 %v3652
        %v3749 = vunpack.c.l.b16 %v3656
        %v3750 = vunpack.c.l.b16 %v3659
        %v3751 = vunpack.c.l.b16 %v3663
        %v3752 = vunpack.c.l.b16 %v3666
        %v3753 = vunpack.c.l.b16 %v3670
        %v3754 = vunpack.c.l.b16 %v3673
        %v3755 = vunpack.c.l.b16 %v3677
        %v3756 = vunpack.c.l.b16 %v3680
        %v3757 = vunpack.c.l.b16 %v3684
        %v3758 = vunpack.c.l.b16 %v3687
        %v3759 = vunpack.c.l.b16 %v3691
        %v3760 = vunpack.c.l.b16 %v3694
        %v3761 = vunpack.c.l.b16 %v3698
        %v3762 = vunpack.c.l.b16 %v3701
        %v3763 = vunpack.c.l.b16 %v3705
        %v3764 = vunpack.c.l.b16 %v3708
        %v3765 = vunpack.c.l.b16 %v3712
        %v3766 = vunpack.c.l.b16 %v3715
        %v3767 = vunpack.c.l.b16 %v3719
        %v3768 = vunpack.c.l.b16 %v3722
        %v3769 = vunpack.c.l.b16 %v3726
        %v3770 = vunpack.c.l.b16 %v3729
        %v3771 = vunpack.c.l.b16 %v3733
        %v3772 = vunpack.c.l.b16 %v3736
        %v3773 = vpack.c.b16 %v3742, %v3741
        %v3774 = vpack.c.b16 %v3744, %v3743
        %v3775 = vpack.c.b16 %v3746, %v3745
        %v3776 = vpack.c.b16 %v3748, %v3747
        %v3777 = vpack.c.b16 %v3750, %v3749
        %v3778 = vpack.c.b16 %v3752, %v3751
        %v3779 = vpack.c.b16 %v3754, %v3753
        %v3780 = vpack.c.b16 %v3756, %v3755
        %v3781 = vpack.c.b16 %v3758, %v3757
        %v3782 = vpack.c.b16 %v3760, %v3759
        %v3783 = vpack.c.b16 %v3762, %v3761
        %v3784 = vpack.c.b16 %v3764, %v3763
        %v3785 = vpack.c.b16 %v3766, %v3765
        %v3786 = vpack.c.b16 %v3768, %v3767
        %v3787 = vpack.c.b16 %v3770, %v3769
        %v3788 = vpack.c.b16 %v3772, %v3771
        %v3793 = vunpack.c.l.b16 %v3737
        %v3794 = vunpack.c.l.b16 %v3738
        %v3795 = vunpack.c.l.b16 %v3739
        %v3796 = vunpack.c.l.b16 %v3740
        %v3797 = vpack.c.b16 %v3794, %v3793
        %v3798 = vpack.c.b16 %v3796, %v3795
        %v3802 = vsel %vm1476, %v3773, 0
        %v3805 = vsel %vm1476, %v3774, 0
        %v3808 = vsel %vm1476, %v3775, 0
        %v3811 = vsel %vm1476, %v3776, 0
        %v3814 = vsel %vm1476, %v3777, 0
        %v3817 = vsel %vm1476, %v3778, 0
        %v3820 = vsel %vm1476, %v3779, 0
        %v3823 = vsel %vm1476, %v3780, 0
        %v3826 = vsel %vm1476, %v3781, 0
        %v3829 = vsel %vm1476, %v3782, 0
        %v3832 = vsel %vm1476, %v3783, 0
        %v3835 = vsel %vm1476, %v3784, 0
        %v3838 = vsel %vm1476, %v3785, 0
        %v3841 = vsel %vm1476, %v3786, 0
        %v3844 = vsel %vm1476, %v3787, 0
        %v3847 = vsel %vm1476, %v3788, 0
        %3849 = vmatprep.subr.bf16.mxu0 0
        %3850 = vmatpush1.bf16.msra.mxu0 0
        %3851 = vmatprep.subr.bf16.mxu0 0
        %3852 = vmatpush1.bf16.msra.mxu0 0
        %3853 = vmatprep.subr.bf16.mxu0 0
        %3854 = vmatpush1.bf16.msra.mxu0 0
        %3855 = vmatprep.subr.bf16.mxu0 0
        %3856 = vmatpush1.bf16.msra.mxu0 0
        %3857 = vmatprep.subr.bf16.mxu0 0
        %3858 = vmatpush1.bf16.msra.mxu0 0
        %3859 = vmatprep.subr.bf16.mxu0 0
        %3860 = vmatpush1.bf16.msra.mxu0 0
        %3861 = vmatprep.subr.bf16.mxu0 0
        %3862 = vmatpush1.bf16.msra.mxu0 %v3798
        %3863 = vmatprep.subr.bf16.mxu0 0
        %3864 = vmatpush1.bf16.msra.mxu0 %v3797
        %3865 = vmatprep.subr.bf16.mxu0 0
        %3866 = vmatpush2.bf16.msra.mxu0 0
        %3867 = vmatprep.subr.bf16.mxu0 0
        %3868 = vmatpush2.bf16.msra.mxu0 0
        %3869 = vmatprep.subr.bf16.mxu0 0
        %3870 = vmatpush2.bf16.msra.mxu0 0
        %3871 = vmatprep.subr.bf16.mxu0 0
        %3872 = vmatpush2.bf16.msra.mxu0 0
        %3873 = vmatprep.subr.bf16.mxu0 0
        %3874 = vmatpush2.bf16.msra.mxu0 0
        %3875 = vmatprep.subr.bf16.mxu0 0
        %3876 = vmatpush2.bf16.msra.mxu0 0
        %3877 = vmatprep.subr.bf16.mxu0 0
        %3878 = vmatpush2.bf16.msra.mxu0 0
        %3879 = vmatprep.subr.bf16.mxu0 0
        %3880 = vmatpush2.bf16.msra.mxu0 0
        %3881 = vmatprep.mubr.bf16.mxu0 0
        %3882 = vmatmul.mubr.bf16.gmra.mxu0 %v3802
        %v3883 = vpop.f32.mrf.mxu0
        %v3884 = vadd.f32 0.0, %v3883
        %v3885 = vpop.f32.mrf.mxu0
        %v3886 = vpop.f32.mrf.mxu0
        %v3887 = vadd.f32 0.0, %v3886
        %v3888 = vpop.f32.mrf.mxu0
        %3889 = vmatprep.mubr.bf16.mxu0 0
        %3890 = vmatmul.mubr.bf16.gmra.mxu0 %v3805
        %v3891 = vpop.f32.mrf.mxu0
        %v3892 = vadd.f32 0.0, %v3891
        %v3893 = vpop.f32.mrf.mxu0
        %v3894 = vpop.f32.mrf.mxu0
        %v3895 = vadd.f32 0.0, %v3894
        %v3896 = vpop.f32.mrf.mxu0
        %3897 = vmatprep.mubr.bf16.mxu0 0
        %3898 = vmatmul.mubr.bf16.gmra.mxu0 %v3808
        %v3899 = vpop.f32.mrf.mxu0
        %v3900 = vadd.f32 0.0, %v3899
        %v3901 = vpop.f32.mrf.mxu0
        %v3902 = vpop.f32.mrf.mxu0
        %v3903 = vadd.f32 0.0, %v3902
        %v3904 = vpop.f32.mrf.mxu0
        %3905 = vmatprep.mubr.bf16.mxu0 0
        %3906 = vmatmul.mubr.bf16.gmra.mxu0 %v3811
        %v3907 = vpop.f32.mrf.mxu0
        %v3908 = vadd.f32 0.0, %v3907
        %v3909 = vpop.f32.mrf.mxu0
        %v3910 = vpop.f32.mrf.mxu0
        %v3911 = vadd.f32 0.0, %v3910
        %v3912 = vpop.f32.mrf.mxu0
        %3913 = vmatprep.mubr.bf16.mxu0 0
        %3914 = vmatmul.mubr.bf16.gmra.mxu0 %v3814
        %v3915 = vpop.f32.mrf.mxu0
        %v3916 = vadd.f32 0.0, %v3915
        %v3917 = vpop.f32.mrf.mxu0
        %v3918 = vpop.f32.mrf.mxu0
        %v3919 = vadd.f32 0.0, %v3918
        %v3920 = vpop.f32.mrf.mxu0
        %3921 = vmatprep.mubr.bf16.mxu0 0
        %3922 = vmatmul.mubr.bf16.gmra.mxu0 %v3817
        %v3923 = vpop.f32.mrf.mxu0
        %v3924 = vadd.f32 0.0, %v3923
        %v3925 = vpop.f32.mrf.mxu0
        %v3926 = vpop.f32.mrf.mxu0
        %v3927 = vadd.f32 0.0, %v3926
        %v3928 = vpop.f32.mrf.mxu0
        %3929 = vmatprep.mubr.bf16.mxu0 0
        %3930 = vmatmul.mubr.bf16.gmra.mxu0 %v3820
        %v3931 = vpop.f32.mrf.mxu0
        %v3932 = vadd.f32 0.0, %v3931
        %v3933 = vpop.f32.mrf.mxu0
        %v3934 = vpop.f32.mrf.mxu0
        %v3935 = vadd.f32 0.0, %v3934
        %v3936 = vpop.f32.mrf.mxu0
        %3937 = vmatprep.mubr.bf16.mxu0 0
        %3938 = vmatmul.mubr.bf16.gmra.mxu0 %v3823
        %v3939 = vpop.f32.mrf.mxu0
        %v3940 = vadd.f32 0.0, %v3939
        %v3941 = vpop.f32.mrf.mxu0
        %v3942 = vpop.f32.mrf.mxu0
        %v3943 = vadd.f32 0.0, %v3942
        %v3944 = vpop.f32.mrf.mxu0
        %3945 = vmatprep.mubr.bf16.mxu0 0
        %3946 = vmatmul.mubr.bf16.gmra.mxu0 %v3826
        %v3947 = vpop.f32.mrf.mxu0
        %v3948 = vadd.f32 0.0, %v3947
        %v3949 = vpop.f32.mrf.mxu0
        %v3950 = vpop.f32.mrf.mxu0
        %v3951 = vadd.f32 0.0, %v3950
        %v3952 = vpop.f32.mrf.mxu0
        %3953 = vmatprep.mubr.bf16.mxu0 0
        %3954 = vmatmul.mubr.bf16.gmra.mxu0 %v3829
        %v3955 = vpop.f32.mrf.mxu0
        %v3956 = vadd.f32 0.0, %v3955
        %v3957 = vpop.f32.mrf.mxu0
        %v3958 = vpop.f32.mrf.mxu0
        %v3959 = vadd.f32 0.0, %v3958
        %v3960 = vpop.f32.mrf.mxu0
        %3961 = vmatprep.mubr.bf16.mxu0 0
        %3962 = vmatmul.mubr.bf16.gmra.mxu0 %v3832
        %v3963 = vpop.f32.mrf.mxu0
        %v3964 = vadd.f32 0.0, %v3963
        %v3965 = vpop.f32.mrf.mxu0
        %v3966 = vpop.f32.mrf.mxu0
        %v3967 = vadd.f32 0.0, %v3966
        %v3968 = vpop.f32.mrf.mxu0
        %3969 = vmatprep.mubr.bf16.mxu0 0
        %3970 = vmatmul.mubr.bf16.gmra.mxu0 %v3835
        %v3971 = vpop.f32.mrf.mxu0
        %v3972 = vadd.f32 0.0, %v3971
        %v3973 = vpop.f32.mrf.mxu0
        %v3974 = vpop.f32.mrf.mxu0
        %v3975 = vadd.f32 0.0, %v3974
        %v3976 = vpop.f32.mrf.mxu0
        %3977 = vmatprep.mubr.bf16.mxu0 0
        %3978 = vmatmul.mubr.bf16.gmra.mxu0 %v3838
        %v3979 = vpop.f32.mrf.mxu0
        %v3980 = vadd.f32 0.0, %v3979
        %v3981 = vpop.f32.mrf.mxu0
        %v3982 = vpop.f32.mrf.mxu0
        %v3983 = vadd.f32 0.0, %v3982
        %v3984 = vpop.f32.mrf.mxu0
        %3985 = vmatprep.mubr.bf16.mxu0 0
        %3986 = vmatmul.mubr.bf16.gmra.mxu0 %v3841
        %v3987 = vpop.f32.mrf.mxu0
        %v3988 = vadd.f32 0.0, %v3987
        %v3989 = vpop.f32.mrf.mxu0
        %v3990 = vpop.f32.mrf.mxu0
        %v3991 = vadd.f32 0.0, %v3990
        %v3992 = vpop.f32.mrf.mxu0
        %3993 = vmatprep.mubr.bf16.mxu0 0
        %3994 = vmatmul.mubr.bf16.gmra.mxu0 %v3844
        %v3995 = vpop.f32.mrf.mxu0
        %v3996 = vadd.f32 0.0, %v3995
        %v3997 = vpop.f32.mrf.mxu0
        %v3998 = vpop.f32.mrf.mxu0
        %v3999 = vadd.f32 0.0, %v3998
        %v4000 = vpop.f32.mrf.mxu0
        %4001 = vmatprep.mubr.bf16.mxu0 0
        %4002 = vmatmul.mubr.bf16.gmra.mxu0 %v3847
        %v4003 = vpop.f32.mrf.mxu0
        %v4004 = vadd.f32 0.0, %v4003
        %v4005 = vpop.f32.mrf.mxu0
        %v4006 = vpop.f32.mrf.mxu0
        %v4007 = vadd.f32 0.0, %v4006
        %v4008 = vpop.f32.mrf.mxu0
        %4009 = vdwg.mxu0
        %v4010 = vadd.f32 %v3529, %v3884
        %v4011 = vadd.f32 %v3530, %v3887
        %v4012 = vadd.f32 %v3531, %v3892
        %v4013 = vadd.f32 %v3532, %v3895
        %v4014 = vadd.f32 %v3533, %v3900
        %v4015 = vadd.f32 %v3534, %v3903
        %v4016 = vadd.f32 %v3535, %v3908
        %v4017 = vadd.f32 %v3536, %v3911
        %v4018 = vadd.f32 %v3537, %v3916
        %v4019 = vadd.f32 %v3538, %v3919
        %v4020 = vadd.f32 %v3539, %v3924
        %v4021 = vadd.f32 %v3540, %v3927
        %v4022 = vadd.f32 %v3541, %v3932
        %v4023 = vadd.f32 %v3542, %v3935
        %v4024 = vadd.f32 %v3543, %v3940
        %v4025 = vadd.f32 %v3544, %v3943
        %v4026 = vadd.f32 %v3545, %v3948
        %v4027 = vadd.f32 %v3546, %v3951
        %v4028 = vadd.f32 %v3547, %v3956
        %v4029 = vadd.f32 %v3548, %v3959
        %v4030 = vadd.f32 %v3549, %v3964
        %v4031 = vadd.f32 %v3550, %v3967
        %v4032 = vadd.f32 %v3551, %v3972
        %v4033 = vadd.f32 %v3552, %v3975
        %v4034 = vadd.f32 %v3553, %v3980
        %v4035 = vadd.f32 %v3554, %v3983
        %v4036 = vadd.f32 %v3555, %v3988
        %v4037 = vadd.f32 %v3556, %v3991
        %v4038 = vadd.f32 %v3557, %v3996
        %v4039 = vadd.f32 %v3558, %v3999
        %v4040 = vadd.f32 %v3559, %v4004
        %v4041 = vadd.f32 %v3560, %v4007
        %s4042 = scalar_lea.vmem [#allocation2], 24
        %v4043 = vld [vmem:[%s4042] sm:$0xf]
        %v4044 = vld [vmem:[%s4042 + $0x4] sm:$0xf]
        %v4045 = vld [vmem:[%s4042 + $0xc] sm:$0xf]
        %v4046 = vld [vmem:[%s4042 + $0x10] sm:$0xf]
        %v4047 = vld [vmem:[%s4042 + $0x18] sm:$0xf]
        %v4048 = vld [vmem:[%s4042 + $0x1c] sm:$0xf]
        %v4049 = vld [vmem:[%s4042 + $0x24] sm:$0xf]
        %v4050 = vld [vmem:[%s4042 + $0x28] sm:$0xf]
        %v4051 = vld [vmem:[%s4042 + $0x30] sm:$0xf]
        %v4052 = vld [vmem:[%s4042 + $0x34] sm:$0xf]
        %v4053 = vld [vmem:[%s4042 + $0x3c] sm:$0xf]
        %v4054 = vld [vmem:[%s4042 + $0x40] sm:$0xf]
        %v4055 = vld [vmem:[%s4042 + $0x48] sm:$0xf]
        %v4056 = vld [vmem:[%s4042 + $0x4c] sm:$0xf]
        %v4057 = vld [vmem:[%s4042 + $0x54] sm:$0xf]
        %v4058 = vld [vmem:[%s4042 + $0x58] sm:$0xf]
        %v4059 = vld [vmem:[%s4042 + $0x60] sm:$0xf]
        %v4060 = vld [vmem:[%s4042 + $0x64] sm:$0xf]
        %v4061 = vld [vmem:[%s4042 + $0x6c] sm:$0xf]
        %v4062 = vld [vmem:[%s4042 + $0x70] sm:$0xf]
        %v4063 = vld [vmem:[%s4042 + $0x78] sm:$0xf]
        %v4064 = vld [vmem:[%s4042 + $0x7c] sm:$0xf]
        %v4065 = vld [vmem:[%s4042 + $0x84] sm:$0xf]
        %v4066 = vld [vmem:[%s4042 + $0x88] sm:$0xf]
        %v4067 = vld [vmem:[%s4042 + $0x90] sm:$0xf]
        %v4068 = vld [vmem:[%s4042 + $0x94] sm:$0xf]
        %v4069 = vld [vmem:[%s4042 + $0x9c] sm:$0xf]
        %v4070 = vld [vmem:[%s4042 + $0xa0] sm:$0xf]
        %v4071 = vld [vmem:[%s4042 + $0xa8] sm:$0xf]
        %v4072 = vld [vmem:[%s4042 + $0xac] sm:$0xf]
        %v4073 = vld [vmem:[%s4042 + $0xb4] sm:$0xf]
        %v4074 = vld [vmem:[%s4042 + $0xb8] sm:$0xf]
        %v4075 = vld [vmem:[%s1 + $0x60] sm:$0xf]
        %v4076 = vld [vmem:[%s1 + $0x64] sm:$0xf]
        %v4077 = vld [vmem:[%s1 + $0x68] sm:$0xf]
        %v4078 = vld [vmem:[%s1 + $0x6c] sm:$0xf]
        %v4111 = vunpack.c.l.b16 %v4043
        %v4112 = vunpack.c.l.b16 %v4044
        %v4113 = vunpack.c.l.b16 %v4045
        %v4114 = vunpack.c.l.b16 %v4046
        %v4115 = vunpack.c.l.b16 %v4047
        %v4116 = vunpack.c.l.b16 %v4048
        %v4117 = vunpack.c.l.b16 %v4049
        %v4118 = vunpack.c.l.b16 %v4050
        %v4119 = vunpack.c.l.b16 %v4051
        %v4120 = vunpack.c.l.b16 %v4052
        %v4121 = vunpack.c.l.b16 %v4053
        %v4122 = vunpack.c.l.b16 %v4054
        %v4123 = vunpack.c.l.b16 %v4055
        %v4124 = vunpack.c.l.b16 %v4056
        %v4125 = vunpack.c.l.b16 %v4057
        %v4126 = vunpack.c.l.b16 %v4058
        %v4127 = vunpack.c.l.b16 %v4059
        %v4128 = vunpack.c.l.b16 %v4060
        %v4129 = vunpack.c.l.b16 %v4061
        %v4130 = vunpack.c.l.b16 %v4062
        %v4131 = vunpack.c.l.b16 %v4063
        %v4132 = vunpack.c.l.b16 %v4064
        %v4133 = vunpack.c.l.b16 %v4065
        %v4134 = vunpack.c.l.b16 %v4066
        %v4135 = vunpack.c.l.b16 %v4067
        %v4136 = vunpack.c.l.b16 %v4068
        %v4137 = vunpack.c.l.b16 %v4069
        %v4138 = vunpack.c.l.b16 %v4070
        %v4139 = vunpack.c.l.b16 %v4071
        %v4140 = vunpack.c.l.b16 %v4072
        %v4141 = vunpack.c.l.b16 %v4073
        %v4142 = vunpack.c.l.b16 %v4074
        %v4143 = vpack.c.b16 %v4112, %v4111
        %v4144 = vpack.c.b16 %v4114, %v4113
        %v4145 = vpack.c.b16 %v4116, %v4115
        %v4146 = vpack.c.b16 %v4118, %v4117
        %v4147 = vpack.c.b16 %v4120, %v4119
        %v4148 = vpack.c.b16 %v4122, %v4121
        %v4149 = vpack.c.b16 %v4124, %v4123
        %v4150 = vpack.c.b16 %v4126, %v4125
        %v4151 = vpack.c.b16 %v4128, %v4127
        %v4152 = vpack.c.b16 %v4130, %v4129
        %v4153 = vpack.c.b16 %v4132, %v4131
        %v4154 = vpack.c.b16 %v4134, %v4133
        %v4155 = vpack.c.b16 %v4136, %v4135
        %v4156 = vpack.c.b16 %v4138, %v4137
        %v4157 = vpack.c.b16 %v4140, %v4139
        %v4158 = vpack.c.b16 %v4142, %v4141
        %v4163 = vunpack.c.l.b16 %v4075
        %v4164 = vunpack.c.l.b16 %v4076
        %v4165 = vunpack.c.l.b16 %v4077
        %v4166 = vunpack.c.l.b16 %v4078
        %v4167 = vpack.c.b16 %v4164, %v4163
        %v4168 = vpack.c.b16 %v4166, %v4165
        %v4172 = vsel %vm1476, %v4143, 0
        %v4175 = vsel %vm1476, %v4144, 0
        %v4178 = vsel %vm1476, %v4145, 0
        %v4181 = vsel %vm1476, %v4146, 0
        %v4184 = vsel %vm1476, %v4147, 0
        %v4187 = vsel %vm1476, %v4148, 0
        %v4190 = vsel %vm1476, %v4149, 0
        %v4193 = vsel %vm1476, %v4150, 0
        %v4196 = vsel %vm1476, %v4151, 0
        %v4199 = vsel %vm1476, %v4152, 0
        %v4202 = vsel %vm1476, %v4153, 0
        %v4205 = vsel %vm1476, %v4154, 0
        %v4208 = vsel %vm1476, %v4155, 0
        %v4211 = vsel %vm1476, %v4156, 0
        %v4214 = vsel %vm1476, %v4157, 0
        %v4217 = vsel %vm1476, %v4158, 0
        %4219 = vmatprep.subr.bf16.mxu0 0
        %4220 = vmatpush1.bf16.msra.mxu0 0
        %4221 = vmatprep.subr.bf16.mxu0 0
        %4222 = vmatpush1.bf16.msra.mxu0 0
        %4223 = vmatprep.subr.bf16.mxu0 0
        %4224 = vmatpush1.bf16.msra.mxu0 0
        %4225 = vmatprep.subr.bf16.mxu0 0
        %4226 = vmatpush1.bf16.msra.mxu0 0
        %4227 = vmatprep.subr.bf16.mxu0 0
        %4228 = vmatpush1.bf16.msra.mxu0 0
        %4229 = vmatprep.subr.bf16.mxu0 0
        %4230 = vmatpush1.bf16.msra.mxu0 0
        %4231 = vmatprep.subr.bf16.mxu0 0
        %4232 = vmatpush1.bf16.msra.mxu0 %v4168
        %4233 = vmatprep.subr.bf16.mxu0 0
        %4234 = vmatpush1.bf16.msra.mxu0 %v4167
        %4235 = vmatprep.subr.bf16.mxu0 0
        %4236 = vmatpush2.bf16.msra.mxu0 0
        %4237 = vmatprep.subr.bf16.mxu0 0
        %4238 = vmatpush2.bf16.msra.mxu0 0
        %4239 = vmatprep.subr.bf16.mxu0 0
        %4240 = vmatpush2.bf16.msra.mxu0 0
        %4241 = vmatprep.subr.bf16.mxu0 0
        %4242 = vmatpush2.bf16.msra.mxu0 0
        %4243 = vmatprep.subr.bf16.mxu0 0
        %4244 = vmatpush2.bf16.msra.mxu0 0
        %4245 = vmatprep.subr.bf16.mxu0 0
        %4246 = vmatpush2.bf16.msra.mxu0 0
        %4247 = vmatprep.subr.bf16.mxu0 0
        %4248 = vmatpush2.bf16.msra.mxu0 0
        %4249 = vmatprep.subr.bf16.mxu0 0
        %4250 = vmatpush2.bf16.msra.mxu0 0
        %4251 = vmatprep.mubr.bf16.mxu0 0
        %4252 = vmatmul.mubr.bf16.gmra.mxu0 %v4172
        %v4253 = vpop.f32.mrf.mxu0
        %v4254 = vadd.f32 0.0, %v4253
        %v4255 = vpop.f32.mrf.mxu0
        %v4256 = vpop.f32.mrf.mxu0
        %v4257 = vadd.f32 0.0, %v4256
        %v4258 = vpop.f32.mrf.mxu0
        %4259 = vmatprep.mubr.bf16.mxu0 0
        %4260 = vmatmul.mubr.bf16.gmra.mxu0 %v4175
        %v4261 = vpop.f32.mrf.mxu0
        %v4262 = vadd.f32 0.0, %v4261
        %v4263 = vpop.f32.mrf.mxu0
        %v4264 = vpop.f32.mrf.mxu0
        %v4265 = vadd.f32 0.0, %v4264
        %v4266 = vpop.f32.mrf.mxu0
        %4267 = vmatprep.mubr.bf16.mxu0 0
        %4268 = vmatmul.mubr.bf16.gmra.mxu0 %v4178
        %v4269 = vpop.f32.mrf.mxu0
        %v4270 = vadd.f32 0.0, %v4269
        %v4271 = vpop.f32.mrf.mxu0
        %v4272 = vpop.f32.mrf.mxu0
        %v4273 = vadd.f32 0.0, %v4272
        %v4274 = vpop.f32.mrf.mxu0
        %4275 = vmatprep.mubr.bf16.mxu0 0
        %4276 = vmatmul.mubr.bf16.gmra.mxu0 %v4181
        %v4277 = vpop.f32.mrf.mxu0
        %v4278 = vadd.f32 0.0, %v4277
        %v4279 = vpop.f32.mrf.mxu0
        %v4280 = vpop.f32.mrf.mxu0
        %v4281 = vadd.f32 0.0, %v4280
        %v4282 = vpop.f32.mrf.mxu0
        %4283 = vmatprep.mubr.bf16.mxu0 0
        %4284 = vmatmul.mubr.bf16.gmra.mxu0 %v4184
        %v4285 = vpop.f32.mrf.mxu0
        %v4286 = vadd.f32 0.0, %v4285
        %v4287 = vpop.f32.mrf.mxu0
        %v4288 = vpop.f32.mrf.mxu0
        %v4289 = vadd.f32 0.0, %v4288
        %v4290 = vpop.f32.mrf.mxu0
        %4291 = vmatprep.mubr.bf16.mxu0 0
        %4292 = vmatmul.mubr.bf16.gmra.mxu0 %v4187
        %v4293 = vpop.f32.mrf.mxu0
        %v4294 = vadd.f32 0.0, %v4293
        %v4295 = vpop.f32.mrf.mxu0
        %v4296 = vpop.f32.mrf.mxu0
        %v4297 = vadd.f32 0.0, %v4296
        %v4298 = vpop.f32.mrf.mxu0
        %4299 = vmatprep.mubr.bf16.mxu0 0
        %4300 = vmatmul.mubr.bf16.gmra.mxu0 %v4190
        %v4301 = vpop.f32.mrf.mxu0
        %v4302 = vadd.f32 0.0, %v4301
        %v4303 = vpop.f32.mrf.mxu0
        %v4304 = vpop.f32.mrf.mxu0
        %v4305 = vadd.f32 0.0, %v4304
        %v4306 = vpop.f32.mrf.mxu0
        %4307 = vmatprep.mubr.bf16.mxu0 0
        %4308 = vmatmul.mubr.bf16.gmra.mxu0 %v4193
        %v4309 = vpop.f32.mrf.mxu0
        %v4310 = vadd.f32 0.0, %v4309
        %v4311 = vpop.f32.mrf.mxu0
        %v4312 = vpop.f32.mrf.mxu0
        %v4313 = vadd.f32 0.0, %v4312
        %v4314 = vpop.f32.mrf.mxu0
        %4315 = vmatprep.mubr.bf16.mxu0 0
        %4316 = vmatmul.mubr.bf16.gmra.mxu0 %v4196
        %v4317 = vpop.f32.mrf.mxu0
        %v4318 = vadd.f32 0.0, %v4317
        %v4319 = vpop.f32.mrf.mxu0
        %v4320 = vpop.f32.mrf.mxu0
        %v4321 = vadd.f32 0.0, %v4320
        %v4322 = vpop.f32.mrf.mxu0
        %4323 = vmatprep.mubr.bf16.mxu0 0
        %4324 = vmatmul.mubr.bf16.gmra.mxu0 %v4199
        %v4325 = vpop.f32.mrf.mxu0
        %v4326 = vadd.f32 0.0, %v4325
        %v4327 = vpop.f32.mrf.mxu0
        %v4328 = vpop.f32.mrf.mxu0
        %v4329 = vadd.f32 0.0, %v4328
        %v4330 = vpop.f32.mrf.mxu0
        %4331 = vmatprep.mubr.bf16.mxu0 0
        %4332 = vmatmul.mubr.bf16.gmra.mxu0 %v4202
        %v4333 = vpop.f32.mrf.mxu0
        %v4334 = vadd.f32 0.0, %v4333
        %v4335 = vpop.f32.mrf.mxu0
        %v4336 = vpop.f32.mrf.mxu0
        %v4337 = vadd.f32 0.0, %v4336
        %v4338 = vpop.f32.mrf.mxu0
        %4339 = vmatprep.mubr.bf16.mxu0 0
        %4340 = vmatmul.mubr.bf16.gmra.mxu0 %v4205
        %v4341 = vpop.f32.mrf.mxu0
        %v4342 = vadd.f32 0.0, %v4341
        %v4343 = vpop.f32.mrf.mxu0
        %v4344 = vpop.f32.mrf.mxu0
        %v4345 = vadd.f32 0.0, %v4344
        %v4346 = vpop.f32.mrf.mxu0
        %4347 = vmatprep.mubr.bf16.mxu0 0
        %4348 = vmatmul.mubr.bf16.gmra.mxu0 %v4208
        %v4349 = vpop.f32.mrf.mxu0
        %v4350 = vadd.f32 0.0, %v4349
        %v4351 = vpop.f32.mrf.mxu0
        %v4352 = vpop.f32.mrf.mxu0
        %v4353 = vadd.f32 0.0, %v4352
        %v4354 = vpop.f32.mrf.mxu0
        %4355 = vmatprep.mubr.bf16.mxu0 0
        %4356 = vmatmul.mubr.bf16.gmra.mxu0 %v4211
        %v4357 = vpop.f32.mrf.mxu0
        %v4358 = vadd.f32 0.0, %v4357
        %v4359 = vpop.f32.mrf.mxu0
        %v4360 = vpop.f32.mrf.mxu0
        %v4361 = vadd.f32 0.0, %v4360
        %v4362 = vpop.f32.mrf.mxu0
        %4363 = vmatprep.mubr.bf16.mxu0 0
        %4364 = vmatmul.mubr.bf16.gmra.mxu0 %v4214
        %v4365 = vpop.f32.mrf.mxu0
        %v4366 = vadd.f32 0.0, %v4365
        %v4367 = vpop.f32.mrf.mxu0
        %v4368 = vpop.f32.mrf.mxu0
        %v4369 = vadd.f32 0.0, %v4368
        %v4370 = vpop.f32.mrf.mxu0
        %4371 = vmatprep.mubr.bf16.mxu0 0
        %4372 = vmatmul.mubr.bf16.gmra.mxu0 %v4217
        %v4373 = vpop.f32.mrf.mxu0
        %v4374 = vadd.f32 0.0, %v4373
        %v4375 = vpop.f32.mrf.mxu0
        %v4376 = vpop.f32.mrf.mxu0
        %v4377 = vadd.f32 0.0, %v4376
        %v4378 = vpop.f32.mrf.mxu0
        %4379 = vdwg.mxu0
        %v4380 = vadd.f32 %v4010, %v4254
        %v4381 = vadd.f32 %v4011, %v4257
        %v4382 = vadd.f32 %v4012, %v4262
        %v4383 = vadd.f32 %v4013, %v4265
        %v4384 = vadd.f32 %v4014, %v4270
        %v4385 = vadd.f32 %v4015, %v4273
        %v4386 = vadd.f32 %v4016, %v4278
        %v4387 = vadd.f32 %v4017, %v4281
        %v4388 = vadd.f32 %v4018, %v4286
        %v4389 = vadd.f32 %v4019, %v4289
        %v4390 = vadd.f32 %v4020, %v4294
        %v4391 = vadd.f32 %v4021, %v4297
        %v4392 = vadd.f32 %v4022, %v4302
        %v4393 = vadd.f32 %v4023, %v4305
        %v4394 = vadd.f32 %v4024, %v4310
        %v4395 = vadd.f32 %v4025, %v4313
        %v4396 = vadd.f32 %v4026, %v4318
        %v4397 = vadd.f32 %v4027, %v4321
        %v4398 = vadd.f32 %v4028, %v4326
        %v4399 = vadd.f32 %v4029, %v4329
        %v4400 = vadd.f32 %v4030, %v4334
        %v4401 = vadd.f32 %v4031, %v4337
        %v4402 = vadd.f32 %v4032, %v4342
        %v4403 = vadd.f32 %v4033, %v4345
        %v4404 = vadd.f32 %v4034, %v4350
        %v4405 = vadd.f32 %v4035, %v4353
        %v4406 = vadd.f32 %v4036, %v4358
        %v4407 = vadd.f32 %v4037, %v4361
        %v4408 = vadd.f32 %v4038, %v4366
        %v4409 = vadd.f32 %v4039, %v4369
        %v4410 = vadd.f32 %v4040, %v4374
        %v4411 = vadd.f32 %v4041, %v4377
        %v4412 = vld [vmem:[%s4042] sm:$0xf]
        %v4413 = vld [vmem:[%s4042 + $0x4] sm:$0xf]
        %v4414 = vld [vmem:[%s4042 + $0x8] sm:$0x1]
        %v4415 = vld [vmem:[%s4042 + $0xc] sm:$0xf]
        %v4416 = vld [vmem:[%s4042 + $0x10] sm:$0xf]
        %v4417 = vld [vmem:[%s4042 + $0x14] sm:$0x1]
        %v4418 = vld [vmem:[%s4042 + $0x18] sm:$0xf]
        %v4419 = vld [vmem:[%s4042 + $0x1c] sm:$0xf]
        %v4420 = vld [vmem:[%s4042 + $0x20] sm:$0x1]
        %v4421 = vld [vmem:[%s4042 + $0x24] sm:$0xf]
        %v4422 = vld [vmem:[%s4042 + $0x28] sm:$0xf]
        %v4423 = vld [vmem:[%s4042 + $0x2c] sm:$0x1]
        %v4424 = vld [vmem:[%s4042 + $0x30] sm:$0xf]
        %v4425 = vld [vmem:[%s4042 + $0x34] sm:$0xf]
        %v4426 = vld [vmem:[%s4042 + $0x38] sm:$0x1]
        %v4427 = vld [vmem:[%s4042 + $0x3c] sm:$0xf]
        %v4428 = vld [vmem:[%s4042 + $0x40] sm:$0xf]
        %v4429 = vld [vmem:[%s4042 + $0x44] sm:$0x1]
        %v4430 = vld [vmem:[%s4042 + $0x48] sm:$0xf]
        %v4431 = vld [vmem:[%s4042 + $0x4c] sm:$0xf]
        %v4432 = vld [vmem:[%s4042 + $0x50] sm:$0x1]
        %v4433 = vld [vmem:[%s4042 + $0x54] sm:$0xf]
        %v4434 = vld [vmem:[%s4042 + $0x58] sm:$0xf]
        %v4435 = vld [vmem:[%s4042 + $0x5c] sm:$0x1]
        %v4436 = vld [vmem:[%s4042 + $0x60] sm:$0xf]
        %v4437 = vld [vmem:[%s4042 + $0x64] sm:$0xf]
        %v4438 = vld [vmem:[%s4042 + $0x68] sm:$0x1]
        %v4439 = vld [vmem:[%s4042 + $0x6c] sm:$0xf]
        %v4440 = vld [vmem:[%s4042 + $0x70] sm:$0xf]
        %v4441 = vld [vmem:[%s4042 + $0x74] sm:$0x1]
        %v4442 = vld [vmem:[%s4042 + $0x78] sm:$0xf]
        %v4443 = vld [vmem:[%s4042 + $0x7c] sm:$0xf]
        %v4444 = vld [vmem:[%s4042 + $0x80] sm:$0x1]
        %v4445 = vld [vmem:[%s4042 + $0x84] sm:$0xf]
        %v4446 = vld [vmem:[%s4042 + $0x88] sm:$0xf]
        %v4447 = vld [vmem:[%s4042 + $0x8c] sm:$0x1]
        %v4448 = vld [vmem:[%s4042 + $0x90] sm:$0xf]
        %v4449 = vld [vmem:[%s4042 + $0x94] sm:$0xf]
        %v4450 = vld [vmem:[%s4042 + $0x98] sm:$0x1]
        %v4451 = vld [vmem:[%s4042 + $0x9c] sm:$0xf]
        %v4452 = vld [vmem:[%s4042 + $0xa0] sm:$0xf]
        %v4453 = vld [vmem:[%s4042 + $0xa4] sm:$0x1]
        %v4454 = vld [vmem:[%s4042 + $0xa8] sm:$0xf]
        %v4455 = vld [vmem:[%s4042 + $0xac] sm:$0xf]
        %v4456 = vld [vmem:[%s4042 + $0xb0] sm:$0x1]
        %v4457 = vld [vmem:[%s4042 + $0xb4] sm:$0xf]
        %v4458 = vld [vmem:[%s4042 + $0xb8] sm:$0xf]
        %v4459 = vld [vmem:[%s4042 + $0xbc] sm:$0x1]
        %v4461 = vshrl.u32 %v4412, 16
        %v4463 = vrot.slane %v4461, 4
        %v4464 = vshll.u32 %v4412, 16
        %v4466 = vrot.slane %v4464, 5
        %v4467 = vor.u32 %v4463, %v4466
        %v4468 = vrot.slane %v4467, 4
        %v4470 = vshll.u32 %v4413, 16
        %v4472 = vrot.slane %v4470, 5
        %v4473 = vsel %vm1027, %v4468, %v4472
        %v4474 = vshrl.u32 %v4413, 16
        %v4476 = vrot.slane %v4474, 4
        %v4477 = vor.u32 %v4476, %v4472
        %v4478 = vrot.slane %v4477, 4
        %v4480 = vshll.u32 %v4414, 16
        %v4482 = vrot.slane %v4480, 5
        %v4483 = vsel %vm1027, %v4478, %v4482
        %v4485 = vshrl.u32 %v4415, 16
        %v4487 = vrot.slane %v4485, 4
        %v4488 = vshll.u32 %v4415, 16
        %v4490 = vrot.slane %v4488, 5
        %v4491 = vor.u32 %v4487, %v4490
        %v4492 = vrot.slane %v4491, 4
        %v4494 = vshll.u32 %v4416, 16
        %v4496 = vrot.slane %v4494, 5
        %v4497 = vsel %vm1027, %v4492, %v4496
        %v4498 = vshrl.u32 %v4416, 16
        %v4500 = vrot.slane %v4498, 4
        %v4501 = vor.u32 %v4500, %v4496
        %v4502 = vrot.slane %v4501, 4
        %v4504 = vshll.u32 %v4417, 16
        %v4506 = vrot.slane %v4504, 5
        %v4507 = vsel %vm1027, %v4502, %v4506
        %v4509 = vshrl.u32 %v4418, 16
        %v4511 = vrot.slane %v4509, 4
        %v4512 = vshll.u32 %v4418, 16
        %v4514 = vrot.slane %v4512, 5
        %v4515 = vor.u32 %v4511, %v4514
        %v4516 = vrot.slane %v4515, 4
        %v4518 = vshll.u32 %v4419, 16
        %v4520 = vrot.slane %v4518, 5
        %v4521 = vsel %vm1027, %v4516, %v4520
        %v4522 = vshrl.u32 %v4419, 16
        %v4524 = vrot.slane %v4522, 4
        %v4525 = vor.u32 %v4524, %v4520
        %v4526 = vrot.slane %v4525, 4
        %v4528 = vshll.u32 %v4420, 16
        %v4530 = vrot.slane %v4528, 5
        %v4531 = vsel %vm1027, %v4526, %v4530
        %v4533 = vshrl.u32 %v4421, 16
        %v4535 = vrot.slane %v4533, 4
        %v4536 = vshll.u32 %v4421, 16
        %v4538 = vrot.slane %v4536, 5
        %v4539 = vor.u32 %v4535, %v4538
        %v4540 = vrot.slane %v4539, 4
        %v4542 = vshll.u32 %v4422, 16
        %v4544 = vrot.slane %v4542, 5
        %v4545 = vsel %vm1027, %v4540, %v4544
        %v4546 = vshrl.u32 %v4422, 16
        %v4548 = vrot.slane %v4546, 4
        %v4549 = vor.u32 %v4548, %v4544
        %v4550 = vrot.slane %v4549, 4
        %v4552 = vshll.u32 %v4423, 16
        %v4554 = vrot.slane %v4552, 5
        %v4555 = vsel %vm1027, %v4550, %v4554
        %v4557 = vshrl.u32 %v4424, 16
        %v4559 = vrot.slane %v4557, 4
        %v4560 = vshll.u32 %v4424, 16
        %v4562 = vrot.slane %v4560, 5
        %v4563 = vor.u32 %v4559, %v4562
        %v4564 = vrot.slane %v4563, 4
        %v4566 = vshll.u32 %v4425, 16
        %v4568 = vrot.slane %v4566, 5
        %v4569 = vsel %vm1027, %v4564, %v4568
        %v4570 = vshrl.u32 %v4425, 16
        %v4572 = vrot.slane %v4570, 4
        %v4573 = vor.u32 %v4572, %v4568
        %v4574 = vrot.slane %v4573, 4
        %v4576 = vshll.u32 %v4426, 16
        %v4578 = vrot.slane %v4576, 5
        %v4579 = vsel %vm1027, %v4574, %v4578
        %v4581 = vshrl.u32 %v4427, 16
        %v4583 = vrot.slane %v4581, 4
        %v4584 = vshll.u32 %v4427, 16
        %v4586 = vrot.slane %v4584, 5
        %v4587 = vor.u32 %v4583, %v4586
        %v4588 = vrot.slane %v4587, 4
        %v4590 = vshll.u32 %v4428, 16
        %v4592 = vrot.slane %v4590, 5
        %v4593 = vsel %vm1027, %v4588, %v4592
        %v4594 = vshrl.u32 %v4428, 16
        %v4596 = vrot.slane %v4594, 4
        %v4597 = vor.u32 %v4596, %v4592
        %v4598 = vrot.slane %v4597, 4
        %v4600 = vshll.u32 %v4429, 16
        %v4602 = vrot.slane %v4600, 5
        %v4603 = vsel %vm1027, %v4598, %v4602
        %v4605 = vshrl.u32 %v4430, 16
        %v4607 = vrot.slane %v4605, 4
        %v4608 = vshll.u32 %v4430, 16
        %v4610 = vrot.slane %v4608, 5
        %v4611 = vor.u32 %v4607, %v4610
        %v4612 = vrot.slane %v4611, 4
        %v4614 = vshll.u32 %v4431, 16
        %v4616 = vrot.slane %v4614, 5
        %v4617 = vsel %vm1027, %v4612, %v4616
        %v4618 = vshrl.u32 %v4431, 16
        %v4620 = vrot.slane %v4618, 4
        %v4621 = vor.u32 %v4620, %v4616
        %v4622 = vrot.slane %v4621, 4
        %v4624 = vshll.u32 %v4432, 16
        %v4626 = vrot.slane %v4624, 5
        %v4627 = vsel %vm1027, %v4622, %v4626
        %v4629 = vshrl.u32 %v4433, 16
        %v4631 = vrot.slane %v4629, 4
        %v4632 = vshll.u32 %v4433, 16
        %v4634 = vrot.slane %v4632, 5
        %v4635 = vor.u32 %v4631, %v4634
        %v4636 = vrot.slane %v4635, 4
        %v4638 = vshll.u32 %v4434, 16
        %v4640 = vrot.slane %v4638, 5
        %v4641 = vsel %vm1027, %v4636, %v4640
        %v4642 = vshrl.u32 %v4434, 16
        %v4644 = vrot.slane %v4642, 4
        %v4645 = vor.u32 %v4644, %v4640
        %v4646 = vrot.slane %v4645, 4
        %v4648 = vshll.u32 %v4435, 16
        %v4650 = vrot.slane %v4648, 5
        %v4651 = vsel %vm1027, %v4646, %v4650
        %v4653 = vshrl.u32 %v4436, 16
        %v4655 = vrot.slane %v4653, 4
        %v4656 = vshll.u32 %v4436, 16
        %v4658 = vrot.slane %v4656, 5
        %v4659 = vor.u32 %v4655, %v4658
        %v4660 = vrot.slane %v4659, 4
        %v4662 = vshll.u32 %v4437, 16
        %v4664 = vrot.slane %v4662, 5
        %v4665 = vsel %vm1027, %v4660, %v4664
        %v4666 = vshrl.u32 %v4437, 16
        %v4668 = vrot.slane %v4666, 4
        %v4669 = vor.u32 %v4668, %v4664
        %v4670 = vrot.slane %v4669, 4
        %v4672 = vshll.u32 %v4438, 16
        %v4674 = vrot.slane %v4672, 5
        %v4675 = vsel %vm1027, %v4670, %v4674
        %v4677 = vshrl.u32 %v4439, 16
        %v4679 = vrot.slane %v4677, 4
        %v4680 = vshll.u32 %v4439, 16
        %v4682 = vrot.slane %v4680, 5
        %v4683 = vor.u32 %v4679, %v4682
        %v4684 = vrot.slane %v4683, 4
        %v4686 = vshll.u32 %v4440, 16
        %v4688 = vrot.slane %v4686, 5
        %v4689 = vsel %vm1027, %v4684, %v4688
        %v4690 = vshrl.u32 %v4440, 16
        %v4692 = vrot.slane %v4690, 4
        %v4693 = vor.u32 %v4692, %v4688
        %v4694 = vrot.slane %v4693, 4
        %v4696 = vshll.u32 %v4441, 16
        %v4698 = vrot.slane %v4696, 5
        %v4699 = vsel %vm1027, %v4694, %v4698
        %v4701 = vshrl.u32 %v4442, 16
        %v4703 = vrot.slane %v4701, 4
        %v4704 = vshll.u32 %v4442, 16
        %v4706 = vrot.slane %v4704, 5
        %v4707 = vor.u32 %v4703, %v4706
        %v4708 = vrot.slane %v4707, 4
        %v4710 = vshll.u32 %v4443, 16
        %v4712 = vrot.slane %v4710, 5
        %v4713 = vsel %vm1027, %v4708, %v4712
        %v4714 = vshrl.u32 %v4443, 16
        %v4716 = vrot.slane %v4714, 4
        %v4717 = vor.u32 %v4716, %v4712
        %v4718 = vrot.slane %v4717, 4
        %v4720 = vshll.u32 %v4444, 16
        %v4722 = vrot.slane %v4720, 5
        %v4723 = vsel %vm1027, %v4718, %v4722
        %v4725 = vshrl.u32 %v4445, 16
        %v4727 = vrot.slane %v4725, 4
        %v4728 = vshll.u32 %v4445, 16
        %v4730 = vrot.slane %v4728, 5
        %v4731 = vor.u32 %v4727, %v4730
        %v4732 = vrot.slane %v4731, 4
        %v4734 = vshll.u32 %v4446, 16
        %v4736 = vrot.slane %v4734, 5
        %v4737 = vsel %vm1027, %v4732, %v4736
        %v4738 = vshrl.u32 %v4446, 16
        %v4740 = vrot.slane %v4738, 4
        %v4741 = vor.u32 %v4740, %v4736
        %v4742 = vrot.slane %v4741, 4
        %v4744 = vshll.u32 %v4447, 16
        %v4746 = vrot.slane %v4744, 5
        %v4747 = vsel %vm1027, %v4742, %v4746
        %v4749 = vshrl.u32 %v4448, 16
        %v4751 = vrot.slane %v4749, 4
        %v4752 = vshll.u32 %v4448, 16
        %v4754 = vrot.slane %v4752, 5
        %v4755 = vor.u32 %v4751, %v4754
        %v4756 = vrot.slane %v4755, 4
        %v4758 = vshll.u32 %v4449, 16
        %v4760 = vrot.slane %v4758, 5
        %v4761 = vsel %vm1027, %v4756, %v4760
        %v4762 = vshrl.u32 %v4449, 16
        %v4764 = vrot.slane %v4762, 4
        %v4765 = vor.u32 %v4764, %v4760
        %v4766 = vrot.slane %v4765, 4
        %v4768 = vshll.u32 %v4450, 16
        %v4770 = vrot.slane %v4768, 5
        %v4771 = vsel %vm1027, %v4766, %v4770
        %v4773 = vshrl.u32 %v4451, 16
        %v4775 = vrot.slane %v4773, 4
        %v4776 = vshll.u32 %v4451, 16
        %v4778 = vrot.slane %v4776, 5
        %v4779 = vor.u32 %v4775, %v4778
        %v4780 = vrot.slane %v4779, 4
        %v4782 = vshll.u32 %v4452, 16
        %v4784 = vrot.slane %v4782, 5
        %v4785 = vsel %vm1027, %v4780, %v4784
        %v4786 = vshrl.u32 %v4452, 16
        %v4788 = vrot.slane %v4786, 4
        %v4789 = vor.u32 %v4788, %v4784
        %v4790 = vrot.slane %v4789, 4
        %v4792 = vshll.u32 %v4453, 16
        %v4794 = vrot.slane %v4792, 5
        %v4795 = vsel %vm1027, %v4790, %v4794
        %v4797 = vshrl.u32 %v4454, 16
        %v4799 = vrot.slane %v4797, 4
        %v4800 = vshll.u32 %v4454, 16
        %v4802 = vrot.slane %v4800, 5
        %v4803 = vor.u32 %v4799, %v4802
        %v4804 = vrot.slane %v4803, 4
        %v4806 = vshll.u32 %v4455, 16
        %v4808 = vrot.slane %v4806, 5
        %v4809 = vsel %vm1027, %v4804, %v4808
        %v4810 = vshrl.u32 %v4455, 16
        %v4812 = vrot.slane %v4810, 4
        %v4813 = vor.u32 %v4812, %v4808
        %v4814 = vrot.slane %v4813, 4
        %v4816 = vshll.u32 %v4456, 16
        %v4818 = vrot.slane %v4816, 5
        %v4819 = vsel %vm1027, %v4814, %v4818
        %v4821 = vshrl.u32 %v4457, 16
        %v4823 = vrot.slane %v4821, 4
        %v4824 = vshll.u32 %v4457, 16
        %v4826 = vrot.slane %v4824, 5
        %v4827 = vor.u32 %v4823, %v4826
        %v4828 = vrot.slane %v4827, 4
        %v4830 = vshll.u32 %v4458, 16
        %v4832 = vrot.slane %v4830, 5
        %v4833 = vsel %vm1027, %v4828, %v4832
        %v4834 = vshrl.u32 %v4458, 16
        %v4836 = vrot.slane %v4834, 4
        %v4837 = vor.u32 %v4836, %v4832
        %v4838 = vrot.slane %v4837, 4
        %v4840 = vshll.u32 %v4459, 16
        %v4842 = vrot.slane %v4840, 5
        %v4843 = vsel %vm1027, %v4838, %v4842
        %v4844 = vld [vmem:[%s1 + $0x70] sm:$0xf]
        %v4845 = vld [vmem:[%s1 + $0x74] sm:$0xf]
        %v4846 = vld [vmem:[%s1 + $0x78] sm:$0xf]
        %v4847 = vld [vmem:[%s1 + $0x7c] sm:$0xf]
        %v4848 = vunpack.c.l.b16 %v4473
        %v4849 = vunpack.c.l.b16 %v4483
        %v4850 = vunpack.c.l.b16 %v4497
        %v4851 = vunpack.c.l.b16 %v4507
        %v4852 = vunpack.c.l.b16 %v4521
        %v4853 = vunpack.c.l.b16 %v4531
        %v4854 = vunpack.c.l.b16 %v4545
        %v4855 = vunpack.c.l.b16 %v4555
        %v4856 = vunpack.c.l.b16 %v4569
        %v4857 = vunpack.c.l.b16 %v4579
        %v4858 = vunpack.c.l.b16 %v4593
        %v4859 = vunpack.c.l.b16 %v4603
        %v4860 = vunpack.c.l.b16 %v4617
        %v4861 = vunpack.c.l.b16 %v4627
        %v4862 = vunpack.c.l.b16 %v4641
        %v4863 = vunpack.c.l.b16 %v4651
        %v4864 = vunpack.c.l.b16 %v4665
        %v4865 = vunpack.c.l.b16 %v4675
        %v4866 = vunpack.c.l.b16 %v4689
        %v4867 = vunpack.c.l.b16 %v4699
        %v4868 = vunpack.c.l.b16 %v4713
        %v4869 = vunpack.c.l.b16 %v4723
        %v4870 = vunpack.c.l.b16 %v4737
        %v4871 = vunpack.c.l.b16 %v4747
        %v4872 = vunpack.c.l.b16 %v4761
        %v4873 = vunpack.c.l.b16 %v4771
        %v4874 = vunpack.c.l.b16 %v4785
        %v4875 = vunpack.c.l.b16 %v4795
        %v4876 = vunpack.c.l.b16 %v4809
        %v4877 = vunpack.c.l.b16 %v4819
        %v4878 = vunpack.c.l.b16 %v4833
        %v4879 = vunpack.c.l.b16 %v4843
        %v4880 = vpack.c.b16 %v4849, %v4848
        %v4881 = vpack.c.b16 %v4851, %v4850
        %v4882 = vpack.c.b16 %v4853, %v4852
        %v4883 = vpack.c.b16 %v4855, %v4854
        %v4884 = vpack.c.b16 %v4857, %v4856
        %v4885 = vpack.c.b16 %v4859, %v4858
        %v4886 = vpack.c.b16 %v4861, %v4860
        %v4887 = vpack.c.b16 %v4863, %v4862
        %v4888 = vpack.c.b16 %v4865, %v4864
        %v4889 = vpack.c.b16 %v4867, %v4866
        %v4890 = vpack.c.b16 %v4869, %v4868
        %v4891 = vpack.c.b16 %v4871, %v4870
        %v4892 = vpack.c.b16 %v4873, %v4872
        %v4893 = vpack.c.b16 %v4875, %v4874
        %v4894 = vpack.c.b16 %v4877, %v4876
        %v4895 = vpack.c.b16 %v4879, %v4878
        %v4900 = vunpack.c.l.b16 %v4844
        %v4901 = vunpack.c.l.b16 %v4845
        %v4902 = vunpack.c.l.b16 %v4846
        %v4903 = vunpack.c.l.b16 %v4847
        %v4904 = vpack.c.b16 %v4901, %v4900
        %v4905 = vpack.c.b16 %v4903, %v4902
        %v4909 = vsel %vm1476, %v4880, 0
        %v4912 = vsel %vm1476, %v4881, 0
        %v4915 = vsel %vm1476, %v4882, 0
        %v4918 = vsel %vm1476, %v4883, 0
        %v4921 = vsel %vm1476, %v4884, 0
        %v4924 = vsel %vm1476, %v4885, 0
        %v4927 = vsel %vm1476, %v4886, 0
        %v4930 = vsel %vm1476, %v4887, 0
        %v4933 = vsel %vm1476, %v4888, 0
        %v4936 = vsel %vm1476, %v4889, 0
        %v4939 = vsel %vm1476, %v4890, 0
        %v4942 = vsel %vm1476, %v4891, 0
        %v4945 = vsel %vm1476, %v4892, 0
        %v4948 = vsel %vm1476, %v4893, 0
        %v4951 = vsel %vm1476, %v4894, 0
        %v4954 = vsel %vm1476, %v4895, 0
        %4956 = vmatprep.subr.bf16.mxu0 0
        %4957 = vmatpush1.bf16.msra.mxu0 0
        %4958 = vmatprep.subr.bf16.mxu0 0
        %4959 = vmatpush1.bf16.msra.mxu0 0
        %4960 = vmatprep.subr.bf16.mxu0 0
        %4961 = vmatpush1.bf16.msra.mxu0 0
        %4962 = vmatprep.subr.bf16.mxu0 0
        %4963 = vmatpush1.bf16.msra.mxu0 0
        %4964 = vmatprep.subr.bf16.mxu0 0
        %4965 = vmatpush1.bf16.msra.mxu0 0
        %4966 = vmatprep.subr.bf16.mxu0 0
        %4967 = vmatpush1.bf16.msra.mxu0 0
        %4968 = vmatprep.subr.bf16.mxu0 0
        %4969 = vmatpush1.bf16.msra.mxu0 %v4905
        %4970 = vmatprep.subr.bf16.mxu0 0
        %4971 = vmatpush1.bf16.msra.mxu0 %v4904
        %4972 = vmatprep.subr.bf16.mxu0 0
        %4973 = vmatpush2.bf16.msra.mxu0 0
        %4974 = vmatprep.subr.bf16.mxu0 0
        %4975 = vmatpush2.bf16.msra.mxu0 0
        %4976 = vmatprep.subr.bf16.mxu0 0
        %4977 = vmatpush2.bf16.msra.mxu0 0
        %4978 = vmatprep.subr.bf16.mxu0 0
        %4979 = vmatpush2.bf16.msra.mxu0 0
        %4980 = vmatprep.subr.bf16.mxu0 0
        %4981 = vmatpush2.bf16.msra.mxu0 0
        %4982 = vmatprep.subr.bf16.mxu0 0
        %4983 = vmatpush2.bf16.msra.mxu0 0
        %4984 = vmatprep.subr.bf16.mxu0 0
        %4985 = vmatpush2.bf16.msra.mxu0 0
        %4986 = vmatprep.subr.bf16.mxu0 0
        %4987 = vmatpush2.bf16.msra.mxu0 0
        %4988 = vmatprep.mubr.bf16.mxu0 0
        %4989 = vmatmul.mubr.bf16.gmra.mxu0 %v4909
        %v4990 = vpop.f32.mrf.mxu0
        %v4991 = vadd.f32 0.0, %v4990
        %v4992 = vpop.f32.mrf.mxu0
        %v4993 = vpop.f32.mrf.mxu0
        %v4994 = vadd.f32 0.0, %v4993
        %v4995 = vpop.f32.mrf.mxu0
        %4996 = vmatprep.mubr.bf16.mxu0 0
        %4997 = vmatmul.mubr.bf16.gmra.mxu0 %v4912
        %v4998 = vpop.f32.mrf.mxu0
        %v4999 = vadd.f32 0.0, %v4998
        %v5000 = vpop.f32.mrf.mxu0
        %v5001 = vpop.f32.mrf.mxu0
        %v5002 = vadd.f32 0.0, %v5001
        %v5003 = vpop.f32.mrf.mxu0
        %5004 = vmatprep.mubr.bf16.mxu0 0
        %5005 = vmatmul.mubr.bf16.gmra.mxu0 %v4915
        %v5006 = vpop.f32.mrf.mxu0
        %v5007 = vadd.f32 0.0, %v5006
        %v5008 = vpop.f32.mrf.mxu0
        %v5009 = vpop.f32.mrf.mxu0
        %v5010 = vadd.f32 0.0, %v5009
        %v5011 = vpop.f32.mrf.mxu0
        %5012 = vmatprep.mubr.bf16.mxu0 0
        %5013 = vmatmul.mubr.bf16.gmra.mxu0 %v4918
        %v5014 = vpop.f32.mrf.mxu0
        %v5015 = vadd.f32 0.0, %v5014
        %v5016 = vpop.f32.mrf.mxu0
        %v5017 = vpop.f32.mrf.mxu0
        %v5018 = vadd.f32 0.0, %v5017
        %v5019 = vpop.f32.mrf.mxu0
        %5020 = vmatprep.mubr.bf16.mxu0 0
        %5021 = vmatmul.mubr.bf16.gmra.mxu0 %v4921
        %v5022 = vpop.f32.mrf.mxu0
        %v5023 = vadd.f32 0.0, %v5022
        %v5024 = vpop.f32.mrf.mxu0
        %v5025 = vpop.f32.mrf.mxu0
        %v5026 = vadd.f32 0.0, %v5025
        %v5027 = vpop.f32.mrf.mxu0
        %5028 = vmatprep.mubr.bf16.mxu0 0
        %5029 = vmatmul.mubr.bf16.gmra.mxu0 %v4924
        %v5030 = vpop.f32.mrf.mxu0
        %v5031 = vadd.f32 0.0, %v5030
        %v5032 = vpop.f32.mrf.mxu0
        %v5033 = vpop.f32.mrf.mxu0
        %v5034 = vadd.f32 0.0, %v5033
        %v5035 = vpop.f32.mrf.mxu0
        %5036 = vmatprep.mubr.bf16.mxu0 0
        %5037 = vmatmul.mubr.bf16.gmra.mxu0 %v4927
        %v5038 = vpop.f32.mrf.mxu0
        %v5039 = vadd.f32 0.0, %v5038
        %v5040 = vpop.f32.mrf.mxu0
        %v5041 = vpop.f32.mrf.mxu0
        %v5042 = vadd.f32 0.0, %v5041
        %v5043 = vpop.f32.mrf.mxu0
        %5044 = vmatprep.mubr.bf16.mxu0 0
        %5045 = vmatmul.mubr.bf16.gmra.mxu0 %v4930
        %v5046 = vpop.f32.mrf.mxu0
        %v5047 = vadd.f32 0.0, %v5046
        %v5048 = vpop.f32.mrf.mxu0
        %v5049 = vpop.f32.mrf.mxu0
        %v5050 = vadd.f32 0.0, %v5049
        %v5051 = vpop.f32.mrf.mxu0
        %5052 = vmatprep.mubr.bf16.mxu0 0
        %5053 = vmatmul.mubr.bf16.gmra.mxu0 %v4933
        %v5054 = vpop.f32.mrf.mxu0
        %v5055 = vadd.f32 0.0, %v5054
        %v5056 = vpop.f32.mrf.mxu0
        %v5057 = vpop.f32.mrf.mxu0
        %v5058 = vadd.f32 0.0, %v5057
        %v5059 = vpop.f32.mrf.mxu0
        %5060 = vmatprep.mubr.bf16.mxu0 0
        %5061 = vmatmul.mubr.bf16.gmra.mxu0 %v4936
        %v5062 = vpop.f32.mrf.mxu0
        %v5063 = vadd.f32 0.0, %v5062
        %v5064 = vpop.f32.mrf.mxu0
        %v5065 = vpop.f32.mrf.mxu0
        %v5066 = vadd.f32 0.0, %v5065
        %v5067 = vpop.f32.mrf.mxu0
        %5068 = vmatprep.mubr.bf16.mxu0 0
        %5069 = vmatmul.mubr.bf16.gmra.mxu0 %v4939
        %v5070 = vpop.f32.mrf.mxu0
        %v5071 = vadd.f32 0.0, %v5070
        %v5072 = vpop.f32.mrf.mxu0
        %v5073 = vpop.f32.mrf.mxu0
        %v5074 = vadd.f32 0.0, %v5073
        %v5075 = vpop.f32.mrf.mxu0
        %5076 = vmatprep.mubr.bf16.mxu0 0
        %5077 = vmatmul.mubr.bf16.gmra.mxu0 %v4942
        %v5078 = vpop.f32.mrf.mxu0
        %v5079 = vadd.f32 0.0, %v5078
        %v5080 = vpop.f32.mrf.mxu0
        %v5081 = vpop.f32.mrf.mxu0
        %v5082 = vadd.f32 0.0, %v5081
        %v5083 = vpop.f32.mrf.mxu0
        %5084 = vmatprep.mubr.bf16.mxu0 0
        %5085 = vmatmul.mubr.bf16.gmra.mxu0 %v4945
        %v5086 = vpop.f32.mrf.mxu0
        %v5087 = vadd.f32 0.0, %v5086
        %v5088 = vpop.f32.mrf.mxu0
        %v5089 = vpop.f32.mrf.mxu0
        %v5090 = vadd.f32 0.0, %v5089
        %v5091 = vpop.f32.mrf.mxu0
        %5092 = vmatprep.mubr.bf16.mxu0 0
        %5093 = vmatmul.mubr.bf16.gmra.mxu0 %v4948
        %v5094 = vpop.f32.mrf.mxu0
        %v5095 = vadd.f32 0.0, %v5094
        %v5096 = vpop.f32.mrf.mxu0
        %v5097 = vpop.f32.mrf.mxu0
        %v5098 = vadd.f32 0.0, %v5097
        %v5099 = vpop.f32.mrf.mxu0
        %5100 = vmatprep.mubr.bf16.mxu0 0
        %5101 = vmatmul.mubr.bf16.gmra.mxu0 %v4951
        %v5102 = vpop.f32.mrf.mxu0
        %v5103 = vadd.f32 0.0, %v5102
        %v5104 = vpop.f32.mrf.mxu0
        %v5105 = vpop.f32.mrf.mxu0
        %v5106 = vadd.f32 0.0, %v5105
        %v5107 = vpop.f32.mrf.mxu0
        %5108 = vmatprep.mubr.bf16.mxu0 0
        %5109 = vmatmul.mubr.bf16.gmra.mxu0 %v4954
        %v5110 = vpop.f32.mrf.mxu0
        %v5111 = vadd.f32 0.0, %v5110
        %v5112 = vpop.f32.mrf.mxu0
        %v5113 = vpop.f32.mrf.mxu0
        %v5114 = vadd.f32 0.0, %v5113
        %v5115 = vpop.f32.mrf.mxu0
        %5116 = vdwg.mxu0
        %v5117 = vadd.f32 %v4380, %v4991
        %v5118 = vadd.f32 %v4381, %v4994
        %v5119 = vadd.f32 %v4382, %v4999
        %v5120 = vadd.f32 %v4383, %v5002
        %v5121 = vadd.f32 %v4384, %v5007
        %v5122 = vadd.f32 %v4385, %v5010
        %v5123 = vadd.f32 %v4386, %v5015
        %v5124 = vadd.f32 %v4387, %v5018
        %v5125 = vadd.f32 %v4388, %v5023
        %v5126 = vadd.f32 %v4389, %v5026
        %v5127 = vadd.f32 %v4390, %v5031
        %v5128 = vadd.f32 %v4391, %v5034
        %v5129 = vadd.f32 %v4392, %v5039
        %v5130 = vadd.f32 %v4393, %v5042
        %v5131 = vadd.f32 %v4394, %v5047
        %v5132 = vadd.f32 %v4395, %v5050
        %v5133 = vadd.f32 %v4396, %v5055
        %v5134 = vadd.f32 %v4397, %v5058
        %v5135 = vadd.f32 %v4398, %v5063
        %v5136 = vadd.f32 %v4399, %v5066
        %v5137 = vadd.f32 %v4400, %v5071
        %v5138 = vadd.f32 %v4401, %v5074
        %v5139 = vadd.f32 %v4402, %v5079
        %v5140 = vadd.f32 %v4403, %v5082
        %v5141 = vadd.f32 %v4404, %v5087
        %v5142 = vadd.f32 %v4405, %v5090
        %v5143 = vadd.f32 %v4406, %v5095
        %v5144 = vadd.f32 %v4407, %v5098
        %v5145 = vadd.f32 %v4408, %v5103
        %v5146 = vadd.f32 %v4409, %v5106
        %v5147 = vadd.f32 %v4410, %v5111
        %v5148 = vadd.f32 %v4411, %v5114
        %v5149 = vld [vmem:[%s4042] sm:$0xe]
        %v5150 = vld [vmem:[%s4042 + $0xc] sm:$0xe]
        %v5151 = vld [vmem:[%s4042 + $0x18] sm:$0xe]
        %v5152 = vld [vmem:[%s4042 + $0x24] sm:$0xe]
        %v5153 = vld [vmem:[%s4042 + $0x30] sm:$0xe]
        %v5154 = vld [vmem:[%s4042 + $0x3c] sm:$0xe]
        %v5155 = vld [vmem:[%s4042 + $0x48] sm:$0xe]
        %v5156 = vld [vmem:[%s4042 + $0x54] sm:$0xe]
        %v5157 = vld [vmem:[%s4042 + $0x60] sm:$0xe]
        %v5158 = vld [vmem:[%s4042 + $0x6c] sm:$0xe]
        %v5159 = vld [vmem:[%s4042 + $0x78] sm:$0xe]
        %v5160 = vld [vmem:[%s4042 + $0x84] sm:$0xe]
        %v5161 = vld [vmem:[%s4042 + $0x90] sm:$0xe]
        %v5162 = vld [vmem:[%s4042 + $0x9c] sm:$0xe]
        %v5163 = vld [vmem:[%s4042 + $0xa8] sm:$0xe]
        %v5164 = vld [vmem:[%s4042 + $0xb4] sm:$0xe]
        %v5213 = vrot.slane %v5149, 5
        %v5214 = vrot.slane %v5213, 4
        %v5215 = vrot.slane %v4413, 5
        %v5216 = vsel %vm2037, %v5214, %v5215
        %v5217 = vrot.slane %v5215, 4
        %v5218 = vrot.slane %v4414, 5
        %v5219 = vsel %vm2037, %v5217, %v5218
        %v5220 = vrot.slane %v5150, 5
        %v5221 = vrot.slane %v5220, 4
        %v5222 = vrot.slane %v4416, 5
        %v5223 = vsel %vm2037, %v5221, %v5222
        %v5224 = vrot.slane %v5222, 4
        %v5225 = vrot.slane %v4417, 5
        %v5226 = vsel %vm2037, %v5224, %v5225
        %v5227 = vrot.slane %v5151, 5
        %v5228 = vrot.slane %v5227, 4
        %v5229 = vrot.slane %v4419, 5
        %v5230 = vsel %vm2037, %v5228, %v5229
        %v5231 = vrot.slane %v5229, 4
        %v5232 = vrot.slane %v4420, 5
        %v5233 = vsel %vm2037, %v5231, %v5232
        %v5234 = vrot.slane %v5152, 5
        %v5235 = vrot.slane %v5234, 4
        %v5236 = vrot.slane %v4422, 5
        %v5237 = vsel %vm2037, %v5235, %v5236
        %v5238 = vrot.slane %v5236, 4
        %v5239 = vrot.slane %v4423, 5
        %v5240 = vsel %vm2037, %v5238, %v5239
        %v5241 = vrot.slane %v5153, 5
        %v5242 = vrot.slane %v5241, 4
        %v5243 = vrot.slane %v4425, 5
        %v5244 = vsel %vm2037, %v5242, %v5243
        %v5245 = vrot.slane %v5243, 4
        %v5246 = vrot.slane %v4426, 5
        %v5247 = vsel %vm2037, %v5245, %v5246
        %v5248 = vrot.slane %v5154, 5
        %v5249 = vrot.slane %v5248, 4
        %v5250 = vrot.slane %v4428, 5
        %v5251 = vsel %vm2037, %v5249, %v5250
        %v5252 = vrot.slane %v5250, 4
        %v5253 = vrot.slane %v4429, 5
        %v5254 = vsel %vm2037, %v5252, %v5253
        %v5255 = vrot.slane %v5155, 5
        %v5256 = vrot.slane %v5255, 4
        %v5257 = vrot.slane %v4431, 5
        %v5258 = vsel %vm2037, %v5256, %v5257
        %v5259 = vrot.slane %v5257, 4
        %v5260 = vrot.slane %v4432, 5
        %v5261 = vsel %vm2037, %v5259, %v5260
        %v5262 = vrot.slane %v5156, 5
        %v5263 = vrot.slane %v5262, 4
        %v5264 = vrot.slane %v4434, 5
        %v5265 = vsel %vm2037, %v5263, %v5264
        %v5266 = vrot.slane %v5264, 4
        %v5267 = vrot.slane %v4435, 5
        %v5268 = vsel %vm2037, %v5266, %v5267
        %v5269 = vrot.slane %v5157, 5
        %v5270 = vrot.slane %v5269, 4
        %v5271 = vrot.slane %v4437, 5
        %v5272 = vsel %vm2037, %v5270, %v5271
        %v5273 = vrot.slane %v5271, 4
        %v5274 = vrot.slane %v4438, 5
        %v5275 = vsel %vm2037, %v5273, %v5274
        %v5276 = vrot.slane %v5158, 5
        %v5277 = vrot.slane %v5276, 4
        %v5278 = vrot.slane %v4440, 5
        %v5279 = vsel %vm2037, %v5277, %v5278
        %v5280 = vrot.slane %v5278, 4
        %v5281 = vrot.slane %v4441, 5
        %v5282 = vsel %vm2037, %v5280, %v5281
        %v5283 = vrot.slane %v5159, 5
        %v5284 = vrot.slane %v5283, 4
        %v5285 = vrot.slane %v4443, 5
        %v5286 = vsel %vm2037, %v5284, %v5285
        %v5287 = vrot.slane %v5285, 4
        %v5288 = vrot.slane %v4444, 5
        %v5289 = vsel %vm2037, %v5287, %v5288
        %v5290 = vrot.slane %v5160, 5
        %v5291 = vrot.slane %v5290, 4
        %v5292 = vrot.slane %v4446, 5
        %v5293 = vsel %vm2037, %v5291, %v5292
        %v5294 = vrot.slane %v5292, 4
        %v5295 = vrot.slane %v4447, 5
        %v5296 = vsel %vm2037, %v5294, %v5295
        %v5297 = vrot.slane %v5161, 5
        %v5298 = vrot.slane %v5297, 4
        %v5299 = vrot.slane %v4449, 5
        %v5300 = vsel %vm2037, %v5298, %v5299
        %v5301 = vrot.slane %v5299, 4
        %v5302 = vrot.slane %v4450, 5
        %v5303 = vsel %vm2037, %v5301, %v5302
        %v5304 = vrot.slane %v5162, 5
        %v5305 = vrot.slane %v5304, 4
        %v5306 = vrot.slane %v4452, 5
        %v5307 = vsel %vm2037, %v5305, %v5306
        %v5308 = vrot.slane %v5306, 4
        %v5309 = vrot.slane %v4453, 5
        %v5310 = vsel %vm2037, %v5308, %v5309
        %v5311 = vrot.slane %v5163, 5
        %v5312 = vrot.slane %v5311, 4
        %v5313 = vrot.slane %v4455, 5
        %v5314 = vsel %vm2037, %v5312, %v5313
        %v5315 = vrot.slane %v5313, 4
        %v5316 = vrot.slane %v4456, 5
        %v5317 = vsel %vm2037, %v5315, %v5316
        %v5318 = vrot.slane %v5164, 5
        %v5319 = vrot.slane %v5318, 4
        %v5320 = vrot.slane %v4458, 5
        %v5321 = vsel %vm2037, %v5319, %v5320
        %v5322 = vrot.slane %v5320, 4
        %v5323 = vrot.slane %v4459, 5
        %v5324 = vsel %vm2037, %v5322, %v5323
        %v5325 = vld [vmem:[%s1 + $0x80] sm:$0xf]
        %v5326 = vld [vmem:[%s1 + $0x84] sm:$0xf]
        %v5327 = vld [vmem:[%s1 + $0x88] sm:$0xf]
        %v5328 = vld [vmem:[%s1 + $0x8c] sm:$0xf]
        %v5329 = vunpack.c.l.b16 %v5216
        %v5330 = vunpack.c.l.b16 %v5219
        %v5331 = vunpack.c.l.b16 %v5223
        %v5332 = vunpack.c.l.b16 %v5226
        %v5333 = vunpack.c.l.b16 %v5230
        %v5334 = vunpack.c.l.b16 %v5233
        %v5335 = vunpack.c.l.b16 %v5237
        %v5336 = vunpack.c.l.b16 %v5240
        %v5337 = vunpack.c.l.b16 %v5244
        %v5338 = vunpack.c.l.b16 %v5247
        %v5339 = vunpack.c.l.b16 %v5251
        %v5340 = vunpack.c.l.b16 %v5254
        %v5341 = vunpack.c.l.b16 %v5258
        %v5342 = vunpack.c.l.b16 %v5261
        %v5343 = vunpack.c.l.b16 %v5265
        %v5344 = vunpack.c.l.b16 %v5268
        %v5345 = vunpack.c.l.b16 %v5272
        %v5346 = vunpack.c.l.b16 %v5275
        %v5347 = vunpack.c.l.b16 %v5279
        %v5348 = vunpack.c.l.b16 %v5282
        %v5349 = vunpack.c.l.b16 %v5286
        %v5350 = vunpack.c.l.b16 %v5289
        %v5351 = vunpack.c.l.b16 %v5293
        %v5352 = vunpack.c.l.b16 %v5296
        %v5353 = vunpack.c.l.b16 %v5300
        %v5354 = vunpack.c.l.b16 %v5303
        %v5355 = vunpack.c.l.b16 %v5307
        %v5356 = vunpack.c.l.b16 %v5310
        %v5357 = vunpack.c.l.b16 %v5314
        %v5358 = vunpack.c.l.b16 %v5317
        %v5359 = vunpack.c.l.b16 %v5321
        %v5360 = vunpack.c.l.b16 %v5324
        %v5361 = vpack.c.b16 %v5330, %v5329
        %v5362 = vpack.c.b16 %v5332, %v5331
        %v5363 = vpack.c.b16 %v5334, %v5333
        %v5364 = vpack.c.b16 %v5336, %v5335
        %v5365 = vpack.c.b16 %v5338, %v5337
        %v5366 = vpack.c.b16 %v5340, %v5339
        %v5367 = vpack.c.b16 %v5342, %v5341
        %v5368 = vpack.c.b16 %v5344, %v5343
        %v5369 = vpack.c.b16 %v5346, %v5345
        %v5370 = vpack.c.b16 %v5348, %v5347
        %v5371 = vpack.c.b16 %v5350, %v5349
        %v5372 = vpack.c.b16 %v5352, %v5351
        %v5373 = vpack.c.b16 %v5354, %v5353
        %v5374 = vpack.c.b16 %v5356, %v5355
        %v5375 = vpack.c.b16 %v5358, %v5357
        %v5376 = vpack.c.b16 %v5360, %v5359
        %v5381 = vunpack.c.l.b16 %v5325
        %v5382 = vunpack.c.l.b16 %v5326
        %v5383 = vunpack.c.l.b16 %v5327
        %v5384 = vunpack.c.l.b16 %v5328
        %v5385 = vpack.c.b16 %v5382, %v5381
        %v5386 = vpack.c.b16 %v5384, %v5383
        %v5390 = vsel %vm1476, %v5361, 0
        %v5393 = vsel %vm1476, %v5362, 0
        %v5396 = vsel %vm1476, %v5363, 0
        %v5399 = vsel %vm1476, %v5364, 0
        %v5402 = vsel %vm1476, %v5365, 0
        %v5405 = vsel %vm1476, %v5366, 0
        %v5408 = vsel %vm1476, %v5367, 0
        %v5411 = vsel %vm1476, %v5368, 0
        %v5414 = vsel %vm1476, %v5369, 0
        %v5417 = vsel %vm1476, %v5370, 0
        %v5420 = vsel %vm1476, %v5371, 0
        %v5423 = vsel %vm1476, %v5372, 0
        %v5426 = vsel %vm1476, %v5373, 0
        %v5429 = vsel %vm1476, %v5374, 0
        %v5432 = vsel %vm1476, %v5375, 0
        %v5435 = vsel %vm1476, %v5376, 0
        %5437 = vmatprep.subr.bf16.mxu0 0
        %5438 = vmatpush1.bf16.msra.mxu0 0
        %5439 = vmatprep.subr.bf16.mxu0 0
        %5440 = vmatpush1.bf16.msra.mxu0 0
        %5441 = vmatprep.subr.bf16.mxu0 0
        %5442 = vmatpush1.bf16.msra.mxu0 0
        %5443 = vmatprep.subr.bf16.mxu0 0
        %5444 = vmatpush1.bf16.msra.mxu0 0
        %5445 = vmatprep.subr.bf16.mxu0 0
        %5446 = vmatpush1.bf16.msra.mxu0 0
        %5447 = vmatprep.subr.bf16.mxu0 0
        %5448 = vmatpush1.bf16.msra.mxu0 0
        %5449 = vmatprep.subr.bf16.mxu0 0
        %5450 = vmatpush1.bf16.msra.mxu0 %v5386
        %5451 = vmatprep.subr.bf16.mxu0 0
        %5452 = vmatpush1.bf16.msra.mxu0 %v5385
        %5453 = vmatprep.subr.bf16.mxu0 0
        %5454 = vmatpush2.bf16.msra.mxu0 0
        %5455 = vmatprep.subr.bf16.mxu0 0
        %5456 = vmatpush2.bf16.msra.mxu0 0
        %5457 = vmatprep.subr.bf16.mxu0 0
        %5458 = vmatpush2.bf16.msra.mxu0 0
        %5459 = vmatprep.subr.bf16.mxu0 0
        %5460 = vmatpush2.bf16.msra.mxu0 0
        %5461 = vmatprep.subr.bf16.mxu0 0
        %5462 = vmatpush2.bf16.msra.mxu0 0
        %5463 = vmatprep.subr.bf16.mxu0 0
        %5464 = vmatpush2.bf16.msra.mxu0 0
        %5465 = vmatprep.subr.bf16.mxu0 0
        %5466 = vmatpush2.bf16.msra.mxu0 0
        %5467 = vmatprep.subr.bf16.mxu0 0
        %5468 = vmatpush2.bf16.msra.mxu0 0
        %5469 = vmatprep.mubr.bf16.mxu0 0
        %5470 = vmatmul.mubr.bf16.gmra.mxu0 %v5390
        %v5471 = vpop.f32.mrf.mxu0
        %v5472 = vadd.f32 0.0, %v5471
        %v5473 = vpop.f32.mrf.mxu0
        %v5474 = vpop.f32.mrf.mxu0
        %v5475 = vadd.f32 0.0, %v5474
        %v5476 = vpop.f32.mrf.mxu0
        %5477 = vmatprep.mubr.bf16.mxu0 0
        %5478 = vmatmul.mubr.bf16.gmra.mxu0 %v5393
        %v5479 = vpop.f32.mrf.mxu0
        %v5480 = vadd.f32 0.0, %v5479
        %v5481 = vpop.f32.mrf.mxu0
        %v5482 = vpop.f32.mrf.mxu0
        %v5483 = vadd.f32 0.0, %v5482
        %v5484 = vpop.f32.mrf.mxu0
        %5485 = vmatprep.mubr.bf16.mxu0 0
        %5486 = vmatmul.mubr.bf16.gmra.mxu0 %v5396
        %v5487 = vpop.f32.mrf.mxu0
        %v5488 = vadd.f32 0.0, %v5487
        %v5489 = vpop.f32.mrf.mxu0
        %v5490 = vpop.f32.mrf.mxu0
        %v5491 = vadd.f32 0.0, %v5490
        %v5492 = vpop.f32.mrf.mxu0
        %5493 = vmatprep.mubr.bf16.mxu0 0
        %5494 = vmatmul.mubr.bf16.gmra.mxu0 %v5399
        %v5495 = vpop.f32.mrf.mxu0
        %v5496 = vadd.f32 0.0, %v5495
        %v5497 = vpop.f32.mrf.mxu0
        %v5498 = vpop.f32.mrf.mxu0
        %v5499 = vadd.f32 0.0, %v5498
        %v5500 = vpop.f32.mrf.mxu0
        %5501 = vmatprep.mubr.bf16.mxu0 0
        %5502 = vmatmul.mubr.bf16.gmra.mxu0 %v5402
        %v5503 = vpop.f32.mrf.mxu0
        %v5504 = vadd.f32 0.0, %v5503
        %v5505 = vpop.f32.mrf.mxu0
        %v5506 = vpop.f32.mrf.mxu0
        %v5507 = vadd.f32 0.0, %v5506
        %v5508 = vpop.f32.mrf.mxu0
        %5509 = vmatprep.mubr.bf16.mxu0 0
        %5510 = vmatmul.mubr.bf16.gmra.mxu0 %v5405
        %v5511 = vpop.f32.mrf.mxu0
        %v5512 = vadd.f32 0.0, %v5511
        %v5513 = vpop.f32.mrf.mxu0
        %v5514 = vpop.f32.mrf.mxu0
        %v5515 = vadd.f32 0.0, %v5514
        %v5516 = vpop.f32.mrf.mxu0
        %5517 = vmatprep.mubr.bf16.mxu0 0
        %5518 = vmatmul.mubr.bf16.gmra.mxu0 %v5408
        %v5519 = vpop.f32.mrf.mxu0
        %v5520 = vadd.f32 0.0, %v5519
        %v5521 = vpop.f32.mrf.mxu0
        %v5522 = vpop.f32.mrf.mxu0
        %v5523 = vadd.f32 0.0, %v5522
        %v5524 = vpop.f32.mrf.mxu0
        %5525 = vmatprep.mubr.bf16.mxu0 0
        %5526 = vmatmul.mubr.bf16.gmra.mxu0 %v5411
        %v5527 = vpop.f32.mrf.mxu0
        %v5528 = vadd.f32 0.0, %v5527
        %v5529 = vpop.f32.mrf.mxu0
        %v5530 = vpop.f32.mrf.mxu0
        %v5531 = vadd.f32 0.0, %v5530
        %v5532 = vpop.f32.mrf.mxu0
        %5533 = vmatprep.mubr.bf16.mxu0 0
        %5534 = vmatmul.mubr.bf16.gmra.mxu0 %v5414
        %v5535 = vpop.f32.mrf.mxu0
        %v5536 = vadd.f32 0.0, %v5535
        %v5537 = vpop.f32.mrf.mxu0
        %v5538 = vpop.f32.mrf.mxu0
        %v5539 = vadd.f32 0.0, %v5538
        %v5540 = vpop.f32.mrf.mxu0
        %5541 = vmatprep.mubr.bf16.mxu0 0
        %5542 = vmatmul.mubr.bf16.gmra.mxu0 %v5417
        %v5543 = vpop.f32.mrf.mxu0
        %v5544 = vadd.f32 0.0, %v5543
        %v5545 = vpop.f32.mrf.mxu0
        %v5546 = vpop.f32.mrf.mxu0
        %v5547 = vadd.f32 0.0, %v5546
        %v5548 = vpop.f32.mrf.mxu0
        %5549 = vmatprep.mubr.bf16.mxu0 0
        %5550 = vmatmul.mubr.bf16.gmra.mxu0 %v5420
        %v5551 = vpop.f32.mrf.mxu0
        %v5552 = vadd.f32 0.0, %v5551
        %v5553 = vpop.f32.mrf.mxu0
        %v5554 = vpop.f32.mrf.mxu0
        %v5555 = vadd.f32 0.0, %v5554
        %v5556 = vpop.f32.mrf.mxu0
        %5557 = vmatprep.mubr.bf16.mxu0 0
        %5558 = vmatmul.mubr.bf16.gmra.mxu0 %v5423
        %v5559 = vpop.f32.mrf.mxu0
        %v5560 = vadd.f32 0.0, %v5559
        %v5561 = vpop.f32.mrf.mxu0
        %v5562 = vpop.f32.mrf.mxu0
        %v5563 = vadd.f32 0.0, %v5562
        %v5564 = vpop.f32.mrf.mxu0
        %5565 = vmatprep.mubr.bf16.mxu0 0
        %5566 = vmatmul.mubr.bf16.gmra.mxu0 %v5426
        %v5567 = vpop.f32.mrf.mxu0
        %v5568 = vadd.f32 0.0, %v5567
        %v5569 = vpop.f32.mrf.mxu0
        %v5570 = vpop.f32.mrf.mxu0
        %v5571 = vadd.f32 0.0, %v5570
        %v5572 = vpop.f32.mrf.mxu0
        %5573 = vmatprep.mubr.bf16.mxu0 0
        %5574 = vmatmul.mubr.bf16.gmra.mxu0 %v5429
        %v5575 = vpop.f32.mrf.mxu0
        %v5576 = vadd.f32 0.0, %v5575
        %v5577 = vpop.f32.mrf.mxu0
        %v5578 = vpop.f32.mrf.mxu0
        %v5579 = vadd.f32 0.0, %v5578
        %v5580 = vpop.f32.mrf.mxu0
        %5581 = vmatprep.mubr.bf16.mxu0 0
        %5582 = vmatmul.mubr.bf16.gmra.mxu0 %v5432
        %v5583 = vpop.f32.mrf.mxu0
        %v5584 = vadd.f32 0.0, %v5583
        %v5585 = vpop.f32.mrf.mxu0
        %v5586 = vpop.f32.mrf.mxu0
        %v5587 = vadd.f32 0.0, %v5586
        %v5588 = vpop.f32.mrf.mxu0
        %5589 = vmatprep.mubr.bf16.mxu0 0
        %5590 = vmatmul.mubr.bf16.gmra.mxu0 %v5435
        %v5591 = vpop.f32.mrf.mxu0
        %v5592 = vadd.f32 0.0, %v5591
        %v5593 = vpop.f32.mrf.mxu0
        %v5594 = vpop.f32.mrf.mxu0
        %v5595 = vadd.f32 0.0, %v5594
        %v5596 = vpop.f32.mrf.mxu0
        %5597 = vdwg.mxu0
        %v5598 = vadd.f32 %v5117, %v5472
        %v5599 = vadd.f32 %v5118, %v5475
        %v5600 = vadd.f32 %v5119, %v5480
        %v5601 = vadd.f32 %v5120, %v5483
        %v5602 = vadd.f32 %v5121, %v5488
        %v5603 = vadd.f32 %v5122, %v5491
        %v5604 = vadd.f32 %v5123, %v5496
        %v5605 = vadd.f32 %v5124, %v5499
        %v5606 = vadd.f32 %v5125, %v5504
        %v5607 = vadd.f32 %v5126, %v5507
        %v5608 = vadd.f32 %v5127, %v5512
        %v5609 = vadd.f32 %v5128, %v5515
        %v5610 = vadd.f32 %v5129, %v5520
        %v5611 = vadd.f32 %v5130, %v5523
        %v5612 = vadd.f32 %v5131, %v5528
        %v5613 = vadd.f32 %v5132, %v5531
        %v5614 = vadd.f32 %v5133, %v5536
        %v5615 = vadd.f32 %v5134, %v5539
        %v5616 = vadd.f32 %v5135, %v5544
        %v5617 = vadd.f32 %v5136, %v5547
        %v5618 = vadd.f32 %v5137, %v5552
        %v5619 = vadd.f32 %v5138, %v5555
        %v5620 = vadd.f32 %v5139, %v5560
        %v5621 = vadd.f32 %v5140, %v5563
        %v5622 = vadd.f32 %v5141, %v5568
        %v5623 = vadd.f32 %v5142, %v5571
        %v5624 = vadd.f32 %v5143, %v5576
        %v5625 = vadd.f32 %v5144, %v5579
        %v5626 = vadd.f32 %v5145, %v5584
        %v5627 = vadd.f32 %v5146, %v5587
        %v5628 = vadd.f32 %v5147, %v5592
        %v5629 = vadd.f32 %v5148, %v5595
        %v5630 = vld [vmem:[%s2] sm:$0x1]
        %v5632 = vlaneseq
        %v5633 = vshrl.u32 %v5632, 7
        %v5634 = vsub.s32 0, %v5633
        %v5635 = vrot.slane %v5630, %v5634
        %v5637 = vadd.f32 %v5598, %v5635
        %v5638 = vadd.f32 %v5599, %v5635
        %v5639 = vadd.f32 %v5600, %v5635
        %v5640 = vadd.f32 %v5601, %v5635
        %v5641 = vadd.f32 %v5602, %v5635
        %v5642 = vadd.f32 %v5603, %v5635
        %v5643 = vadd.f32 %v5604, %v5635
        %v5644 = vadd.f32 %v5605, %v5635
        %v5645 = vadd.f32 %v5606, %v5635
        %v5646 = vadd.f32 %v5607, %v5635
        %v5647 = vadd.f32 %v5608, %v5635
        %v5648 = vadd.f32 %v5609, %v5635
        %v5649 = vadd.f32 %v5610, %v5635
        %v5650 = vadd.f32 %v5611, %v5635
        %v5651 = vadd.f32 %v5612, %v5635
        %v5652 = vadd.f32 %v5613, %v5635
        %v5653 = vadd.f32 %v5614, %v5635
        %v5654 = vadd.f32 %v5615, %v5635
        %v5655 = vadd.f32 %v5616, %v5635
        %v5656 = vadd.f32 %v5617, %v5635
        %v5657 = vadd.f32 %v5618, %v5635
        %v5658 = vadd.f32 %v5619, %v5635
        %v5659 = vadd.f32 %v5620, %v5635
        %v5660 = vadd.f32 %v5621, %v5635
        %v5661 = vadd.f32 %v5622, %v5635
        %v5662 = vadd.f32 %v5623, %v5635
        %v5663 = vadd.f32 %v5624, %v5635
        %v5664 = vadd.f32 %v5625, %v5635
        %v5665 = vadd.f32 %v5626, %v5635
        %v5666 = vadd.f32 %v5627, %v5635
        %v5667 = vadd.f32 %v5628, %v5635
        %v5668 = vadd.f32 %v5629, %v5635
        %v5669 = vmax.f32 %v5637, 0.0
        %v5670 = vmax.f32 %v5638, 0.0
        %v5671 = vmax.f32 %v5639, 0.0
        %v5672 = vmax.f32 %v5640, 0.0
        %v5673 = vmax.f32 %v5641, 0.0
        %v5674 = vmax.f32 %v5642, 0.0
        %v5675 = vmax.f32 %v5643, 0.0
        %v5676 = vmax.f32 %v5644, 0.0
        %v5677 = vmax.f32 %v5645, 0.0
        %v5678 = vmax.f32 %v5646, 0.0
        %v5679 = vmax.f32 %v5647, 0.0
        %v5680 = vmax.f32 %v5648, 0.0
        %v5681 = vmax.f32 %v5649, 0.0
        %v5682 = vmax.f32 %v5650, 0.0
        %v5683 = vmax.f32 %v5651, 0.0
        %v5684 = vmax.f32 %v5652, 0.0
        %v5685 = vmax.f32 %v5653, 0.0
        %v5686 = vmax.f32 %v5654, 0.0
        %v5687 = vmax.f32 %v5655, 0.0
        %v5688 = vmax.f32 %v5656, 0.0
        %v5689 = vmax.f32 %v5657, 0.0
        %v5690 = vmax.f32 %v5658, 0.0
        %v5691 = vmax.f32 %v5659, 0.0
        %v5692 = vmax.f32 %v5660, 0.0
        %v5693 = vmax.f32 %v5661, 0.0
        %v5694 = vmax.f32 %v5662, 0.0
        %v5695 = vmax.f32 %v5663, 0.0
        %v5696 = vmax.f32 %v5664, 0.0
        %v5697 = vmax.f32 %v5665, 0.0
        %v5698 = vmax.f32 %v5666, 0.0
        %v5699 = vmax.f32 %v5667, 0.0
        %v5700 = vmax.f32 %v5668, 0.0
        %v5701 = vpack.c.bf16 %v5670, %v5669
        %v5702 = vpack.c.bf16 %v5672, %v5671
        %v5703 = vpack.c.bf16 %v5674, %v5673
        %v5704 = vpack.c.bf16 %v5676, %v5675
        %v5705 = vpack.c.bf16 %v5678, %v5677
        %v5706 = vpack.c.bf16 %v5680, %v5679
        %v5707 = vpack.c.bf16 %v5682, %v5681
        %v5708 = vpack.c.bf16 %v5684, %v5683
        %v5709 = vpack.c.bf16 %v5686, %v5685
        %v5710 = vpack.c.bf16 %v5688, %v5687
        %v5711 = vpack.c.bf16 %v5690, %v5689
        %v5712 = vpack.c.bf16 %v5692, %v5691
        %v5713 = vpack.c.bf16 %v5694, %v5693
        %v5714 = vpack.c.bf16 %v5696, %v5695
        %v5715 = vpack.c.bf16 %v5698, %v5697
        %v5716 = vpack.c.bf16 %v5700, %v5699
        %v5733 = vunpack.c.l.b16 %v5701
        %v5734 = vunpack.c.h.b16 %v5701
        %v5735 = vunpack.c.l.b16 %v5702
        %v5736 = vunpack.c.h.b16 %v5702
        %v5737 = vunpack.c.l.b16 %v5703
        %v5738 = vunpack.c.h.b16 %v5703
        %v5739 = vunpack.c.l.b16 %v5704
        %v5740 = vunpack.c.h.b16 %v5704
        %v5741 = vunpack.c.l.b16 %v5705
        %v5742 = vunpack.c.h.b16 %v5705
        %v5743 = vunpack.c.l.b16 %v5706
        %v5744 = vunpack.c.h.b16 %v5706
        %v5745 = vunpack.c.l.b16 %v5707
        %v5746 = vunpack.c.h.b16 %v5707
        %v5747 = vunpack.c.l.b16 %v5708
        %v5748 = vunpack.c.h.b16 %v5708
        %v5749 = vunpack.c.l.b16 %v5709
        %v5750 = vunpack.c.h.b16 %v5709
        %v5751 = vunpack.c.l.b16 %v5710
        %v5752 = vunpack.c.h.b16 %v5710
        %v5753 = vunpack.c.l.b16 %v5711
        %v5754 = vunpack.c.h.b16 %v5711
        %v5755 = vunpack.c.l.b16 %v5712
        %v5756 = vunpack.c.h.b16 %v5712
        %v5757 = vunpack.c.l.b16 %v5713
        %v5758 = vunpack.c.h.b16 %v5713
        %v5759 = vunpack.c.l.b16 %v5714
        %v5760 = vunpack.c.h.b16 %v5714
        %v5761 = vunpack.c.l.b16 %v5715
        %v5762 = vunpack.c.h.b16 %v5715
        %v5763 = vunpack.c.l.b16 %v5716
        %v5764 = vunpack.c.h.b16 %v5716
        %v5765 = vpack.c.b16 %v5733, %v5733
        %v5766 = vpack.c.b16 %v5734, %v5734
        %v5767 = vpack.c.b16 %v5735, %v5735
        %v5768 = vpack.c.b16 %v5736, %v5736
        %v5769 = vpack.c.b16 %v5737, %v5737
        %v5770 = vpack.c.b16 %v5738, %v5738
        %v5771 = vpack.c.b16 %v5739, %v5739
        %v5772 = vpack.c.b16 %v5740, %v5740
        %v5773 = vpack.c.b16 %v5741, %v5741
        %v5774 = vpack.c.b16 %v5742, %v5742
        %v5775 = vpack.c.b16 %v5743, %v5743
        %v5776 = vpack.c.b16 %v5744, %v5744
        %v5777 = vpack.c.b16 %v5745, %v5745
        %v5778 = vpack.c.b16 %v5746, %v5746
        %v5779 = vpack.c.b16 %v5747, %v5747
        %v5780 = vpack.c.b16 %v5748, %v5748
        %v5781 = vpack.c.b16 %v5749, %v5749
        %v5782 = vpack.c.b16 %v5750, %v5750
        %v5783 = vpack.c.b16 %v5751, %v5751
        %v5784 = vpack.c.b16 %v5752, %v5752
        %v5785 = vpack.c.b16 %v5753, %v5753
        %v5786 = vpack.c.b16 %v5754, %v5754
        %v5787 = vpack.c.b16 %v5755, %v5755
        %v5788 = vpack.c.b16 %v5756, %v5756
        %v5789 = vpack.c.b16 %v5757, %v5757
        %v5790 = vpack.c.b16 %v5758, %v5758
        %v5791 = vpack.c.b16 %v5759, %v5759
        %v5792 = vpack.c.b16 %v5760, %v5760
        %v5793 = vpack.c.b16 %v5761, %v5761
        %v5794 = vpack.c.b16 %v5762, %v5762
        %v5795 = vpack.c.b16 %v5763, %v5763
        %v5796 = vpack.c.b16 %v5764, %v5764
        %v5798 = vshrl.u32 %v5765, 16
        %v5800 = vrot.slane %v5798, 7
        %v5801 = vshll.u32 %v5765, 16
        %v5803 = vor.u32 %v5800, %v5801
        %v5804 = vrot.slane %v5800, 4
        %v5806 = vshrl.u32 %v5766, 16
        %v5808 = vrot.slane %v5806, 7
        %v5809 = vshll.u32 %v5766, 16
        %v5811 = vor.u32 %v5808, %v5809
        %v5812 = vsel %vm538, %v5804, %v5811
        %v5813 = vrot.slane %v5808, 4
        %v5815 = vshrl.u32 %v5767, 16
        %v5817 = vrot.slane %v5815, 7
        %v5818 = vshll.u32 %v5767, 16
        %v5820 = vor.u32 %v5817, %v5818
        %v5821 = vrot.slane %v5817, 4
        %v5823 = vshrl.u32 %v5768, 16
        %v5825 = vrot.slane %v5823, 7
        %v5826 = vshll.u32 %v5768, 16
        %v5828 = vor.u32 %v5825, %v5826
        %v5829 = vsel %vm538, %v5821, %v5828
        %v5830 = vrot.slane %v5825, 4
        %v5832 = vshrl.u32 %v5769, 16
        %v5834 = vrot.slane %v5832, 7
        %v5835 = vshll.u32 %v5769, 16
        %v5837 = vor.u32 %v5834, %v5835
        %v5838 = vrot.slane %v5834, 4
        %v5840 = vshrl.u32 %v5770, 16
        %v5842 = vrot.slane %v5840, 7
        %v5843 = vshll.u32 %v5770, 16
        %v5845 = vor.u32 %v5842, %v5843
        %v5846 = vsel %vm538, %v5838, %v5845
        %v5847 = vrot.slane %v5842, 4
        %v5849 = vshrl.u32 %v5771, 16
        %v5851 = vrot.slane %v5849, 7
        %v5852 = vshll.u32 %v5771, 16
        %v5854 = vor.u32 %v5851, %v5852
        %v5855 = vrot.slane %v5851, 4
        %v5857 = vshrl.u32 %v5772, 16
        %v5859 = vrot.slane %v5857, 7
        %v5860 = vshll.u32 %v5772, 16
        %v5862 = vor.u32 %v5859, %v5860
        %v5863 = vsel %vm538, %v5855, %v5862
        %v5864 = vrot.slane %v5859, 4
        %v5866 = vshrl.u32 %v5773, 16
        %v5868 = vrot.slane %v5866, 7
        %v5869 = vshll.u32 %v5773, 16
        %v5871 = vor.u32 %v5868, %v5869
        %v5872 = vrot.slane %v5868, 4
        %v5874 = vshrl.u32 %v5774, 16
        %v5876 = vrot.slane %v5874, 7
        %v5877 = vshll.u32 %v5774, 16
        %v5879 = vor.u32 %v5876, %v5877
        %v5880 = vsel %vm538, %v5872, %v5879
        %v5881 = vrot.slane %v5876, 4
        %v5883 = vshrl.u32 %v5775, 16
        %v5885 = vrot.slane %v5883, 7
        %v5886 = vshll.u32 %v5775, 16
        %v5888 = vor.u32 %v5885, %v5886
        %v5889 = vrot.slane %v5885, 4
        %v5891 = vshrl.u32 %v5776, 16
        %v5893 = vrot.slane %v5891, 7
        %v5894 = vshll.u32 %v5776, 16
        %v5896 = vor.u32 %v5893, %v5894
        %v5897 = vsel %vm538, %v5889, %v5896
        %v5898 = vrot.slane %v5893, 4
        %v5900 = vshrl.u32 %v5777, 16
        %v5902 = vrot.slane %v5900, 7
        %v5903 = vshll.u32 %v5777, 16
        %v5905 = vor.u32 %v5902, %v5903
        %v5906 = vrot.slane %v5902, 4
        %v5908 = vshrl.u32 %v5778, 16
        %v5910 = vrot.slane %v5908, 7
        %v5911 = vshll.u32 %v5778, 16
        %v5913 = vor.u32 %v5910, %v5911
        %v5914 = vsel %vm538, %v5906, %v5913
        %v5915 = vrot.slane %v5910, 4
        %v5917 = vshrl.u32 %v5779, 16
        %v5919 = vrot.slane %v5917, 7
        %v5920 = vshll.u32 %v5779, 16
        %v5922 = vor.u32 %v5919, %v5920
        %v5923 = vrot.slane %v5919, 4
        %v5925 = vshrl.u32 %v5780, 16
        %v5927 = vrot.slane %v5925, 7
        %v5928 = vshll.u32 %v5780, 16
        %v5930 = vor.u32 %v5927, %v5928
        %v5931 = vsel %vm538, %v5923, %v5930
        %v5932 = vrot.slane %v5927, 4
        %v5934 = vshrl.u32 %v5781, 16
        %v5936 = vrot.slane %v5934, 7
        %v5937 = vshll.u32 %v5781, 16
        %v5939 = vor.u32 %v5936, %v5937
        %v5940 = vrot.slane %v5936, 4
        %v5942 = vshrl.u32 %v5782, 16
        %v5944 = vrot.slane %v5942, 7
        %v5945 = vshll.u32 %v5782, 16
        %v5947 = vor.u32 %v5944, %v5945
        %v5948 = vsel %vm538, %v5940, %v5947
        %v5949 = vrot.slane %v5944, 4
        %v5951 = vshrl.u32 %v5783, 16
        %v5953 = vrot.slane %v5951, 7
        %v5954 = vshll.u32 %v5783, 16
        %v5956 = vor.u32 %v5953, %v5954
        %v5957 = vrot.slane %v5953, 4
        %v5959 = vshrl.u32 %v5784, 16
        %v5961 = vrot.slane %v5959, 7
        %v5962 = vshll.u32 %v5784, 16
        %v5964 = vor.u32 %v5961, %v5962
        %v5965 = vsel %vm538, %v5957, %v5964
        %v5966 = vrot.slane %v5961, 4
        %v5968 = vshrl.u32 %v5785, 16
        %v5970 = vrot.slane %v5968, 7
        %v5971 = vshll.u32 %v5785, 16
        %v5973 = vor.u32 %v5970, %v5971
        %v5974 = vrot.slane %v5970, 4
        %v5976 = vshrl.u32 %v5786, 16
        %v5978 = vrot.slane %v5976, 7
        %v5979 = vshll.u32 %v5786, 16
        %v5981 = vor.u32 %v5978, %v5979
        %v5982 = vsel %vm538, %v5974, %v5981
        %v5983 = vrot.slane %v5978, 4
        %v5985 = vshrl.u32 %v5787, 16
        %v5987 = vrot.slane %v5985, 7
        %v5988 = vshll.u32 %v5787, 16
        %v5990 = vor.u32 %v5987, %v5988
        %v5991 = vrot.slane %v5987, 4
        %v5993 = vshrl.u32 %v5788, 16
        %v5995 = vrot.slane %v5993, 7
        %v5996 = vshll.u32 %v5788, 16
        %v5998 = vor.u32 %v5995, %v5996
        %v5999 = vsel %vm538, %v5991, %v5998
        %v6000 = vrot.slane %v5995, 4
        %v6002 = vshrl.u32 %v5789, 16
        %v6004 = vrot.slane %v6002, 7
        %v6005 = vshll.u32 %v5789, 16
        %v6007 = vor.u32 %v6004, %v6005
        %v6008 = vrot.slane %v6004, 4
        %v6010 = vshrl.u32 %v5790, 16
        %v6012 = vrot.slane %v6010, 7
        %v6013 = vshll.u32 %v5790, 16
        %v6015 = vor.u32 %v6012, %v6013
        %v6016 = vsel %vm538, %v6008, %v6015
        %v6017 = vrot.slane %v6012, 4
        %v6019 = vshrl.u32 %v5791, 16
        %v6021 = vrot.slane %v6019, 7
        %v6022 = vshll.u32 %v5791, 16
        %v6024 = vor.u32 %v6021, %v6022
        %v6025 = vrot.slane %v6021, 4
        %v6027 = vshrl.u32 %v5792, 16
        %v6029 = vrot.slane %v6027, 7
        %v6030 = vshll.u32 %v5792, 16
        %v6032 = vor.u32 %v6029, %v6030
        %v6033 = vsel %vm538, %v6025, %v6032
        %v6034 = vrot.slane %v6029, 4
        %v6036 = vshrl.u32 %v5793, 16
        %v6038 = vrot.slane %v6036, 7
        %v6039 = vshll.u32 %v5793, 16
        %v6041 = vor.u32 %v6038, %v6039
        %v6042 = vrot.slane %v6038, 4
        %v6044 = vshrl.u32 %v5794, 16
        %v6046 = vrot.slane %v6044, 7
        %v6047 = vshll.u32 %v5794, 16
        %v6049 = vor.u32 %v6046, %v6047
        %v6050 = vsel %vm538, %v6042, %v6049
        %v6051 = vrot.slane %v6046, 4
        %v6053 = vshrl.u32 %v5795, 16
        %v6055 = vrot.slane %v6053, 7
        %v6056 = vshll.u32 %v5795, 16
        %v6058 = vor.u32 %v6055, %v6056
        %v6059 = vrot.slane %v6055, 4
        %v6061 = vshrl.u32 %v5796, 16
        %v6063 = vrot.slane %v6061, 7
        %v6064 = vshll.u32 %v5796, 16
        %v6066 = vor.u32 %v6063, %v6064
        %v6067 = vsel %vm538, %v6059, %v6066
        %v6068 = vrot.slane %v6063, 4
        %v6117 = vsel %vm860, %v5803, %v2824
        %6118 = vst [vmem:[%s307] sm:$0xf] %v6117
        %6119 = vst.msk [vmem:[%s307 + $0x4] sm:$0xf] %vm298, %v5812
        %v6120 = vld [vmem:[%s307 + $0x8] sm:$0x1]
        %v6121 = vsel %vm310, %v5813, %v6120
        %6122 = vst [vmem:[%s307 + $0x8] sm:$0x1] %v6121
        %v6123 = vld [vmem:[%s307 + $0xc] sm:$0xf]
        %v6124 = vsel %vm860, %v5820, %v6123
        %6125 = vst [vmem:[%s307 + $0xc] sm:$0xf] %v6124
        %6126 = vst.msk [vmem:[%s307 + $0x10] sm:$0xf] %vm298, %v5829
        %v6127 = vld [vmem:[%s307 + $0x14] sm:$0x1]
        %v6128 = vsel %vm310, %v5830, %v6127
        %6129 = vst [vmem:[%s307 + $0x14] sm:$0x1] %v6128
        %v6130 = vld [vmem:[%s307 + $0x18] sm:$0xf]
        %v6131 = vsel %vm860, %v5837, %v6130
        %6132 = vst [vmem:[%s307 + $0x18] sm:$0xf] %v6131
        %6133 = vst.msk [vmem:[%s307 + $0x1c] sm:$0xf] %vm298, %v5846
        %v6134 = vld [vmem:[%s307 + $0x20] sm:$0x1]
        %v6135 = vsel %vm310, %v5847, %v6134
        %6136 = vst [vmem:[%s307 + $0x20] sm:$0x1] %v6135
        %v6137 = vld [vmem:[%s307 + $0x24] sm:$0xf]
        %v6138 = vsel %vm860, %v5854, %v6137
        %6139 = vst [vmem:[%s307 + $0x24] sm:$0xf] %v6138
        %6140 = vst.msk [vmem:[%s307 + $0x28] sm:$0xf] %vm298, %v5863
        %v6141 = vld [vmem:[%s307 + $0x2c] sm:$0x1]
        %v6142 = vsel %vm310, %v5864, %v6141
        %6143 = vst [vmem:[%s307 + $0x2c] sm:$0x1] %v6142
        %v6144 = vld [vmem:[%s307 + $0x30] sm:$0xf]
        %v6145 = vsel %vm860, %v5871, %v6144
        %6146 = vst [vmem:[%s307 + $0x30] sm:$0xf] %v6145
        %6147 = vst.msk [vmem:[%s307 + $0x34] sm:$0xf] %vm298, %v5880
        %v6148 = vld [vmem:[%s307 + $0x38] sm:$0x1]
        %v6149 = vsel %vm310, %v5881, %v6148
        %6150 = vst [vmem:[%s307 + $0x38] sm:$0x1] %v6149
        %v6151 = vld [vmem:[%s307 + $0x3c] sm:$0xf]
        %v6152 = vsel %vm860, %v5888, %v6151
        %6153 = vst [vmem:[%s307 + $0x3c] sm:$0xf] %v6152
        %6154 = vst.msk [vmem:[%s307 + $0x40] sm:$0xf] %vm298, %v5897
        %v6155 = vld [vmem:[%s307 + $0x44] sm:$0x1]
        %v6156 = vsel %vm310, %v5898, %v6155
        %6157 = vst [vmem:[%s307 + $0x44] sm:$0x1] %v6156
        %v6158 = vld [vmem:[%s307 + $0x48] sm:$0xf]
        %v6159 = vsel %vm860, %v5905, %v6158
        %6160 = vst [vmem:[%s307 + $0x48] sm:$0xf] %v6159
        %6161 = vst.msk [vmem:[%s307 + $0x4c] sm:$0xf] %vm298, %v5914
        %v6162 = vld [vmem:[%s307 + $0x50] sm:$0x1]
        %v6163 = vsel %vm310, %v5915, %v6162
        %6164 = vst [vmem:[%s307 + $0x50] sm:$0x1] %v6163
        %v6165 = vld [vmem:[%s307 + $0x54] sm:$0xf]
        %v6166 = vsel %vm860, %v5922, %v6165
        %6167 = vst [vmem:[%s307 + $0x54] sm:$0xf] %v6166
        %6168 = vst.msk [vmem:[%s307 + $0x58] sm:$0xf] %vm298, %v5931
        %v6169 = vld [vmem:[%s307 + $0x5c] sm:$0x1]
        %v6170 = vsel %vm310, %v5932, %v6169
        %6171 = vst [vmem:[%s307 + $0x5c] sm:$0x1] %v6170
        %v6172 = vld [vmem:[%s307 + $0x60] sm:$0xf]
        %v6173 = vsel %vm860, %v5939, %v6172
        %6174 = vst [vmem:[%s307 + $0x60] sm:$0xf] %v6173
        %6175 = vst.msk [vmem:[%s307 + $0x64] sm:$0xf] %vm298, %v5948
        %v6176 = vld [vmem:[%s307 + $0x68] sm:$0x1]
        %v6177 = vsel %vm310, %v5949, %v6176
        %6178 = vst [vmem:[%s307 + $0x68] sm:$0x1] %v6177
        %v6179 = vld [vmem:[%s307 + $0x6c] sm:$0xf]
        %v6180 = vsel %vm860, %v5956, %v6179
        %6181 = vst [vmem:[%s307 + $0x6c] sm:$0xf] %v6180
        %6182 = vst.msk [vmem:[%s307 + $0x70] sm:$0xf] %vm298, %v5965
        %v6183 = vld [vmem:[%s307 + $0x74] sm:$0x1]
        %v6184 = vsel %vm310, %v5966, %v6183
        %6185 = vst [vmem:[%s307 + $0x74] sm:$0x1] %v6184
        %v6186 = vld [vmem:[%s307 + $0x78] sm:$0xf]
        %v6187 = vsel %vm860, %v5973, %v6186
        %6188 = vst [vmem:[%s307 + $0x78] sm:$0xf] %v6187
        %6189 = vst.msk [vmem:[%s307 + $0x7c] sm:$0xf] %vm298, %v5982
        %v6190 = vld [vmem:[%s307 + $0x80] sm:$0x1]
        %v6191 = vsel %vm310, %v5983, %v6190
        %6192 = vst [vmem:[%s307 + $0x80] sm:$0x1] %v6191
        %v6193 = vld [vmem:[%s307 + $0x84] sm:$0xf]
        %v6194 = vsel %vm860, %v5990, %v6193
        %6195 = vst [vmem:[%s307 + $0x84] sm:$0xf] %v6194
        %6196 = vst.msk [vmem:[%s307 + $0x88] sm:$0xf] %vm298, %v5999
        %v6197 = vld [vmem:[%s307 + $0x8c] sm:$0x1]
        %v6198 = vsel %vm310, %v6000, %v6197
        %6199 = vst [vmem:[%s307 + $0x8c] sm:$0x1] %v6198
        %v6200 = vld [vmem:[%s307 + $0x90] sm:$0xf]
        %v6201 = vsel %vm860, %v6007, %v6200
        %6202 = vst [vmem:[%s307 + $0x90] sm:$0xf] %v6201
        %6203 = vst.msk [vmem:[%s307 + $0x94] sm:$0xf] %vm298, %v6016
        %v6204 = vld [vmem:[%s307 + $0x98] sm:$0x1]
        %v6205 = vsel %vm310, %v6017, %v6204
        %6206 = vst [vmem:[%s307 + $0x98] sm:$0x1] %v6205
        %v6207 = vld [vmem:[%s307 + $0x9c] sm:$0xf]
        %v6208 = vsel %vm860, %v6024, %v6207
        %6209 = vst [vmem:[%s307 + $0x9c] sm:$0xf] %v6208
        %6210 = vst.msk [vmem:[%s307 + $0xa0] sm:$0xf] %vm298, %v6033
        %v6211 = vld [vmem:[%s307 + $0xa4] sm:$0x1]
        %v6212 = vsel %vm310, %v6034, %v6211
        %6213 = vst [vmem:[%s307 + $0xa4] sm:$0x1] %v6212
        %v6214 = vld [vmem:[%s307 + $0xa8] sm:$0xf]
        %v6215 = vsel %vm860, %v6041, %v6214
        %6216 = vst [vmem:[%s307 + $0xa8] sm:$0xf] %v6215
        %6217 = vst.msk [vmem:[%s307 + $0xac] sm:$0xf] %vm298, %v6050
        %v6218 = vld [vmem:[%s307 + $0xb0] sm:$0x1]
        %v6219 = vsel %vm310, %v6051, %v6218
        %6220 = vst [vmem:[%s307 + $0xb0] sm:$0x1] %v6219
        %v6221 = vld [vmem:[%s307 + $0xb4] sm:$0xf]
        %v6222 = vsel %vm860, %v6058, %v6221
        %6223 = vst [vmem:[%s307 + $0xb4] sm:$0xf] %v6222
        %6224 = vst.msk [vmem:[%s307 + $0xb8] sm:$0xf] %vm298, %v6067
        %v6225 = vld [vmem:[%s307 + $0xbc] sm:$0x1]
        %v6226 = vsel %vm310, %v6068, %v6225
        %6227 = vst [vmem:[%s307 + $0xbc] sm:$0x1] %v6226
        %v6228 = vld [vmem:[#allocation2] sm:$0xf]
        %v6229 = vld [vmem:[#allocation2 + $0x4] sm:$0xf]
        %v6230 = vld [vmem:[#allocation2 + $0xc] sm:$0xf]
        %v6231 = vld [vmem:[#allocation2 + $0x10] sm:$0xf]
        %v6232 = vld [vmem:[#allocation2 + $0x18] sm:$0xf]
        %v6233 = vld [vmem:[#allocation2 + $0x1c] sm:$0xf]
        %v6234 = vld [vmem:[#allocation2 + $0x24] sm:$0xf]
        %v6235 = vld [vmem:[#allocation2 + $0x28] sm:$0xf]
        %v6236 = vld [vmem:[#allocation2 + $0x30] sm:$0xf]
        %v6237 = vld [vmem:[#allocation2 + $0x34] sm:$0xf]
        %v6238 = vld [vmem:[#allocation2 + $0x3c] sm:$0xf]
        %v6239 = vld [vmem:[#allocation2 + $0x40] sm:$0xf]
        %v6240 = vld [vmem:[#allocation2 + $0x48] sm:$0xf]
        %v6241 = vld [vmem:[#allocation2 + $0x4c] sm:$0xf]
        %v6242 = vld [vmem:[#allocation2 + $0x54] sm:$0xf]
        %v6243 = vld [vmem:[#allocation2 + $0x58] sm:$0xf]
        %v6244 = vld [vmem:[#allocation2 + $0x60] sm:$0xf]
        %v6245 = vld [vmem:[#allocation2 + $0x64] sm:$0xf]
        %v6246 = vld [vmem:[#allocation2 + $0x6c] sm:$0xf]
        %v6247 = vld [vmem:[#allocation2 + $0x70] sm:$0xf]
        %v6248 = vld [vmem:[#allocation2 + $0x78] sm:$0xf]
        %v6249 = vld [vmem:[#allocation2 + $0x7c] sm:$0xf]
        %v6250 = vld [vmem:[#allocation2 + $0x84] sm:$0xf]
        %v6251 = vld [vmem:[#allocation2 + $0x88] sm:$0xf]
        %v6252 = vld [vmem:[#allocation2 + $0x90] sm:$0xf]
        %v6253 = vld [vmem:[#allocation2 + $0x94] sm:$0xf]
        %v6254 = vld [vmem:[#allocation2 + $0x9c] sm:$0xf]
        %v6255 = vld [vmem:[#allocation2 + $0xa0] sm:$0xf]
        %v6256 = vld [vmem:[#allocation2 + $0xa8] sm:$0xf]
        %v6257 = vld [vmem:[#allocation2 + $0xac] sm:$0xf]
        %v6258 = vld [vmem:[#allocation2 + $0xb4] sm:$0xf]
        %v6259 = vld [vmem:[#allocation2 + $0xb8] sm:$0xf]
        %v6260 = vld [vmem:[%s3] sm:$0xf]
        %v6261 = vld [vmem:[%s3 + $0x4] sm:$0xf]
        %v6262 = vld [vmem:[%s3 + $0x8] sm:$0xf]
        %v6263 = vld [vmem:[%s3 + $0xc] sm:$0xf]
        %v6264 = vld [vmem:[#allocation2 + $0x8] sm:$0x1]
        %v6265 = vld [vmem:[#allocation2 + $0x14] sm:$0x1]
        %v6266 = vld [vmem:[#allocation2 + $0x20] sm:$0x1]
        %v6267 = vld [vmem:[#allocation2 + $0x2c] sm:$0x1]
        %v6268 = vld [vmem:[#allocation2 + $0x38] sm:$0x1]
        %v6269 = vld [vmem:[#allocation2 + $0x44] sm:$0x1]
        %v6270 = vld [vmem:[#allocation2 + $0x50] sm:$0x1]
        %v6271 = vld [vmem:[#allocation2 + $0x5c] sm:$0x1]
        %v6272 = vld [vmem:[#allocation2 + $0x68] sm:$0x1]
        %v6273 = vld [vmem:[#allocation2 + $0x74] sm:$0x1]
        %v6274 = vld [vmem:[#allocation2 + $0x80] sm:$0x1]
        %v6275 = vld [vmem:[#allocation2 + $0x8c] sm:$0x1]
        %v6276 = vld [vmem:[#allocation2 + $0x98] sm:$0x1]
        %v6277 = vld [vmem:[#allocation2 + $0xa4] sm:$0x1]
        %v6278 = vld [vmem:[#allocation2 + $0xb0] sm:$0x1]
        %v6279 = vld [vmem:[#allocation2 + $0xbc] sm:$0x1]
        %v6281 = vshrl.u32 %v6228, 16
        %v6283 = vrot.slane %v6281, 4
        %v6284 = vshll.u32 %v6228, 16
        %v6286 = vrot.slane %v6284, 5
        %v6287 = vor.u32 %v6283, %v6286
        %v6288 = vrot.slane %v6287, 4
        %v6290 = vshll.u32 %v6229, 16
        %v6292 = vrot.slane %v6290, 5
        %v6293 = vsel %vm1027, %v6288, %v6292
        %v6294 = vshrl.u32 %v6229, 16
        %v6296 = vrot.slane %v6294, 4
        %v6297 = vor.u32 %v6296, %v6292
        %v6298 = vrot.slane %v6297, 4
        %v6300 = vshll.u32 %v6264, 16
        %v6302 = vrot.slane %v6300, 5
        %v6303 = vsel %vm1027, %v6298, %v6302
        %v6305 = vshrl.u32 %v6230, 16
        %v6307 = vrot.slane %v6305, 4
        %v6308 = vshll.u32 %v6230, 16
        %v6310 = vrot.slane %v6308, 5
        %v6311 = vor.u32 %v6307, %v6310
        %v6312 = vrot.slane %v6311, 4
        %v6314 = vshll.u32 %v6231, 16
        %v6316 = vrot.slane %v6314, 5
        %v6317 = vsel %vm1027, %v6312, %v6316
        %v6318 = vshrl.u32 %v6231, 16
        %v6320 = vrot.slane %v6318, 4
        %v6321 = vor.u32 %v6320, %v6316
        %v6322 = vrot.slane %v6321, 4
        %v6324 = vshll.u32 %v6265, 16
        %v6326 = vrot.slane %v6324, 5
        %v6327 = vsel %vm1027, %v6322, %v6326
        %v6329 = vshrl.u32 %v6232, 16
        %v6331 = vrot.slane %v6329, 4
        %v6332 = vshll.u32 %v6232, 16
        %v6334 = vrot.slane %v6332, 5
        %v6335 = vor.u32 %v6331, %v6334
        %v6336 = vrot.slane %v6335, 4
        %v6338 = vshll.u32 %v6233, 16
        %v6340 = vrot.slane %v6338, 5
        %v6341 = vsel %vm1027, %v6336, %v6340
        %v6342 = vshrl.u32 %v6233, 16
        %v6344 = vrot.slane %v6342, 4
        %v6345 = vor.u32 %v6344, %v6340
        %v6346 = vrot.slane %v6345, 4
        %v6348 = vshll.u32 %v6266, 16
        %v6350 = vrot.slane %v6348, 5
        %v6351 = vsel %vm1027, %v6346, %v6350
        %v6353 = vshrl.u32 %v6234, 16
        %v6355 = vrot.slane %v6353, 4
        %v6356 = vshll.u32 %v6234, 16
        %v6358 = vrot.slane %v6356, 5
        %v6359 = vor.u32 %v6355, %v6358
        %v6360 = vrot.slane %v6359, 4
        %v6362 = vshll.u32 %v6235, 16
        %v6364 = vrot.slane %v6362, 5
        %v6365 = vsel %vm1027, %v6360, %v6364
        %v6366 = vshrl.u32 %v6235, 16
        %v6368 = vrot.slane %v6366, 4
        %v6369 = vor.u32 %v6368, %v6364
        %v6370 = vrot.slane %v6369, 4
        %v6372 = vshll.u32 %v6267, 16
        %v6374 = vrot.slane %v6372, 5
        %v6375 = vsel %vm1027, %v6370, %v6374
        %v6377 = vshrl.u32 %v6236, 16
        %v6379 = vrot.slane %v6377, 4
        %v6380 = vshll.u32 %v6236, 16
        %v6382 = vrot.slane %v6380, 5
        %v6383 = vor.u32 %v6379, %v6382
        %v6384 = vrot.slane %v6383, 4
        %v6386 = vshll.u32 %v6237, 16
        %v6388 = vrot.slane %v6386, 5
        %v6389 = vsel %vm1027, %v6384, %v6388
        %v6390 = vshrl.u32 %v6237, 16
        %v6392 = vrot.slane %v6390, 4
        %v6393 = vor.u32 %v6392, %v6388
        %v6394 = vrot.slane %v6393, 4
        %v6396 = vshll.u32 %v6268, 16
        %v6398 = vrot.slane %v6396, 5
        %v6399 = vsel %vm1027, %v6394, %v6398
        %v6401 = vshrl.u32 %v6238, 16
        %v6403 = vrot.slane %v6401, 4
        %v6404 = vshll.u32 %v6238, 16
        %v6406 = vrot.slane %v6404, 5
        %v6407 = vor.u32 %v6403, %v6406
        %v6408 = vrot.slane %v6407, 4
        %v6410 = vshll.u32 %v6239, 16
        %v6412 = vrot.slane %v6410, 5
        %v6413 = vsel %vm1027, %v6408, %v6412
        %v6414 = vshrl.u32 %v6239, 16
        %v6416 = vrot.slane %v6414, 4
        %v6417 = vor.u32 %v6416, %v6412
        %v6418 = vrot.slane %v6417, 4
        %v6420 = vshll.u32 %v6269, 16
        %v6422 = vrot.slane %v6420, 5
        %v6423 = vsel %vm1027, %v6418, %v6422
        %v6425 = vshrl.u32 %v6240, 16
        %v6427 = vrot.slane %v6425, 4
        %v6428 = vshll.u32 %v6240, 16
        %v6430 = vrot.slane %v6428, 5
        %v6431 = vor.u32 %v6427, %v6430
        %v6432 = vrot.slane %v6431, 4
        %v6434 = vshll.u32 %v6241, 16
        %v6436 = vrot.slane %v6434, 5
        %v6437 = vsel %vm1027, %v6432, %v6436
        %v6438 = vshrl.u32 %v6241, 16
        %v6440 = vrot.slane %v6438, 4
        %v6441 = vor.u32 %v6440, %v6436
        %v6442 = vrot.slane %v6441, 4
        %v6444 = vshll.u32 %v6270, 16
        %v6446 = vrot.slane %v6444, 5
        %v6447 = vsel %vm1027, %v6442, %v6446
        %v6449 = vshrl.u32 %v6242, 16
        %v6451 = vrot.slane %v6449, 4
        %v6452 = vshll.u32 %v6242, 16
        %v6454 = vrot.slane %v6452, 5
        %v6455 = vor.u32 %v6451, %v6454
        %v6456 = vrot.slane %v6455, 4
        %v6458 = vshll.u32 %v6243, 16
        %v6460 = vrot.slane %v6458, 5
        %v6461 = vsel %vm1027, %v6456, %v6460
        %v6462 = vshrl.u32 %v6243, 16
        %v6464 = vrot.slane %v6462, 4
        %v6465 = vor.u32 %v6464, %v6460
        %v6466 = vrot.slane %v6465, 4
        %v6468 = vshll.u32 %v6271, 16
        %v6470 = vrot.slane %v6468, 5
        %v6471 = vsel %vm1027, %v6466, %v6470
        %v6473 = vshrl.u32 %v6244, 16
        %v6475 = vrot.slane %v6473, 4
        %v6476 = vshll.u32 %v6244, 16
        %v6478 = vrot.slane %v6476, 5
        %v6479 = vor.u32 %v6475, %v6478
        %v6480 = vrot.slane %v6479, 4
        %v6482 = vshll.u32 %v6245, 16
        %v6484 = vrot.slane %v6482, 5
        %v6485 = vsel %vm1027, %v6480, %v6484
        %v6486 = vshrl.u32 %v6245, 16
        %v6488 = vrot.slane %v6486, 4
        %v6489 = vor.u32 %v6488, %v6484
        %v6490 = vrot.slane %v6489, 4
        %v6492 = vshll.u32 %v6272, 16
        %v6494 = vrot.slane %v6492, 5
        %v6495 = vsel %vm1027, %v6490, %v6494
        %v6497 = vshrl.u32 %v6246, 16
        %v6499 = vrot.slane %v6497, 4
        %v6500 = vshll.u32 %v6246, 16
        %v6502 = vrot.slane %v6500, 5
        %v6503 = vor.u32 %v6499, %v6502
        %v6504 = vrot.slane %v6503, 4
        %v6506 = vshll.u32 %v6247, 16
        %v6508 = vrot.slane %v6506, 5
        %v6509 = vsel %vm1027, %v6504, %v6508
        %v6510 = vshrl.u32 %v6247, 16
        %v6512 = vrot.slane %v6510, 4
        %v6513 = vor.u32 %v6512, %v6508
        %v6514 = vrot.slane %v6513, 4
        %v6516 = vshll.u32 %v6273, 16
        %v6518 = vrot.slane %v6516, 5
        %v6519 = vsel %vm1027, %v6514, %v6518
        %v6521 = vshrl.u32 %v6248, 16
        %v6523 = vrot.slane %v6521, 4
        %v6524 = vshll.u32 %v6248, 16
        %v6526 = vrot.slane %v6524, 5
        %v6527 = vor.u32 %v6523, %v6526
        %v6528 = vrot.slane %v6527, 4
        %v6530 = vshll.u32 %v6249, 16
        %v6532 = vrot.slane %v6530, 5
        %v6533 = vsel %vm1027, %v6528, %v6532
        %v6534 = vshrl.u32 %v6249, 16
        %v6536 = vrot.slane %v6534, 4
        %v6537 = vor.u32 %v6536, %v6532
        %v6538 = vrot.slane %v6537, 4
        %v6540 = vshll.u32 %v6274, 16
        %v6542 = vrot.slane %v6540, 5
        %v6543 = vsel %vm1027, %v6538, %v6542
        %v6545 = vshrl.u32 %v6250, 16
        %v6547 = vrot.slane %v6545, 4
        %v6548 = vshll.u32 %v6250, 16
        %v6550 = vrot.slane %v6548, 5
        %v6551 = vor.u32 %v6547, %v6550
        %v6552 = vrot.slane %v6551, 4
        %v6554 = vshll.u32 %v6251, 16
        %v6556 = vrot.slane %v6554, 5
        %v6557 = vsel %vm1027, %v6552, %v6556
        %v6558 = vshrl.u32 %v6251, 16
        %v6560 = vrot.slane %v6558, 4
        %v6561 = vor.u32 %v6560, %v6556
        %v6562 = vrot.slane %v6561, 4
        %v6564 = vshll.u32 %v6275, 16
        %v6566 = vrot.slane %v6564, 5
        %v6567 = vsel %vm1027, %v6562, %v6566
        %v6569 = vshrl.u32 %v6252, 16
        %v6571 = vrot.slane %v6569, 4
        %v6572 = vshll.u32 %v6252, 16
        %v6574 = vrot.slane %v6572, 5
        %v6575 = vor.u32 %v6571, %v6574
        %v6576 = vrot.slane %v6575, 4
        %v6578 = vshll.u32 %v6253, 16
        %v6580 = vrot.slane %v6578, 5
        %v6581 = vsel %vm1027, %v6576, %v6580
        %v6582 = vshrl.u32 %v6253, 16
        %v6584 = vrot.slane %v6582, 4
        %v6585 = vor.u32 %v6584, %v6580
        %v6586 = vrot.slane %v6585, 4
        %v6588 = vshll.u32 %v6276, 16
        %v6590 = vrot.slane %v6588, 5
        %v6591 = vsel %vm1027, %v6586, %v6590
        %v6593 = vshrl.u32 %v6254, 16
        %v6595 = vrot.slane %v6593, 4
        %v6596 = vshll.u32 %v6254, 16
        %v6598 = vrot.slane %v6596, 5
        %v6599 = vor.u32 %v6595, %v6598
        %v6600 = vrot.slane %v6599, 4
        %v6602 = vshll.u32 %v6255, 16
        %v6604 = vrot.slane %v6602, 5
        %v6605 = vsel %vm1027, %v6600, %v6604
        %v6606 = vshrl.u32 %v6255, 16
        %v6608 = vrot.slane %v6606, 4
        %v6609 = vor.u32 %v6608, %v6604
        %v6610 = vrot.slane %v6609, 4
        %v6612 = vshll.u32 %v6277, 16
        %v6614 = vrot.slane %v6612, 5
        %v6615 = vsel %vm1027, %v6610, %v6614
        %v6617 = vshrl.u32 %v6256, 16
        %v6619 = vrot.slane %v6617, 4
        %v6620 = vshll.u32 %v6256, 16
        %v6622 = vrot.slane %v6620, 5
        %v6623 = vor.u32 %v6619, %v6622
        %v6624 = vrot.slane %v6623, 4
        %v6626 = vshll.u32 %v6257, 16
        %v6628 = vrot.slane %v6626, 5
        %v6629 = vsel %vm1027, %v6624, %v6628
        %v6630 = vshrl.u32 %v6257, 16
        %v6632 = vrot.slane %v6630, 4
        %v6633 = vor.u32 %v6632, %v6628
        %v6634 = vrot.slane %v6633, 4
        %v6636 = vshll.u32 %v6278, 16
        %v6638 = vrot.slane %v6636, 5
        %v6639 = vsel %vm1027, %v6634, %v6638
        %v6641 = vshrl.u32 %v6258, 16
        %v6643 = vrot.slane %v6641, 4
        %v6644 = vshll.u32 %v6258, 16
        %v6646 = vrot.slane %v6644, 5
        %v6647 = vor.u32 %v6643, %v6646
        %v6648 = vrot.slane %v6647, 4
        %v6650 = vshll.u32 %v6259, 16
        %v6652 = vrot.slane %v6650, 5
        %v6653 = vsel %vm1027, %v6648, %v6652
        %v6654 = vshrl.u32 %v6259, 16
        %v6656 = vrot.slane %v6654, 4
        %v6657 = vor.u32 %v6656, %v6652
        %v6658 = vrot.slane %v6657, 4
        %v6660 = vshll.u32 %v6279, 16
        %v6662 = vrot.slane %v6660, 5
        %v6663 = vsel %vm1027, %v6658, %v6662
        %v6664 = vld [vmem:[%s3 + $0x10] sm:$0xf]
        %v6665 = vld [vmem:[%s3 + $0x14] sm:$0xf]
        %v6666 = vld [vmem:[%s3 + $0x18] sm:$0xf]
        %v6667 = vld [vmem:[%s3 + $0x1c] sm:$0xf]
        %v6668 = vunpack.c.l.b16 %v6293
        %v6669 = vunpack.c.l.b16 %v6303
        %v6670 = vunpack.c.l.b16 %v6317
        %v6671 = vunpack.c.l.b16 %v6327
        %v6672 = vunpack.c.l.b16 %v6341
        %v6673 = vunpack.c.l.b16 %v6351
        %v6674 = vunpack.c.l.b16 %v6365
        %v6675 = vunpack.c.l.b16 %v6375
        %v6676 = vunpack.c.l.b16 %v6389
        %v6677 = vunpack.c.l.b16 %v6399
        %v6678 = vunpack.c.l.b16 %v6413
        %v6679 = vunpack.c.l.b16 %v6423
        %v6680 = vunpack.c.l.b16 %v6437
        %v6681 = vunpack.c.l.b16 %v6447
        %v6682 = vunpack.c.l.b16 %v6461
        %v6683 = vunpack.c.l.b16 %v6471
        %v6684 = vunpack.c.l.b16 %v6485
        %v6685 = vunpack.c.l.b16 %v6495
        %v6686 = vunpack.c.l.b16 %v6509
        %v6687 = vunpack.c.l.b16 %v6519
        %v6688 = vunpack.c.l.b16 %v6533
        %v6689 = vunpack.c.l.b16 %v6543
        %v6690 = vunpack.c.l.b16 %v6557
        %v6691 = vunpack.c.l.b16 %v6567
        %v6692 = vunpack.c.l.b16 %v6581
        %v6693 = vunpack.c.l.b16 %v6591
        %v6694 = vunpack.c.l.b16 %v6605
        %v6695 = vunpack.c.l.b16 %v6615
        %v6696 = vunpack.c.l.b16 %v6629
        %v6697 = vunpack.c.l.b16 %v6639
        %v6698 = vunpack.c.l.b16 %v6653
        %v6699 = vunpack.c.l.b16 %v6663
        %v6700 = vpack.c.b16 %v6669, %v6668
        %v6701 = vpack.c.b16 %v6671, %v6670
        %v6702 = vpack.c.b16 %v6673, %v6672
        %v6703 = vpack.c.b16 %v6675, %v6674
        %v6704 = vpack.c.b16 %v6677, %v6676
        %v6705 = vpack.c.b16 %v6679, %v6678
        %v6706 = vpack.c.b16 %v6681, %v6680
        %v6707 = vpack.c.b16 %v6683, %v6682
        %v6708 = vpack.c.b16 %v6685, %v6684
        %v6709 = vpack.c.b16 %v6687, %v6686
        %v6710 = vpack.c.b16 %v6689, %v6688
        %v6711 = vpack.c.b16 %v6691, %v6690
        %v6712 = vpack.c.b16 %v6693, %v6692
        %v6713 = vpack.c.b16 %v6695, %v6694
        %v6714 = vpack.c.b16 %v6697, %v6696
        %v6715 = vpack.c.b16 %v6699, %v6698
        %v6720 = vunpack.c.l.b16 %v6664
        %v6721 = vunpack.c.l.b16 %v6665
        %v6722 = vunpack.c.l.b16 %v6666
        %v6723 = vunpack.c.l.b16 %v6667
        %v6724 = vpack.c.b16 %v6721, %v6720
        %v6725 = vpack.c.b16 %v6723, %v6722
        %v6729 = vsel %vm1476, %v6700, 0
        %v6732 = vsel %vm1476, %v6701, 0
        %v6735 = vsel %vm1476, %v6702, 0
        %v6738 = vsel %vm1476, %v6703, 0
        %v6741 = vsel %vm1476, %v6704, 0
        %v6744 = vsel %vm1476, %v6705, 0
        %v6747 = vsel %vm1476, %v6706, 0
        %v6750 = vsel %vm1476, %v6707, 0
        %v6753 = vsel %vm1476, %v6708, 0
        %v6756 = vsel %vm1476, %v6709, 0
        %v6759 = vsel %vm1476, %v6710, 0
        %v6762 = vsel %vm1476, %v6711, 0
        %v6765 = vsel %vm1476, %v6712, 0
        %v6768 = vsel %vm1476, %v6713, 0
        %v6771 = vsel %vm1476, %v6714, 0
        %v6774 = vsel %vm1476, %v6715, 0
        %6776 = vmatprep.subr.bf16.mxu0 0
        %6777 = vmatpush1.bf16.msra.mxu0 0
        %6778 = vmatprep.subr.bf16.mxu0 0
        %6779 = vmatpush1.bf16.msra.mxu0 0
        %6780 = vmatprep.subr.bf16.mxu0 0
        %6781 = vmatpush1.bf16.msra.mxu0 0
        %6782 = vmatprep.subr.bf16.mxu0 0
        %6783 = vmatpush1.bf16.msra.mxu0 0
        %6784 = vmatprep.subr.bf16.mxu0 0
        %6785 = vmatpush1.bf16.msra.mxu0 0
        %6786 = vmatprep.subr.bf16.mxu0 0
        %6787 = vmatpush1.bf16.msra.mxu0 0
        %6788 = vmatprep.subr.bf16.mxu0 0
        %6789 = vmatpush1.bf16.msra.mxu0 %v6725
        %6790 = vmatprep.subr.bf16.mxu0 0
        %6791 = vmatpush1.bf16.msra.mxu0 %v6724
        %6792 = vmatprep.subr.bf16.mxu0 0
        %6793 = vmatpush2.bf16.msra.mxu0 0
        %6794 = vmatprep.subr.bf16.mxu0 0
        %6795 = vmatpush2.bf16.msra.mxu0 0
        %6796 = vmatprep.subr.bf16.mxu0 0
        %6797 = vmatpush2.bf16.msra.mxu0 0
        %6798 = vmatprep.subr.bf16.mxu0 0
        %6799 = vmatpush2.bf16.msra.mxu0 0
        %6800 = vmatprep.subr.bf16.mxu0 0
        %6801 = vmatpush2.bf16.msra.mxu0 0
        %6802 = vmatprep.subr.bf16.mxu0 0
        %6803 = vmatpush2.bf16.msra.mxu0 0
        %6804 = vmatprep.subr.bf16.mxu0 0
        %6805 = vmatpush2.bf16.msra.mxu0 0
        %6806 = vmatprep.subr.bf16.mxu0 0
        %6807 = vmatpush2.bf16.msra.mxu0 0
        %6808 = vmatprep.mubr.bf16.mxu0 0
        %6809 = vmatmul.mubr.bf16.gmra.mxu0 %v6729
        %v6810 = vpop.f32.mrf.mxu0
        %v6811 = vadd.f32 0.0, %v6810
        %v6812 = vpop.f32.mrf.mxu0
        %v6813 = vpop.f32.mrf.mxu0
        %v6814 = vadd.f32 0.0, %v6813
        %v6815 = vpop.f32.mrf.mxu0
        %6816 = vmatprep.mubr.bf16.mxu0 0
        %6817 = vmatmul.mubr.bf16.gmra.mxu0 %v6732
        %v6818 = vpop.f32.mrf.mxu0
        %v6819 = vadd.f32 0.0, %v6818
        %v6820 = vpop.f32.mrf.mxu0
        %v6821 = vpop.f32.mrf.mxu0
        %v6822 = vadd.f32 0.0, %v6821
        %v6823 = vpop.f32.mrf.mxu0
        %6824 = vmatprep.mubr.bf16.mxu0 0
        %6825 = vmatmul.mubr.bf16.gmra.mxu0 %v6735
        %v6826 = vpop.f32.mrf.mxu0
        %v6827 = vadd.f32 0.0, %v6826
        %v6828 = vpop.f32.mrf.mxu0
        %v6829 = vpop.f32.mrf.mxu0
        %v6830 = vadd.f32 0.0, %v6829
        %v6831 = vpop.f32.mrf.mxu0
        %6832 = vmatprep.mubr.bf16.mxu0 0
        %6833 = vmatmul.mubr.bf16.gmra.mxu0 %v6738
        %v6834 = vpop.f32.mrf.mxu0
        %v6835 = vadd.f32 0.0, %v6834
        %v6836 = vpop.f32.mrf.mxu0
        %v6837 = vpop.f32.mrf.mxu0
        %v6838 = vadd.f32 0.0, %v6837
        %v6839 = vpop.f32.mrf.mxu0
        %6840 = vmatprep.mubr.bf16.mxu0 0
        %6841 = vmatmul.mubr.bf16.gmra.mxu0 %v6741
        %v6842 = vpop.f32.mrf.mxu0
        %v6843 = vadd.f32 0.0, %v6842
        %v6844 = vpop.f32.mrf.mxu0
        %v6845 = vpop.f32.mrf.mxu0
        %v6846 = vadd.f32 0.0, %v6845
        %v6847 = vpop.f32.mrf.mxu0
        %6848 = vmatprep.mubr.bf16.mxu0 0
        %6849 = vmatmul.mubr.bf16.gmra.mxu0 %v6744
        %v6850 = vpop.f32.mrf.mxu0
        %v6851 = vadd.f32 0.0, %v6850
        %v6852 = vpop.f32.mrf.mxu0
        %v6853 = vpop.f32.mrf.mxu0
        %v6854 = vadd.f32 0.0, %v6853
        %v6855 = vpop.f32.mrf.mxu0
        %6856 = vmatprep.mubr.bf16.mxu0 0
        %6857 = vmatmul.mubr.bf16.gmra.mxu0 %v6747
        %v6858 = vpop.f32.mrf.mxu0
        %v6859 = vadd.f32 0.0, %v6858
        %v6860 = vpop.f32.mrf.mxu0
        %v6861 = vpop.f32.mrf.mxu0
        %v6862 = vadd.f32 0.0, %v6861
        %v6863 = vpop.f32.mrf.mxu0
        %6864 = vmatprep.mubr.bf16.mxu0 0
        %6865 = vmatmul.mubr.bf16.gmra.mxu0 %v6750
        %v6866 = vpop.f32.mrf.mxu0
        %v6867 = vadd.f32 0.0, %v6866
        %v6868 = vpop.f32.mrf.mxu0
        %v6869 = vpop.f32.mrf.mxu0
        %v6870 = vadd.f32 0.0, %v6869
        %v6871 = vpop.f32.mrf.mxu0
        %6872 = vmatprep.mubr.bf16.mxu0 0
        %6873 = vmatmul.mubr.bf16.gmra.mxu0 %v6753
        %v6874 = vpop.f32.mrf.mxu0
        %v6875 = vadd.f32 0.0, %v6874
        %v6876 = vpop.f32.mrf.mxu0
        %v6877 = vpop.f32.mrf.mxu0
        %v6878 = vadd.f32 0.0, %v6877
        %v6879 = vpop.f32.mrf.mxu0
        %6880 = vmatprep.mubr.bf16.mxu0 0
        %6881 = vmatmul.mubr.bf16.gmra.mxu0 %v6756
        %v6882 = vpop.f32.mrf.mxu0
        %v6883 = vadd.f32 0.0, %v6882
        %v6884 = vpop.f32.mrf.mxu0
        %v6885 = vpop.f32.mrf.mxu0
        %v6886 = vadd.f32 0.0, %v6885
        %v6887 = vpop.f32.mrf.mxu0
        %6888 = vmatprep.mubr.bf16.mxu0 0
        %6889 = vmatmul.mubr.bf16.gmra.mxu0 %v6759
        %v6890 = vpop.f32.mrf.mxu0
        %v6891 = vadd.f32 0.0, %v6890
        %v6892 = vpop.f32.mrf.mxu0
        %v6893 = vpop.f32.mrf.mxu0
        %v6894 = vadd.f32 0.0, %v6893
        %v6895 = vpop.f32.mrf.mxu0
        %6896 = vmatprep.mubr.bf16.mxu0 0
        %6897 = vmatmul.mubr.bf16.gmra.mxu0 %v6762
        %v6898 = vpop.f32.mrf.mxu0
        %v6899 = vadd.f32 0.0, %v6898
        %v6900 = vpop.f32.mrf.mxu0
        %v6901 = vpop.f32.mrf.mxu0
        %v6902 = vadd.f32 0.0, %v6901
        %v6903 = vpop.f32.mrf.mxu0
        %6904 = vmatprep.mubr.bf16.mxu0 0
        %6905 = vmatmul.mubr.bf16.gmra.mxu0 %v6765
        %v6906 = vpop.f32.mrf.mxu0
        %v6907 = vadd.f32 0.0, %v6906
        %v6908 = vpop.f32.mrf.mxu0
        %v6909 = vpop.f32.mrf.mxu0
        %v6910 = vadd.f32 0.0, %v6909
        %v6911 = vpop.f32.mrf.mxu0
        %6912 = vmatprep.mubr.bf16.mxu0 0
        %6913 = vmatmul.mubr.bf16.gmra.mxu0 %v6768
        %v6914 = vpop.f32.mrf.mxu0
        %v6915 = vadd.f32 0.0, %v6914
        %v6916 = vpop.f32.mrf.mxu0
        %v6917 = vpop.f32.mrf.mxu0
        %v6918 = vadd.f32 0.0, %v6917
        %v6919 = vpop.f32.mrf.mxu0
        %6920 = vmatprep.mubr.bf16.mxu0 0
        %6921 = vmatmul.mubr.bf16.gmra.mxu0 %v6771
        %v6922 = vpop.f32.mrf.mxu0
        %v6923 = vadd.f32 0.0, %v6922
        %v6924 = vpop.f32.mrf.mxu0
        %v6925 = vpop.f32.mrf.mxu0
        %v6926 = vadd.f32 0.0, %v6925
        %v6927 = vpop.f32.mrf.mxu0
        %6928 = vmatprep.mubr.bf16.mxu0 0
        %6929 = vmatmul.mubr.bf16.gmra.mxu0 %v6774
        %v6930 = vpop.f32.mrf.mxu0
        %v6931 = vadd.f32 0.0, %v6930
        %v6932 = vpop.f32.mrf.mxu0
        %v6933 = vpop.f32.mrf.mxu0
        %v6934 = vadd.f32 0.0, %v6933
        %v6935 = vpop.f32.mrf.mxu0
        %6936 = vdwg.mxu0
        %v6969 = vunpack.c.l.b16 %v6228
        %v6970 = vunpack.c.l.b16 %v6229
        %v6971 = vunpack.c.l.b16 %v6230
        %v6972 = vunpack.c.l.b16 %v6231
        %v6973 = vunpack.c.l.b16 %v6232
        %v6974 = vunpack.c.l.b16 %v6233
        %v6975 = vunpack.c.l.b16 %v6234
        %v6976 = vunpack.c.l.b16 %v6235
        %v6977 = vunpack.c.l.b16 %v6236
        %v6978 = vunpack.c.l.b16 %v6237
        %v6979 = vunpack.c.l.b16 %v6238
        %v6980 = vunpack.c.l.b16 %v6239
        %v6981 = vunpack.c.l.b16 %v6240
        %v6982 = vunpack.c.l.b16 %v6241
        %v6983 = vunpack.c.l.b16 %v6242
        %v6984 = vunpack.c.l.b16 %v6243
        %v6985 = vunpack.c.l.b16 %v6244
        %v6986 = vunpack.c.l.b16 %v6245
        %v6987 = vunpack.c.l.b16 %v6246
        %v6988 = vunpack.c.l.b16 %v6247
        %v6989 = vunpack.c.l.b16 %v6248
        %v6990 = vunpack.c.l.b16 %v6249
        %v6991 = vunpack.c.l.b16 %v6250
        %v6992 = vunpack.c.l.b16 %v6251
        %v6993 = vunpack.c.l.b16 %v6252
        %v6994 = vunpack.c.l.b16 %v6253
        %v6995 = vunpack.c.l.b16 %v6254
        %v6996 = vunpack.c.l.b16 %v6255
        %v6997 = vunpack.c.l.b16 %v6256
        %v6998 = vunpack.c.l.b16 %v6257
        %v6999 = vunpack.c.l.b16 %v6258
        %v7000 = vunpack.c.l.b16 %v6259
        %v7001 = vpack.c.b16 %v6970, %v6969
        %v7002 = vpack.c.b16 %v6972, %v6971
        %v7003 = vpack.c.b16 %v6974, %v6973
        %v7004 = vpack.c.b16 %v6976, %v6975
        %v7005 = vpack.c.b16 %v6978, %v6977
        %v7006 = vpack.c.b16 %v6980, %v6979
        %v7007 = vpack.c.b16 %v6982, %v6981
        %v7008 = vpack.c.b16 %v6984, %v6983
        %v7009 = vpack.c.b16 %v6986, %v6985
        %v7010 = vpack.c.b16 %v6988, %v6987
        %v7011 = vpack.c.b16 %v6990, %v6989
        %v7012 = vpack.c.b16 %v6992, %v6991
        %v7013 = vpack.c.b16 %v6994, %v6993
        %v7014 = vpack.c.b16 %v6996, %v6995
        %v7015 = vpack.c.b16 %v6998, %v6997
        %v7016 = vpack.c.b16 %v7000, %v6999
        %v7021 = vunpack.c.l.b16 %v6260
        %v7022 = vunpack.c.l.b16 %v6261
        %v7023 = vunpack.c.l.b16 %v6262
        %v7024 = vunpack.c.l.b16 %v6263
        %v7025 = vpack.c.b16 %v7022, %v7021
        %v7026 = vpack.c.b16 %v7024, %v7023
        %v7030 = vsel %vm1476, %v7001, 0
        %v7033 = vsel %vm1476, %v7002, 0
        %v7036 = vsel %vm1476, %v7003, 0
        %v7039 = vsel %vm1476, %v7004, 0
        %v7042 = vsel %vm1476, %v7005, 0
        %v7045 = vsel %vm1476, %v7006, 0
        %v7048 = vsel %vm1476, %v7007, 0
        %v7051 = vsel %vm1476, %v7008, 0
        %v7054 = vsel %vm1476, %v7009, 0
        %v7057 = vsel %vm1476, %v7010, 0
        %v7060 = vsel %vm1476, %v7011, 0
        %v7063 = vsel %vm1476, %v7012, 0
        %v7066 = vsel %vm1476, %v7013, 0
        %v7069 = vsel %vm1476, %v7014, 0
        %v7072 = vsel %vm1476, %v7015, 0
        %v7075 = vsel %vm1476, %v7016, 0
        %7077 = vmatprep.subr.bf16.mxu0 0
        %7078 = vmatpush1.bf16.msra.mxu0 0
        %7079 = vmatprep.subr.bf16.mxu0 0
        %7080 = vmatpush1.bf16.msra.mxu0 0
        %7081 = vmatprep.subr.bf16.mxu0 0
        %7082 = vmatpush1.bf16.msra.mxu0 0
        %7083 = vmatprep.subr.bf16.mxu0 0
        %7084 = vmatpush1.bf16.msra.mxu0 0
        %7085 = vmatprep.subr.bf16.mxu0 0
        %7086 = vmatpush1.bf16.msra.mxu0 0
        %7087 = vmatprep.subr.bf16.mxu0 0
        %7088 = vmatpush1.bf16.msra.mxu0 0
        %7089 = vmatprep.subr.bf16.mxu0 0
        %7090 = vmatpush1.bf16.msra.mxu0 %v7026
        %7091 = vmatprep.subr.bf16.mxu0 0
        %7092 = vmatpush1.bf16.msra.mxu0 %v7025
        %7093 = vmatprep.subr.bf16.mxu0 0
        %7094 = vmatpush2.bf16.msra.mxu0 0
        %7095 = vmatprep.subr.bf16.mxu0 0
        %7096 = vmatpush2.bf16.msra.mxu0 0
        %7097 = vmatprep.subr.bf16.mxu0 0
        %7098 = vmatpush2.bf16.msra.mxu0 0
        %7099 = vmatprep.subr.bf16.mxu0 0
        %7100 = vmatpush2.bf16.msra.mxu0 0
        %7101 = vmatprep.subr.bf16.mxu0 0
        %7102 = vmatpush2.bf16.msra.mxu0 0
        %7103 = vmatprep.subr.bf16.mxu0 0
        %7104 = vmatpush2.bf16.msra.mxu0 0
        %7105 = vmatprep.subr.bf16.mxu0 0
        %7106 = vmatpush2.bf16.msra.mxu0 0
        %7107 = vmatprep.subr.bf16.mxu0 0
        %7108 = vmatpush2.bf16.msra.mxu0 0
        %7109 = vmatprep.mubr.bf16.mxu0 0
        %7110 = vmatmul.mubr.bf16.gmra.mxu0 %v7030
        %v7111 = vpop.f32.mrf.mxu0
        %v7112 = vadd.f32 %v6811, %v7111
        %v7113 = vpop.f32.mrf.mxu0
        %v7114 = vpop.f32.mrf.mxu0
        %v7115 = vadd.f32 %v6814, %v7114
        %v7116 = vpop.f32.mrf.mxu0
        %7117 = vmatprep.mubr.bf16.mxu0 0
        %7118 = vmatmul.mubr.bf16.gmra.mxu0 %v7033
        %v7119 = vpop.f32.mrf.mxu0
        %v7120 = vadd.f32 %v6819, %v7119
        %v7121 = vpop.f32.mrf.mxu0
        %v7122 = vpop.f32.mrf.mxu0
        %v7123 = vadd.f32 %v6822, %v7122
        %v7124 = vpop.f32.mrf.mxu0
        %7125 = vmatprep.mubr.bf16.mxu0 0
        %7126 = vmatmul.mubr.bf16.gmra.mxu0 %v7036
        %v7127 = vpop.f32.mrf.mxu0
        %v7128 = vadd.f32 %v6827, %v7127
        %v7129 = vpop.f32.mrf.mxu0
        %v7130 = vpop.f32.mrf.mxu0
        %v7131 = vadd.f32 %v6830, %v7130
        %v7132 = vpop.f32.mrf.mxu0
        %7133 = vmatprep.mubr.bf16.mxu0 0
        %7134 = vmatmul.mubr.bf16.gmra.mxu0 %v7039
        %v7135 = vpop.f32.mrf.mxu0
        %v7136 = vadd.f32 %v6835, %v7135
        %v7137 = vpop.f32.mrf.mxu0
        %v7138 = vpop.f32.mrf.mxu0
        %v7139 = vadd.f32 %v6838, %v7138
        %v7140 = vpop.f32.mrf.mxu0
        %7141 = vmatprep.mubr.bf16.mxu0 0
        %7142 = vmatmul.mubr.bf16.gmra.mxu0 %v7042
        %v7143 = vpop.f32.mrf.mxu0
        %v7144 = vadd.f32 %v6843, %v7143
        %v7145 = vpop.f32.mrf.mxu0
        %v7146 = vpop.f32.mrf.mxu0
        %v7147 = vadd.f32 %v6846, %v7146
        %v7148 = vpop.f32.mrf.mxu0
        %7149 = vmatprep.mubr.bf16.mxu0 0
        %7150 = vmatmul.mubr.bf16.gmra.mxu0 %v7045
        %v7151 = vpop.f32.mrf.mxu0
        %v7152 = vadd.f32 %v6851, %v7151
        %v7153 = vpop.f32.mrf.mxu0
        %v7154 = vpop.f32.mrf.mxu0
        %v7155 = vadd.f32 %v6854, %v7154
        %v7156 = vpop.f32.mrf.mxu0
        %7157 = vmatprep.mubr.bf16.mxu0 0
        %7158 = vmatmul.mubr.bf16.gmra.mxu0 %v7048
        %v7159 = vpop.f32.mrf.mxu0
        %v7160 = vadd.f32 %v6859, %v7159
        %v7161 = vpop.f32.mrf.mxu0
        %v7162 = vpop.f32.mrf.mxu0
        %v7163 = vadd.f32 %v6862, %v7162
        %v7164 = vpop.f32.mrf.mxu0
        %7165 = vmatprep.mubr.bf16.mxu0 0
        %7166 = vmatmul.mubr.bf16.gmra.mxu0 %v7051
        %v7167 = vpop.f32.mrf.mxu0
        %v7168 = vadd.f32 %v6867, %v7167
        %v7169 = vpop.f32.mrf.mxu0
        %v7170 = vpop.f32.mrf.mxu0
        %v7171 = vadd.f32 %v6870, %v7170
        %v7172 = vpop.f32.mrf.mxu0
        %7173 = vmatprep.mubr.bf16.mxu0 0
        %7174 = vmatmul.mubr.bf16.gmra.mxu0 %v7054
        %v7175 = vpop.f32.mrf.mxu0
        %v7176 = vadd.f32 %v6875, %v7175
        %v7177 = vpop.f32.mrf.mxu0
        %v7178 = vpop.f32.mrf.mxu0
        %v7179 = vadd.f32 %v6878, %v7178
        %v7180 = vpop.f32.mrf.mxu0
        %7181 = vmatprep.mubr.bf16.mxu0 0
        %7182 = vmatmul.mubr.bf16.gmra.mxu0 %v7057
        %v7183 = vpop.f32.mrf.mxu0
        %v7184 = vadd.f32 %v6883, %v7183
        %v7185 = vpop.f32.mrf.mxu0
        %v7186 = vpop.f32.mrf.mxu0
        %v7187 = vadd.f32 %v6886, %v7186
        %v7188 = vpop.f32.mrf.mxu0
        %7189 = vmatprep.mubr.bf16.mxu0 0
        %7190 = vmatmul.mubr.bf16.gmra.mxu0 %v7060
        %v7191 = vpop.f32.mrf.mxu0
        %v7192 = vadd.f32 %v6891, %v7191
        %v7193 = vpop.f32.mrf.mxu0
        %v7194 = vpop.f32.mrf.mxu0
        %v7195 = vadd.f32 %v6894, %v7194
        %v7196 = vpop.f32.mrf.mxu0
        %7197 = vmatprep.mubr.bf16.mxu0 0
        %7198 = vmatmul.mubr.bf16.gmra.mxu0 %v7063
        %v7199 = vpop.f32.mrf.mxu0
        %v7200 = vadd.f32 %v6899, %v7199
        %v7201 = vpop.f32.mrf.mxu0
        %v7202 = vpop.f32.mrf.mxu0
        %v7203 = vadd.f32 %v6902, %v7202
        %v7204 = vpop.f32.mrf.mxu0
        %7205 = vmatprep.mubr.bf16.mxu0 0
        %7206 = vmatmul.mubr.bf16.gmra.mxu0 %v7066
        %v7207 = vpop.f32.mrf.mxu0
        %v7208 = vadd.f32 %v6907, %v7207
        %v7209 = vpop.f32.mrf.mxu0
        %v7210 = vpop.f32.mrf.mxu0
        %v7211 = vadd.f32 %v6910, %v7210
        %v7212 = vpop.f32.mrf.mxu0
        %7213 = vmatprep.mubr.bf16.mxu0 0
        %7214 = vmatmul.mubr.bf16.gmra.mxu0 %v7069
        %v7215 = vpop.f32.mrf.mxu0
        %v7216 = vadd.f32 %v6915, %v7215
        %v7217 = vpop.f32.mrf.mxu0
        %v7218 = vpop.f32.mrf.mxu0
        %v7219 = vadd.f32 %v6918, %v7218
        %v7220 = vpop.f32.mrf.mxu0
        %7221 = vmatprep.mubr.bf16.mxu0 0
        %7222 = vmatmul.mubr.bf16.gmra.mxu0 %v7072
        %v7223 = vpop.f32.mrf.mxu0
        %v7224 = vadd.f32 %v6923, %v7223
        %v7225 = vpop.f32.mrf.mxu0
        %v7226 = vpop.f32.mrf.mxu0
        %v7227 = vadd.f32 %v6926, %v7226
        %v7228 = vpop.f32.mrf.mxu0
        %7229 = vmatprep.mubr.bf16.mxu0 0
        %7230 = vmatmul.mubr.bf16.gmra.mxu0 %v7075
        %v7231 = vpop.f32.mrf.mxu0
        %v7232 = vadd.f32 %v6931, %v7231
        %v7233 = vpop.f32.mrf.mxu0
        %v7234 = vpop.f32.mrf.mxu0
        %v7235 = vadd.f32 %v6934, %v7234
        %v7236 = vpop.f32.mrf.mxu0
        %7237 = vdwg.mxu0
        %v7238 = vld [vmem:[#allocation2] sm:$0xe]
        %v7239 = vld [vmem:[#allocation2 + $0xc] sm:$0xe]
        %v7240 = vld [vmem:[#allocation2 + $0x18] sm:$0xe]
        %v7241 = vld [vmem:[#allocation2 + $0x24] sm:$0xe]
        %v7242 = vld [vmem:[#allocation2 + $0x30] sm:$0xe]
        %v7243 = vld [vmem:[#allocation2 + $0x3c] sm:$0xe]
        %v7244 = vld [vmem:[#allocation2 + $0x48] sm:$0xe]
        %v7245 = vld [vmem:[#allocation2 + $0x54] sm:$0xe]
        %v7246 = vld [vmem:[#allocation2 + $0x60] sm:$0xe]
        %v7247 = vld [vmem:[#allocation2 + $0x6c] sm:$0xe]
        %v7248 = vld [vmem:[#allocation2 + $0x78] sm:$0xe]
        %v7249 = vld [vmem:[#allocation2 + $0x84] sm:$0xe]
        %v7250 = vld [vmem:[#allocation2 + $0x90] sm:$0xe]
        %v7251 = vld [vmem:[#allocation2 + $0x9c] sm:$0xe]
        %v7252 = vld [vmem:[#allocation2 + $0xa8] sm:$0xe]
        %v7253 = vld [vmem:[#allocation2 + $0xb4] sm:$0xe]
        %v7286 = vrot.slane %v7238, 5
        %v7287 = vrot.slane %v7286, 4
        %v7288 = vrot.slane %v6229, 5
        %v7289 = vsel %vm2037, %v7287, %v7288
        %v7290 = vrot.slane %v7288, 4
        %v7291 = vrot.slane %v6264, 5
        %v7292 = vsel %vm2037, %v7290, %v7291
        %v7293 = vrot.slane %v7239, 5
        %v7294 = vrot.slane %v7293, 4
        %v7295 = vrot.slane %v6231, 5
        %v7296 = vsel %vm2037, %v7294, %v7295
        %v7297 = vrot.slane %v7295, 4
        %v7298 = vrot.slane %v6265, 5
        %v7299 = vsel %vm2037, %v7297, %v7298
        %v7300 = vrot.slane %v7240, 5
        %v7301 = vrot.slane %v7300, 4
        %v7302 = vrot.slane %v6233, 5
        %v7303 = vsel %vm2037, %v7301, %v7302
        %v7304 = vrot.slane %v7302, 4
        %v7305 = vrot.slane %v6266, 5
        %v7306 = vsel %vm2037, %v7304, %v7305
        %v7307 = vrot.slane %v7241, 5
        %v7308 = vrot.slane %v7307, 4
        %v7309 = vrot.slane %v6235, 5
        %v7310 = vsel %vm2037, %v7308, %v7309
        %v7311 = vrot.slane %v7309, 4
        %v7312 = vrot.slane %v6267, 5
        %v7313 = vsel %vm2037, %v7311, %v7312
        %v7314 = vrot.slane %v7242, 5
        %v7315 = vrot.slane %v7314, 4
        %v7316 = vrot.slane %v6237, 5
        %v7317 = vsel %vm2037, %v7315, %v7316
        %v7318 = vrot.slane %v7316, 4
        %v7319 = vrot.slane %v6268, 5
        %v7320 = vsel %vm2037, %v7318, %v7319
        %v7321 = vrot.slane %v7243, 5
        %v7322 = vrot.slane %v7321, 4
        %v7323 = vrot.slane %v6239, 5
        %v7324 = vsel %vm2037, %v7322, %v7323
        %v7325 = vrot.slane %v7323, 4
        %v7326 = vrot.slane %v6269, 5
        %v7327 = vsel %vm2037, %v7325, %v7326
        %v7328 = vrot.slane %v7244, 5
        %v7329 = vrot.slane %v7328, 4
        %v7330 = vrot.slane %v6241, 5
        %v7331 = vsel %vm2037, %v7329, %v7330
        %v7332 = vrot.slane %v7330, 4
        %v7333 = vrot.slane %v6270, 5
        %v7334 = vsel %vm2037, %v7332, %v7333
        %v7335 = vrot.slane %v7245, 5
        %v7336 = vrot.slane %v7335, 4
        %v7337 = vrot.slane %v6243, 5
        %v7338 = vsel %vm2037, %v7336, %v7337
        %v7339 = vrot.slane %v7337, 4
        %v7340 = vrot.slane %v6271, 5
        %v7341 = vsel %vm2037, %v7339, %v7340
        %v7342 = vrot.slane %v7246, 5
        %v7343 = vrot.slane %v7342, 4
        %v7344 = vrot.slane %v6245, 5
        %v7345 = vsel %vm2037, %v7343, %v7344
        %v7346 = vrot.slane %v7344, 4
        %v7347 = vrot.slane %v6272, 5
        %v7348 = vsel %vm2037, %v7346, %v7347
        %v7349 = vrot.slane %v7247, 5
        %v7350 = vrot.slane %v7349, 4
        %v7351 = vrot.slane %v6247, 5
        %v7352 = vsel %vm2037, %v7350, %v7351
        %v7353 = vrot.slane %v7351, 4
        %v7354 = vrot.slane %v6273, 5
        %v7355 = vsel %vm2037, %v7353, %v7354
        %v7356 = vrot.slane %v7248, 5
        %v7357 = vrot.slane %v7356, 4
        %v7358 = vrot.slane %v6249, 5
        %v7359 = vsel %vm2037, %v7357, %v7358
        %v7360 = vrot.slane %v7358, 4
        %v7361 = vrot.slane %v6274, 5
        %v7362 = vsel %vm2037, %v7360, %v7361
        %v7363 = vrot.slane %v7249, 5
        %v7364 = vrot.slane %v7363, 4
        %v7365 = vrot.slane %v6251, 5
        %v7366 = vsel %vm2037, %v7364, %v7365
        %v7367 = vrot.slane %v7365, 4
        %v7368 = vrot.slane %v6275, 5
        %v7369 = vsel %vm2037, %v7367, %v7368
        %v7370 = vrot.slane %v7250, 5
        %v7371 = vrot.slane %v7370, 4
        %v7372 = vrot.slane %v6253, 5
        %v7373 = vsel %vm2037, %v7371, %v7372
        %v7374 = vrot.slane %v7372, 4
        %v7375 = vrot.slane %v6276, 5
        %v7376 = vsel %vm2037, %v7374, %v7375
        %v7377 = vrot.slane %v7251, 5
        %v7378 = vrot.slane %v7377, 4
        %v7379 = vrot.slane %v6255, 5
        %v7380 = vsel %vm2037, %v7378, %v7379
        %v7381 = vrot.slane %v7379, 4
        %v7382 = vrot.slane %v6277, 5
        %v7383 = vsel %vm2037, %v7381, %v7382
        %v7384 = vrot.slane %v7252, 5
        %v7385 = vrot.slane %v7384, 4
        %v7386 = vrot.slane %v6257, 5
        %v7387 = vsel %vm2037, %v7385, %v7386
        %v7388 = vrot.slane %v7386, 4
        %v7389 = vrot.slane %v6278, 5
        %v7390 = vsel %vm2037, %v7388, %v7389
        %v7391 = vrot.slane %v7253, 5
        %v7392 = vrot.slane %v7391, 4
        %v7393 = vrot.slane %v6259, 5
        %v7394 = vsel %vm2037, %v7392, %v7393
        %v7395 = vrot.slane %v7393, 4
        %v7396 = vrot.slane %v6279, 5
        %v7397 = vsel %vm2037, %v7395, %v7396
        %v7398 = vld [vmem:[%s3 + $0x20] sm:$0xf]
        %v7399 = vld [vmem:[%s3 + $0x24] sm:$0xf]
        %v7400 = vld [vmem:[%s3 + $0x28] sm:$0xf]
        %v7401 = vld [vmem:[%s3 + $0x2c] sm:$0xf]
        %v7402 = vunpack.c.l.b16 %v7289
        %v7403 = vunpack.c.l.b16 %v7292
        %v7404 = vunpack.c.l.b16 %v7296
        %v7405 = vunpack.c.l.b16 %v7299
        %v7406 = vunpack.c.l.b16 %v7303
        %v7407 = vunpack.c.l.b16 %v7306
        %v7408 = vunpack.c.l.b16 %v7310
        %v7409 = vunpack.c.l.b16 %v7313
        %v7410 = vunpack.c.l.b16 %v7317
        %v7411 = vunpack.c.l.b16 %v7320
        %v7412 = vunpack.c.l.b16 %v7324
        %v7413 = vunpack.c.l.b16 %v7327
        %v7414 = vunpack.c.l.b16 %v7331
        %v7415 = vunpack.c.l.b16 %v7334
        %v7416 = vunpack.c.l.b16 %v7338
        %v7417 = vunpack.c.l.b16 %v7341
        %v7418 = vunpack.c.l.b16 %v7345
        %v7419 = vunpack.c.l.b16 %v7348
        %v7420 = vunpack.c.l.b16 %v7352
        %v7421 = vunpack.c.l.b16 %v7355
        %v7422 = vunpack.c.l.b16 %v7359
        %v7423 = vunpack.c.l.b16 %v7362
        %v7424 = vunpack.c.l.b16 %v7366
        %v7425 = vunpack.c.l.b16 %v7369
        %v7426 = vunpack.c.l.b16 %v7373
        %v7427 = vunpack.c.l.b16 %v7376
        %v7428 = vunpack.c.l.b16 %v7380
        %v7429 = vunpack.c.l.b16 %v7383
        %v7430 = vunpack.c.l.b16 %v7387
        %v7431 = vunpack.c.l.b16 %v7390
        %v7432 = vunpack.c.l.b16 %v7394
        %v7433 = vunpack.c.l.b16 %v7397
        %v7434 = vpack.c.b16 %v7403, %v7402
        %v7435 = vpack.c.b16 %v7405, %v7404
        %v7436 = vpack.c.b16 %v7407, %v7406
        %v7437 = vpack.c.b16 %v7409, %v7408
        %v7438 = vpack.c.b16 %v7411, %v7410
        %v7439 = vpack.c.b16 %v7413, %v7412
        %v7440 = vpack.c.b16 %v7415, %v7414
        %v7441 = vpack.c.b16 %v7417, %v7416
        %v7442 = vpack.c.b16 %v7419, %v7418
        %v7443 = vpack.c.b16 %v7421, %v7420
        %v7444 = vpack.c.b16 %v7423, %v7422
        %v7445 = vpack.c.b16 %v7425, %v7424
        %v7446 = vpack.c.b16 %v7427, %v7426
        %v7447 = vpack.c.b16 %v7429, %v7428
        %v7448 = vpack.c.b16 %v7431, %v7430
        %v7449 = vpack.c.b16 %v7433, %v7432
        %v7454 = vunpack.c.l.b16 %v7398
        %v7455 = vunpack.c.l.b16 %v7399
        %v7456 = vunpack.c.l.b16 %v7400
        %v7457 = vunpack.c.l.b16 %v7401
        %v7458 = vpack.c.b16 %v7455, %v7454
        %v7459 = vpack.c.b16 %v7457, %v7456
        %v7463 = vsel %vm1476, %v7434, 0
        %v7466 = vsel %vm1476, %v7435, 0
        %v7469 = vsel %vm1476, %v7436, 0
        %v7472 = vsel %vm1476, %v7437, 0
        %v7475 = vsel %vm1476, %v7438, 0
        %v7478 = vsel %vm1476, %v7439, 0
        %v7481 = vsel %vm1476, %v7440, 0
        %v7484 = vsel %vm1476, %v7441, 0
        %v7487 = vsel %vm1476, %v7442, 0
        %v7490 = vsel %vm1476, %v7443, 0
        %v7493 = vsel %vm1476, %v7444, 0
        %v7496 = vsel %vm1476, %v7445, 0
        %v7499 = vsel %vm1476, %v7446, 0
        %v7502 = vsel %vm1476, %v7447, 0
        %v7505 = vsel %vm1476, %v7448, 0
        %v7508 = vsel %vm1476, %v7449, 0
        %7510 = vmatprep.subr.bf16.mxu0 0
        %7511 = vmatpush1.bf16.msra.mxu0 0
        %7512 = vmatprep.subr.bf16.mxu0 0
        %7513 = vmatpush1.bf16.msra.mxu0 0
        %7514 = vmatprep.subr.bf16.mxu0 0
        %7515 = vmatpush1.bf16.msra.mxu0 0
        %7516 = vmatprep.subr.bf16.mxu0 0
        %7517 = vmatpush1.bf16.msra.mxu0 0
        %7518 = vmatprep.subr.bf16.mxu0 0
        %7519 = vmatpush1.bf16.msra.mxu0 0
        %7520 = vmatprep.subr.bf16.mxu0 0
        %7521 = vmatpush1.bf16.msra.mxu0 0
        %7522 = vmatprep.subr.bf16.mxu0 0
        %7523 = vmatpush1.bf16.msra.mxu0 %v7459
        %7524 = vmatprep.subr.bf16.mxu0 0
        %7525 = vmatpush1.bf16.msra.mxu0 %v7458
        %7526 = vmatprep.subr.bf16.mxu0 0
        %7527 = vmatpush2.bf16.msra.mxu0 0
        %7528 = vmatprep.subr.bf16.mxu0 0
        %7529 = vmatpush2.bf16.msra.mxu0 0
        %7530 = vmatprep.subr.bf16.mxu0 0
        %7531 = vmatpush2.bf16.msra.mxu0 0
        %7532 = vmatprep.subr.bf16.mxu0 0
        %7533 = vmatpush2.bf16.msra.mxu0 0
        %7534 = vmatprep.subr.bf16.mxu0 0
        %7535 = vmatpush2.bf16.msra.mxu0 0
        %7536 = vmatprep.subr.bf16.mxu0 0
        %7537 = vmatpush2.bf16.msra.mxu0 0
        %7538 = vmatprep.subr.bf16.mxu0 0
        %7539 = vmatpush2.bf16.msra.mxu0 0
        %7540 = vmatprep.subr.bf16.mxu0 0
        %7541 = vmatpush2.bf16.msra.mxu0 0
        %7542 = vmatprep.mubr.bf16.mxu0 0
        %7543 = vmatmul.mubr.bf16.gmra.mxu0 %v7463
        %v7544 = vpop.f32.mrf.mxu0
        %v7545 = vadd.f32 0.0, %v7544
        %v7546 = vpop.f32.mrf.mxu0
        %v7547 = vpop.f32.mrf.mxu0
        %v7548 = vadd.f32 0.0, %v7547
        %v7549 = vpop.f32.mrf.mxu0
        %7550 = vmatprep.mubr.bf16.mxu0 0
        %7551 = vmatmul.mubr.bf16.gmra.mxu0 %v7466
        %v7552 = vpop.f32.mrf.mxu0
        %v7553 = vadd.f32 0.0, %v7552
        %v7554 = vpop.f32.mrf.mxu0
        %v7555 = vpop.f32.mrf.mxu0
        %v7556 = vadd.f32 0.0, %v7555
        %v7557 = vpop.f32.mrf.mxu0
        %7558 = vmatprep.mubr.bf16.mxu0 0
        %7559 = vmatmul.mubr.bf16.gmra.mxu0 %v7469
        %v7560 = vpop.f32.mrf.mxu0
        %v7561 = vadd.f32 0.0, %v7560
        %v7562 = vpop.f32.mrf.mxu0
        %v7563 = vpop.f32.mrf.mxu0
        %v7564 = vadd.f32 0.0, %v7563
        %v7565 = vpop.f32.mrf.mxu0
        %7566 = vmatprep.mubr.bf16.mxu0 0
        %7567 = vmatmul.mubr.bf16.gmra.mxu0 %v7472
        %v7568 = vpop.f32.mrf.mxu0
        %v7569 = vadd.f32 0.0, %v7568
        %v7570 = vpop.f32.mrf.mxu0
        %v7571 = vpop.f32.mrf.mxu0
        %v7572 = vadd.f32 0.0, %v7571
        %v7573 = vpop.f32.mrf.mxu0
        %7574 = vmatprep.mubr.bf16.mxu0 0
        %7575 = vmatmul.mubr.bf16.gmra.mxu0 %v7475
        %v7576 = vpop.f32.mrf.mxu0
        %v7577 = vadd.f32 0.0, %v7576
        %v7578 = vpop.f32.mrf.mxu0
        %v7579 = vpop.f32.mrf.mxu0
        %v7580 = vadd.f32 0.0, %v7579
        %v7581 = vpop.f32.mrf.mxu0
        %7582 = vmatprep.mubr.bf16.mxu0 0
        %7583 = vmatmul.mubr.bf16.gmra.mxu0 %v7478
        %v7584 = vpop.f32.mrf.mxu0
        %v7585 = vadd.f32 0.0, %v7584
        %v7586 = vpop.f32.mrf.mxu0
        %v7587 = vpop.f32.mrf.mxu0
        %v7588 = vadd.f32 0.0, %v7587
        %v7589 = vpop.f32.mrf.mxu0
        %7590 = vmatprep.mubr.bf16.mxu0 0
        %7591 = vmatmul.mubr.bf16.gmra.mxu0 %v7481
        %v7592 = vpop.f32.mrf.mxu0
        %v7593 = vadd.f32 0.0, %v7592
        %v7594 = vpop.f32.mrf.mxu0
        %v7595 = vpop.f32.mrf.mxu0
        %v7596 = vadd.f32 0.0, %v7595
        %v7597 = vpop.f32.mrf.mxu0
        %7598 = vmatprep.mubr.bf16.mxu0 0
        %7599 = vmatmul.mubr.bf16.gmra.mxu0 %v7484
        %v7600 = vpop.f32.mrf.mxu0
        %v7601 = vadd.f32 0.0, %v7600
        %v7602 = vpop.f32.mrf.mxu0
        %v7603 = vpop.f32.mrf.mxu0
        %v7604 = vadd.f32 0.0, %v7603
        %v7605 = vpop.f32.mrf.mxu0
        %7606 = vmatprep.mubr.bf16.mxu0 0
        %7607 = vmatmul.mubr.bf16.gmra.mxu0 %v7487
        %v7608 = vpop.f32.mrf.mxu0
        %v7609 = vadd.f32 0.0, %v7608
        %v7610 = vpop.f32.mrf.mxu0
        %v7611 = vpop.f32.mrf.mxu0
        %v7612 = vadd.f32 0.0, %v7611
        %v7613 = vpop.f32.mrf.mxu0
        %7614 = vmatprep.mubr.bf16.mxu0 0
        %7615 = vmatmul.mubr.bf16.gmra.mxu0 %v7490
        %v7616 = vpop.f32.mrf.mxu0
        %v7617 = vadd.f32 0.0, %v7616
        %v7618 = vpop.f32.mrf.mxu0
        %v7619 = vpop.f32.mrf.mxu0
        %v7620 = vadd.f32 0.0, %v7619
        %v7621 = vpop.f32.mrf.mxu0
        %7622 = vmatprep.mubr.bf16.mxu0 0
        %7623 = vmatmul.mubr.bf16.gmra.mxu0 %v7493
        %v7624 = vpop.f32.mrf.mxu0
        %v7625 = vadd.f32 0.0, %v7624
        %v7626 = vpop.f32.mrf.mxu0
        %v7627 = vpop.f32.mrf.mxu0
        %v7628 = vadd.f32 0.0, %v7627
        %v7629 = vpop.f32.mrf.mxu0
        %7630 = vmatprep.mubr.bf16.mxu0 0
        %7631 = vmatmul.mubr.bf16.gmra.mxu0 %v7496
        %v7632 = vpop.f32.mrf.mxu0
        %v7633 = vadd.f32 0.0, %v7632
        %v7634 = vpop.f32.mrf.mxu0
        %v7635 = vpop.f32.mrf.mxu0
        %v7636 = vadd.f32 0.0, %v7635
        %v7637 = vpop.f32.mrf.mxu0
        %7638 = vmatprep.mubr.bf16.mxu0 0
        %7639 = vmatmul.mubr.bf16.gmra.mxu0 %v7499
        %v7640 = vpop.f32.mrf.mxu0
        %v7641 = vadd.f32 0.0, %v7640
        %v7642 = vpop.f32.mrf.mxu0
        %v7643 = vpop.f32.mrf.mxu0
        %v7644 = vadd.f32 0.0, %v7643
        %v7645 = vpop.f32.mrf.mxu0
        %7646 = vmatprep.mubr.bf16.mxu0 0
        %7647 = vmatmul.mubr.bf16.gmra.mxu0 %v7502
        %v7648 = vpop.f32.mrf.mxu0
        %v7649 = vadd.f32 0.0, %v7648
        %v7650 = vpop.f32.mrf.mxu0
        %v7651 = vpop.f32.mrf.mxu0
        %v7652 = vadd.f32 0.0, %v7651
        %v7653 = vpop.f32.mrf.mxu0
        %7654 = vmatprep.mubr.bf16.mxu0 0
        %7655 = vmatmul.mubr.bf16.gmra.mxu0 %v7505
        %v7656 = vpop.f32.mrf.mxu0
        %v7657 = vadd.f32 0.0, %v7656
        %v7658 = vpop.f32.mrf.mxu0
        %v7659 = vpop.f32.mrf.mxu0
        %v7660 = vadd.f32 0.0, %v7659
        %v7661 = vpop.f32.mrf.mxu0
        %7662 = vmatprep.mubr.bf16.mxu0 0
        %7663 = vmatmul.mubr.bf16.gmra.mxu0 %v7508
        %v7664 = vpop.f32.mrf.mxu0
        %v7665 = vadd.f32 0.0, %v7664
        %v7666 = vpop.f32.mrf.mxu0
        %v7667 = vpop.f32.mrf.mxu0
        %v7668 = vadd.f32 0.0, %v7667
        %v7669 = vpop.f32.mrf.mxu0
        %7670 = vdwg.mxu0
        %v7671 = vadd.f32 %v7112, %v7545
        %v7672 = vadd.f32 %v7115, %v7548
        %v7673 = vadd.f32 %v7120, %v7553
        %v7674 = vadd.f32 %v7123, %v7556
        %v7675 = vadd.f32 %v7128, %v7561
        %v7676 = vadd.f32 %v7131, %v7564
        %v7677 = vadd.f32 %v7136, %v7569
        %v7678 = vadd.f32 %v7139, %v7572
        %v7679 = vadd.f32 %v7144, %v7577
        %v7680 = vadd.f32 %v7147, %v7580
        %v7681 = vadd.f32 %v7152, %v7585
        %v7682 = vadd.f32 %v7155, %v7588
        %v7683 = vadd.f32 %v7160, %v7593
        %v7684 = vadd.f32 %v7163, %v7596
        %v7685 = vadd.f32 %v7168, %v7601
        %v7686 = vadd.f32 %v7171, %v7604
        %v7687 = vadd.f32 %v7176, %v7609
        %v7688 = vadd.f32 %v7179, %v7612
        %v7689 = vadd.f32 %v7184, %v7617
        %v7690 = vadd.f32 %v7187, %v7620
        %v7691 = vadd.f32 %v7192, %v7625
        %v7692 = vadd.f32 %v7195, %v7628
        %v7693 = vadd.f32 %v7200, %v7633
        %v7694 = vadd.f32 %v7203, %v7636
        %v7695 = vadd.f32 %v7208, %v7641
        %v7696 = vadd.f32 %v7211, %v7644
        %v7697 = vadd.f32 %v7216, %v7649
        %v7698 = vadd.f32 %v7219, %v7652
        %v7699 = vadd.f32 %v7224, %v7657
        %v7700 = vadd.f32 %v7227, %v7660
        %v7701 = vadd.f32 %v7232, %v7665
        %v7702 = vadd.f32 %v7235, %v7668
        %v7703 = vld [vmem:[%s307] sm:$0xf]
        %v7704 = vld [vmem:[%s307 + $0x4] sm:$0xf]
        %v7705 = vld [vmem:[%s307 + $0xc] sm:$0xf]
        %v7706 = vld [vmem:[%s307 + $0x10] sm:$0xf]
        %v7707 = vld [vmem:[%s307 + $0x18] sm:$0xf]
        %v7708 = vld [vmem:[%s307 + $0x1c] sm:$0xf]
        %v7709 = vld [vmem:[%s307 + $0x24] sm:$0xf]
        %v7710 = vld [vmem:[%s307 + $0x28] sm:$0xf]
        %v7711 = vld [vmem:[%s307 + $0x30] sm:$0xf]
        %v7712 = vld [vmem:[%s307 + $0x34] sm:$0xf]
        %v7713 = vld [vmem:[%s307 + $0x3c] sm:$0xf]
        %v7714 = vld [vmem:[%s307 + $0x40] sm:$0xf]
        %v7715 = vld [vmem:[%s307 + $0x48] sm:$0xf]
        %v7716 = vld [vmem:[%s307 + $0x4c] sm:$0xf]
        %v7717 = vld [vmem:[%s307 + $0x54] sm:$0xf]
        %v7718 = vld [vmem:[%s307 + $0x58] sm:$0xf]
        %v7719 = vld [vmem:[%s307 + $0x60] sm:$0xf]
        %v7720 = vld [vmem:[%s307 + $0x64] sm:$0xf]
        %v7721 = vld [vmem:[%s307 + $0x6c] sm:$0xf]
        %v7722 = vld [vmem:[%s307 + $0x70] sm:$0xf]
        %v7723 = vld [vmem:[%s307 + $0x78] sm:$0xf]
        %v7724 = vld [vmem:[%s307 + $0x7c] sm:$0xf]
        %v7725 = vld [vmem:[%s307 + $0x84] sm:$0xf]
        %v7726 = vld [vmem:[%s307 + $0x88] sm:$0xf]
        %v7727 = vld [vmem:[%s307 + $0x90] sm:$0xf]
        %v7728 = vld [vmem:[%s307 + $0x94] sm:$0xf]
        %v7729 = vld [vmem:[%s307 + $0x9c] sm:$0xf]
        %v7730 = vld [vmem:[%s307 + $0xa0] sm:$0xf]
        %v7731 = vld [vmem:[%s307 + $0xa8] sm:$0xf]
        %v7732 = vld [vmem:[%s307 + $0xac] sm:$0xf]
        %v7733 = vld [vmem:[%s307 + $0xb4] sm:$0xf]
        %v7734 = vld [vmem:[%s307 + $0xb8] sm:$0xf]
        %v7735 = vld [vmem:[%s3 + $0x30] sm:$0xf]
        %v7736 = vld [vmem:[%s3 + $0x34] sm:$0xf]
        %v7737 = vld [vmem:[%s3 + $0x38] sm:$0xf]
        %v7738 = vld [vmem:[%s3 + $0x3c] sm:$0xf]
        %v7771 = vunpack.c.l.b16 %v7703
        %v7772 = vunpack.c.l.b16 %v7704
        %v7773 = vunpack.c.l.b16 %v7705
        %v7774 = vunpack.c.l.b16 %v7706
        %v7775 = vunpack.c.l.b16 %v7707
        %v7776 = vunpack.c.l.b16 %v7708
        %v7777 = vunpack.c.l.b16 %v7709
        %v7778 = vunpack.c.l.b16 %v7710
        %v7779 = vunpack.c.l.b16 %v7711
        %v7780 = vunpack.c.l.b16 %v7712
        %v7781 = vunpack.c.l.b16 %v7713
        %v7782 = vunpack.c.l.b16 %v7714
        %v7783 = vunpack.c.l.b16 %v7715
        %v7784 = vunpack.c.l.b16 %v7716
        %v7785 = vunpack.c.l.b16 %v7717
        %v7786 = vunpack.c.l.b16 %v7718
        %v7787 = vunpack.c.l.b16 %v7719
        %v7788 = vunpack.c.l.b16 %v7720
        %v7789 = vunpack.c.l.b16 %v7721
        %v7790 = vunpack.c.l.b16 %v7722
        %v7791 = vunpack.c.l.b16 %v7723
        %v7792 = vunpack.c.l.b16 %v7724
        %v7793 = vunpack.c.l.b16 %v7725
        %v7794 = vunpack.c.l.b16 %v7726
        %v7795 = vunpack.c.l.b16 %v7727
        %v7796 = vunpack.c.l.b16 %v7728
        %v7797 = vunpack.c.l.b16 %v7729
        %v7798 = vunpack.c.l.b16 %v7730
        %v7799 = vunpack.c.l.b16 %v7731
        %v7800 = vunpack.c.l.b16 %v7732
        %v7801 = vunpack.c.l.b16 %v7733
        %v7802 = vunpack.c.l.b16 %v7734
        %v7803 = vpack.c.b16 %v7772, %v7771
        %v7804 = vpack.c.b16 %v7774, %v7773
        %v7805 = vpack.c.b16 %v7776, %v7775
        %v7806 = vpack.c.b16 %v7778, %v7777
        %v7807 = vpack.c.b16 %v7780, %v7779
        %v7808 = vpack.c.b16 %v7782, %v7781
        %v7809 = vpack.c.b16 %v7784, %v7783
        %v7810 = vpack.c.b16 %v7786, %v7785
        %v7811 = vpack.c.b16 %v7788, %v7787
        %v7812 = vpack.c.b16 %v7790, %v7789
        %v7813 = vpack.c.b16 %v7792, %v7791
        %v7814 = vpack.c.b16 %v7794, %v7793
        %v7815 = vpack.c.b16 %v7796, %v7795
        %v7816 = vpack.c.b16 %v7798, %v7797
        %v7817 = vpack.c.b16 %v7800, %v7799
        %v7818 = vpack.c.b16 %v7802, %v7801
        %v7823 = vunpack.c.l.b16 %v7735
        %v7824 = vunpack.c.l.b16 %v7736
        %v7825 = vunpack.c.l.b16 %v7737
        %v7826 = vunpack.c.l.b16 %v7738
        %v7827 = vpack.c.b16 %v7824, %v7823
        %v7828 = vpack.c.b16 %v7826, %v7825
        %v7832 = vsel %vm1476, %v7803, 0
        %v7835 = vsel %vm1476, %v7804, 0
        %v7838 = vsel %vm1476, %v7805, 0
        %v7841 = vsel %vm1476, %v7806, 0
        %v7844 = vsel %vm1476, %v7807, 0
        %v7847 = vsel %vm1476, %v7808, 0
        %v7850 = vsel %vm1476, %v7809, 0
        %v7853 = vsel %vm1476, %v7810, 0
        %v7856 = vsel %vm1476, %v7811, 0
        %v7859 = vsel %vm1476, %v7812, 0
        %v7862 = vsel %vm1476, %v7813, 0
        %v7865 = vsel %vm1476, %v7814, 0
        %v7868 = vsel %vm1476, %v7815, 0
        %v7871 = vsel %vm1476, %v7816, 0
        %v7874 = vsel %vm1476, %v7817, 0
        %v7877 = vsel %vm1476, %v7818, 0
        %7879 = vmatprep.subr.bf16.mxu0 0
        %7880 = vmatpush1.bf16.msra.mxu0 0
        %7881 = vmatprep.subr.bf16.mxu0 0
        %7882 = vmatpush1.bf16.msra.mxu0 0
        %7883 = vmatprep.subr.bf16.mxu0 0
        %7884 = vmatpush1.bf16.msra.mxu0 0
        %7885 = vmatprep.subr.bf16.mxu0 0
        %7886 = vmatpush1.bf16.msra.mxu0 0
        %7887 = vmatprep.subr.bf16.mxu0 0
        %7888 = vmatpush1.bf16.msra.mxu0 0
        %7889 = vmatprep.subr.bf16.mxu0 0
        %7890 = vmatpush1.bf16.msra.mxu0 0
        %7891 = vmatprep.subr.bf16.mxu0 0
        %7892 = vmatpush1.bf16.msra.mxu0 %v7828
        %7893 = vmatprep.subr.bf16.mxu0 0
        %7894 = vmatpush1.bf16.msra.mxu0 %v7827
        %7895 = vmatprep.subr.bf16.mxu0 0
        %7896 = vmatpush2.bf16.msra.mxu0 0
        %7897 = vmatprep.subr.bf16.mxu0 0
        %7898 = vmatpush2.bf16.msra.mxu0 0
        %7899 = vmatprep.subr.bf16.mxu0 0
        %7900 = vmatpush2.bf16.msra.mxu0 0
        %7901 = vmatprep.subr.bf16.mxu0 0
        %7902 = vmatpush2.bf16.msra.mxu0 0
        %7903 = vmatprep.subr.bf16.mxu0 0
        %7904 = vmatpush2.bf16.msra.mxu0 0
        %7905 = vmatprep.subr.bf16.mxu0 0
        %7906 = vmatpush2.bf16.msra.mxu0 0
        %7907 = vmatprep.subr.bf16.mxu0 0
        %7908 = vmatpush2.bf16.msra.mxu0 0
        %7909 = vmatprep.subr.bf16.mxu0 0
        %7910 = vmatpush2.bf16.msra.mxu0 0
        %7911 = vmatprep.mubr.bf16.mxu0 0
        %7912 = vmatmul.mubr.bf16.gmra.mxu0 %v7832
        %v7913 = vpop.f32.mrf.mxu0
        %v7914 = vadd.f32 0.0, %v7913
        %v7915 = vpop.f32.mrf.mxu0
        %v7916 = vpop.f32.mrf.mxu0
        %v7917 = vadd.f32 0.0, %v7916
        %v7918 = vpop.f32.mrf.mxu0
        %7919 = vmatprep.mubr.bf16.mxu0 0
        %7920 = vmatmul.mubr.bf16.gmra.mxu0 %v7835
        %v7921 = vpop.f32.mrf.mxu0
        %v7922 = vadd.f32 0.0, %v7921
        %v7923 = vpop.f32.mrf.mxu0
        %v7924 = vpop.f32.mrf.mxu0
        %v7925 = vadd.f32 0.0, %v7924
        %v7926 = vpop.f32.mrf.mxu0
        %7927 = vmatprep.mubr.bf16.mxu0 0
        %7928 = vmatmul.mubr.bf16.gmra.mxu0 %v7838
        %v7929 = vpop.f32.mrf.mxu0
        %v7930 = vadd.f32 0.0, %v7929
        %v7931 = vpop.f32.mrf.mxu0
        %v7932 = vpop.f32.mrf.mxu0
        %v7933 = vadd.f32 0.0, %v7932
        %v7934 = vpop.f32.mrf.mxu0
        %7935 = vmatprep.mubr.bf16.mxu0 0
        %7936 = vmatmul.mubr.bf16.gmra.mxu0 %v7841
        %v7937 = vpop.f32.mrf.mxu0
        %v7938 = vadd.f32 0.0, %v7937
        %v7939 = vpop.f32.mrf.mxu0
        %v7940 = vpop.f32.mrf.mxu0
        %v7941 = vadd.f32 0.0, %v7940
        %v7942 = vpop.f32.mrf.mxu0
        %7943 = vmatprep.mubr.bf16.mxu0 0
        %7944 = vmatmul.mubr.bf16.gmra.mxu0 %v7844
        %v7945 = vpop.f32.mrf.mxu0
        %v7946 = vadd.f32 0.0, %v7945
        %v7947 = vpop.f32.mrf.mxu0
        %v7948 = vpop.f32.mrf.mxu0
        %v7949 = vadd.f32 0.0, %v7948
        %v7950 = vpop.f32.mrf.mxu0
        %7951 = vmatprep.mubr.bf16.mxu0 0
        %7952 = vmatmul.mubr.bf16.gmra.mxu0 %v7847
        %v7953 = vpop.f32.mrf.mxu0
        %v7954 = vadd.f32 0.0, %v7953
        %v7955 = vpop.f32.mrf.mxu0
        %v7956 = vpop.f32.mrf.mxu0
        %v7957 = vadd.f32 0.0, %v7956
        %v7958 = vpop.f32.mrf.mxu0
        %7959 = vmatprep.mubr.bf16.mxu0 0
        %7960 = vmatmul.mubr.bf16.gmra.mxu0 %v7850
        %v7961 = vpop.f32.mrf.mxu0
        %v7962 = vadd.f32 0.0, %v7961
        %v7963 = vpop.f32.mrf.mxu0
        %v7964 = vpop.f32.mrf.mxu0
        %v7965 = vadd.f32 0.0, %v7964
        %v7966 = vpop.f32.mrf.mxu0
        %7967 = vmatprep.mubr.bf16.mxu0 0
        %7968 = vmatmul.mubr.bf16.gmra.mxu0 %v7853
        %v7969 = vpop.f32.mrf.mxu0
        %v7970 = vadd.f32 0.0, %v7969
        %v7971 = vpop.f32.mrf.mxu0
        %v7972 = vpop.f32.mrf.mxu0
        %v7973 = vadd.f32 0.0, %v7972
        %v7974 = vpop.f32.mrf.mxu0
        %7975 = vmatprep.mubr.bf16.mxu0 0
        %7976 = vmatmul.mubr.bf16.gmra.mxu0 %v7856
        %v7977 = vpop.f32.mrf.mxu0
        %v7978 = vadd.f32 0.0, %v7977
        %v7979 = vpop.f32.mrf.mxu0
        %v7980 = vpop.f32.mrf.mxu0
        %v7981 = vadd.f32 0.0, %v7980
        %v7982 = vpop.f32.mrf.mxu0
        %7983 = vmatprep.mubr.bf16.mxu0 0
        %7984 = vmatmul.mubr.bf16.gmra.mxu0 %v7859
        %v7985 = vpop.f32.mrf.mxu0
        %v7986 = vadd.f32 0.0, %v7985
        %v7987 = vpop.f32.mrf.mxu0
        %v7988 = vpop.f32.mrf.mxu0
        %v7989 = vadd.f32 0.0, %v7988
        %v7990 = vpop.f32.mrf.mxu0
        %7991 = vmatprep.mubr.bf16.mxu0 0
        %7992 = vmatmul.mubr.bf16.gmra.mxu0 %v7862
        %v7993 = vpop.f32.mrf.mxu0
        %v7994 = vadd.f32 0.0, %v7993
        %v7995 = vpop.f32.mrf.mxu0
        %v7996 = vpop.f32.mrf.mxu0
        %v7997 = vadd.f32 0.0, %v7996
        %v7998 = vpop.f32.mrf.mxu0
        %7999 = vmatprep.mubr.bf16.mxu0 0
        %8000 = vmatmul.mubr.bf16.gmra.mxu0 %v7865
        %v8001 = vpop.f32.mrf.mxu0
        %v8002 = vadd.f32 0.0, %v8001
        %v8003 = vpop.f32.mrf.mxu0
        %v8004 = vpop.f32.mrf.mxu0
        %v8005 = vadd.f32 0.0, %v8004
        %v8006 = vpop.f32.mrf.mxu0
        %8007 = vmatprep.mubr.bf16.mxu0 0
        %8008 = vmatmul.mubr.bf16.gmra.mxu0 %v7868
        %v8009 = vpop.f32.mrf.mxu0
        %v8010 = vadd.f32 0.0, %v8009
        %v8011 = vpop.f32.mrf.mxu0
        %v8012 = vpop.f32.mrf.mxu0
        %v8013 = vadd.f32 0.0, %v8012
        %v8014 = vpop.f32.mrf.mxu0
        %8015 = vmatprep.mubr.bf16.mxu0 0
        %8016 = vmatmul.mubr.bf16.gmra.mxu0 %v7871
        %v8017 = vpop.f32.mrf.mxu0
        %v8018 = vadd.f32 0.0, %v8017
        %v8019 = vpop.f32.mrf.mxu0
        %v8020 = vpop.f32.mrf.mxu0
        %v8021 = vadd.f32 0.0, %v8020
        %v8022 = vpop.f32.mrf.mxu0
        %8023 = vmatprep.mubr.bf16.mxu0 0
        %8024 = vmatmul.mubr.bf16.gmra.mxu0 %v7874
        %v8025 = vpop.f32.mrf.mxu0
        %v8026 = vadd.f32 0.0, %v8025
        %v8027 = vpop.f32.mrf.mxu0
        %v8028 = vpop.f32.mrf.mxu0
        %v8029 = vadd.f32 0.0, %v8028
        %v8030 = vpop.f32.mrf.mxu0
        %8031 = vmatprep.mubr.bf16.mxu0 0
        %8032 = vmatmul.mubr.bf16.gmra.mxu0 %v7877
        %v8033 = vpop.f32.mrf.mxu0
        %v8034 = vadd.f32 0.0, %v8033
        %v8035 = vpop.f32.mrf.mxu0
        %v8036 = vpop.f32.mrf.mxu0
        %v8037 = vadd.f32 0.0, %v8036
        %v8038 = vpop.f32.mrf.mxu0
        %8039 = vdwg.mxu0
        %v8040 = vadd.f32 %v7671, %v7914
        %v8041 = vadd.f32 %v7672, %v7917
        %v8042 = vadd.f32 %v7673, %v7922
        %v8043 = vadd.f32 %v7674, %v7925
        %v8044 = vadd.f32 %v7675, %v7930
        %v8045 = vadd.f32 %v7676, %v7933
        %v8046 = vadd.f32 %v7677, %v7938
        %v8047 = vadd.f32 %v7678, %v7941
        %v8048 = vadd.f32 %v7679, %v7946
        %v8049 = vadd.f32 %v7680, %v7949
        %v8050 = vadd.f32 %v7681, %v7954
        %v8051 = vadd.f32 %v7682, %v7957
        %v8052 = vadd.f32 %v7683, %v7962
        %v8053 = vadd.f32 %v7684, %v7965
        %v8054 = vadd.f32 %v7685, %v7970
        %v8055 = vadd.f32 %v7686, %v7973
        %v8056 = vadd.f32 %v7687, %v7978
        %v8057 = vadd.f32 %v7688, %v7981
        %v8058 = vadd.f32 %v7689, %v7986
        %v8059 = vadd.f32 %v7690, %v7989
        %v8060 = vadd.f32 %v7691, %v7994
        %v8061 = vadd.f32 %v7692, %v7997
        %v8062 = vadd.f32 %v7693, %v8002
        %v8063 = vadd.f32 %v7694, %v8005
        %v8064 = vadd.f32 %v7695, %v8010
        %v8065 = vadd.f32 %v7696, %v8013
        %v8066 = vadd.f32 %v7697, %v8018
        %v8067 = vadd.f32 %v7698, %v8021
        %v8068 = vadd.f32 %v7699, %v8026
        %v8069 = vadd.f32 %v7700, %v8029
        %v8070 = vadd.f32 %v7701, %v8034
        %v8071 = vadd.f32 %v7702, %v8037
        %v8072 = vld [vmem:[%s307] sm:$0xf]
        %v8073 = vld [vmem:[%s307 + $0x4] sm:$0xf]
        %v8074 = vld [vmem:[%s307 + $0x8] sm:$0x1]
        %v8075 = vld [vmem:[%s307 + $0xc] sm:$0xf]
        %v8076 = vld [vmem:[%s307 + $0x10] sm:$0xf]
        %v8077 = vld [vmem:[%s307 + $0x14] sm:$0x1]
        %v8078 = vld [vmem:[%s307 + $0x18] sm:$0xf]
        %v8079 = vld [vmem:[%s307 + $0x1c] sm:$0xf]
        %v8080 = vld [vmem:[%s307 + $0x20] sm:$0x1]
        %v8081 = vld [vmem:[%s307 + $0x24] sm:$0xf]
        %v8082 = vld [vmem:[%s307 + $0x28] sm:$0xf]
        %v8083 = vld [vmem:[%s307 + $0x2c] sm:$0x1]
        %v8084 = vld [vmem:[%s307 + $0x30] sm:$0xf]
        %v8085 = vld [vmem:[%s307 + $0x34] sm:$0xf]
        %v8086 = vld [vmem:[%s307 + $0x38] sm:$0x1]
        %v8087 = vld [vmem:[%s307 + $0x3c] sm:$0xf]
        %v8088 = vld [vmem:[%s307 + $0x40] sm:$0xf]
        %v8089 = vld [vmem:[%s307 + $0x44] sm:$0x1]
        %v8090 = vld [vmem:[%s307 + $0x48] sm:$0xf]
        %v8091 = vld [vmem:[%s307 + $0x4c] sm:$0xf]
        %v8092 = vld [vmem:[%s307 + $0x50] sm:$0x1]
        %v8093 = vld [vmem:[%s307 + $0x54] sm:$0xf]
        %v8094 = vld [vmem:[%s307 + $0x58] sm:$0xf]
        %v8095 = vld [vmem:[%s307 + $0x5c] sm:$0x1]
        %v8096 = vld [vmem:[%s307 + $0x60] sm:$0xf]
        %v8097 = vld [vmem:[%s307 + $0x64] sm:$0xf]
        %v8098 = vld [vmem:[%s307 + $0x68] sm:$0x1]
        %v8099 = vld [vmem:[%s307 + $0x6c] sm:$0xf]
        %v8100 = vld [vmem:[%s307 + $0x70] sm:$0xf]
        %v8101 = vld [vmem:[%s307 + $0x74] sm:$0x1]
        %v8102 = vld [vmem:[%s307 + $0x78] sm:$0xf]
        %v8103 = vld [vmem:[%s307 + $0x7c] sm:$0xf]
        %v8104 = vld [vmem:[%s307 + $0x80] sm:$0x1]
        %v8105 = vld [vmem:[%s307 + $0x84] sm:$0xf]
        %v8106 = vld [vmem:[%s307 + $0x88] sm:$0xf]
        %v8107 = vld [vmem:[%s307 + $0x8c] sm:$0x1]
        %v8108 = vld [vmem:[%s307 + $0x90] sm:$0xf]
        %v8109 = vld [vmem:[%s307 + $0x94] sm:$0xf]
        %v8110 = vld [vmem:[%s307 + $0x98] sm:$0x1]
        %v8111 = vld [vmem:[%s307 + $0x9c] sm:$0xf]
        %v8112 = vld [vmem:[%s307 + $0xa0] sm:$0xf]
        %v8113 = vld [vmem:[%s307 + $0xa4] sm:$0x1]
        %v8114 = vld [vmem:[%s307 + $0xa8] sm:$0xf]
        %v8115 = vld [vmem:[%s307 + $0xac] sm:$0xf]
        %v8116 = vld [vmem:[%s307 + $0xb0] sm:$0x1]
        %v8117 = vld [vmem:[%s307 + $0xb4] sm:$0xf]
        %v8118 = vld [vmem:[%s307 + $0xb8] sm:$0xf]
        %v8119 = vld [vmem:[%s307 + $0xbc] sm:$0x1]
        %v8121 = vshrl.u32 %v8072, 16
        %v8123 = vrot.slane %v8121, 4
        %v8124 = vshll.u32 %v8072, 16
        %v8126 = vrot.slane %v8124, 5
        %v8127 = vor.u32 %v8123, %v8126
        %v8128 = vrot.slane %v8127, 4
        %v8130 = vshll.u32 %v8073, 16
        %v8132 = vrot.slane %v8130, 5
        %v8133 = vsel %vm1027, %v8128, %v8132
        %v8134 = vshrl.u32 %v8073, 16
        %v8136 = vrot.slane %v8134, 4
        %v8137 = vor.u32 %v8136, %v8132
        %v8138 = vrot.slane %v8137, 4
        %v8140 = vshll.u32 %v8074, 16
        %v8142 = vrot.slane %v8140, 5
        %v8143 = vsel %vm1027, %v8138, %v8142
        %v8145 = vshrl.u32 %v8075, 16
        %v8147 = vrot.slane %v8145, 4
        %v8148 = vshll.u32 %v8075, 16
        %v8150 = vrot.slane %v8148, 5
        %v8151 = vor.u32 %v8147, %v8150
        %v8152 = vrot.slane %v8151, 4
        %v8154 = vshll.u32 %v8076, 16
        %v8156 = vrot.slane %v8154, 5
        %v8157 = vsel %vm1027, %v8152, %v8156
        %v8158 = vshrl.u32 %v8076, 16
        %v8160 = vrot.slane %v8158, 4
        %v8161 = vor.u32 %v8160, %v8156
        %v8162 = vrot.slane %v8161, 4
        %v8164 = vshll.u32 %v8077, 16
        %v8166 = vrot.slane %v8164, 5
        %v8167 = vsel %vm1027, %v8162, %v8166
        %v8169 = vshrl.u32 %v8078, 16
        %v8171 = vrot.slane %v8169, 4
        %v8172 = vshll.u32 %v8078, 16
        %v8174 = vrot.slane %v8172, 5
        %v8175 = vor.u32 %v8171, %v8174
        %v8176 = vrot.slane %v8175, 4
        %v8178 = vshll.u32 %v8079, 16
        %v8180 = vrot.slane %v8178, 5
        %v8181 = vsel %vm1027, %v8176, %v8180
        %v8182 = vshrl.u32 %v8079, 16
        %v8184 = vrot.slane %v8182, 4
        %v8185 = vor.u32 %v8184, %v8180
        %v8186 = vrot.slane %v8185, 4
        %v8188 = vshll.u32 %v8080, 16
        %v8190 = vrot.slane %v8188, 5
        %v8191 = vsel %vm1027, %v8186, %v8190
        %v8193 = vshrl.u32 %v8081, 16
        %v8195 = vrot.slane %v8193, 4
        %v8196 = vshll.u32 %v8081, 16
        %v8198 = vrot.slane %v8196, 5
        %v8199 = vor.u32 %v8195, %v8198
        %v8200 = vrot.slane %v8199, 4
        %v8202 = vshll.u32 %v8082, 16
        %v8204 = vrot.slane %v8202, 5
        %v8205 = vsel %vm1027, %v8200, %v8204
        %v8206 = vshrl.u32 %v8082, 16
        %v8208 = vrot.slane %v8206, 4
        %v8209 = vor.u32 %v8208, %v8204
        %v8210 = vrot.slane %v8209, 4
        %v8212 = vshll.u32 %v8083, 16
        %v8214 = vrot.slane %v8212, 5
        %v8215 = vsel %vm1027, %v8210, %v8214
        %v8217 = vshrl.u32 %v8084, 16
        %v8219 = vrot.slane %v8217, 4
        %v8220 = vshll.u32 %v8084, 16
        %v8222 = vrot.slane %v8220, 5
        %v8223 = vor.u32 %v8219, %v8222
        %v8224 = vrot.slane %v8223, 4
        %v8226 = vshll.u32 %v8085, 16
        %v8228 = vrot.slane %v8226, 5
        %v8229 = vsel %vm1027, %v8224, %v8228
        %v8230 = vshrl.u32 %v8085, 16
        %v8232 = vrot.slane %v8230, 4
        %v8233 = vor.u32 %v8232, %v8228
        %v8234 = vrot.slane %v8233, 4
        %v8236 = vshll.u32 %v8086, 16
        %v8238 = vrot.slane %v8236, 5
        %v8239 = vsel %vm1027, %v8234, %v8238
        %v8241 = vshrl.u32 %v8087, 16
        %v8243 = vrot.slane %v8241, 4
        %v8244 = vshll.u32 %v8087, 16
        %v8246 = vrot.slane %v8244, 5
        %v8247 = vor.u32 %v8243, %v8246
        %v8248 = vrot.slane %v8247, 4
        %v8250 = vshll.u32 %v8088, 16
        %v8252 = vrot.slane %v8250, 5
        %v8253 = vsel %vm1027, %v8248, %v8252
        %v8254 = vshrl.u32 %v8088, 16
        %v8256 = vrot.slane %v8254, 4
        %v8257 = vor.u32 %v8256, %v8252
        %v8258 = vrot.slane %v8257, 4
        %v8260 = vshll.u32 %v8089, 16
        %v8262 = vrot.slane %v8260, 5
        %v8263 = vsel %vm1027, %v8258, %v8262
        %v8265 = vshrl.u32 %v8090, 16
        %v8267 = vrot.slane %v8265, 4
        %v8268 = vshll.u32 %v8090, 16
        %v8270 = vrot.slane %v8268, 5
        %v8271 = vor.u32 %v8267, %v8270
        %v8272 = vrot.slane %v8271, 4
        %v8274 = vshll.u32 %v8091, 16
        %v8276 = vrot.slane %v8274, 5
        %v8277 = vsel %vm1027, %v8272, %v8276
        %v8278 = vshrl.u32 %v8091, 16
        %v8280 = vrot.slane %v8278, 4
        %v8281 = vor.u32 %v8280, %v8276
        %v8282 = vrot.slane %v8281, 4
        %v8284 = vshll.u32 %v8092, 16
        %v8286 = vrot.slane %v8284, 5
        %v8287 = vsel %vm1027, %v8282, %v8286
        %v8289 = vshrl.u32 %v8093, 16
        %v8291 = vrot.slane %v8289, 4
        %v8292 = vshll.u32 %v8093, 16
        %v8294 = vrot.slane %v8292, 5
        %v8295 = vor.u32 %v8291, %v8294
        %v8296 = vrot.slane %v8295, 4
        %v8298 = vshll.u32 %v8094, 16
        %v8300 = vrot.slane %v8298, 5
        %v8301 = vsel %vm1027, %v8296, %v8300
        %v8302 = vshrl.u32 %v8094, 16
        %v8304 = vrot.slane %v8302, 4
        %v8305 = vor.u32 %v8304, %v8300
        %v8306 = vrot.slane %v8305, 4
        %v8308 = vshll.u32 %v8095, 16
        %v8310 = vrot.slane %v8308, 5
        %v8311 = vsel %vm1027, %v8306, %v8310
        %v8313 = vshrl.u32 %v8096, 16
        %v8315 = vrot.slane %v8313, 4
        %v8316 = vshll.u32 %v8096, 16
        %v8318 = vrot.slane %v8316, 5
        %v8319 = vor.u32 %v8315, %v8318
        %v8320 = vrot.slane %v8319, 4
        %v8322 = vshll.u32 %v8097, 16
        %v8324 = vrot.slane %v8322, 5
        %v8325 = vsel %vm1027, %v8320, %v8324
        %v8326 = vshrl.u32 %v8097, 16
        %v8328 = vrot.slane %v8326, 4
        %v8329 = vor.u32 %v8328, %v8324
        %v8330 = vrot.slane %v8329, 4
        %v8332 = vshll.u32 %v8098, 16
        %v8334 = vrot.slane %v8332, 5
        %v8335 = vsel %vm1027, %v8330, %v8334
        %v8337 = vshrl.u32 %v8099, 16
        %v8339 = vrot.slane %v8337, 4
        %v8340 = vshll.u32 %v8099, 16
        %v8342 = vrot.slane %v8340, 5
        %v8343 = vor.u32 %v8339, %v8342
        %v8344 = vrot.slane %v8343, 4
        %v8346 = vshll.u32 %v8100, 16
        %v8348 = vrot.slane %v8346, 5
        %v8349 = vsel %vm1027, %v8344, %v8348
        %v8350 = vshrl.u32 %v8100, 16
        %v8352 = vrot.slane %v8350, 4
        %v8353 = vor.u32 %v8352, %v8348
        %v8354 = vrot.slane %v8353, 4
        %v8356 = vshll.u32 %v8101, 16
        %v8358 = vrot.slane %v8356, 5
        %v8359 = vsel %vm1027, %v8354, %v8358
        %v8361 = vshrl.u32 %v8102, 16
        %v8363 = vrot.slane %v8361, 4
        %v8364 = vshll.u32 %v8102, 16
        %v8366 = vrot.slane %v8364, 5
        %v8367 = vor.u32 %v8363, %v8366
        %v8368 = vrot.slane %v8367, 4
        %v8370 = vshll.u32 %v8103, 16
        %v8372 = vrot.slane %v8370, 5
        %v8373 = vsel %vm1027, %v8368, %v8372
        %v8374 = vshrl.u32 %v8103, 16
        %v8376 = vrot.slane %v8374, 4
        %v8377 = vor.u32 %v8376, %v8372
        %v8378 = vrot.slane %v8377, 4
        %v8380 = vshll.u32 %v8104, 16
        %v8382 = vrot.slane %v8380, 5
        %v8383 = vsel %vm1027, %v8378, %v8382
        %v8385 = vshrl.u32 %v8105, 16
        %v8387 = vrot.slane %v8385, 4
        %v8388 = vshll.u32 %v8105, 16
        %v8390 = vrot.slane %v8388, 5
        %v8391 = vor.u32 %v8387, %v8390
        %v8392 = vrot.slane %v8391, 4
        %v8394 = vshll.u32 %v8106, 16
        %v8396 = vrot.slane %v8394, 5
        %v8397 = vsel %vm1027, %v8392, %v8396
        %v8398 = vshrl.u32 %v8106, 16
        %v8400 = vrot.slane %v8398, 4
        %v8401 = vor.u32 %v8400, %v8396
        %v8402 = vrot.slane %v8401, 4
        %v8404 = vshll.u32 %v8107, 16
        %v8406 = vrot.slane %v8404, 5
        %v8407 = vsel %vm1027, %v8402, %v8406
        %v8409 = vshrl.u32 %v8108, 16
        %v8411 = vrot.slane %v8409, 4
        %v8412 = vshll.u32 %v8108, 16
        %v8414 = vrot.slane %v8412, 5
        %v8415 = vor.u32 %v8411, %v8414
        %v8416 = vrot.slane %v8415, 4
        %v8418 = vshll.u32 %v8109, 16
        %v8420 = vrot.slane %v8418, 5
        %v8421 = vsel %vm1027, %v8416, %v8420
        %v8422 = vshrl.u32 %v8109, 16
        %v8424 = vrot.slane %v8422, 4
        %v8425 = vor.u32 %v8424, %v8420
        %v8426 = vrot.slane %v8425, 4
        %v8428 = vshll.u32 %v8110, 16
        %v8430 = vrot.slane %v8428, 5
        %v8431 = vsel %vm1027, %v8426, %v8430
        %v8433 = vshrl.u32 %v8111, 16
        %v8435 = vrot.slane %v8433, 4
        %v8436 = vshll.u32 %v8111, 16
        %v8438 = vrot.slane %v8436, 5
        %v8439 = vor.u32 %v8435, %v8438
        %v8440 = vrot.slane %v8439, 4
        %v8442 = vshll.u32 %v8112, 16
        %v8444 = vrot.slane %v8442, 5
        %v8445 = vsel %vm1027, %v8440, %v8444
        %v8446 = vshrl.u32 %v8112, 16
        %v8448 = vrot.slane %v8446, 4
        %v8449 = vor.u32 %v8448, %v8444
        %v8450 = vrot.slane %v8449, 4
        %v8452 = vshll.u32 %v8113, 16
        %v8454 = vrot.slane %v8452, 5
        %v8455 = vsel %vm1027, %v8450, %v8454
        %v8457 = vshrl.u32 %v8114, 16
        %v8459 = vrot.slane %v8457, 4
        %v8460 = vshll.u32 %v8114, 16
        %v8462 = vrot.slane %v8460, 5
        %v8463 = vor.u32 %v8459, %v8462
        %v8464 = vrot.slane %v8463, 4
        %v8466 = vshll.u32 %v8115, 16
        %v8468 = vrot.slane %v8466, 5
        %v8469 = vsel %vm1027, %v8464, %v8468
        %v8470 = vshrl.u32 %v8115, 16
        %v8472 = vrot.slane %v8470, 4
        %v8473 = vor.u32 %v8472, %v8468
        %v8474 = vrot.slane %v8473, 4
        %v8476 = vshll.u32 %v8116, 16
        %v8478 = vrot.slane %v8476, 5
        %v8479 = vsel %vm1027, %v8474, %v8478
        %v8481 = vshrl.u32 %v8117, 16
        %v8483 = vrot.slane %v8481, 4
        %v8484 = vshll.u32 %v8117, 16
        %v8486 = vrot.slane %v8484, 5
        %v8487 = vor.u32 %v8483, %v8486
        %v8488 = vrot.slane %v8487, 4
        %v8490 = vshll.u32 %v8118, 16
        %v8492 = vrot.slane %v8490, 5
        %v8493 = vsel %vm1027, %v8488, %v8492
        %v8494 = vshrl.u32 %v8118, 16
        %v8496 = vrot.slane %v8494, 4
        %v8497 = vor.u32 %v8496, %v8492
        %v8498 = vrot.slane %v8497, 4
        %v8500 = vshll.u32 %v8119, 16
        %v8502 = vrot.slane %v8500, 5
        %v8503 = vsel %vm1027, %v8498, %v8502
        %v8504 = vld [vmem:[%s3 + $0x40] sm:$0xf]
        %v8505 = vld [vmem:[%s3 + $0x44] sm:$0xf]
        %v8506 = vld [vmem:[%s3 + $0x48] sm:$0xf]
        %v8507 = vld [vmem:[%s3 + $0x4c] sm:$0xf]
        %v8508 = vunpack.c.l.b16 %v8133
        %v8509 = vunpack.c.l.b16 %v8143
        %v8510 = vunpack.c.l.b16 %v8157
        %v8511 = vunpack.c.l.b16 %v8167
        %v8512 = vunpack.c.l.b16 %v8181
        %v8513 = vunpack.c.l.b16 %v8191
        %v8514 = vunpack.c.l.b16 %v8205
        %v8515 = vunpack.c.l.b16 %v8215
        %v8516 = vunpack.c.l.b16 %v8229
        %v8517 = vunpack.c.l.b16 %v8239
        %v8518 = vunpack.c.l.b16 %v8253
        %v8519 = vunpack.c.l.b16 %v8263
        %v8520 = vunpack.c.l.b16 %v8277
        %v8521 = vunpack.c.l.b16 %v8287
        %v8522 = vunpack.c.l.b16 %v8301
        %v8523 = vunpack.c.l.b16 %v8311
        %v8524 = vunpack.c.l.b16 %v8325
        %v8525 = vunpack.c.l.b16 %v8335
        %v8526 = vunpack.c.l.b16 %v8349
        %v8527 = vunpack.c.l.b16 %v8359
        %v8528 = vunpack.c.l.b16 %v8373
        %v8529 = vunpack.c.l.b16 %v8383
        %v8530 = vunpack.c.l.b16 %v8397
        %v8531 = vunpack.c.l.b16 %v8407
        %v8532 = vunpack.c.l.b16 %v8421
        %v8533 = vunpack.c.l.b16 %v8431
        %v8534 = vunpack.c.l.b16 %v8445
        %v8535 = vunpack.c.l.b16 %v8455
        %v8536 = vunpack.c.l.b16 %v8469
        %v8537 = vunpack.c.l.b16 %v8479
        %v8538 = vunpack.c.l.b16 %v8493
        %v8539 = vunpack.c.l.b16 %v8503
        %v8540 = vpack.c.b16 %v8509, %v8508
        %v8541 = vpack.c.b16 %v8511, %v8510
        %v8542 = vpack.c.b16 %v8513, %v8512
        %v8543 = vpack.c.b16 %v8515, %v8514
        %v8544 = vpack.c.b16 %v8517, %v8516
        %v8545 = vpack.c.b16 %v8519, %v8518
        %v8546 = vpack.c.b16 %v8521, %v8520
        %v8547 = vpack.c.b16 %v8523, %v8522
        %v8548 = vpack.c.b16 %v8525, %v8524
        %v8549 = vpack.c.b16 %v8527, %v8526
        %v8550 = vpack.c.b16 %v8529, %v8528
        %v8551 = vpack.c.b16 %v8531, %v8530
        %v8552 = vpack.c.b16 %v8533, %v8532
        %v8553 = vpack.c.b16 %v8535, %v8534
        %v8554 = vpack.c.b16 %v8537, %v8536
        %v8555 = vpack.c.b16 %v8539, %v8538
        %v8560 = vunpack.c.l.b16 %v8504
        %v8561 = vunpack.c.l.b16 %v8505
        %v8562 = vunpack.c.l.b16 %v8506
        %v8563 = vunpack.c.l.b16 %v8507
        %v8564 = vpack.c.b16 %v8561, %v8560
        %v8565 = vpack.c.b16 %v8563, %v8562
        %v8569 = vsel %vm1476, %v8540, 0
        %v8572 = vsel %vm1476, %v8541, 0
        %v8575 = vsel %vm1476, %v8542, 0
        %v8578 = vsel %vm1476, %v8543, 0
        %v8581 = vsel %vm1476, %v8544, 0
        %v8584 = vsel %vm1476, %v8545, 0
        %v8587 = vsel %vm1476, %v8546, 0
        %v8590 = vsel %vm1476, %v8547, 0
        %v8593 = vsel %vm1476, %v8548, 0
        %v8596 = vsel %vm1476, %v8549, 0
        %v8599 = vsel %vm1476, %v8550, 0
        %v8602 = vsel %vm1476, %v8551, 0
        %v8605 = vsel %vm1476, %v8552, 0
        %v8608 = vsel %vm1476, %v8553, 0
        %v8611 = vsel %vm1476, %v8554, 0
        %v8614 = vsel %vm1476, %v8555, 0
        %8616 = vmatprep.subr.bf16.mxu0 0
        %8617 = vmatpush1.bf16.msra.mxu0 0
        %8618 = vmatprep.subr.bf16.mxu0 0
        %8619 = vmatpush1.bf16.msra.mxu0 0
        %8620 = vmatprep.subr.bf16.mxu0 0
        %8621 = vmatpush1.bf16.msra.mxu0 0
        %8622 = vmatprep.subr.bf16.mxu0 0
        %8623 = vmatpush1.bf16.msra.mxu0 0
        %8624 = vmatprep.subr.bf16.mxu0 0
        %8625 = vmatpush1.bf16.msra.mxu0 0
        %8626 = vmatprep.subr.bf16.mxu0 0
        %8627 = vmatpush1.bf16.msra.mxu0 0
        %8628 = vmatprep.subr.bf16.mxu0 0
        %8629 = vmatpush1.bf16.msra.mxu0 %v8565
        %8630 = vmatprep.subr.bf16.mxu0 0
        %8631 = vmatpush1.bf16.msra.mxu0 %v8564
        %8632 = vmatprep.subr.bf16.mxu0 0
        %8633 = vmatpush2.bf16.msra.mxu0 0
        %8634 = vmatprep.subr.bf16.mxu0 0
        %8635 = vmatpush2.bf16.msra.mxu0 0
        %8636 = vmatprep.subr.bf16.mxu0 0
        %8637 = vmatpush2.bf16.msra.mxu0 0
        %8638 = vmatprep.subr.bf16.mxu0 0
        %8639 = vmatpush2.bf16.msra.mxu0 0
        %8640 = vmatprep.subr.bf16.mxu0 0
        %8641 = vmatpush2.bf16.msra.mxu0 0
        %8642 = vmatprep.subr.bf16.mxu0 0
        %8643 = vmatpush2.bf16.msra.mxu0 0
        %8644 = vmatprep.subr.bf16.mxu0 0
        %8645 = vmatpush2.bf16.msra.mxu0 0
        %8646 = vmatprep.subr.bf16.mxu0 0
        %8647 = vmatpush2.bf16.msra.mxu0 0
        %8648 = vmatprep.mubr.bf16.mxu0 0
        %8649 = vmatmul.mubr.bf16.gmra.mxu0 %v8569
        %v8650 = vpop.f32.mrf.mxu0
        %v8651 = vadd.f32 0.0, %v8650
        %v8652 = vpop.f32.mrf.mxu0
        %v8653 = vpop.f32.mrf.mxu0
        %v8654 = vadd.f32 0.0, %v8653
        %v8655 = vpop.f32.mrf.mxu0
        %8656 = vmatprep.mubr.bf16.mxu0 0
        %8657 = vmatmul.mubr.bf16.gmra.mxu0 %v8572
        %v8658 = vpop.f32.mrf.mxu0
        %v8659 = vadd.f32 0.0, %v8658
        %v8660 = vpop.f32.mrf.mxu0
        %v8661 = vpop.f32.mrf.mxu0
        %v8662 = vadd.f32 0.0, %v8661
        %v8663 = vpop.f32.mrf.mxu0
        %8664 = vmatprep.mubr.bf16.mxu0 0
        %8665 = vmatmul.mubr.bf16.gmra.mxu0 %v8575
        %v8666 = vpop.f32.mrf.mxu0
        %v8667 = vadd.f32 0.0, %v8666
        %v8668 = vpop.f32.mrf.mxu0
        %v8669 = vpop.f32.mrf.mxu0
        %v8670 = vadd.f32 0.0, %v8669
        %v8671 = vpop.f32.mrf.mxu0
        %8672 = vmatprep.mubr.bf16.mxu0 0
        %8673 = vmatmul.mubr.bf16.gmra.mxu0 %v8578
        %v8674 = vpop.f32.mrf.mxu0
        %v8675 = vadd.f32 0.0, %v8674
        %v8676 = vpop.f32.mrf.mxu0
        %v8677 = vpop.f32.mrf.mxu0
        %v8678 = vadd.f32 0.0, %v8677
        %v8679 = vpop.f32.mrf.mxu0
        %8680 = vmatprep.mubr.bf16.mxu0 0
        %8681 = vmatmul.mubr.bf16.gmra.mxu0 %v8581
        %v8682 = vpop.f32.mrf.mxu0
        %v8683 = vadd.f32 0.0, %v8682
        %v8684 = vpop.f32.mrf.mxu0
        %v8685 = vpop.f32.mrf.mxu0
        %v8686 = vadd.f32 0.0, %v8685
        %v8687 = vpop.f32.mrf.mxu0
        %8688 = vmatprep.mubr.bf16.mxu0 0
        %8689 = vmatmul.mubr.bf16.gmra.mxu0 %v8584
        %v8690 = vpop.f32.mrf.mxu0
        %v8691 = vadd.f32 0.0, %v8690
        %v8692 = vpop.f32.mrf.mxu0
        %v8693 = vpop.f32.mrf.mxu0
        %v8694 = vadd.f32 0.0, %v8693
        %v8695 = vpop.f32.mrf.mxu0
        %8696 = vmatprep.mubr.bf16.mxu0 0
        %8697 = vmatmul.mubr.bf16.gmra.mxu0 %v8587
        %v8698 = vpop.f32.mrf.mxu0
        %v8699 = vadd.f32 0.0, %v8698
        %v8700 = vpop.f32.mrf.mxu0
        %v8701 = vpop.f32.mrf.mxu0
        %v8702 = vadd.f32 0.0, %v8701
        %v8703 = vpop.f32.mrf.mxu0
        %8704 = vmatprep.mubr.bf16.mxu0 0
        %8705 = vmatmul.mubr.bf16.gmra.mxu0 %v8590
        %v8706 = vpop.f32.mrf.mxu0
        %v8707 = vadd.f32 0.0, %v8706
        %v8708 = vpop.f32.mrf.mxu0
        %v8709 = vpop.f32.mrf.mxu0
        %v8710 = vadd.f32 0.0, %v8709
        %v8711 = vpop.f32.mrf.mxu0
        %8712 = vmatprep.mubr.bf16.mxu0 0
        %8713 = vmatmul.mubr.bf16.gmra.mxu0 %v8593
        %v8714 = vpop.f32.mrf.mxu0
        %v8715 = vadd.f32 0.0, %v8714
        %v8716 = vpop.f32.mrf.mxu0
        %v8717 = vpop.f32.mrf.mxu0
        %v8718 = vadd.f32 0.0, %v8717
        %v8719 = vpop.f32.mrf.mxu0
        %8720 = vmatprep.mubr.bf16.mxu0 0
        %8721 = vmatmul.mubr.bf16.gmra.mxu0 %v8596
        %v8722 = vpop.f32.mrf.mxu0
        %v8723 = vadd.f32 0.0, %v8722
        %v8724 = vpop.f32.mrf.mxu0
        %v8725 = vpop.f32.mrf.mxu0
        %v8726 = vadd.f32 0.0, %v8725
        %v8727 = vpop.f32.mrf.mxu0
        %8728 = vmatprep.mubr.bf16.mxu0 0
        %8729 = vmatmul.mubr.bf16.gmra.mxu0 %v8599
        %v8730 = vpop.f32.mrf.mxu0
        %v8731 = vadd.f32 0.0, %v8730
        %v8732 = vpop.f32.mrf.mxu0
        %v8733 = vpop.f32.mrf.mxu0
        %v8734 = vadd.f32 0.0, %v8733
        %v8735 = vpop.f32.mrf.mxu0
        %8736 = vmatprep.mubr.bf16.mxu0 0
        %8737 = vmatmul.mubr.bf16.gmra.mxu0 %v8602
        %v8738 = vpop.f32.mrf.mxu0
        %v8739 = vadd.f32 0.0, %v8738
        %v8740 = vpop.f32.mrf.mxu0
        %v8741 = vpop.f32.mrf.mxu0
        %v8742 = vadd.f32 0.0, %v8741
        %v8743 = vpop.f32.mrf.mxu0
        %8744 = vmatprep.mubr.bf16.mxu0 0
        %8745 = vmatmul.mubr.bf16.gmra.mxu0 %v8605
        %v8746 = vpop.f32.mrf.mxu0
        %v8747 = vadd.f32 0.0, %v8746
        %v8748 = vpop.f32.mrf.mxu0
        %v8749 = vpop.f32.mrf.mxu0
        %v8750 = vadd.f32 0.0, %v8749
        %v8751 = vpop.f32.mrf.mxu0
        %8752 = vmatprep.mubr.bf16.mxu0 0
        %8753 = vmatmul.mubr.bf16.gmra.mxu0 %v8608
        %v8754 = vpop.f32.mrf.mxu0
        %v8755 = vadd.f32 0.0, %v8754
        %v8756 = vpop.f32.mrf.mxu0
        %v8757 = vpop.f32.mrf.mxu0
        %v8758 = vadd.f32 0.0, %v8757
        %v8759 = vpop.f32.mrf.mxu0
        %8760 = vmatprep.mubr.bf16.mxu0 0
        %8761 = vmatmul.mubr.bf16.gmra.mxu0 %v8611
        %v8762 = vpop.f32.mrf.mxu0
        %v8763 = vadd.f32 0.0, %v8762
        %v8764 = vpop.f32.mrf.mxu0
        %v8765 = vpop.f32.mrf.mxu0
        %v8766 = vadd.f32 0.0, %v8765
        %v8767 = vpop.f32.mrf.mxu0
        %8768 = vmatprep.mubr.bf16.mxu0 0
        %8769 = vmatmul.mubr.bf16.gmra.mxu0 %v8614
        %v8770 = vpop.f32.mrf.mxu0
        %v8771 = vadd.f32 0.0, %v8770
        %v8772 = vpop.f32.mrf.mxu0
        %v8773 = vpop.f32.mrf.mxu0
        %v8774 = vadd.f32 0.0, %v8773
        %v8775 = vpop.f32.mrf.mxu0
        %8776 = vdwg.mxu0
        %v8777 = vadd.f32 %v8040, %v8651
        %v8778 = vadd.f32 %v8041, %v8654
        %v8779 = vadd.f32 %v8042, %v8659
        %v8780 = vadd.f32 %v8043, %v8662
        %v8781 = vadd.f32 %v8044, %v8667
        %v8782 = vadd.f32 %v8045, %v8670
        %v8783 = vadd.f32 %v8046, %v8675
        %v8784 = vadd.f32 %v8047, %v8678
        %v8785 = vadd.f32 %v8048, %v8683
        %v8786 = vadd.f32 %v8049, %v8686
        %v8787 = vadd.f32 %v8050, %v8691
        %v8788 = vadd.f32 %v8051, %v8694
        %v8789 = vadd.f32 %v8052, %v8699
        %v8790 = vadd.f32 %v8053, %v8702
        %v8791 = vadd.f32 %v8054, %v8707
        %v8792 = vadd.f32 %v8055, %v8710
        %v8793 = vadd.f32 %v8056, %v8715
        %v8794 = vadd.f32 %v8057, %v8718
        %v8795 = vadd.f32 %v8058, %v8723
        %v8796 = vadd.f32 %v8059, %v8726
        %v8797 = vadd.f32 %v8060, %v8731
        %v8798 = vadd.f32 %v8061, %v8734
        %v8799 = vadd.f32 %v8062, %v8739
        %v8800 = vadd.f32 %v8063, %v8742
        %v8801 = vadd.f32 %v8064, %v8747
        %v8802 = vadd.f32 %v8065, %v8750
        %v8803 = vadd.f32 %v8066, %v8755
        %v8804 = vadd.f32 %v8067, %v8758
        %v8805 = vadd.f32 %v8068, %v8763
        %v8806 = vadd.f32 %v8069, %v8766
        %v8807 = vadd.f32 %v8070, %v8771
        %v8808 = vadd.f32 %v8071, %v8774
        %v8809 = vld [vmem:[%s307] sm:$0xe]
        %v8810 = vld [vmem:[%s307 + $0xc] sm:$0xe]
        %v8811 = vld [vmem:[%s307 + $0x18] sm:$0xe]
        %v8812 = vld [vmem:[%s307 + $0x24] sm:$0xe]
        %v8813 = vld [vmem:[%s307 + $0x30] sm:$0xe]
        %v8814 = vld [vmem:[%s307 + $0x3c] sm:$0xe]
        %v8815 = vld [vmem:[%s307 + $0x48] sm:$0xe]
        %v8816 = vld [vmem:[%s307 + $0x54] sm:$0xe]
        %v8817 = vld [vmem:[%s307 + $0x60] sm:$0xe]
        %v8818 = vld [vmem:[%s307 + $0x6c] sm:$0xe]
        %v8819 = vld [vmem:[%s307 + $0x78] sm:$0xe]
        %v8820 = vld [vmem:[%s307 + $0x84] sm:$0xe]
        %v8821 = vld [vmem:[%s307 + $0x90] sm:$0xe]
        %v8822 = vld [vmem:[%s307 + $0x9c] sm:$0xe]
        %v8823 = vld [vmem:[%s307 + $0xa8] sm:$0xe]
        %v8824 = vld [vmem:[%s307 + $0xb4] sm:$0xe]
        %v8873 = vrot.slane %v8809, 5
        %v8874 = vrot.slane %v8873, 4
        %v8875 = vrot.slane %v8073, 5
        %v8876 = vsel %vm2037, %v8874, %v8875
        %v8877 = vrot.slane %v8875, 4
        %v8878 = vrot.slane %v8074, 5
        %v8879 = vsel %vm2037, %v8877, %v8878
        %v8880 = vrot.slane %v8810, 5
        %v8881 = vrot.slane %v8880, 4
        %v8882 = vrot.slane %v8076, 5
        %v8883 = vsel %vm2037, %v8881, %v8882
        %v8884 = vrot.slane %v8882, 4
        %v8885 = vrot.slane %v8077, 5
        %v8886 = vsel %vm2037, %v8884, %v8885
        %v8887 = vrot.slane %v8811, 5
        %v8888 = vrot.slane %v8887, 4
        %v8889 = vrot.slane %v8079, 5
        %v8890 = vsel %vm2037, %v8888, %v8889
        %v8891 = vrot.slane %v8889, 4
        %v8892 = vrot.slane %v8080, 5
        %v8893 = vsel %vm2037, %v8891, %v8892
        %v8894 = vrot.slane %v8812, 5
        %v8895 = vrot.slane %v8894, 4
        %v8896 = vrot.slane %v8082, 5
        %v8897 = vsel %vm2037, %v8895, %v8896
        %v8898 = vrot.slane %v8896, 4
        %v8899 = vrot.slane %v8083, 5
        %v8900 = vsel %vm2037, %v8898, %v8899
        %v8901 = vrot.slane %v8813, 5
        %v8902 = vrot.slane %v8901, 4
        %v8903 = vrot.slane %v8085, 5
        %v8904 = vsel %vm2037, %v8902, %v8903
        %v8905 = vrot.slane %v8903, 4
        %v8906 = vrot.slane %v8086, 5
        %v8907 = vsel %vm2037, %v8905, %v8906
        %v8908 = vrot.slane %v8814, 5
        %v8909 = vrot.slane %v8908, 4
        %v8910 = vrot.slane %v8088, 5
        %v8911 = vsel %vm2037, %v8909, %v8910
        %v8912 = vrot.slane %v8910, 4
        %v8913 = vrot.slane %v8089, 5
        %v8914 = vsel %vm2037, %v8912, %v8913
        %v8915 = vrot.slane %v8815, 5
        %v8916 = vrot.slane %v8915, 4
        %v8917 = vrot.slane %v8091, 5
        %v8918 = vsel %vm2037, %v8916, %v8917
        %v8919 = vrot.slane %v8917, 4
        %v8920 = vrot.slane %v8092, 5
        %v8921 = vsel %vm2037, %v8919, %v8920
        %v8922 = vrot.slane %v8816, 5
        %v8923 = vrot.slane %v8922, 4
        %v8924 = vrot.slane %v8094, 5
        %v8925 = vsel %vm2037, %v8923, %v8924
        %v8926 = vrot.slane %v8924, 4
        %v8927 = vrot.slane %v8095, 5
        %v8928 = vsel %vm2037, %v8926, %v8927
        %v8929 = vrot.slane %v8817, 5
        %v8930 = vrot.slane %v8929, 4
        %v8931 = vrot.slane %v8097, 5
        %v8932 = vsel %vm2037, %v8930, %v8931
        %v8933 = vrot.slane %v8931, 4
        %v8934 = vrot.slane %v8098, 5
        %v8935 = vsel %vm2037, %v8933, %v8934
        %v8936 = vrot.slane %v8818, 5
        %v8937 = vrot.slane %v8936, 4
        %v8938 = vrot.slane %v8100, 5
        %v8939 = vsel %vm2037, %v8937, %v8938
        %v8940 = vrot.slane %v8938, 4
        %v8941 = vrot.slane %v8101, 5
        %v8942 = vsel %vm2037, %v8940, %v8941
        %v8943 = vrot.slane %v8819, 5
        %v8944 = vrot.slane %v8943, 4
        %v8945 = vrot.slane %v8103, 5
        %v8946 = vsel %vm2037, %v8944, %v8945
        %v8947 = vrot.slane %v8945, 4
        %v8948 = vrot.slane %v8104, 5
        %v8949 = vsel %vm2037, %v8947, %v8948
        %v8950 = vrot.slane %v8820, 5
        %v8951 = vrot.slane %v8950, 4
        %v8952 = vrot.slane %v8106, 5
        %v8953 = vsel %vm2037, %v8951, %v8952
        %v8954 = vrot.slane %v8952, 4
        %v8955 = vrot.slane %v8107, 5
        %v8956 = vsel %vm2037, %v8954, %v8955
        %v8957 = vrot.slane %v8821, 5
        %v8958 = vrot.slane %v8957, 4
        %v8959 = vrot.slane %v8109, 5
        %v8960 = vsel %vm2037, %v8958, %v8959
        %v8961 = vrot.slane %v8959, 4
        %v8962 = vrot.slane %v8110, 5
        %v8963 = vsel %vm2037, %v8961, %v8962
        %v8964 = vrot.slane %v8822, 5
        %v8965 = vrot.slane %v8964, 4
        %v8966 = vrot.slane %v8112, 5
        %v8967 = vsel %vm2037, %v8965, %v8966
        %v8968 = vrot.slane %v8966, 4
        %v8969 = vrot.slane %v8113, 5
        %v8970 = vsel %vm2037, %v8968, %v8969
        %v8971 = vrot.slane %v8823, 5
        %v8972 = vrot.slane %v8971, 4
        %v8973 = vrot.slane %v8115, 5
        %v8974 = vsel %vm2037, %v8972, %v8973
        %v8975 = vrot.slane %v8973, 4
        %v8976 = vrot.slane %v8116, 5
        %v8977 = vsel %vm2037, %v8975, %v8976
        %v8978 = vrot.slane %v8824, 5
        %v8979 = vrot.slane %v8978, 4
        %v8980 = vrot.slane %v8118, 5
        %v8981 = vsel %vm2037, %v8979, %v8980
        %v8982 = vrot.slane %v8980, 4
        %v8983 = vrot.slane %v8119, 5
        %v8984 = vsel %vm2037, %v8982, %v8983
        %v8985 = vld [vmem:[%s3 + $0x50] sm:$0xf]
        %v8986 = vld [vmem:[%s3 + $0x54] sm:$0xf]
        %v8987 = vld [vmem:[%s3 + $0x58] sm:$0xf]
        %v8988 = vld [vmem:[%s3 + $0x5c] sm:$0xf]
        %v8989 = vunpack.c.l.b16 %v8876
        %v8990 = vunpack.c.l.b16 %v8879
        %v8991 = vunpack.c.l.b16 %v8883
        %v8992 = vunpack.c.l.b16 %v8886
        %v8993 = vunpack.c.l.b16 %v8890
        %v8994 = vunpack.c.l.b16 %v8893
        %v8995 = vunpack.c.l.b16 %v8897
        %v8996 = vunpack.c.l.b16 %v8900
        %v8997 = vunpack.c.l.b16 %v8904
        %v8998 = vunpack.c.l.b16 %v8907
        %v8999 = vunpack.c.l.b16 %v8911
        %v9000 = vunpack.c.l.b16 %v8914
        %v9001 = vunpack.c.l.b16 %v8918
        %v9002 = vunpack.c.l.b16 %v8921
        %v9003 = vunpack.c.l.b16 %v8925
        %v9004 = vunpack.c.l.b16 %v8928
        %v9005 = vunpack.c.l.b16 %v8932
        %v9006 = vunpack.c.l.b16 %v8935
        %v9007 = vunpack.c.l.b16 %v8939
        %v9008 = vunpack.c.l.b16 %v8942
        %v9009 = vunpack.c.l.b16 %v8946
        %v9010 = vunpack.c.l.b16 %v8949
        %v9011 = vunpack.c.l.b16 %v8953
        %v9012 = vunpack.c.l.b16 %v8956
        %v9013 = vunpack.c.l.b16 %v8960
        %v9014 = vunpack.c.l.b16 %v8963
        %v9015 = vunpack.c.l.b16 %v8967
        %v9016 = vunpack.c.l.b16 %v8970
        %v9017 = vunpack.c.l.b16 %v8974
        %v9018 = vunpack.c.l.b16 %v8977
        %v9019 = vunpack.c.l.b16 %v8981
        %v9020 = vunpack.c.l.b16 %v8984
        %v9021 = vpack.c.b16 %v8990, %v8989
        %v9022 = vpack.c.b16 %v8992, %v8991
        %v9023 = vpack.c.b16 %v8994, %v8993
        %v9024 = vpack.c.b16 %v8996, %v8995
        %v9025 = vpack.c.b16 %v8998, %v8997
        %v9026 = vpack.c.b16 %v9000, %v8999
        %v9027 = vpack.c.b16 %v9002, %v9001
        %v9028 = vpack.c.b16 %v9004, %v9003
        %v9029 = vpack.c.b16 %v9006, %v9005
        %v9030 = vpack.c.b16 %v9008, %v9007
        %v9031 = vpack.c.b16 %v9010, %v9009
        %v9032 = vpack.c.b16 %v9012, %v9011
        %v9033 = vpack.c.b16 %v9014, %v9013
        %v9034 = vpack.c.b16 %v9016, %v9015
        %v9035 = vpack.c.b16 %v9018, %v9017
        %v9036 = vpack.c.b16 %v9020, %v9019
        %v9041 = vunpack.c.l.b16 %v8985
        %v9042 = vunpack.c.l.b16 %v8986
        %v9043 = vunpack.c.l.b16 %v8987
        %v9044 = vunpack.c.l.b16 %v8988
        %v9045 = vpack.c.b16 %v9042, %v9041
        %v9046 = vpack.c.b16 %v9044, %v9043
        %v9050 = vsel %vm1476, %v9021, 0
        %v9053 = vsel %vm1476, %v9022, 0
        %v9056 = vsel %vm1476, %v9023, 0
        %v9059 = vsel %vm1476, %v9024, 0
        %v9062 = vsel %vm1476, %v9025, 0
        %v9065 = vsel %vm1476, %v9026, 0
        %v9068 = vsel %vm1476, %v9027, 0
        %v9071 = vsel %vm1476, %v9028, 0
        %v9074 = vsel %vm1476, %v9029, 0
        %v9077 = vsel %vm1476, %v9030, 0
        %v9080 = vsel %vm1476, %v9031, 0
        %v9083 = vsel %vm1476, %v9032, 0
        %v9086 = vsel %vm1476, %v9033, 0
        %v9089 = vsel %vm1476, %v9034, 0
        %v9092 = vsel %vm1476, %v9035, 0
        %v9095 = vsel %vm1476, %v9036, 0
        %9097 = vmatprep.subr.bf16.mxu0 0
        %9098 = vmatpush1.bf16.msra.mxu0 0
        %9099 = vmatprep.subr.bf16.mxu0 0
        %9100 = vmatpush1.bf16.msra.mxu0 0
        %9101 = vmatprep.subr.bf16.mxu0 0
        %9102 = vmatpush1.bf16.msra.mxu0 0
        %9103 = vmatprep.subr.bf16.mxu0 0
        %9104 = vmatpush1.bf16.msra.mxu0 0
        %9105 = vmatprep.subr.bf16.mxu0 0
        %9106 = vmatpush1.bf16.msra.mxu0 0
        %9107 = vmatprep.subr.bf16.mxu0 0
        %9108 = vmatpush1.bf16.msra.mxu0 0
        %9109 = vmatprep.subr.bf16.mxu0 0
        %9110 = vmatpush1.bf16.msra.mxu0 %v9046
        %9111 = vmatprep.subr.bf16.mxu0 0
        %9112 = vmatpush1.bf16.msra.mxu0 %v9045
        %9113 = vmatprep.subr.bf16.mxu0 0
        %9114 = vmatpush2.bf16.msra.mxu0 0
        %9115 = vmatprep.subr.bf16.mxu0 0
        %9116 = vmatpush2.bf16.msra.mxu0 0
        %9117 = vmatprep.subr.bf16.mxu0 0
        %9118 = vmatpush2.bf16.msra.mxu0 0
        %9119 = vmatprep.subr.bf16.mxu0 0
        %9120 = vmatpush2.bf16.msra.mxu0 0
        %9121 = vmatprep.subr.bf16.mxu0 0
        %9122 = vmatpush2.bf16.msra.mxu0 0
        %9123 = vmatprep.subr.bf16.mxu0 0
        %9124 = vmatpush2.bf16.msra.mxu0 0
        %9125 = vmatprep.subr.bf16.mxu0 0
        %9126 = vmatpush2.bf16.msra.mxu0 0
        %9127 = vmatprep.subr.bf16.mxu0 0
        %9128 = vmatpush2.bf16.msra.mxu0 0
        %9129 = vmatprep.mubr.bf16.mxu0 0
        %9130 = vmatmul.mubr.bf16.gmra.mxu0 %v9050
        %v9131 = vpop.f32.mrf.mxu0
        %v9132 = vadd.f32 0.0, %v9131
        %v9133 = vpop.f32.mrf.mxu0
        %v9134 = vpop.f32.mrf.mxu0
        %v9135 = vadd.f32 0.0, %v9134
        %v9136 = vpop.f32.mrf.mxu0
        %9137 = vmatprep.mubr.bf16.mxu0 0
        %9138 = vmatmul.mubr.bf16.gmra.mxu0 %v9053
        %v9139 = vpop.f32.mrf.mxu0
        %v9140 = vadd.f32 0.0, %v9139
        %v9141 = vpop.f32.mrf.mxu0
        %v9142 = vpop.f32.mrf.mxu0
        %v9143 = vadd.f32 0.0, %v9142
        %v9144 = vpop.f32.mrf.mxu0
        %9145 = vmatprep.mubr.bf16.mxu0 0
        %9146 = vmatmul.mubr.bf16.gmra.mxu0 %v9056
        %v9147 = vpop.f32.mrf.mxu0
        %v9148 = vadd.f32 0.0, %v9147
        %v9149 = vpop.f32.mrf.mxu0
        %v9150 = vpop.f32.mrf.mxu0
        %v9151 = vadd.f32 0.0, %v9150
        %v9152 = vpop.f32.mrf.mxu0
        %9153 = vmatprep.mubr.bf16.mxu0 0
        %9154 = vmatmul.mubr.bf16.gmra.mxu0 %v9059
        %v9155 = vpop.f32.mrf.mxu0
        %v9156 = vadd.f32 0.0, %v9155
        %v9157 = vpop.f32.mrf.mxu0
        %v9158 = vpop.f32.mrf.mxu0
        %v9159 = vadd.f32 0.0, %v9158
        %v9160 = vpop.f32.mrf.mxu0
        %9161 = vmatprep.mubr.bf16.mxu0 0
        %9162 = vmatmul.mubr.bf16.gmra.mxu0 %v9062
        %v9163 = vpop.f32.mrf.mxu0
        %v9164 = vadd.f32 0.0, %v9163
        %v9165 = vpop.f32.mrf.mxu0
        %v9166 = vpop.f32.mrf.mxu0
        %v9167 = vadd.f32 0.0, %v9166
        %v9168 = vpop.f32.mrf.mxu0
        %9169 = vmatprep.mubr.bf16.mxu0 0
        %9170 = vmatmul.mubr.bf16.gmra.mxu0 %v9065
        %v9171 = vpop.f32.mrf.mxu0
        %v9172 = vadd.f32 0.0, %v9171
        %v9173 = vpop.f32.mrf.mxu0
        %v9174 = vpop.f32.mrf.mxu0
        %v9175 = vadd.f32 0.0, %v9174
        %v9176 = vpop.f32.mrf.mxu0
        %9177 = vmatprep.mubr.bf16.mxu0 0
        %9178 = vmatmul.mubr.bf16.gmra.mxu0 %v9068
        %v9179 = vpop.f32.mrf.mxu0
        %v9180 = vadd.f32 0.0, %v9179
        %v9181 = vpop.f32.mrf.mxu0
        %v9182 = vpop.f32.mrf.mxu0
        %v9183 = vadd.f32 0.0, %v9182
        %v9184 = vpop.f32.mrf.mxu0
        %9185 = vmatprep.mubr.bf16.mxu0 0
        %9186 = vmatmul.mubr.bf16.gmra.mxu0 %v9071
        %v9187 = vpop.f32.mrf.mxu0
        %v9188 = vadd.f32 0.0, %v9187
        %v9189 = vpop.f32.mrf.mxu0
        %v9190 = vpop.f32.mrf.mxu0
        %v9191 = vadd.f32 0.0, %v9190
        %v9192 = vpop.f32.mrf.mxu0
        %9193 = vmatprep.mubr.bf16.mxu0 0
        %9194 = vmatmul.mubr.bf16.gmra.mxu0 %v9074
        %v9195 = vpop.f32.mrf.mxu0
        %v9196 = vadd.f32 0.0, %v9195
        %v9197 = vpop.f32.mrf.mxu0
        %v9198 = vpop.f32.mrf.mxu0
        %v9199 = vadd.f32 0.0, %v9198
        %v9200 = vpop.f32.mrf.mxu0
        %9201 = vmatprep.mubr.bf16.mxu0 0
        %9202 = vmatmul.mubr.bf16.gmra.mxu0 %v9077
        %v9203 = vpop.f32.mrf.mxu0
        %v9204 = vadd.f32 0.0, %v9203
        %v9205 = vpop.f32.mrf.mxu0
        %v9206 = vpop.f32.mrf.mxu0
        %v9207 = vadd.f32 0.0, %v9206
        %v9208 = vpop.f32.mrf.mxu0
        %9209 = vmatprep.mubr.bf16.mxu0 0
        %9210 = vmatmul.mubr.bf16.gmra.mxu0 %v9080
        %v9211 = vpop.f32.mrf.mxu0
        %v9212 = vadd.f32 0.0, %v9211
        %v9213 = vpop.f32.mrf.mxu0
        %v9214 = vpop.f32.mrf.mxu0
        %v9215 = vadd.f32 0.0, %v9214
        %v9216 = vpop.f32.mrf.mxu0
        %9217 = vmatprep.mubr.bf16.mxu0 0
        %9218 = vmatmul.mubr.bf16.gmra.mxu0 %v9083
        %v9219 = vpop.f32.mrf.mxu0
        %v9220 = vadd.f32 0.0, %v9219
        %v9221 = vpop.f32.mrf.mxu0
        %v9222 = vpop.f32.mrf.mxu0
        %v9223 = vadd.f32 0.0, %v9222
        %v9224 = vpop.f32.mrf.mxu0
        %9225 = vmatprep.mubr.bf16.mxu0 0
        %9226 = vmatmul.mubr.bf16.gmra.mxu0 %v9086
        %v9227 = vpop.f32.mrf.mxu0
        %v9228 = vadd.f32 0.0, %v9227
        %v9229 = vpop.f32.mrf.mxu0
        %v9230 = vpop.f32.mrf.mxu0
        %v9231 = vadd.f32 0.0, %v9230
        %v9232 = vpop.f32.mrf.mxu0
        %9233 = vmatprep.mubr.bf16.mxu0 0
        %9234 = vmatmul.mubr.bf16.gmra.mxu0 %v9089
        %v9235 = vpop.f32.mrf.mxu0
        %v9236 = vadd.f32 0.0, %v9235
        %v9237 = vpop.f32.mrf.mxu0
        %v9238 = vpop.f32.mrf.mxu0
        %v9239 = vadd.f32 0.0, %v9238
        %v9240 = vpop.f32.mrf.mxu0
        %9241 = vmatprep.mubr.bf16.mxu0 0
        %9242 = vmatmul.mubr.bf16.gmra.mxu0 %v9092
        %v9243 = vpop.f32.mrf.mxu0
        %v9244 = vadd.f32 0.0, %v9243
        %v9245 = vpop.f32.mrf.mxu0
        %v9246 = vpop.f32.mrf.mxu0
        %v9247 = vadd.f32 0.0, %v9246
        %v9248 = vpop.f32.mrf.mxu0
        %9249 = vmatprep.mubr.bf16.mxu0 0
        %9250 = vmatmul.mubr.bf16.gmra.mxu0 %v9095
        %v9251 = vpop.f32.mrf.mxu0
        %v9252 = vadd.f32 0.0, %v9251
        %v9253 = vpop.f32.mrf.mxu0
        %v9254 = vpop.f32.mrf.mxu0
        %v9255 = vadd.f32 0.0, %v9254
        %v9256 = vpop.f32.mrf.mxu0
        %9257 = vdwg.mxu0
        %v9258 = vadd.f32 %v8777, %v9132
        %v9259 = vadd.f32 %v8778, %v9135
        %v9260 = vadd.f32 %v8779, %v9140
        %v9261 = vadd.f32 %v8780, %v9143
        %v9262 = vadd.f32 %v8781, %v9148
        %v9263 = vadd.f32 %v8782, %v9151
        %v9264 = vadd.f32 %v8783, %v9156
        %v9265 = vadd.f32 %v8784, %v9159
        %v9266 = vadd.f32 %v8785, %v9164
        %v9267 = vadd.f32 %v8786, %v9167
        %v9268 = vadd.f32 %v8787, %v9172
        %v9269 = vadd.f32 %v8788, %v9175
        %v9270 = vadd.f32 %v8789, %v9180
        %v9271 = vadd.f32 %v8790, %v9183
        %v9272 = vadd.f32 %v8791, %v9188
        %v9273 = vadd.f32 %v8792, %v9191
        %v9274 = vadd.f32 %v8793, %v9196
        %v9275 = vadd.f32 %v8794, %v9199
        %v9276 = vadd.f32 %v8795, %v9204
        %v9277 = vadd.f32 %v8796, %v9207
        %v9278 = vadd.f32 %v8797, %v9212
        %v9279 = vadd.f32 %v8798, %v9215
        %v9280 = vadd.f32 %v8799, %v9220
        %v9281 = vadd.f32 %v8800, %v9223
        %v9282 = vadd.f32 %v8801, %v9228
        %v9283 = vadd.f32 %v8802, %v9231
        %v9284 = vadd.f32 %v8803, %v9236
        %v9285 = vadd.f32 %v8804, %v9239
        %v9286 = vadd.f32 %v8805, %v9244
        %v9287 = vadd.f32 %v8806, %v9247
        %v9288 = vadd.f32 %v8807, %v9252
        %v9289 = vadd.f32 %v8808, %v9255
        %v9290 = vld [vmem:[%s4042] sm:$0xf]
        %v9291 = vld [vmem:[%s4042 + $0x4] sm:$0xf]
        %v9292 = vld [vmem:[%s4042 + $0xc] sm:$0xf]
        %v9293 = vld [vmem:[%s4042 + $0x10] sm:$0xf]
        %v9294 = vld [vmem:[%s4042 + $0x18] sm:$0xf]
        %v9295 = vld [vmem:[%s4042 + $0x1c] sm:$0xf]
        %v9296 = vld [vmem:[%s4042 + $0x24] sm:$0xf]
        %v9297 = vld [vmem:[%s4042 + $0x28] sm:$0xf]
        %v9298 = vld [vmem:[%s4042 + $0x30] sm:$0xf]
        %v9299 = vld [vmem:[%s4042 + $0x34] sm:$0xf]
        %v9300 = vld [vmem:[%s4042 + $0x3c] sm:$0xf]
        %v9301 = vld [vmem:[%s4042 + $0x40] sm:$0xf]
        %v9302 = vld [vmem:[%s4042 + $0x48] sm:$0xf]
        %v9303 = vld [vmem:[%s4042 + $0x4c] sm:$0xf]
        %v9304 = vld [vmem:[%s4042 + $0x54] sm:$0xf]
        %v9305 = vld [vmem:[%s4042 + $0x58] sm:$0xf]
        %v9306 = vld [vmem:[%s4042 + $0x60] sm:$0xf]
        %v9307 = vld [vmem:[%s4042 + $0x64] sm:$0xf]
        %v9308 = vld [vmem:[%s4042 + $0x6c] sm:$0xf]
        %v9309 = vld [vmem:[%s4042 + $0x70] sm:$0xf]
        %v9310 = vld [vmem:[%s4042 + $0x78] sm:$0xf]
        %v9311 = vld [vmem:[%s4042 + $0x7c] sm:$0xf]
        %v9312 = vld [vmem:[%s4042 + $0x84] sm:$0xf]
        %v9313 = vld [vmem:[%s4042 + $0x88] sm:$0xf]
        %v9314 = vld [vmem:[%s4042 + $0x90] sm:$0xf]
        %v9315 = vld [vmem:[%s4042 + $0x94] sm:$0xf]
        %v9316 = vld [vmem:[%s4042 + $0x9c] sm:$0xf]
        %v9317 = vld [vmem:[%s4042 + $0xa0] sm:$0xf]
        %v9318 = vld [vmem:[%s4042 + $0xa8] sm:$0xf]
        %v9319 = vld [vmem:[%s4042 + $0xac] sm:$0xf]
        %v9320 = vld [vmem:[%s4042 + $0xb4] sm:$0xf]
        %v9321 = vld [vmem:[%s4042 + $0xb8] sm:$0xf]
        %v9322 = vld [vmem:[%s3 + $0x60] sm:$0xf]
        %v9323 = vld [vmem:[%s3 + $0x64] sm:$0xf]
        %v9324 = vld [vmem:[%s3 + $0x68] sm:$0xf]
        %v9325 = vld [vmem:[%s3 + $0x6c] sm:$0xf]
        %v9358 = vunpack.c.l.b16 %v9290
        %v9359 = vunpack.c.l.b16 %v9291
        %v9360 = vunpack.c.l.b16 %v9292
        %v9361 = vunpack.c.l.b16 %v9293
        %v9362 = vunpack.c.l.b16 %v9294
        %v9363 = vunpack.c.l.b16 %v9295
        %v9364 = vunpack.c.l.b16 %v9296
        %v9365 = vunpack.c.l.b16 %v9297
        %v9366 = vunpack.c.l.b16 %v9298
        %v9367 = vunpack.c.l.b16 %v9299
        %v9368 = vunpack.c.l.b16 %v9300
        %v9369 = vunpack.c.l.b16 %v9301
        %v9370 = vunpack.c.l.b16 %v9302
        %v9371 = vunpack.c.l.b16 %v9303
        %v9372 = vunpack.c.l.b16 %v9304
        %v9373 = vunpack.c.l.b16 %v9305
        %v9374 = vunpack.c.l.b16 %v9306
        %v9375 = vunpack.c.l.b16 %v9307
        %v9376 = vunpack.c.l.b16 %v9308
        %v9377 = vunpack.c.l.b16 %v9309
        %v9378 = vunpack.c.l.b16 %v9310
        %v9379 = vunpack.c.l.b16 %v9311
        %v9380 = vunpack.c.l.b16 %v9312
        %v9381 = vunpack.c.l.b16 %v9313
        %v9382 = vunpack.c.l.b16 %v9314
        %v9383 = vunpack.c.l.b16 %v9315
        %v9384 = vunpack.c.l.b16 %v9316
        %v9385 = vunpack.c.l.b16 %v9317
        %v9386 = vunpack.c.l.b16 %v9318
        %v9387 = vunpack.c.l.b16 %v9319
        %v9388 = vunpack.c.l.b16 %v9320
        %v9389 = vunpack.c.l.b16 %v9321
        %v9390 = vpack.c.b16 %v9359, %v9358
        %v9391 = vpack.c.b16 %v9361, %v9360
        %v9392 = vpack.c.b16 %v9363, %v9362
        %v9393 = vpack.c.b16 %v9365, %v9364
        %v9394 = vpack.c.b16 %v9367, %v9366
        %v9395 = vpack.c.b16 %v9369, %v9368
        %v9396 = vpack.c.b16 %v9371, %v9370
        %v9397 = vpack.c.b16 %v9373, %v9372
        %v9398 = vpack.c.b16 %v9375, %v9374
        %v9399 = vpack.c.b16 %v9377, %v9376
        %v9400 = vpack.c.b16 %v9379, %v9378
        %v9401 = vpack.c.b16 %v9381, %v9380
        %v9402 = vpack.c.b16 %v9383, %v9382
        %v9403 = vpack.c.b16 %v9385, %v9384
        %v9404 = vpack.c.b16 %v9387, %v9386
        %v9405 = vpack.c.b16 %v9389, %v9388
        %v9410 = vunpack.c.l.b16 %v9322
        %v9411 = vunpack.c.l.b16 %v9323
        %v9412 = vunpack.c.l.b16 %v9324
        %v9413 = vunpack.c.l.b16 %v9325
        %v9414 = vpack.c.b16 %v9411, %v9410
        %v9415 = vpack.c.b16 %v9413, %v9412
        %v9419 = vsel %vm1476, %v9390, 0
        %v9422 = vsel %vm1476, %v9391, 0
        %v9425 = vsel %vm1476, %v9392, 0
        %v9428 = vsel %vm1476, %v9393, 0
        %v9431 = vsel %vm1476, %v9394, 0
        %v9434 = vsel %vm1476, %v9395, 0
        %v9437 = vsel %vm1476, %v9396, 0
        %v9440 = vsel %vm1476, %v9397, 0
        %v9443 = vsel %vm1476, %v9398, 0
        %v9446 = vsel %vm1476, %v9399, 0
        %v9449 = vsel %vm1476, %v9400, 0
        %v9452 = vsel %vm1476, %v9401, 0
        %v9455 = vsel %vm1476, %v9402, 0
        %v9458 = vsel %vm1476, %v9403, 0
        %v9461 = vsel %vm1476, %v9404, 0
        %v9464 = vsel %vm1476, %v9405, 0
        %9466 = vmatprep.subr.bf16.mxu0 0
        %9467 = vmatpush1.bf16.msra.mxu0 0
        %9468 = vmatprep.subr.bf16.mxu0 0
        %9469 = vmatpush1.bf16.msra.mxu0 0
        %9470 = vmatprep.subr.bf16.mxu0 0
        %9471 = vmatpush1.bf16.msra.mxu0 0
        %9472 = vmatprep.subr.bf16.mxu0 0
        %9473 = vmatpush1.bf16.msra.mxu0 0
        %9474 = vmatprep.subr.bf16.mxu0 0
        %9475 = vmatpush1.bf16.msra.mxu0 0
        %9476 = vmatprep.subr.bf16.mxu0 0
        %9477 = vmatpush1.bf16.msra.mxu0 0
        %9478 = vmatprep.subr.bf16.mxu0 0
        %9479 = vmatpush1.bf16.msra.mxu0 %v9415
        %9480 = vmatprep.subr.bf16.mxu0 0
        %9481 = vmatpush1.bf16.msra.mxu0 %v9414
        %9482 = vmatprep.subr.bf16.mxu0 0
        %9483 = vmatpush2.bf16.msra.mxu0 0
        %9484 = vmatprep.subr.bf16.mxu0 0
        %9485 = vmatpush2.bf16.msra.mxu0 0
        %9486 = vmatprep.subr.bf16.mxu0 0
        %9487 = vmatpush2.bf16.msra.mxu0 0
        %9488 = vmatprep.subr.bf16.mxu0 0
        %9489 = vmatpush2.bf16.msra.mxu0 0
        %9490 = vmatprep.subr.bf16.mxu0 0
        %9491 = vmatpush2.bf16.msra.mxu0 0
        %9492 = vmatprep.subr.bf16.mxu0 0
        %9493 = vmatpush2.bf16.msra.mxu0 0
        %9494 = vmatprep.subr.bf16.mxu0 0
        %9495 = vmatpush2.bf16.msra.mxu0 0
        %9496 = vmatprep.subr.bf16.mxu0 0
        %9497 = vmatpush2.bf16.msra.mxu0 0
        %9498 = vmatprep.mubr.bf16.mxu0 0
        %9499 = vmatmul.mubr.bf16.gmra.mxu0 %v9419
        %v9500 = vpop.f32.mrf.mxu0
        %v9501 = vadd.f32 0.0, %v9500
        %v9502 = vpop.f32.mrf.mxu0
        %v9503 = vpop.f32.mrf.mxu0
        %v9504 = vadd.f32 0.0, %v9503
        %v9505 = vpop.f32.mrf.mxu0
        %9506 = vmatprep.mubr.bf16.mxu0 0
        %9507 = vmatmul.mubr.bf16.gmra.mxu0 %v9422
        %v9508 = vpop.f32.mrf.mxu0
        %v9509 = vadd.f32 0.0, %v9508
        %v9510 = vpop.f32.mrf.mxu0
        %v9511 = vpop.f32.mrf.mxu0
        %v9512 = vadd.f32 0.0, %v9511
        %v9513 = vpop.f32.mrf.mxu0
        %9514 = vmatprep.mubr.bf16.mxu0 0
        %9515 = vmatmul.mubr.bf16.gmra.mxu0 %v9425
        %v9516 = vpop.f32.mrf.mxu0
        %v9517 = vadd.f32 0.0, %v9516
        %v9518 = vpop.f32.mrf.mxu0
        %v9519 = vpop.f32.mrf.mxu0
        %v9520 = vadd.f32 0.0, %v9519
        %v9521 = vpop.f32.mrf.mxu0
        %9522 = vmatprep.mubr.bf16.mxu0 0
        %9523 = vmatmul.mubr.bf16.gmra.mxu0 %v9428
        %v9524 = vpop.f32.mrf.mxu0
        %v9525 = vadd.f32 0.0, %v9524
        %v9526 = vpop.f32.mrf.mxu0
        %v9527 = vpop.f32.mrf.mxu0
        %v9528 = vadd.f32 0.0, %v9527
        %v9529 = vpop.f32.mrf.mxu0
        %9530 = vmatprep.mubr.bf16.mxu0 0
        %9531 = vmatmul.mubr.bf16.gmra.mxu0 %v9431
        %v9532 = vpop.f32.mrf.mxu0
        %v9533 = vadd.f32 0.0, %v9532
        %v9534 = vpop.f32.mrf.mxu0
        %v9535 = vpop.f32.mrf.mxu0
        %v9536 = vadd.f32 0.0, %v9535
        %v9537 = vpop.f32.mrf.mxu0
        %9538 = vmatprep.mubr.bf16.mxu0 0
        %9539 = vmatmul.mubr.bf16.gmra.mxu0 %v9434
        %v9540 = vpop.f32.mrf.mxu0
        %v9541 = vadd.f32 0.0, %v9540
        %v9542 = vpop.f32.mrf.mxu0
        %v9543 = vpop.f32.mrf.mxu0
        %v9544 = vadd.f32 0.0, %v9543
        %v9545 = vpop.f32.mrf.mxu0
        %9546 = vmatprep.mubr.bf16.mxu0 0
        %9547 = vmatmul.mubr.bf16.gmra.mxu0 %v9437
        %v9548 = vpop.f32.mrf.mxu0
        %v9549 = vadd.f32 0.0, %v9548
        %v9550 = vpop.f32.mrf.mxu0
        %v9551 = vpop.f32.mrf.mxu0
        %v9552 = vadd.f32 0.0, %v9551
        %v9553 = vpop.f32.mrf.mxu0
        %9554 = vmatprep.mubr.bf16.mxu0 0
        %9555 = vmatmul.mubr.bf16.gmra.mxu0 %v9440
        %v9556 = vpop.f32.mrf.mxu0
        %v9557 = vadd.f32 0.0, %v9556
        %v9558 = vpop.f32.mrf.mxu0
        %v9559 = vpop.f32.mrf.mxu0
        %v9560 = vadd.f32 0.0, %v9559
        %v9561 = vpop.f32.mrf.mxu0
        %9562 = vmatprep.mubr.bf16.mxu0 0
        %9563 = vmatmul.mubr.bf16.gmra.mxu0 %v9443
        %v9564 = vpop.f32.mrf.mxu0
        %v9565 = vadd.f32 0.0, %v9564
        %v9566 = vpop.f32.mrf.mxu0
        %v9567 = vpop.f32.mrf.mxu0
        %v9568 = vadd.f32 0.0, %v9567
        %v9569 = vpop.f32.mrf.mxu0
        %9570 = vmatprep.mubr.bf16.mxu0 0
        %9571 = vmatmul.mubr.bf16.gmra.mxu0 %v9446
        %v9572 = vpop.f32.mrf.mxu0
        %v9573 = vadd.f32 0.0, %v9572
        %v9574 = vpop.f32.mrf.mxu0
        %v9575 = vpop.f32.mrf.mxu0
        %v9576 = vadd.f32 0.0, %v9575
        %v9577 = vpop.f32.mrf.mxu0
        %9578 = vmatprep.mubr.bf16.mxu0 0
        %9579 = vmatmul.mubr.bf16.gmra.mxu0 %v9449
        %v9580 = vpop.f32.mrf.mxu0
        %v9581 = vadd.f32 0.0, %v9580
        %v9582 = vpop.f32.mrf.mxu0
        %v9583 = vpop.f32.mrf.mxu0
        %v9584 = vadd.f32 0.0, %v9583
        %v9585 = vpop.f32.mrf.mxu0
        %9586 = vmatprep.mubr.bf16.mxu0 0
        %9587 = vmatmul.mubr.bf16.gmra.mxu0 %v9452
        %v9588 = vpop.f32.mrf.mxu0
        %v9589 = vadd.f32 0.0, %v9588
        %v9590 = vpop.f32.mrf.mxu0
        %v9591 = vpop.f32.mrf.mxu0
        %v9592 = vadd.f32 0.0, %v9591
        %v9593 = vpop.f32.mrf.mxu0
        %9594 = vmatprep.mubr.bf16.mxu0 0
        %9595 = vmatmul.mubr.bf16.gmra.mxu0 %v9455
        %v9596 = vpop.f32.mrf.mxu0
        %v9597 = vadd.f32 0.0, %v9596
        %v9598 = vpop.f32.mrf.mxu0
        %v9599 = vpop.f32.mrf.mxu0
        %v9600 = vadd.f32 0.0, %v9599
        %v9601 = vpop.f32.mrf.mxu0
        %9602 = vmatprep.mubr.bf16.mxu0 0
        %9603 = vmatmul.mubr.bf16.gmra.mxu0 %v9458
        %v9604 = vpop.f32.mrf.mxu0
        %v9605 = vadd.f32 0.0, %v9604
        %v9606 = vpop.f32.mrf.mxu0
        %v9607 = vpop.f32.mrf.mxu0
        %v9608 = vadd.f32 0.0, %v9607
        %v9609 = vpop.f32.mrf.mxu0
        %9610 = vmatprep.mubr.bf16.mxu0 0
        %9611 = vmatmul.mubr.bf16.gmra.mxu0 %v9461
        %v9612 = vpop.f32.mrf.mxu0
        %v9613 = vadd.f32 0.0, %v9612
        %v9614 = vpop.f32.mrf.mxu0
        %v9615 = vpop.f32.mrf.mxu0
        %v9616 = vadd.f32 0.0, %v9615
        %v9617 = vpop.f32.mrf.mxu0
        %9618 = vmatprep.mubr.bf16.mxu0 0
        %9619 = vmatmul.mubr.bf16.gmra.mxu0 %v9464
        %v9620 = vpop.f32.mrf.mxu0
        %v9621 = vadd.f32 0.0, %v9620
        %v9622 = vpop.f32.mrf.mxu0
        %v9623 = vpop.f32.mrf.mxu0
        %v9624 = vadd.f32 0.0, %v9623
        %v9625 = vpop.f32.mrf.mxu0
        %9626 = vdwg.mxu0
        %v9627 = vadd.f32 %v9258, %v9501
        %v9628 = vadd.f32 %v9259, %v9504
        %v9629 = vadd.f32 %v9260, %v9509
        %v9630 = vadd.f32 %v9261, %v9512
        %v9631 = vadd.f32 %v9262, %v9517
        %v9632 = vadd.f32 %v9263, %v9520
        %v9633 = vadd.f32 %v9264, %v9525
        %v9634 = vadd.f32 %v9265, %v9528
        %v9635 = vadd.f32 %v9266, %v9533
        %v9636 = vadd.f32 %v9267, %v9536
        %v9637 = vadd.f32 %v9268, %v9541
        %v9638 = vadd.f32 %v9269, %v9544
        %v9639 = vadd.f32 %v9270, %v9549
        %v9640 = vadd.f32 %v9271, %v9552
        %v9641 = vadd.f32 %v9272, %v9557
        %v9642 = vadd.f32 %v9273, %v9560
        %v9643 = vadd.f32 %v9274, %v9565
        %v9644 = vadd.f32 %v9275, %v9568
        %v9645 = vadd.f32 %v9276, %v9573
        %v9646 = vadd.f32 %v9277, %v9576
        %v9647 = vadd.f32 %v9278, %v9581
        %v9648 = vadd.f32 %v9279, %v9584
        %v9649 = vadd.f32 %v9280, %v9589
        %v9650 = vadd.f32 %v9281, %v9592
        %v9651 = vadd.f32 %v9282, %v9597
        %v9652 = vadd.f32 %v9283, %v9600
        %v9653 = vadd.f32 %v9284, %v9605
        %v9654 = vadd.f32 %v9285, %v9608
        %v9655 = vadd.f32 %v9286, %v9613
        %v9656 = vadd.f32 %v9287, %v9616
        %v9657 = vadd.f32 %v9288, %v9621
        %v9658 = vadd.f32 %v9289, %v9624
        %v9659 = vld [vmem:[%s4042] sm:$0xf]
        %v9660 = vld [vmem:[%s4042 + $0x4] sm:$0xf]
        %v9661 = vld [vmem:[%s4042 + $0x8] sm:$0x1]
        %v9662 = vld [vmem:[%s4042 + $0xc] sm:$0xf]
        %v9663 = vld [vmem:[%s4042 + $0x10] sm:$0xf]
        %v9664 = vld [vmem:[%s4042 + $0x14] sm:$0x1]
        %v9665 = vld [vmem:[%s4042 + $0x18] sm:$0xf]
        %v9666 = vld [vmem:[%s4042 + $0x1c] sm:$0xf]
        %v9667 = vld [vmem:[%s4042 + $0x20] sm:$0x1]
        %v9668 = vld [vmem:[%s4042 + $0x24] sm:$0xf]
        %v9669 = vld [vmem:[%s4042 + $0x28] sm:$0xf]
        %v9670 = vld [vmem:[%s4042 + $0x2c] sm:$0x1]
        %v9671 = vld [vmem:[%s4042 + $0x30] sm:$0xf]
        %v9672 = vld [vmem:[%s4042 + $0x34] sm:$0xf]
        %v9673 = vld [vmem:[%s4042 + $0x38] sm:$0x1]
        %v9674 = vld [vmem:[%s4042 + $0x3c] sm:$0xf]
        %v9675 = vld [vmem:[%s4042 + $0x40] sm:$0xf]
        %v9676 = vld [vmem:[%s4042 + $0x44] sm:$0x1]
        %v9677 = vld [vmem:[%s4042 + $0x48] sm:$0xf]
        %v9678 = vld [vmem:[%s4042 + $0x4c] sm:$0xf]
        %v9679 = vld [vmem:[%s4042 + $0x50] sm:$0x1]
        %v9680 = vld [vmem:[%s4042 + $0x54] sm:$0xf]
        %v9681 = vld [vmem:[%s4042 + $0x58] sm:$0xf]
        %v9682 = vld [vmem:[%s4042 + $0x5c] sm:$0x1]
        %v9683 = vld [vmem:[%s4042 + $0x60] sm:$0xf]
        %v9684 = vld [vmem:[%s4042 + $0x64] sm:$0xf]
        %v9685 = vld [vmem:[%s4042 + $0x68] sm:$0x1]
        %v9686 = vld [vmem:[%s4042 + $0x6c] sm:$0xf]
        %v9687 = vld [vmem:[%s4042 + $0x70] sm:$0xf]
        %v9688 = vld [vmem:[%s4042 + $0x74] sm:$0x1]
        %v9689 = vld [vmem:[%s4042 + $0x78] sm:$0xf]
        %v9690 = vld [vmem:[%s4042 + $0x7c] sm:$0xf]
        %v9691 = vld [vmem:[%s4042 + $0x80] sm:$0x1]
        %v9692 = vld [vmem:[%s4042 + $0x84] sm:$0xf]
        %v9693 = vld [vmem:[%s4042 + $0x88] sm:$0xf]
        %v9694 = vld [vmem:[%s4042 + $0x8c] sm:$0x1]
        %v9695 = vld [vmem:[%s4042 + $0x90] sm:$0xf]
        %v9696 = vld [vmem:[%s4042 + $0x94] sm:$0xf]
        %v9697 = vld [vmem:[%s4042 + $0x98] sm:$0x1]
        %v9698 = vld [vmem:[%s4042 + $0x9c] sm:$0xf]
        %v9699 = vld [vmem:[%s4042 + $0xa0] sm:$0xf]
        %v9700 = vld [vmem:[%s4042 + $0xa4] sm:$0x1]
        %v9701 = vld [vmem:[%s4042 + $0xa8] sm:$0xf]
        %v9702 = vld [vmem:[%s4042 + $0xac] sm:$0xf]
        %v9703 = vld [vmem:[%s4042 + $0xb0] sm:$0x1]
        %v9704 = vld [vmem:[%s4042 + $0xb4] sm:$0xf]
        %v9705 = vld [vmem:[%s4042 + $0xb8] sm:$0xf]
        %v9706 = vld [vmem:[%s4042 + $0xbc] sm:$0x1]
        %v9708 = vshrl.u32 %v9659, 16
        %v9710 = vrot.slane %v9708, 4
        %v9711 = vshll.u32 %v9659, 16
        %v9713 = vrot.slane %v9711, 5
        %v9714 = vor.u32 %v9710, %v9713
        %v9715 = vrot.slane %v9714, 4
        %v9717 = vshll.u32 %v9660, 16
        %v9719 = vrot.slane %v9717, 5
        %v9720 = vsel %vm1027, %v9715, %v9719
        %v9721 = vshrl.u32 %v9660, 16
        %v9723 = vrot.slane %v9721, 4
        %v9724 = vor.u32 %v9723, %v9719
        %v9725 = vrot.slane %v9724, 4
        %v9727 = vshll.u32 %v9661, 16
        %v9729 = vrot.slane %v9727, 5
        %v9730 = vsel %vm1027, %v9725, %v9729
        %v9732 = vshrl.u32 %v9662, 16
        %v9734 = vrot.slane %v9732, 4
        %v9735 = vshll.u32 %v9662, 16
        %v9737 = vrot.slane %v9735, 5
        %v9738 = vor.u32 %v9734, %v9737
        %v9739 = vrot.slane %v9738, 4
        %v9741 = vshll.u32 %v9663, 16
        %v9743 = vrot.slane %v9741, 5
        %v9744 = vsel %vm1027, %v9739, %v9743
        %v9745 = vshrl.u32 %v9663, 16
        %v9747 = vrot.slane %v9745, 4
        %v9748 = vor.u32 %v9747, %v9743
        %v9749 = vrot.slane %v9748, 4
        %v9751 = vshll.u32 %v9664, 16
        %v9753 = vrot.slane %v9751, 5
        %v9754 = vsel %vm1027, %v9749, %v9753
        %v9756 = vshrl.u32 %v9665, 16
        %v9758 = vrot.slane %v9756, 4
        %v9759 = vshll.u32 %v9665, 16
        %v9761 = vrot.slane %v9759, 5
        %v9762 = vor.u32 %v9758, %v9761
        %v9763 = vrot.slane %v9762, 4
        %v9765 = vshll.u32 %v9666, 16
        %v9767 = vrot.slane %v9765, 5
        %v9768 = vsel %vm1027, %v9763, %v9767
        %v9769 = vshrl.u32 %v9666, 16
        %v9771 = vrot.slane %v9769, 4
        %v9772 = vor.u32 %v9771, %v9767
        %v9773 = vrot.slane %v9772, 4
        %v9775 = vshll.u32 %v9667, 16
        %v9777 = vrot.slane %v9775, 5
        %v9778 = vsel %vm1027, %v9773, %v9777
        %v9780 = vshrl.u32 %v9668, 16
        %v9782 = vrot.slane %v9780, 4
        %v9783 = vshll.u32 %v9668, 16
        %v9785 = vrot.slane %v9783, 5
        %v9786 = vor.u32 %v9782, %v9785
        %v9787 = vrot.slane %v9786, 4
        %v9789 = vshll.u32 %v9669, 16
        %v9791 = vrot.slane %v9789, 5
        %v9792 = vsel %vm1027, %v9787, %v9791
        %v9793 = vshrl.u32 %v9669, 16
        %v9795 = vrot.slane %v9793, 4
        %v9796 = vor.u32 %v9795, %v9791
        %v9797 = vrot.slane %v9796, 4
        %v9799 = vshll.u32 %v9670, 16
        %v9801 = vrot.slane %v9799, 5
        %v9802 = vsel %vm1027, %v9797, %v9801
        %v9804 = vshrl.u32 %v9671, 16
        %v9806 = vrot.slane %v9804, 4
        %v9807 = vshll.u32 %v9671, 16
        %v9809 = vrot.slane %v9807, 5
        %v9810 = vor.u32 %v9806, %v9809
        %v9811 = vrot.slane %v9810, 4
        %v9813 = vshll.u32 %v9672, 16
        %v9815 = vrot.slane %v9813, 5
        %v9816 = vsel %vm1027, %v9811, %v9815
        %v9817 = vshrl.u32 %v9672, 16
        %v9819 = vrot.slane %v9817, 4
        %v9820 = vor.u32 %v9819, %v9815
        %v9821 = vrot.slane %v9820, 4
        %v9823 = vshll.u32 %v9673, 16
        %v9825 = vrot.slane %v9823, 5
        %v9826 = vsel %vm1027, %v9821, %v9825
        %v9828 = vshrl.u32 %v9674, 16
        %v9830 = vrot.slane %v9828, 4
        %v9831 = vshll.u32 %v9674, 16
        %v9833 = vrot.slane %v9831, 5
        %v9834 = vor.u32 %v9830, %v9833
        %v9835 = vrot.slane %v9834, 4
        %v9837 = vshll.u32 %v9675, 16
        %v9839 = vrot.slane %v9837, 5
        %v9840 = vsel %vm1027, %v9835, %v9839
        %v9841 = vshrl.u32 %v9675, 16
        %v9843 = vrot.slane %v9841, 4
        %v9844 = vor.u32 %v9843, %v9839
        %v9845 = vrot.slane %v9844, 4
        %v9847 = vshll.u32 %v9676, 16
        %v9849 = vrot.slane %v9847, 5
        %v9850 = vsel %vm1027, %v9845, %v9849
        %v9852 = vshrl.u32 %v9677, 16
        %v9854 = vrot.slane %v9852, 4
        %v9855 = vshll.u32 %v9677, 16
        %v9857 = vrot.slane %v9855, 5
        %v9858 = vor.u32 %v9854, %v9857
        %v9859 = vrot.slane %v9858, 4
        %v9861 = vshll.u32 %v9678, 16
        %v9863 = vrot.slane %v9861, 5
        %v9864 = vsel %vm1027, %v9859, %v9863
        %v9865 = vshrl.u32 %v9678, 16
        %v9867 = vrot.slane %v9865, 4
        %v9868 = vor.u32 %v9867, %v9863
        %v9869 = vrot.slane %v9868, 4
        %v9871 = vshll.u32 %v9679, 16
        %v9873 = vrot.slane %v9871, 5
        %v9874 = vsel %vm1027, %v9869, %v9873
        %v9876 = vshrl.u32 %v9680, 16
        %v9878 = vrot.slane %v9876, 4
        %v9879 = vshll.u32 %v9680, 16
        %v9881 = vrot.slane %v9879, 5
        %v9882 = vor.u32 %v9878, %v9881
        %v9883 = vrot.slane %v9882, 4
        %v9885 = vshll.u32 %v9681, 16
        %v9887 = vrot.slane %v9885, 5
        %v9888 = vsel %vm1027, %v9883, %v9887
        %v9889 = vshrl.u32 %v9681, 16
        %v9891 = vrot.slane %v9889, 4
        %v9892 = vor.u32 %v9891, %v9887
        %v9893 = vrot.slane %v9892, 4
        %v9895 = vshll.u32 %v9682, 16
        %v9897 = vrot.slane %v9895, 5
        %v9898 = vsel %vm1027, %v9893, %v9897
        %v9900 = vshrl.u32 %v9683, 16
        %v9902 = vrot.slane %v9900, 4
        %v9903 = vshll.u32 %v9683, 16
        %v9905 = vrot.slane %v9903, 5
        %v9906 = vor.u32 %v9902, %v9905
        %v9907 = vrot.slane %v9906, 4
        %v9909 = vshll.u32 %v9684, 16
        %v9911 = vrot.slane %v9909, 5
        %v9912 = vsel %vm1027, %v9907, %v9911
        %v9913 = vshrl.u32 %v9684, 16
        %v9915 = vrot.slane %v9913, 4
        %v9916 = vor.u32 %v9915, %v9911
        %v9917 = vrot.slane %v9916, 4
        %v9919 = vshll.u32 %v9685, 16
        %v9921 = vrot.slane %v9919, 5
        %v9922 = vsel %vm1027, %v9917, %v9921
        %v9924 = vshrl.u32 %v9686, 16
        %v9926 = vrot.slane %v9924, 4
        %v9927 = vshll.u32 %v9686, 16
        %v9929 = vrot.slane %v9927, 5
        %v9930 = vor.u32 %v9926, %v9929
        %v9931 = vrot.slane %v9930, 4
        %v9933 = vshll.u32 %v9687, 16
        %v9935 = vrot.slane %v9933, 5
        %v9936 = vsel %vm1027, %v9931, %v9935
        %v9937 = vshrl.u32 %v9687, 16
        %v9939 = vrot.slane %v9937, 4
        %v9940 = vor.u32 %v9939, %v9935
        %v9941 = vrot.slane %v9940, 4
        %v9943 = vshll.u32 %v9688, 16
        %v9945 = vrot.slane %v9943, 5
        %v9946 = vsel %vm1027, %v9941, %v9945
        %v9948 = vshrl.u32 %v9689, 16
        %v9950 = vrot.slane %v9948, 4
        %v9951 = vshll.u32 %v9689, 16
        %v9953 = vrot.slane %v9951, 5
        %v9954 = vor.u32 %v9950, %v9953
        %v9955 = vrot.slane %v9954, 4
        %v9957 = vshll.u32 %v9690, 16
        %v9959 = vrot.slane %v9957, 5
        %v9960 = vsel %vm1027, %v9955, %v9959
        %v9961 = vshrl.u32 %v9690, 16
        %v9963 = vrot.slane %v9961, 4
        %v9964 = vor.u32 %v9963, %v9959
        %v9965 = vrot.slane %v9964, 4
        %v9967 = vshll.u32 %v9691, 16
        %v9969 = vrot.slane %v9967, 5
        %v9970 = vsel %vm1027, %v9965, %v9969
        %v9972 = vshrl.u32 %v9692, 16
        %v9974 = vrot.slane %v9972, 4
        %v9975 = vshll.u32 %v9692, 16
        %v9977 = vrot.slane %v9975, 5
        %v9978 = vor.u32 %v9974, %v9977
        %v9979 = vrot.slane %v9978, 4
        %v9981 = vshll.u32 %v9693, 16
        %v9983 = vrot.slane %v9981, 5
        %v9984 = vsel %vm1027, %v9979, %v9983
        %v9985 = vshrl.u32 %v9693, 16
        %v9987 = vrot.slane %v9985, 4
        %v9988 = vor.u32 %v9987, %v9983
        %v9989 = vrot.slane %v9988, 4
        %v9991 = vshll.u32 %v9694, 16
        %v9993 = vrot.slane %v9991, 5
        %v9994 = vsel %vm1027, %v9989, %v9993
        %v9996 = vshrl.u32 %v9695, 16
        %v9998 = vrot.slane %v9996, 4
        %v9999 = vshll.u32 %v9695, 16
        %v10001 = vrot.slane %v9999, 5
        %v10002 = vor.u32 %v9998, %v10001
        %v10003 = vrot.slane %v10002, 4
        %v10005 = vshll.u32 %v9696, 16
        %v10007 = vrot.slane %v10005, 5
        %v10008 = vsel %vm1027, %v10003, %v10007
        %v10009 = vshrl.u32 %v9696, 16
        %v10011 = vrot.slane %v10009, 4
        %v10012 = vor.u32 %v10011, %v10007
        %v10013 = vrot.slane %v10012, 4
        %v10015 = vshll.u32 %v9697, 16
        %v10017 = vrot.slane %v10015, 5
        %v10018 = vsel %vm1027, %v10013, %v10017
        %v10020 = vshrl.u32 %v9698, 16
        %v10022 = vrot.slane %v10020, 4
        %v10023 = vshll.u32 %v9698, 16
        %v10025 = vrot.slane %v10023, 5
        %v10026 = vor.u32 %v10022, %v10025
        %v10027 = vrot.slane %v10026, 4
        %v10029 = vshll.u32 %v9699, 16
        %v10031 = vrot.slane %v10029, 5
        %v10032 = vsel %vm1027, %v10027, %v10031
        %v10033 = vshrl.u32 %v9699, 16
        %v10035 = vrot.slane %v10033, 4
        %v10036 = vor.u32 %v10035, %v10031
        %v10037 = vrot.slane %v10036, 4
        %v10039 = vshll.u32 %v9700, 16
        %v10041 = vrot.slane %v10039, 5
        %v10042 = vsel %vm1027, %v10037, %v10041
        %v10044 = vshrl.u32 %v9701, 16
        %v10046 = vrot.slane %v10044, 4
        %v10047 = vshll.u32 %v9701, 16
        %v10049 = vrot.slane %v10047, 5
        %v10050 = vor.u32 %v10046, %v10049
        %v10051 = vrot.slane %v10050, 4
        %v10053 = vshll.u32 %v9702, 16
        %v10055 = vrot.slane %v10053, 5
        %v10056 = vsel %vm1027, %v10051, %v10055
        %v10057 = vshrl.u32 %v9702, 16
        %v10059 = vrot.slane %v10057, 4
        %v10060 = vor.u32 %v10059, %v10055
        %v10061 = vrot.slane %v10060, 4
        %v10063 = vshll.u32 %v9703, 16
        %v10065 = vrot.slane %v10063, 5
        %v10066 = vsel %vm1027, %v10061, %v10065
        %v10068 = vshrl.u32 %v9704, 16
        %v10070 = vrot.slane %v10068, 4
        %v10071 = vshll.u32 %v9704, 16
        %v10073 = vrot.slane %v10071, 5
        %v10074 = vor.u32 %v10070, %v10073
        %v10075 = vrot.slane %v10074, 4
        %v10077 = vshll.u32 %v9705, 16
        %v10079 = vrot.slane %v10077, 5
        %v10080 = vsel %vm1027, %v10075, %v10079
        %v10081 = vshrl.u32 %v9705, 16
        %v10083 = vrot.slane %v10081, 4
        %v10084 = vor.u32 %v10083, %v10079
        %v10085 = vrot.slane %v10084, 4
        %v10087 = vshll.u32 %v9706, 16
        %v10089 = vrot.slane %v10087, 5
        %v10090 = vsel %vm1027, %v10085, %v10089
        %v10091 = vld [vmem:[%s3 + $0x70] sm:$0xf]
        %v10092 = vld [vmem:[%s3 + $0x74] sm:$0xf]
        %v10093 = vld [vmem:[%s3 + $0x78] sm:$0xf]
        %v10094 = vld [vmem:[%s3 + $0x7c] sm:$0xf]
        %v10095 = vunpack.c.l.b16 %v9720
        %v10096 = vunpack.c.l.b16 %v9730
        %v10097 = vunpack.c.l.b16 %v9744
        %v10098 = vunpack.c.l.b16 %v9754
        %v10099 = vunpack.c.l.b16 %v9768
        %v10100 = vunpack.c.l.b16 %v9778
        %v10101 = vunpack.c.l.b16 %v9792
        %v10102 = vunpack.c.l.b16 %v9802
        %v10103 = vunpack.c.l.b16 %v9816
        %v10104 = vunpack.c.l.b16 %v9826
        %v10105 = vunpack.c.l.b16 %v9840
        %v10106 = vunpack.c.l.b16 %v9850
        %v10107 = vunpack.c.l.b16 %v9864
        %v10108 = vunpack.c.l.b16 %v9874
        %v10109 = vunpack.c.l.b16 %v9888
        %v10110 = vunpack.c.l.b16 %v9898
        %v10111 = vunpack.c.l.b16 %v9912
        %v10112 = vunpack.c.l.b16 %v9922
        %v10113 = vunpack.c.l.b16 %v9936
        %v10114 = vunpack.c.l.b16 %v9946
        %v10115 = vunpack.c.l.b16 %v9960
        %v10116 = vunpack.c.l.b16 %v9970
        %v10117 = vunpack.c.l.b16 %v9984
        %v10118 = vunpack.c.l.b16 %v9994
        %v10119 = vunpack.c.l.b16 %v10008
        %v10120 = vunpack.c.l.b16 %v10018
        %v10121 = vunpack.c.l.b16 %v10032
        %v10122 = vunpack.c.l.b16 %v10042
        %v10123 = vunpack.c.l.b16 %v10056
        %v10124 = vunpack.c.l.b16 %v10066
        %v10125 = vunpack.c.l.b16 %v10080
        %v10126 = vunpack.c.l.b16 %v10090
        %v10127 = vpack.c.b16 %v10096, %v10095
        %v10128 = vpack.c.b16 %v10098, %v10097
        %v10129 = vpack.c.b16 %v10100, %v10099
        %v10130 = vpack.c.b16 %v10102, %v10101
        %v10131 = vpack.c.b16 %v10104, %v10103
        %v10132 = vpack.c.b16 %v10106, %v10105
        %v10133 = vpack.c.b16 %v10108, %v10107
        %v10134 = vpack.c.b16 %v10110, %v10109
        %v10135 = vpack.c.b16 %v10112, %v10111
        %v10136 = vpack.c.b16 %v10114, %v10113
        %v10137 = vpack.c.b16 %v10116, %v10115
        %v10138 = vpack.c.b16 %v10118, %v10117
        %v10139 = vpack.c.b16 %v10120, %v10119
        %v10140 = vpack.c.b16 %v10122, %v10121
        %v10141 = vpack.c.b16 %v10124, %v10123
        %v10142 = vpack.c.b16 %v10126, %v10125
        %v10147 = vunpack.c.l.b16 %v10091
        %v10148 = vunpack.c.l.b16 %v10092
        %v10149 = vunpack.c.l.b16 %v10093
        %v10150 = vunpack.c.l.b16 %v10094
        %v10151 = vpack.c.b16 %v10148, %v10147
        %v10152 = vpack.c.b16 %v10150, %v10149
        %v10156 = vsel %vm1476, %v10127, 0
        %v10159 = vsel %vm1476, %v10128, 0
        %v10162 = vsel %vm1476, %v10129, 0
        %v10165 = vsel %vm1476, %v10130, 0
        %v10168 = vsel %vm1476, %v10131, 0
        %v10171 = vsel %vm1476, %v10132, 0
        %v10174 = vsel %vm1476, %v10133, 0
        %v10177 = vsel %vm1476, %v10134, 0
        %v10180 = vsel %vm1476, %v10135, 0
        %v10183 = vsel %vm1476, %v10136, 0
        %v10186 = vsel %vm1476, %v10137, 0
        %v10189 = vsel %vm1476, %v10138, 0
        %v10192 = vsel %vm1476, %v10139, 0
        %v10195 = vsel %vm1476, %v10140, 0
        %v10198 = vsel %vm1476, %v10141, 0
        %v10201 = vsel %vm1476, %v10142, 0
        %10203 = vmatprep.subr.bf16.mxu0 0
        %10204 = vmatpush1.bf16.msra.mxu0 0
        %10205 = vmatprep.subr.bf16.mxu0 0
        %10206 = vmatpush1.bf16.msra.mxu0 0
        %10207 = vmatprep.subr.bf16.mxu0 0
        %10208 = vmatpush1.bf16.msra.mxu0 0
        %10209 = vmatprep.subr.bf16.mxu0 0
        %10210 = vmatpush1.bf16.msra.mxu0 0
        %10211 = vmatprep.subr.bf16.mxu0 0
        %10212 = vmatpush1.bf16.msra.mxu0 0
        %10213 = vmatprep.subr.bf16.mxu0 0
        %10214 = vmatpush1.bf16.msra.mxu0 0
        %10215 = vmatprep.subr.bf16.mxu0 0
        %10216 = vmatpush1.bf16.msra.mxu0 %v10152
        %10217 = vmatprep.subr.bf16.mxu0 0
        %10218 = vmatpush1.bf16.msra.mxu0 %v10151
        %10219 = vmatprep.subr.bf16.mxu0 0
        %10220 = vmatpush2.bf16.msra.mxu0 0
        %10221 = vmatprep.subr.bf16.mxu0 0
        %10222 = vmatpush2.bf16.msra.mxu0 0
        %10223 = vmatprep.subr.bf16.mxu0 0
        %10224 = vmatpush2.bf16.msra.mxu0 0
        %10225 = vmatprep.subr.bf16.mxu0 0
        %10226 = vmatpush2.bf16.msra.mxu0 0
        %10227 = vmatprep.subr.bf16.mxu0 0
        %10228 = vmatpush2.bf16.msra.mxu0 0
        %10229 = vmatprep.subr.bf16.mxu0 0
        %10230 = vmatpush2.bf16.msra.mxu0 0
        %10231 = vmatprep.subr.bf16.mxu0 0
        %10232 = vmatpush2.bf16.msra.mxu0 0
        %10233 = vmatprep.subr.bf16.mxu0 0
        %10234 = vmatpush2.bf16.msra.mxu0 0
        %10235 = vmatprep.mubr.bf16.mxu0 0
        %10236 = vmatmul.mubr.bf16.gmra.mxu0 %v10156
        %v10237 = vpop.f32.mrf.mxu0
        %v10238 = vadd.f32 0.0, %v10237
        %v10239 = vpop.f32.mrf.mxu0
        %v10240 = vpop.f32.mrf.mxu0
        %v10241 = vadd.f32 0.0, %v10240
        %v10242 = vpop.f32.mrf.mxu0
        %10243 = vmatprep.mubr.bf16.mxu0 0
        %10244 = vmatmul.mubr.bf16.gmra.mxu0 %v10159
        %v10245 = vpop.f32.mrf.mxu0
        %v10246 = vadd.f32 0.0, %v10245
        %v10247 = vpop.f32.mrf.mxu0
        %v10248 = vpop.f32.mrf.mxu0
        %v10249 = vadd.f32 0.0, %v10248
        %v10250 = vpop.f32.mrf.mxu0
        %10251 = vmatprep.mubr.bf16.mxu0 0
        %10252 = vmatmul.mubr.bf16.gmra.mxu0 %v10162
        %v10253 = vpop.f32.mrf.mxu0
        %v10254 = vadd.f32 0.0, %v10253
        %v10255 = vpop.f32.mrf.mxu0
        %v10256 = vpop.f32.mrf.mxu0
        %v10257 = vadd.f32 0.0, %v10256
        %v10258 = vpop.f32.mrf.mxu0
        %10259 = vmatprep.mubr.bf16.mxu0 0
        %10260 = vmatmul.mubr.bf16.gmra.mxu0 %v10165
        %v10261 = vpop.f32.mrf.mxu0
        %v10262 = vadd.f32 0.0, %v10261
        %v10263 = vpop.f32.mrf.mxu0
        %v10264 = vpop.f32.mrf.mxu0
        %v10265 = vadd.f32 0.0, %v10264
        %v10266 = vpop.f32.mrf.mxu0
        %10267 = vmatprep.mubr.bf16.mxu0 0
        %10268 = vmatmul.mubr.bf16.gmra.mxu0 %v10168
        %v10269 = vpop.f32.mrf.mxu0
        %v10270 = vadd.f32 0.0, %v10269
        %v10271 = vpop.f32.mrf.mxu0
        %v10272 = vpop.f32.mrf.mxu0
        %v10273 = vadd.f32 0.0, %v10272
        %v10274 = vpop.f32.mrf.mxu0
        %10275 = vmatprep.mubr.bf16.mxu0 0
        %10276 = vmatmul.mubr.bf16.gmra.mxu0 %v10171
        %v10277 = vpop.f32.mrf.mxu0
        %v10278 = vadd.f32 0.0, %v10277
        %v10279 = vpop.f32.mrf.mxu0
        %v10280 = vpop.f32.mrf.mxu0
        %v10281 = vadd.f32 0.0, %v10280
        %v10282 = vpop.f32.mrf.mxu0
        %10283 = vmatprep.mubr.bf16.mxu0 0
        %10284 = vmatmul.mubr.bf16.gmra.mxu0 %v10174
        %v10285 = vpop.f32.mrf.mxu0
        %v10286 = vadd.f32 0.0, %v10285
        %v10287 = vpop.f32.mrf.mxu0
        %v10288 = vpop.f32.mrf.mxu0
        %v10289 = vadd.f32 0.0, %v10288
        %v10290 = vpop.f32.mrf.mxu0
        %10291 = vmatprep.mubr.bf16.mxu0 0
        %10292 = vmatmul.mubr.bf16.gmra.mxu0 %v10177
        %v10293 = vpop.f32.mrf.mxu0
        %v10294 = vadd.f32 0.0, %v10293
        %v10295 = vpop.f32.mrf.mxu0
        %v10296 = vpop.f32.mrf.mxu0
        %v10297 = vadd.f32 0.0, %v10296
        %v10298 = vpop.f32.mrf.mxu0
        %10299 = vmatprep.mubr.bf16.mxu0 0
        %10300 = vmatmul.mubr.bf16.gmra.mxu0 %v10180
        %v10301 = vpop.f32.mrf.mxu0
        %v10302 = vadd.f32 0.0, %v10301
        %v10303 = vpop.f32.mrf.mxu0
        %v10304 = vpop.f32.mrf.mxu0
        %v10305 = vadd.f32 0.0, %v10304
        %v10306 = vpop.f32.mrf.mxu0
        %10307 = vmatprep.mubr.bf16.mxu0 0
        %10308 = vmatmul.mubr.bf16.gmra.mxu0 %v10183
        %v10309 = vpop.f32.mrf.mxu0
        %v10310 = vadd.f32 0.0, %v10309
        %v10311 = vpop.f32.mrf.mxu0
        %v10312 = vpop.f32.mrf.mxu0
        %v10313 = vadd.f32 0.0, %v10312
        %v10314 = vpop.f32.mrf.mxu0
        %10315 = vmatprep.mubr.bf16.mxu0 0
        %10316 = vmatmul.mubr.bf16.gmra.mxu0 %v10186
        %v10317 = vpop.f32.mrf.mxu0
        %v10318 = vadd.f32 0.0, %v10317
        %v10319 = vpop.f32.mrf.mxu0
        %v10320 = vpop.f32.mrf.mxu0
        %v10321 = vadd.f32 0.0, %v10320
        %v10322 = vpop.f32.mrf.mxu0
        %10323 = vmatprep.mubr.bf16.mxu0 0
        %10324 = vmatmul.mubr.bf16.gmra.mxu0 %v10189
        %v10325 = vpop.f32.mrf.mxu0
        %v10326 = vadd.f32 0.0, %v10325
        %v10327 = vpop.f32.mrf.mxu0
        %v10328 = vpop.f32.mrf.mxu0
        %v10329 = vadd.f32 0.0, %v10328
        %v10330 = vpop.f32.mrf.mxu0
        %10331 = vmatprep.mubr.bf16.mxu0 0
        %10332 = vmatmul.mubr.bf16.gmra.mxu0 %v10192
        %v10333 = vpop.f32.mrf.mxu0
        %v10334 = vadd.f32 0.0, %v10333
        %v10335 = vpop.f32.mrf.mxu0
        %v10336 = vpop.f32.mrf.mxu0
        %v10337 = vadd.f32 0.0, %v10336
        %v10338 = vpop.f32.mrf.mxu0
        %10339 = vmatprep.mubr.bf16.mxu0 0
        %10340 = vmatmul.mubr.bf16.gmra.mxu0 %v10195
        %v10341 = vpop.f32.mrf.mxu0
        %v10342 = vadd.f32 0.0, %v10341
        %v10343 = vpop.f32.mrf.mxu0
        %v10344 = vpop.f32.mrf.mxu0
        %v10345 = vadd.f32 0.0, %v10344
        %v10346 = vpop.f32.mrf.mxu0
        %10347 = vmatprep.mubr.bf16.mxu0 0
        %10348 = vmatmul.mubr.bf16.gmra.mxu0 %v10198
        %v10349 = vpop.f32.mrf.mxu0
        %v10350 = vadd.f32 0.0, %v10349
        %v10351 = vpop.f32.mrf.mxu0
        %v10352 = vpop.f32.mrf.mxu0
        %v10353 = vadd.f32 0.0, %v10352
        %v10354 = vpop.f32.mrf.mxu0
        %10355 = vmatprep.mubr.bf16.mxu0 0
        %10356 = vmatmul.mubr.bf16.gmra.mxu0 %v10201
        %v10357 = vpop.f32.mrf.mxu0
        %v10358 = vadd.f32 0.0, %v10357
        %v10359 = vpop.f32.mrf.mxu0
        %v10360 = vpop.f32.mrf.mxu0
        %v10361 = vadd.f32 0.0, %v10360
        %v10362 = vpop.f32.mrf.mxu0
        %10363 = vdwg.mxu0
        %v10364 = vadd.f32 %v9627, %v10238
        %v10365 = vadd.f32 %v9628, %v10241
        %v10366 = vadd.f32 %v9629, %v10246
        %v10367 = vadd.f32 %v9630, %v10249
        %v10368 = vadd.f32 %v9631, %v10254
        %v10369 = vadd.f32 %v9632, %v10257
        %v10370 = vadd.f32 %v9633, %v10262
        %v10371 = vadd.f32 %v9634, %v10265
        %v10372 = vadd.f32 %v9635, %v10270
        %v10373 = vadd.f32 %v9636, %v10273
        %v10374 = vadd.f32 %v9637, %v10278
        %v10375 = vadd.f32 %v9638, %v10281
        %v10376 = vadd.f32 %v9639, %v10286
        %v10377 = vadd.f32 %v9640, %v10289
        %v10378 = vadd.f32 %v9641, %v10294
        %v10379 = vadd.f32 %v9642, %v10297
        %v10380 = vadd.f32 %v9643, %v10302
        %v10381 = vadd.f32 %v9644, %v10305
        %v10382 = vadd.f32 %v9645, %v10310
        %v10383 = vadd.f32 %v9646, %v10313
        %v10384 = vadd.f32 %v9647, %v10318
        %v10385 = vadd.f32 %v9648, %v10321
        %v10386 = vadd.f32 %v9649, %v10326
        %v10387 = vadd.f32 %v9650, %v10329
        %v10388 = vadd.f32 %v9651, %v10334
        %v10389 = vadd.f32 %v9652, %v10337
        %v10390 = vadd.f32 %v9653, %v10342
        %v10391 = vadd.f32 %v9654, %v10345
        %v10392 = vadd.f32 %v9655, %v10350
        %v10393 = vadd.f32 %v9656, %v10353
        %v10394 = vadd.f32 %v9657, %v10358
        %v10395 = vadd.f32 %v9658, %v10361
        %v10396 = vld [vmem:[%s4042] sm:$0xe]
        %v10397 = vld [vmem:[%s4042 + $0xc] sm:$0xe]
        %v10398 = vld [vmem:[%s4042 + $0x18] sm:$0xe]
        %v10399 = vld [vmem:[%s4042 + $0x24] sm:$0xe]
        %v10400 = vld [vmem:[%s4042 + $0x30] sm:$0xe]
        %v10401 = vld [vmem:[%s4042 + $0x3c] sm:$0xe]
        %v10402 = vld [vmem:[%s4042 + $0x48] sm:$0xe]
        %v10403 = vld [vmem:[%s4042 + $0x54] sm:$0xe]
        %v10404 = vld [vmem:[%s4042 + $0x60] sm:$0xe]
        %v10405 = vld [vmem:[%s4042 + $0x6c] sm:$0xe]
        %v10406 = vld [vmem:[%s4042 + $0x78] sm:$0xe]
        %v10407 = vld [vmem:[%s4042 + $0x84] sm:$0xe]
        %v10408 = vld [vmem:[%s4042 + $0x90] sm:$0xe]
        %v10409 = vld [vmem:[%s4042 + $0x9c] sm:$0xe]
        %v10410 = vld [vmem:[%s4042 + $0xa8] sm:$0xe]
        %v10411 = vld [vmem:[%s4042 + $0xb4] sm:$0xe]
        %v10460 = vrot.slane %v10396, 5
        %v10461 = vrot.slane %v10460, 4
        %v10462 = vrot.slane %v9660, 5
        %v10463 = vsel %vm2037, %v10461, %v10462
        %v10464 = vrot.slane %v10462, 4
        %v10465 = vrot.slane %v9661, 5
        %v10466 = vsel %vm2037, %v10464, %v10465
        %v10467 = vrot.slane %v10397, 5
        %v10468 = vrot.slane %v10467, 4
        %v10469 = vrot.slane %v9663, 5
        %v10470 = vsel %vm2037, %v10468, %v10469
        %v10471 = vrot.slane %v10469, 4
        %v10472 = vrot.slane %v9664, 5
        %v10473 = vsel %vm2037, %v10471, %v10472
        %v10474 = vrot.slane %v10398, 5
        %v10475 = vrot.slane %v10474, 4
        %v10476 = vrot.slane %v9666, 5
        %v10477 = vsel %vm2037, %v10475, %v10476
        %v10478 = vrot.slane %v10476, 4
        %v10479 = vrot.slane %v9667, 5
        %v10480 = vsel %vm2037, %v10478, %v10479
        %v10481 = vrot.slane %v10399, 5
        %v10482 = vrot.slane %v10481, 4
        %v10483 = vrot.slane %v9669, 5
        %v10484 = vsel %vm2037, %v10482, %v10483
        %v10485 = vrot.slane %v10483, 4
        %v10486 = vrot.slane %v9670, 5
        %v10487 = vsel %vm2037, %v10485, %v10486
        %v10488 = vrot.slane %v10400, 5
        %v10489 = vrot.slane %v10488, 4
        %v10490 = vrot.slane %v9672, 5
        %v10491 = vsel %vm2037, %v10489, %v10490
        %v10492 = vrot.slane %v10490, 4
        %v10493 = vrot.slane %v9673, 5
        %v10494 = vsel %vm2037, %v10492, %v10493
        %v10495 = vrot.slane %v10401, 5
        %v10496 = vrot.slane %v10495, 4
        %v10497 = vrot.slane %v9675, 5
        %v10498 = vsel %vm2037, %v10496, %v10497
        %v10499 = vrot.slane %v10497, 4
        %v10500 = vrot.slane %v9676, 5
        %v10501 = vsel %vm2037, %v10499, %v10500
        %v10502 = vrot.slane %v10402, 5
        %v10503 = vrot.slane %v10502, 4
        %v10504 = vrot.slane %v9678, 5
        %v10505 = vsel %vm2037, %v10503, %v10504
        %v10506 = vrot.slane %v10504, 4
        %v10507 = vrot.slane %v9679, 5
        %v10508 = vsel %vm2037, %v10506, %v10507
        %v10509 = vrot.slane %v10403, 5
        %v10510 = vrot.slane %v10509, 4
        %v10511 = vrot.slane %v9681, 5
        %v10512 = vsel %vm2037, %v10510, %v10511
        %v10513 = vrot.slane %v10511, 4
        %v10514 = vrot.slane %v9682, 5
        %v10515 = vsel %vm2037, %v10513, %v10514
        %v10516 = vrot.slane %v10404, 5
        %v10517 = vrot.slane %v10516, 4
        %v10518 = vrot.slane %v9684, 5
        %v10519 = vsel %vm2037, %v10517, %v10518
        %v10520 = vrot.slane %v10518, 4
        %v10521 = vrot.slane %v9685, 5
        %v10522 = vsel %vm2037, %v10520, %v10521
        %v10523 = vrot.slane %v10405, 5
        %v10524 = vrot.slane %v10523, 4
        %v10525 = vrot.slane %v9687, 5
        %v10526 = vsel %vm2037, %v10524, %v10525
        %v10527 = vrot.slane %v10525, 4
        %v10528 = vrot.slane %v9688, 5
        %v10529 = vsel %vm2037, %v10527, %v10528
        %v10530 = vrot.slane %v10406, 5
        %v10531 = vrot.slane %v10530, 4
        %v10532 = vrot.slane %v9690, 5
        %v10533 = vsel %vm2037, %v10531, %v10532
        %v10534 = vrot.slane %v10532, 4
        %v10535 = vrot.slane %v9691, 5
        %v10536 = vsel %vm2037, %v10534, %v10535
        %v10537 = vrot.slane %v10407, 5
        %v10538 = vrot.slane %v10537, 4
        %v10539 = vrot.slane %v9693, 5
        %v10540 = vsel %vm2037, %v10538, %v10539
        %v10541 = vrot.slane %v10539, 4
        %v10542 = vrot.slane %v9694, 5
        %v10543 = vsel %vm2037, %v10541, %v10542
        %v10544 = vrot.slane %v10408, 5
        %v10545 = vrot.slane %v10544, 4
        %v10546 = vrot.slane %v9696, 5
        %v10547 = vsel %vm2037, %v10545, %v10546
        %v10548 = vrot.slane %v10546, 4
        %v10549 = vrot.slane %v9697, 5
        %v10550 = vsel %vm2037, %v10548, %v10549
        %v10551 = vrot.slane %v10409, 5
        %v10552 = vrot.slane %v10551, 4
        %v10553 = vrot.slane %v9699, 5
        %v10554 = vsel %vm2037, %v10552, %v10553
        %v10555 = vrot.slane %v10553, 4
        %v10556 = vrot.slane %v9700, 5
        %v10557 = vsel %vm2037, %v10555, %v10556
        %v10558 = vrot.slane %v10410, 5
        %v10559 = vrot.slane %v10558, 4
        %v10560 = vrot.slane %v9702, 5
        %v10561 = vsel %vm2037, %v10559, %v10560
        %v10562 = vrot.slane %v10560, 4
        %v10563 = vrot.slane %v9703, 5
        %v10564 = vsel %vm2037, %v10562, %v10563
        %v10565 = vrot.slane %v10411, 5
        %v10566 = vrot.slane %v10565, 4
        %v10567 = vrot.slane %v9705, 5
        %v10568 = vsel %vm2037, %v10566, %v10567
        %v10569 = vrot.slane %v10567, 4
        %v10570 = vrot.slane %v9706, 5
        %v10571 = vsel %vm2037, %v10569, %v10570
        %v10572 = vld [vmem:[%s3 + $0x80] sm:$0xf]
        %v10573 = vld [vmem:[%s3 + $0x84] sm:$0xf]
        %v10574 = vld [vmem:[%s3 + $0x88] sm:$0xf]
        %v10575 = vld [vmem:[%s3 + $0x8c] sm:$0xf]
        %v10576 = vunpack.c.l.b16 %v10463
        %v10577 = vunpack.c.l.b16 %v10466
        %v10578 = vunpack.c.l.b16 %v10470
        %v10579 = vunpack.c.l.b16 %v10473
        %v10580 = vunpack.c.l.b16 %v10477
        %v10581 = vunpack.c.l.b16 %v10480
        %v10582 = vunpack.c.l.b16 %v10484
        %v10583 = vunpack.c.l.b16 %v10487
        %v10584 = vunpack.c.l.b16 %v10491
        %v10585 = vunpack.c.l.b16 %v10494
        %v10586 = vunpack.c.l.b16 %v10498
        %v10587 = vunpack.c.l.b16 %v10501
        %v10588 = vunpack.c.l.b16 %v10505
        %v10589 = vunpack.c.l.b16 %v10508
        %v10590 = vunpack.c.l.b16 %v10512
        %v10591 = vunpack.c.l.b16 %v10515
        %v10592 = vunpack.c.l.b16 %v10519
        %v10593 = vunpack.c.l.b16 %v10522
        %v10594 = vunpack.c.l.b16 %v10526
        %v10595 = vunpack.c.l.b16 %v10529
        %v10596 = vunpack.c.l.b16 %v10533
        %v10597 = vunpack.c.l.b16 %v10536
        %v10598 = vunpack.c.l.b16 %v10540
        %v10599 = vunpack.c.l.b16 %v10543
        %v10600 = vunpack.c.l.b16 %v10547
        %v10601 = vunpack.c.l.b16 %v10550
        %v10602 = vunpack.c.l.b16 %v10554
        %v10603 = vunpack.c.l.b16 %v10557
        %v10604 = vunpack.c.l.b16 %v10561
        %v10605 = vunpack.c.l.b16 %v10564
        %v10606 = vunpack.c.l.b16 %v10568
        %v10607 = vunpack.c.l.b16 %v10571
        %v10608 = vpack.c.b16 %v10577, %v10576
        %v10609 = vpack.c.b16 %v10579, %v10578
        %v10610 = vpack.c.b16 %v10581, %v10580
        %v10611 = vpack.c.b16 %v10583, %v10582
        %v10612 = vpack.c.b16 %v10585, %v10584
        %v10613 = vpack.c.b16 %v10587, %v10586
        %v10614 = vpack.c.b16 %v10589, %v10588
        %v10615 = vpack.c.b16 %v10591, %v10590
        %v10616 = vpack.c.b16 %v10593, %v10592
        %v10617 = vpack.c.b16 %v10595, %v10594
        %v10618 = vpack.c.b16 %v10597, %v10596
        %v10619 = vpack.c.b16 %v10599, %v10598
        %v10620 = vpack.c.b16 %v10601, %v10600
        %v10621 = vpack.c.b16 %v10603, %v10602
        %v10622 = vpack.c.b16 %v10605, %v10604
        %v10623 = vpack.c.b16 %v10607, %v10606
        %v10628 = vunpack.c.l.b16 %v10572
        %v10629 = vunpack.c.l.b16 %v10573
        %v10630 = vunpack.c.l.b16 %v10574
        %v10631 = vunpack.c.l.b16 %v10575
        %v10632 = vpack.c.b16 %v10629, %v10628
        %v10633 = vpack.c.b16 %v10631, %v10630
        %v10637 = vsel %vm1476, %v10608, 0
        %v10640 = vsel %vm1476, %v10609, 0
        %v10643 = vsel %vm1476, %v10610, 0
        %v10646 = vsel %vm1476, %v10611, 0
        %v10649 = vsel %vm1476, %v10612, 0
        %v10652 = vsel %vm1476, %v10613, 0
        %v10655 = vsel %vm1476, %v10614, 0
        %v10658 = vsel %vm1476, %v10615, 0
        %v10661 = vsel %vm1476, %v10616, 0
        %v10664 = vsel %vm1476, %v10617, 0
        %v10667 = vsel %vm1476, %v10618, 0
        %v10670 = vsel %vm1476, %v10619, 0
        %v10673 = vsel %vm1476, %v10620, 0
        %v10676 = vsel %vm1476, %v10621, 0
        %v10679 = vsel %vm1476, %v10622, 0
        %v10682 = vsel %vm1476, %v10623, 0
        %10684 = vmatprep.subr.bf16.mxu0 0
        %10685 = vmatpush1.bf16.msra.mxu0 0
        %10686 = vmatprep.subr.bf16.mxu0 0
        %10687 = vmatpush1.bf16.msra.mxu0 0
        %10688 = vmatprep.subr.bf16.mxu0 0
        %10689 = vmatpush1.bf16.msra.mxu0 0
        %10690 = vmatprep.subr.bf16.mxu0 0
        %10691 = vmatpush1.bf16.msra.mxu0 0
        %10692 = vmatprep.subr.bf16.mxu0 0
        %10693 = vmatpush1.bf16.msra.mxu0 0
        %10694 = vmatprep.subr.bf16.mxu0 0
        %10695 = vmatpush1.bf16.msra.mxu0 0
        %10696 = vmatprep.subr.bf16.mxu0 0
        %10697 = vmatpush1.bf16.msra.mxu0 %v10633
        %10698 = vmatprep.subr.bf16.mxu0 0
        %10699 = vmatpush1.bf16.msra.mxu0 %v10632
        %10700 = vmatprep.subr.bf16.mxu0 0
        %10701 = vmatpush2.bf16.msra.mxu0 0
        %10702 = vmatprep.subr.bf16.mxu0 0
        %10703 = vmatpush2.bf16.msra.mxu0 0
        %10704 = vmatprep.subr.bf16.mxu0 0
        %10705 = vmatpush2.bf16.msra.mxu0 0
        %10706 = vmatprep.subr.bf16.mxu0 0
        %10707 = vmatpush2.bf16.msra.mxu0 0
        %10708 = vmatprep.subr.bf16.mxu0 0
        %10709 = vmatpush2.bf16.msra.mxu0 0
        %10710 = vmatprep.subr.bf16.mxu0 0
        %10711 = vmatpush2.bf16.msra.mxu0 0
        %10712 = vmatprep.subr.bf16.mxu0 0
        %10713 = vmatpush2.bf16.msra.mxu0 0
        %10714 = vmatprep.subr.bf16.mxu0 0
        %10715 = vmatpush2.bf16.msra.mxu0 0
        %10716 = vmatprep.mubr.bf16.mxu0 0
        %10717 = vmatmul.mubr.bf16.gmra.mxu0 %v10637
        %v10718 = vpop.f32.mrf.mxu0
        %v10719 = vadd.f32 0.0, %v10718
        %v10720 = vpop.f32.mrf.mxu0
        %v10721 = vpop.f32.mrf.mxu0
        %v10722 = vadd.f32 0.0, %v10721
        %v10723 = vpop.f32.mrf.mxu0
        %10724 = vmatprep.mubr.bf16.mxu0 0
        %10725 = vmatmul.mubr.bf16.gmra.mxu0 %v10640
        %v10726 = vpop.f32.mrf.mxu0
        %v10727 = vadd.f32 0.0, %v10726
        %v10728 = vpop.f32.mrf.mxu0
        %v10729 = vpop.f32.mrf.mxu0
        %v10730 = vadd.f32 0.0, %v10729
        %v10731 = vpop.f32.mrf.mxu0
        %10732 = vmatprep.mubr.bf16.mxu0 0
        %10733 = vmatmul.mubr.bf16.gmra.mxu0 %v10643
        %v10734 = vpop.f32.mrf.mxu0
        %v10735 = vadd.f32 0.0, %v10734
        %v10736 = vpop.f32.mrf.mxu0
        %v10737 = vpop.f32.mrf.mxu0
        %v10738 = vadd.f32 0.0, %v10737
        %v10739 = vpop.f32.mrf.mxu0
        %10740 = vmatprep.mubr.bf16.mxu0 0
        %10741 = vmatmul.mubr.bf16.gmra.mxu0 %v10646
        %v10742 = vpop.f32.mrf.mxu0
        %v10743 = vadd.f32 0.0, %v10742
        %v10744 = vpop.f32.mrf.mxu0
        %v10745 = vpop.f32.mrf.mxu0
        %v10746 = vadd.f32 0.0, %v10745
        %v10747 = vpop.f32.mrf.mxu0
        %10748 = vmatprep.mubr.bf16.mxu0 0
        %10749 = vmatmul.mubr.bf16.gmra.mxu0 %v10649
        %v10750 = vpop.f32.mrf.mxu0
        %v10751 = vadd.f32 0.0, %v10750
        %v10752 = vpop.f32.mrf.mxu0
        %v10753 = vpop.f32.mrf.mxu0
        %v10754 = vadd.f32 0.0, %v10753
        %v10755 = vpop.f32.mrf.mxu0
        %10756 = vmatprep.mubr.bf16.mxu0 0
        %10757 = vmatmul.mubr.bf16.gmra.mxu0 %v10652
        %v10758 = vpop.f32.mrf.mxu0
        %v10759 = vadd.f32 0.0, %v10758
        %v10760 = vpop.f32.mrf.mxu0
        %v10761 = vpop.f32.mrf.mxu0
        %v10762 = vadd.f32 0.0, %v10761
        %v10763 = vpop.f32.mrf.mxu0
        %10764 = vmatprep.mubr.bf16.mxu0 0
        %10765 = vmatmul.mubr.bf16.gmra.mxu0 %v10655
        %v10766 = vpop.f32.mrf.mxu0
        %v10767 = vadd.f32 0.0, %v10766
        %v10768 = vpop.f32.mrf.mxu0
        %v10769 = vpop.f32.mrf.mxu0
        %v10770 = vadd.f32 0.0, %v10769
        %v10771 = vpop.f32.mrf.mxu0
        %10772 = vmatprep.mubr.bf16.mxu0 0
        %10773 = vmatmul.mubr.bf16.gmra.mxu0 %v10658
        %v10774 = vpop.f32.mrf.mxu0
        %v10775 = vadd.f32 0.0, %v10774
        %v10776 = vpop.f32.mrf.mxu0
        %v10777 = vpop.f32.mrf.mxu0
        %v10778 = vadd.f32 0.0, %v10777
        %v10779 = vpop.f32.mrf.mxu0
        %10780 = vmatprep.mubr.bf16.mxu0 0
        %10781 = vmatmul.mubr.bf16.gmra.mxu0 %v10661
        %v10782 = vpop.f32.mrf.mxu0
        %v10783 = vadd.f32 0.0, %v10782
        %v10784 = vpop.f32.mrf.mxu0
        %v10785 = vpop.f32.mrf.mxu0
        %v10786 = vadd.f32 0.0, %v10785
        %v10787 = vpop.f32.mrf.mxu0
        %10788 = vmatprep.mubr.bf16.mxu0 0
        %10789 = vmatmul.mubr.bf16.gmra.mxu0 %v10664
        %v10790 = vpop.f32.mrf.mxu0
        %v10791 = vadd.f32 0.0, %v10790
        %v10792 = vpop.f32.mrf.mxu0
        %v10793 = vpop.f32.mrf.mxu0
        %v10794 = vadd.f32 0.0, %v10793
        %v10795 = vpop.f32.mrf.mxu0
        %10796 = vmatprep.mubr.bf16.mxu0 0
        %10797 = vmatmul.mubr.bf16.gmra.mxu0 %v10667
        %v10798 = vpop.f32.mrf.mxu0
        %v10799 = vadd.f32 0.0, %v10798
        %v10800 = vpop.f32.mrf.mxu0
        %v10801 = vpop.f32.mrf.mxu0
        %v10802 = vadd.f32 0.0, %v10801
        %v10803 = vpop.f32.mrf.mxu0
        %10804 = vmatprep.mubr.bf16.mxu0 0
        %10805 = vmatmul.mubr.bf16.gmra.mxu0 %v10670
        %v10806 = vpop.f32.mrf.mxu0
        %v10807 = vadd.f32 0.0, %v10806
        %v10808 = vpop.f32.mrf.mxu0
        %v10809 = vpop.f32.mrf.mxu0
        %v10810 = vadd.f32 0.0, %v10809
        %v10811 = vpop.f32.mrf.mxu0
        %10812 = vmatprep.mubr.bf16.mxu0 0
        %10813 = vmatmul.mubr.bf16.gmra.mxu0 %v10673
        %v10814 = vpop.f32.mrf.mxu0
        %v10815 = vadd.f32 0.0, %v10814
        %v10816 = vpop.f32.mrf.mxu0
        %v10817 = vpop.f32.mrf.mxu0
        %v10818 = vadd.f32 0.0, %v10817
        %v10819 = vpop.f32.mrf.mxu0
        %10820 = vmatprep.mubr.bf16.mxu0 0
        %10821 = vmatmul.mubr.bf16.gmra.mxu0 %v10676
        %v10822 = vpop.f32.mrf.mxu0
        %v10823 = vadd.f32 0.0, %v10822
        %v10824 = vpop.f32.mrf.mxu0
        %v10825 = vpop.f32.mrf.mxu0
        %v10826 = vadd.f32 0.0, %v10825
        %v10827 = vpop.f32.mrf.mxu0
        %10828 = vmatprep.mubr.bf16.mxu0 0
        %10829 = vmatmul.mubr.bf16.gmra.mxu0 %v10679
        %v10830 = vpop.f32.mrf.mxu0
        %v10831 = vadd.f32 0.0, %v10830
        %v10832 = vpop.f32.mrf.mxu0
        %v10833 = vpop.f32.mrf.mxu0
        %v10834 = vadd.f32 0.0, %v10833
        %v10835 = vpop.f32.mrf.mxu0
        %10836 = vmatprep.mubr.bf16.mxu0 0
        %10837 = vmatmul.mubr.bf16.gmra.mxu0 %v10682
        %v10838 = vpop.f32.mrf.mxu0
        %v10839 = vadd.f32 0.0, %v10838
        %v10840 = vpop.f32.mrf.mxu0
        %v10841 = vpop.f32.mrf.mxu0
        %v10842 = vadd.f32 0.0, %v10841
        %v10843 = vpop.f32.mrf.mxu0
        %10844 = vdwg.mxu0
        %v10845 = vadd.f32 %v10364, %v10719
        %v10846 = vadd.f32 %v10365, %v10722
        %v10847 = vadd.f32 %v10366, %v10727
        %v10848 = vadd.f32 %v10367, %v10730
        %v10849 = vadd.f32 %v10368, %v10735
        %v10850 = vadd.f32 %v10369, %v10738
        %v10851 = vadd.f32 %v10370, %v10743
        %v10852 = vadd.f32 %v10371, %v10746
        %v10853 = vadd.f32 %v10372, %v10751
        %v10854 = vadd.f32 %v10373, %v10754
        %v10855 = vadd.f32 %v10374, %v10759
        %v10856 = vadd.f32 %v10375, %v10762
        %v10857 = vadd.f32 %v10376, %v10767
        %v10858 = vadd.f32 %v10377, %v10770
        %v10859 = vadd.f32 %v10378, %v10775
        %v10860 = vadd.f32 %v10379, %v10778
        %v10861 = vadd.f32 %v10380, %v10783
        %v10862 = vadd.f32 %v10381, %v10786
        %v10863 = vadd.f32 %v10382, %v10791
        %v10864 = vadd.f32 %v10383, %v10794
        %v10865 = vadd.f32 %v10384, %v10799
        %v10866 = vadd.f32 %v10385, %v10802
        %v10867 = vadd.f32 %v10386, %v10807
        %v10868 = vadd.f32 %v10387, %v10810
        %v10869 = vadd.f32 %v10388, %v10815
        %v10870 = vadd.f32 %v10389, %v10818
        %v10871 = vadd.f32 %v10390, %v10823
        %v10872 = vadd.f32 %v10391, %v10826
        %v10873 = vadd.f32 %v10392, %v10831
        %v10874 = vadd.f32 %v10393, %v10834
        %v10875 = vadd.f32 %v10394, %v10839
        %v10876 = vadd.f32 %v10395, %v10842
        %v10877 = vld [vmem:[%s4] sm:$0x1]
        %v10879 = vlaneseq
        %v10880 = vshrl.u32 %v10879, 7
        %v10881 = vsub.s32 0, %v10880
        %v10882 = vrot.slane %v10877, %v10881
        %v10884 = vadd.f32 %v10845, %v10882
        %v10885 = vadd.f32 %v10846, %v10882
        %v10886 = vadd.f32 %v10847, %v10882
        %v10887 = vadd.f32 %v10848, %v10882
        %v10888 = vadd.f32 %v10849, %v10882
        %v10889 = vadd.f32 %v10850, %v10882
        %v10890 = vadd.f32 %v10851, %v10882
        %v10891 = vadd.f32 %v10852, %v10882
        %v10892 = vadd.f32 %v10853, %v10882
        %v10893 = vadd.f32 %v10854, %v10882
        %v10894 = vadd.f32 %v10855, %v10882
        %v10895 = vadd.f32 %v10856, %v10882
        %v10896 = vadd.f32 %v10857, %v10882
        %v10897 = vadd.f32 %v10858, %v10882
        %v10898 = vadd.f32 %v10859, %v10882
        %v10899 = vadd.f32 %v10860, %v10882
        %v10900 = vadd.f32 %v10861, %v10882
        %v10901 = vadd.f32 %v10862, %v10882
        %v10902 = vadd.f32 %v10863, %v10882
        %v10903 = vadd.f32 %v10864, %v10882
        %v10904 = vadd.f32 %v10865, %v10882
        %v10905 = vadd.f32 %v10866, %v10882
        %v10906 = vadd.f32 %v10867, %v10882
        %v10907 = vadd.f32 %v10868, %v10882
        %v10908 = vadd.f32 %v10869, %v10882
        %v10909 = vadd.f32 %v10870, %v10882
        %v10910 = vadd.f32 %v10871, %v10882
        %v10911 = vadd.f32 %v10872, %v10882
        %v10912 = vadd.f32 %v10873, %v10882
        %v10913 = vadd.f32 %v10874, %v10882
        %v10914 = vadd.f32 %v10875, %v10882
        %v10915 = vadd.f32 %v10876, %v10882
        %10948 = vrot.lane.b32.xlu0 %v10884, 94
        %v10949 = vpop.permute.xlu0 %10948
        %10950 = vrot.lane.b32.xlu0 %v10885, 94
        %v10951 = vpop.permute.xlu0 %10950
        %10952 = vrot.lane.b32.xlu0 %v10886, 94
        %v10953 = vpop.permute.xlu0 %10952
        %10954 = vrot.lane.b32.xlu0 %v10887, 94
        %v10955 = vpop.permute.xlu0 %10954
        %10956 = vrot.lane.b32.xlu0 %v10888, 94
        %v10957 = vpop.permute.xlu0 %10956
        %10958 = vrot.lane.b32.xlu0 %v10889, 94
        %v10959 = vpop.permute.xlu0 %10958
        %10960 = vrot.lane.b32.xlu0 %v10890, 94
        %v10961 = vpop.permute.xlu0 %10960
        %10962 = vrot.lane.b32.xlu0 %v10891, 94
        %v10963 = vpop.permute.xlu0 %10962
        %10964 = vrot.lane.b32.xlu0 %v10892, 94
        %v10965 = vpop.permute.xlu0 %10964
        %10966 = vrot.lane.b32.xlu0 %v10893, 94
        %v10967 = vpop.permute.xlu0 %10966
        %10968 = vrot.lane.b32.xlu0 %v10894, 94
        %v10969 = vpop.permute.xlu0 %10968
        %10970 = vrot.lane.b32.xlu0 %v10895, 94
        %v10971 = vpop.permute.xlu0 %10970
        %10972 = vrot.lane.b32.xlu0 %v10896, 94
        %v10973 = vpop.permute.xlu0 %10972
        %10974 = vrot.lane.b32.xlu0 %v10897, 94
        %v10975 = vpop.permute.xlu0 %10974
        %10976 = vrot.lane.b32.xlu0 %v10898, 94
        %v10977 = vpop.permute.xlu0 %10976
        %10978 = vrot.lane.b32.xlu0 %v10899, 94
        %v10979 = vpop.permute.xlu0 %10978
        %10980 = vrot.lane.b32.xlu0 %v10900, 94
        %v10981 = vpop.permute.xlu0 %10980
        %10982 = vrot.lane.b32.xlu0 %v10901, 94
        %v10983 = vpop.permute.xlu0 %10982
        %10984 = vrot.lane.b32.xlu0 %v10902, 94
        %v10985 = vpop.permute.xlu0 %10984
        %10986 = vrot.lane.b32.xlu0 %v10903, 94
        %v10987 = vpop.permute.xlu0 %10986
        %10988 = vrot.lane.b32.xlu0 %v10904, 94
        %v10989 = vpop.permute.xlu0 %10988
        %10990 = vrot.lane.b32.xlu0 %v10905, 94
        %v10991 = vpop.permute.xlu0 %10990
        %10992 = vrot.lane.b32.xlu0 %v10906, 94
        %v10993 = vpop.permute.xlu0 %10992
        %10994 = vrot.lane.b32.xlu0 %v10907, 94
        %v10995 = vpop.permute.xlu0 %10994
        %10996 = vrot.lane.b32.xlu0 %v10908, 94
        %v10997 = vpop.permute.xlu0 %10996
        %10998 = vrot.lane.b32.xlu0 %v10909, 94
        %v10999 = vpop.permute.xlu0 %10998
        %11000 = vrot.lane.b32.xlu0 %v10910, 94
        %v11001 = vpop.permute.xlu0 %11000
        %11002 = vrot.lane.b32.xlu0 %v10911, 94
        %v11003 = vpop.permute.xlu0 %11002
        %11004 = vrot.lane.b32.xlu0 %v10912, 94
        %v11005 = vpop.permute.xlu0 %11004
        %11006 = vrot.lane.b32.xlu0 %v10913, 94
        %v11007 = vpop.permute.xlu0 %11006
        %11008 = vrot.lane.b32.xlu0 %v10914, 94
        %v11009 = vpop.permute.xlu0 %11008
        %11010 = vrot.lane.b32.xlu0 %v10915, 94
        %v11011 = vpop.permute.xlu0 %11010
        %11044 = vxpose.xlu0.b32.start [1/16] %v10949, 128
        %11045 = vxpose.xlu0.b32.cont [2/16] %v10951, 128
        %11046 = vxpose.xlu0.b32.cont [3/16] %v10953, 128
        %11047 = vxpose.xlu0.b32.cont [4/16] %v10955, 128
        %11048 = vxpose.xlu0.b32.cont [5/16] %v10957, 128
        %11049 = vxpose.xlu0.b32.cont [6/16] %v10959, 128
        %11050 = vxpose.xlu0.b32.cont [7/16] %v10961, 128
        %11051 = vxpose.xlu0.b32.cont [8/16] %v10963, 128
        %11052 = vxpose.xlu0.b32.cont [9/16] %v10965, 128
        %11053 = vxpose.xlu0.b32.cont [10/16] %v10967, 128
        %11054 = vxpose.xlu0.b32.cont [11/16] %v10969, 128
        %11055 = vxpose.xlu0.b32.cont [12/16] %v10971, 128
        %11056 = vxpose.xlu0.b32.cont [13/16] %v10973, 128
        %11057 = vxpose.xlu0.b32.cont [14/16] %v10975, 128
        %11058 = vxpose.xlu0.b32.cont [15/16] %v10977, 128
        %11059 = vxpose.xlu0.b32.end [16/16] %v10979, 128
        %v11060 = vpop.trf.xlu0
        %v11061 = vpop.trf.xlu0
        %v11062 = vpop.trf.xlu0
        %v11063 = vpop.trf.xlu0
        %v11064 = vpop.trf.xlu0
        %v11065 = vpop.trf.xlu0
        %v11066 = vpop.trf.xlu0
        %v11067 = vpop.trf.xlu0
        %v11068 = vpop.trf.xlu0
        %v11069 = vpop.trf.xlu0
        %v11070 = vpop.trf.xlu0
        %v11071 = vpop.trf.xlu0
        %v11072 = vpop.trf.xlu0
        %v11073 = vpop.trf.xlu0
        %v11074 = vpop.trf.xlu0
        %v11075 = vpop.trf.xlu0
        %11076 = vxpose.xlu0.b32.start [1/16] %v10981, 128
        %11077 = vxpose.xlu0.b32.cont [2/16] %v10983, 128
        %11078 = vxpose.xlu0.b32.cont [3/16] %v10985, 128
        %11079 = vxpose.xlu0.b32.cont [4/16] %v10987, 128
        %11080 = vxpose.xlu0.b32.cont [5/16] %v10989, 128
        %11081 = vxpose.xlu0.b32.cont [6/16] %v10991, 128
        %11082 = vxpose.xlu0.b32.cont [7/16] %v10993, 128
        %11083 = vxpose.xlu0.b32.cont [8/16] %v10995, 128
        %11084 = vxpose.xlu0.b32.cont [9/16] %v10997, 128
        %11085 = vxpose.xlu0.b32.cont [10/16] %v10999, 128
        %11086 = vxpose.xlu0.b32.cont [11/16] %v11001, 128
        %11087 = vxpose.xlu0.b32.cont [12/16] %v11003, 128
        %11088 = vxpose.xlu0.b32.cont [13/16] %v11005, 128
        %11089 = vxpose.xlu0.b32.cont [14/16] %v11007, 128
        %11090 = vxpose.xlu0.b32.cont [15/16] %v11009, 128
        %11091 = vxpose.xlu0.b32.end [16/16] %v11011, 128
        %v11092 = vpop.trf.xlu0
        %v11093 = vpop.trf.xlu0
        %v11094 = vpop.trf.xlu0
        %v11095 = vpop.trf.xlu0
        %v11096 = vpop.trf.xlu0
        %v11097 = vpop.trf.xlu0
        %v11098 = vpop.trf.xlu0
        %v11099 = vpop.trf.xlu0
        %v11100 = vpop.trf.xlu0
        %v11101 = vpop.trf.xlu0
        %v11102 = vpop.trf.xlu0
        %v11103 = vpop.trf.xlu0
        %v11104 = vpop.trf.xlu0
        %v11105 = vpop.trf.xlu0
        %v11106 = vpop.trf.xlu0
        %v11107 = vpop.trf.xlu0
        %11108 = vset.pattern.permute.xlu0 32
        %11109 = vperm.xlu0 %11108, %v10884
        %v11110 = vpop.permute.xlu0 %11109
        %11112 = vset.pattern.permute.xlu0 32
        %11113 = vperm.xlu0 %11112, %v10885
        %v11114 = vpop.permute.xlu0 %11113
        %11116 = vset.pattern.permute.xlu0 32
        %11117 = vperm.xlu0 %11116, %v10886
        %v11118 = vpop.permute.xlu0 %11117
        %11120 = vset.pattern.permute.xlu0 32
        %11121 = vperm.xlu0 %11120, %v10887
        %v11122 = vpop.permute.xlu0 %11121
        %11124 = vset.pattern.permute.xlu0 32
        %11125 = vperm.xlu0 %11124, %v10888
        %v11126 = vpop.permute.xlu0 %11125
        %11128 = vset.pattern.permute.xlu0 32
        %11129 = vperm.xlu0 %11128, %v10889
        %v11130 = vpop.permute.xlu0 %11129
        %11132 = vset.pattern.permute.xlu0 32
        %11133 = vperm.xlu0 %11132, %v10890
        %v11134 = vpop.permute.xlu0 %11133
        %11136 = vset.pattern.permute.xlu0 32
        %11137 = vperm.xlu0 %11136, %v10891
        %v11138 = vpop.permute.xlu0 %11137
        %11140 = vset.pattern.permute.xlu0 32
        %11141 = vperm.xlu0 %11140, %v10892
        %v11142 = vpop.permute.xlu0 %11141
        %11144 = vset.pattern.permute.xlu0 32
        %11145 = vperm.xlu0 %11144, %v10893
        %v11146 = vpop.permute.xlu0 %11145
        %11148 = vset.pattern.permute.xlu0 32
        %11149 = vperm.xlu0 %11148, %v10894
        %v11150 = vpop.permute.xlu0 %11149
        %11152 = vset.pattern.permute.xlu0 32
        %11153 = vperm.xlu0 %11152, %v10895
        %v11154 = vpop.permute.xlu0 %11153
        %11156 = vset.pattern.permute.xlu0 32
        %11157 = vperm.xlu0 %11156, %v10896
        %v11158 = vpop.permute.xlu0 %11157
        %11160 = vset.pattern.permute.xlu0 32
        %11161 = vperm.xlu0 %11160, %v10897
        %v11162 = vpop.permute.xlu0 %11161
        %11164 = vset.pattern.permute.xlu0 32
        %11165 = vperm.xlu0 %11164, %v10898
        %v11166 = vpop.permute.xlu0 %11165
        %11168 = vset.pattern.permute.xlu0 32
        %11169 = vperm.xlu0 %11168, %v10899
        %v11170 = vpop.permute.xlu0 %11169
        %11172 = vset.pattern.permute.xlu0 32
        %11173 = vperm.xlu0 %11172, %v10900
        %v11174 = vpop.permute.xlu0 %11173
        %11176 = vset.pattern.permute.xlu0 32
        %11177 = vperm.xlu0 %11176, %v10901
        %v11178 = vpop.permute.xlu0 %11177
        %11180 = vset.pattern.permute.xlu0 32
        %11181 = vperm.xlu0 %11180, %v10902
        %v11182 = vpop.permute.xlu0 %11181
        %11184 = vset.pattern.permute.xlu0 32
        %11185 = vperm.xlu0 %11184, %v10903
        %v11186 = vpop.permute.xlu0 %11185
        %11188 = vset.pattern.permute.xlu0 32
        %11189 = vperm.xlu0 %11188, %v10904
        %v11190 = vpop.permute.xlu0 %11189
        %11192 = vset.pattern.permute.xlu0 32
        %11193 = vperm.xlu0 %11192, %v10905
        %v11194 = vpop.permute.xlu0 %11193
        %11196 = vset.pattern.permute.xlu0 32
        %11197 = vperm.xlu0 %11196, %v10906
        %v11198 = vpop.permute.xlu0 %11197
        %11200 = vset.pattern.permute.xlu0 32
        %11201 = vperm.xlu0 %11200, %v10907
        %v11202 = vpop.permute.xlu0 %11201
        %11204 = vset.pattern.permute.xlu0 32
        %11205 = vperm.xlu0 %11204, %v10908
        %v11206 = vpop.permute.xlu0 %11205
        %11208 = vset.pattern.permute.xlu0 32
        %11209 = vperm.xlu0 %11208, %v10909
        %v11210 = vpop.permute.xlu0 %11209
        %11212 = vset.pattern.permute.xlu0 32
        %11213 = vperm.xlu0 %11212, %v10910
        %v11214 = vpop.permute.xlu0 %11213
        %11216 = vset.pattern.permute.xlu0 32
        %11217 = vperm.xlu0 %11216, %v10911
        %v11218 = vpop.permute.xlu0 %11217
        %11220 = vset.pattern.permute.xlu0 32
        %11221 = vperm.xlu0 %11220, %v10912
        %v11222 = vpop.permute.xlu0 %11221
        %11224 = vset.pattern.permute.xlu0 32
        %11225 = vperm.xlu0 %11224, %v10913
        %v11226 = vpop.permute.xlu0 %11225
        %11228 = vset.pattern.permute.xlu0 32
        %11229 = vperm.xlu0 %11228, %v10914
        %v11230 = vpop.permute.xlu0 %11229
        %11232 = vset.pattern.permute.xlu0 32
        %11233 = vperm.xlu0 %11232, %v10915
        %v11234 = vpop.permute.xlu0 %11233
        %v11236 = vlaneseq
        %v11237 = vshrl.u32 %v11236, 7
        %v11238 = vsub.s32 0, %v11237
        %v11239 = vrot.slane %v11060, %v11238
        %v11240 = vlaneseq
        %v11241 = vshrl.u32 %v11240, 7
        %v11242 = vsub.s32 0, %v11241
        %v11243 = vrot.slane %v11092, %v11242
        %v11244 = vmul.f32 %v11110, %v11239
        %v11245 = vmul.f32 %v11110, %v11243
        %v11246 = vmul.f32 %v11114, %v11239
        %v11247 = vmul.f32 %v11114, %v11243
        %v11248 = vmul.f32 %v11118, %v11239
        %v11249 = vmul.f32 %v11118, %v11243
        %v11250 = vmul.f32 %v11122, %v11239
        %v11251 = vmul.f32 %v11122, %v11243
        %v11252 = vmul.f32 %v11126, %v11239
        %v11253 = vmul.f32 %v11126, %v11243
        %v11254 = vmul.f32 %v11130, %v11239
        %v11255 = vmul.f32 %v11130, %v11243
        %v11256 = vmul.f32 %v11134, %v11239
        %v11257 = vmul.f32 %v11134, %v11243
        %v11258 = vmul.f32 %v11138, %v11239
        %v11259 = vmul.f32 %v11138, %v11243
        %v11260 = vmul.f32 %v11142, %v11239
        %v11261 = vmul.f32 %v11142, %v11243
        %v11262 = vmul.f32 %v11146, %v11239
        %v11263 = vmul.f32 %v11146, %v11243
        %v11264 = vmul.f32 %v11150, %v11239
        %v11265 = vmul.f32 %v11150, %v11243
        %v11266 = vmul.f32 %v11154, %v11239
        %v11267 = vmul.f32 %v11154, %v11243
        %v11268 = vmul.f32 %v11158, %v11239
        %v11269 = vmul.f32 %v11158, %v11243
        %v11270 = vmul.f32 %v11162, %v11239
        %v11271 = vmul.f32 %v11162, %v11243
        %v11272 = vmul.f32 %v11166, %v11239
        %v11273 = vmul.f32 %v11166, %v11243
        %v11274 = vmul.f32 %v11170, %v11239
        %v11275 = vmul.f32 %v11170, %v11243
        %v11276 = vmul.f32 %v11174, %v11239
        %v11277 = vmul.f32 %v11174, %v11243
        %v11278 = vmul.f32 %v11178, %v11239
        %v11279 = vmul.f32 %v11178, %v11243
        %v11280 = vmul.f32 %v11182, %v11239
        %v11281 = vmul.f32 %v11182, %v11243
        %v11282 = vmul.f32 %v11186, %v11239
        %v11283 = vmul.f32 %v11186, %v11243
        %v11284 = vmul.f32 %v11190, %v11239
        %v11285 = vmul.f32 %v11190, %v11243
        %v11286 = vmul.f32 %v11194, %v11239
        %v11287 = vmul.f32 %v11194, %v11243
        %v11288 = vmul.f32 %v11198, %v11239
        %v11289 = vmul.f32 %v11198, %v11243
        %v11290 = vmul.f32 %v11202, %v11239
        %v11291 = vmul.f32 %v11202, %v11243
        %v11292 = vmul.f32 %v11206, %v11239
        %v11293 = vmul.f32 %v11206, %v11243
        %v11294 = vmul.f32 %v11210, %v11239
        %v11295 = vmul.f32 %v11210, %v11243
        %v11296 = vmul.f32 %v11214, %v11239
        %v11297 = vmul.f32 %v11214, %v11243
        %v11298 = vmul.f32 %v11218, %v11239
        %v11299 = vmul.f32 %v11218, %v11243
        %v11300 = vmul.f32 %v11222, %v11239
        %v11301 = vmul.f32 %v11222, %v11243
        %v11302 = vmul.f32 %v11226, %v11239
        %v11303 = vmul.f32 %v11226, %v11243
        %v11304 = vmul.f32 %v11230, %v11239
        %v11305 = vmul.f32 %v11230, %v11243
        %v11306 = vmul.f32 %v11234, %v11239
        %v11307 = vmul.f32 %v11234, %v11243
        %11308 = vrot.lane.b32.xlu0 %v10884, 93
        %v11309 = vpop.permute.xlu0 %11308
        %11310 = vrot.lane.b32.xlu0 %v10885, 93
        %v11311 = vpop.permute.xlu0 %11310
        %11312 = vrot.lane.b32.xlu0 %v10886, 93
        %v11313 = vpop.permute.xlu0 %11312
        %11314 = vrot.lane.b32.xlu0 %v10887, 93
        %v11315 = vpop.permute.xlu0 %11314
        %11316 = vrot.lane.b32.xlu0 %v10888, 93
        %v11317 = vpop.permute.xlu0 %11316
        %11318 = vrot.lane.b32.xlu0 %v10889, 93
        %v11319 = vpop.permute.xlu0 %11318
        %11320 = vrot.lane.b32.xlu0 %v10890, 93
        %v11321 = vpop.permute.xlu0 %11320
        %11322 = vrot.lane.b32.xlu0 %v10891, 93
        %v11323 = vpop.permute.xlu0 %11322
        %11324 = vrot.lane.b32.xlu0 %v10892, 93
        %v11325 = vpop.permute.xlu0 %11324
        %11326 = vrot.lane.b32.xlu0 %v10893, 93
        %v11327 = vpop.permute.xlu0 %11326
        %11328 = vrot.lane.b32.xlu0 %v10894, 93
        %v11329 = vpop.permute.xlu0 %11328
        %11330 = vrot.lane.b32.xlu0 %v10895, 93
        %v11331 = vpop.permute.xlu0 %11330
        %11332 = vrot.lane.b32.xlu0 %v10896, 93
        %v11333 = vpop.permute.xlu0 %11332
        %11334 = vrot.lane.b32.xlu0 %v10897, 93
        %v11335 = vpop.permute.xlu0 %11334
        %11336 = vrot.lane.b32.xlu0 %v10898, 93
        %v11337 = vpop.permute.xlu0 %11336
        %11338 = vrot.lane.b32.xlu0 %v10899, 93
        %v11339 = vpop.permute.xlu0 %11338
        %11340 = vrot.lane.b32.xlu0 %v10900, 93
        %v11341 = vpop.permute.xlu0 %11340
        %11342 = vrot.lane.b32.xlu0 %v10901, 93
        %v11343 = vpop.permute.xlu0 %11342
        %11344 = vrot.lane.b32.xlu0 %v10902, 93
        %v11345 = vpop.permute.xlu0 %11344
        %11346 = vrot.lane.b32.xlu0 %v10903, 93
        %v11347 = vpop.permute.xlu0 %11346
        %11348 = vrot.lane.b32.xlu0 %v10904, 93
        %v11349 = vpop.permute.xlu0 %11348
        %11350 = vrot.lane.b32.xlu0 %v10905, 93
        %v11351 = vpop.permute.xlu0 %11350
        %11352 = vrot.lane.b32.xlu0 %v10906, 93
        %v11353 = vpop.permute.xlu0 %11352
        %11354 = vrot.lane.b32.xlu0 %v10907, 93
        %v11355 = vpop.permute.xlu0 %11354
        %11356 = vrot.lane.b32.xlu0 %v10908, 93
        %v11357 = vpop.permute.xlu0 %11356
        %11358 = vrot.lane.b32.xlu0 %v10909, 93
        %v11359 = vpop.permute.xlu0 %11358
        %11360 = vrot.lane.b32.xlu0 %v10910, 93
        %v11361 = vpop.permute.xlu0 %11360
        %11362 = vrot.lane.b32.xlu0 %v10911, 93
        %v11363 = vpop.permute.xlu0 %11362
        %11364 = vrot.lane.b32.xlu0 %v10912, 93
        %v11365 = vpop.permute.xlu0 %11364
        %11366 = vrot.lane.b32.xlu0 %v10913, 93
        %v11367 = vpop.permute.xlu0 %11366
        %11368 = vrot.lane.b32.xlu0 %v10914, 93
        %v11369 = vpop.permute.xlu0 %11368
        %11370 = vrot.lane.b32.xlu0 %v10915, 93
        %v11371 = vpop.permute.xlu0 %11370
        %11404 = vxpose.xlu0.b32.start [1/16] %v11309, 128
        %11405 = vxpose.xlu0.b32.cont [2/16] %v11311, 128
        %11406 = vxpose.xlu0.b32.cont [3/16] %v11313, 128
        %11407 = vxpose.xlu0.b32.cont [4/16] %v11315, 128
        %11408 = vxpose.xlu0.b32.cont [5/16] %v11317, 128
        %11409 = vxpose.xlu0.b32.cont [6/16] %v11319, 128
        %11410 = vxpose.xlu0.b32.cont [7/16] %v11321, 128
        %11411 = vxpose.xlu0.b32.cont [8/16] %v11323, 128
        %11412 = vxpose.xlu0.b32.cont [9/16] %v11325, 128
        %11413 = vxpose.xlu0.b32.cont [10/16] %v11327, 128
        %11414 = vxpose.xlu0.b32.cont [11/16] %v11329, 128
        %11415 = vxpose.xlu0.b32.cont [12/16] %v11331, 128
        %11416 = vxpose.xlu0.b32.cont [13/16] %v11333, 128
        %11417 = vxpose.xlu0.b32.cont [14/16] %v11335, 128
        %11418 = vxpose.xlu0.b32.cont [15/16] %v11337, 128
        %11419 = vxpose.xlu0.b32.end [16/16] %v11339, 128
        %v11420 = vpop.trf.xlu0
        %v11421 = vpop.trf.xlu0
        %v11422 = vpop.trf.xlu0
        %v11423 = vpop.trf.xlu0
        %v11424 = vpop.trf.xlu0
        %v11425 = vpop.trf.xlu0
        %v11426 = vpop.trf.xlu0
        %v11427 = vpop.trf.xlu0
        %v11428 = vpop.trf.xlu0
        %v11429 = vpop.trf.xlu0
        %v11430 = vpop.trf.xlu0
        %v11431 = vpop.trf.xlu0
        %v11432 = vpop.trf.xlu0
        %v11433 = vpop.trf.xlu0
        %v11434 = vpop.trf.xlu0
        %v11435 = vpop.trf.xlu0
        %11436 = vxpose.xlu0.b32.start [1/16] %v11341, 128
        %11437 = vxpose.xlu0.b32.cont [2/16] %v11343, 128
        %11438 = vxpose.xlu0.b32.cont [3/16] %v11345, 128
        %11439 = vxpose.xlu0.b32.cont [4/16] %v11347, 128
        %11440 = vxpose.xlu0.b32.cont [5/16] %v11349, 128
        %11441 = vxpose.xlu0.b32.cont [6/16] %v11351, 128
        %11442 = vxpose.xlu0.b32.cont [7/16] %v11353, 128
        %11443 = vxpose.xlu0.b32.cont [8/16] %v11355, 128
        %11444 = vxpose.xlu0.b32.cont [9/16] %v11357, 128
        %11445 = vxpose.xlu0.b32.cont [10/16] %v11359, 128
        %11446 = vxpose.xlu0.b32.cont [11/16] %v11361, 128
        %11447 = vxpose.xlu0.b32.cont [12/16] %v11363, 128
        %11448 = vxpose.xlu0.b32.cont [13/16] %v11365, 128
        %11449 = vxpose.xlu0.b32.cont [14/16] %v11367, 128
        %11450 = vxpose.xlu0.b32.cont [15/16] %v11369, 128
        %11451 = vxpose.xlu0.b32.end [16/16] %v11371, 128
        %v11452 = vpop.trf.xlu0
        %v11453 = vpop.trf.xlu0
        %v11454 = vpop.trf.xlu0
        %v11455 = vpop.trf.xlu0
        %v11456 = vpop.trf.xlu0
        %v11457 = vpop.trf.xlu0
        %v11458 = vpop.trf.xlu0
        %v11459 = vpop.trf.xlu0
        %v11460 = vpop.trf.xlu0
        %v11461 = vpop.trf.xlu0
        %v11462 = vpop.trf.xlu0
        %v11463 = vpop.trf.xlu0
        %v11464 = vpop.trf.xlu0
        %v11465 = vpop.trf.xlu0
        %v11466 = vpop.trf.xlu0
        %v11467 = vpop.trf.xlu0
        %11468 = vset.pattern.permute.xlu0 33
        %11469 = vperm.xlu0 %11468, %v10884
        %v11470 = vpop.permute.xlu0 %11469
        %11472 = vset.pattern.permute.xlu0 33
        %11473 = vperm.xlu0 %11472, %v10885
        %v11474 = vpop.permute.xlu0 %11473
        %11476 = vset.pattern.permute.xlu0 33
        %11477 = vperm.xlu0 %11476, %v10886
        %v11478 = vpop.permute.xlu0 %11477
        %11480 = vset.pattern.permute.xlu0 33
        %11481 = vperm.xlu0 %11480, %v10887
        %v11482 = vpop.permute.xlu0 %11481
        %11484 = vset.pattern.permute.xlu0 33
        %11485 = vperm.xlu0 %11484, %v10888
        %v11486 = vpop.permute.xlu0 %11485
        %11488 = vset.pattern.permute.xlu0 33
        %11489 = vperm.xlu0 %11488, %v10889
        %v11490 = vpop.permute.xlu0 %11489
        %11492 = vset.pattern.permute.xlu0 33
        %11493 = vperm.xlu0 %11492, %v10890
        %v11494 = vpop.permute.xlu0 %11493
        %11496 = vset.pattern.permute.xlu0 33
        %11497 = vperm.xlu0 %11496, %v10891
        %v11498 = vpop.permute.xlu0 %11497
        %11500 = vset.pattern.permute.xlu0 33
        %11501 = vperm.xlu0 %11500, %v10892
        %v11502 = vpop.permute.xlu0 %11501
        %11504 = vset.pattern.permute.xlu0 33
        %11505 = vperm.xlu0 %11504, %v10893
        %v11506 = vpop.permute.xlu0 %11505
        %11508 = vset.pattern.permute.xlu0 33
        %11509 = vperm.xlu0 %11508, %v10894
        %v11510 = vpop.permute.xlu0 %11509
        %11512 = vset.pattern.permute.xlu0 33
        %11513 = vperm.xlu0 %11512, %v10895
        %v11514 = vpop.permute.xlu0 %11513
        %11516 = vset.pattern.permute.xlu0 33
        %11517 = vperm.xlu0 %11516, %v10896
        %v11518 = vpop.permute.xlu0 %11517
        %11520 = vset.pattern.permute.xlu0 33
        %11521 = vperm.xlu0 %11520, %v10897
        %v11522 = vpop.permute.xlu0 %11521
        %11524 = vset.pattern.permute.xlu0 33
        %11525 = vperm.xlu0 %11524, %v10898
        %v11526 = vpop.permute.xlu0 %11525
        %11528 = vset.pattern.permute.xlu0 33
        %11529 = vperm.xlu0 %11528, %v10899
        %v11530 = vpop.permute.xlu0 %11529
        %11532 = vset.pattern.permute.xlu0 33
        %11533 = vperm.xlu0 %11532, %v10900
        %v11534 = vpop.permute.xlu0 %11533
        %11536 = vset.pattern.permute.xlu0 33
        %11537 = vperm.xlu0 %11536, %v10901
        %v11538 = vpop.permute.xlu0 %11537
        %11540 = vset.pattern.permute.xlu0 33
        %11541 = vperm.xlu0 %11540, %v10902
        %v11542 = vpop.permute.xlu0 %11541
        %11544 = vset.pattern.permute.xlu0 33
        %11545 = vperm.xlu0 %11544, %v10903
        %v11546 = vpop.permute.xlu0 %11545
        %11548 = vset.pattern.permute.xlu0 33
        %11549 = vperm.xlu0 %11548, %v10904
        %v11550 = vpop.permute.xlu0 %11549
        %11552 = vset.pattern.permute.xlu0 33
        %11553 = vperm.xlu0 %11552, %v10905
        %v11554 = vpop.permute.xlu0 %11553
        %11556 = vset.pattern.permute.xlu0 33
        %11557 = vperm.xlu0 %11556, %v10906
        %v11558 = vpop.permute.xlu0 %11557
        %11560 = vset.pattern.permute.xlu0 33
        %11561 = vperm.xlu0 %11560, %v10907
        %v11562 = vpop.permute.xlu0 %11561
        %11564 = vset.pattern.permute.xlu0 33
        %11565 = vperm.xlu0 %11564, %v10908
        %v11566 = vpop.permute.xlu0 %11565
        %11568 = vset.pattern.permute.xlu0 33
        %11569 = vperm.xlu0 %11568, %v10909
        %v11570 = vpop.permute.xlu0 %11569
        %11572 = vset.pattern.permute.xlu0 33
        %11573 = vperm.xlu0 %11572, %v10910
        %v11574 = vpop.permute.xlu0 %11573
        %11576 = vset.pattern.permute.xlu0 33
        %11577 = vperm.xlu0 %11576, %v10911
        %v11578 = vpop.permute.xlu0 %11577
        %11580 = vset.pattern.permute.xlu0 33
        %11581 = vperm.xlu0 %11580, %v10912
        %v11582 = vpop.permute.xlu0 %11581
        %11584 = vset.pattern.permute.xlu0 33
        %11585 = vperm.xlu0 %11584, %v10913
        %v11586 = vpop.permute.xlu0 %11585
        %11588 = vset.pattern.permute.xlu0 33
        %11589 = vperm.xlu0 %11588, %v10914
        %v11590 = vpop.permute.xlu0 %11589
        %11592 = vset.pattern.permute.xlu0 33
        %11593 = vperm.xlu0 %11592, %v10915
        %v11594 = vpop.permute.xlu0 %11593
        %v11596 = vlaneseq
        %v11597 = vshrl.u32 %v11596, 7
        %v11598 = vsub.s32 0, %v11597
        %v11599 = vrot.slane %v11420, %v11598
        %v11600 = vlaneseq
        %v11601 = vshrl.u32 %v11600, 7
        %v11602 = vsub.s32 0, %v11601
        %v11603 = vrot.slane %v11452, %v11602
        %v11604 = vmul.f32 %v11470, %v11599
        %v11605 = vmul.f32 %v11470, %v11603
        %v11606 = vmul.f32 %v11474, %v11599
        %v11607 = vmul.f32 %v11474, %v11603
        %v11608 = vmul.f32 %v11478, %v11599
        %v11609 = vmul.f32 %v11478, %v11603
        %v11610 = vmul.f32 %v11482, %v11599
        %v11611 = vmul.f32 %v11482, %v11603
        %v11612 = vmul.f32 %v11486, %v11599
        %v11613 = vmul.f32 %v11486, %v11603
        %v11614 = vmul.f32 %v11490, %v11599
        %v11615 = vmul.f32 %v11490, %v11603
        %v11616 = vmul.f32 %v11494, %v11599
        %v11617 = vmul.f32 %v11494, %v11603
        %v11618 = vmul.f32 %v11498, %v11599
        %v11619 = vmul.f32 %v11498, %v11603
        %v11620 = vmul.f32 %v11502, %v11599
        %v11621 = vmul.f32 %v11502, %v11603
        %v11622 = vmul.f32 %v11506, %v11599
        %v11623 = vmul.f32 %v11506, %v11603
        %v11624 = vmul.f32 %v11510, %v11599
        %v11625 = vmul.f32 %v11510, %v11603
        %v11626 = vmul.f32 %v11514, %v11599
        %v11627 = vmul.f32 %v11514, %v11603
        %v11628 = vmul.f32 %v11518, %v11599
        %v11629 = vmul.f32 %v11518, %v11603
        %v11630 = vmul.f32 %v11522, %v11599
        %v11631 = vmul.f32 %v11522, %v11603
        %v11632 = vmul.f32 %v11526, %v11599
        %v11633 = vmul.f32 %v11526, %v11603
        %v11634 = vmul.f32 %v11530, %v11599
        %v11635 = vmul.f32 %v11530, %v11603
        %v11636 = vmul.f32 %v11534, %v11599
        %v11637 = vmul.f32 %v11534, %v11603
        %v11638 = vmul.f32 %v11538, %v11599
        %v11639 = vmul.f32 %v11538, %v11603
        %v11640 = vmul.f32 %v11542, %v11599
        %v11641 = vmul.f32 %v11542, %v11603
        %v11642 = vmul.f32 %v11546, %v11599
        %v11643 = vmul.f32 %v11546, %v11603
        %v11644 = vmul.f32 %v11550, %v11599
        %v11645 = vmul.f32 %v11550, %v11603
        %v11646 = vmul.f32 %v11554, %v11599
        %v11647 = vmul.f32 %v11554, %v11603
        %v11648 = vmul.f32 %v11558, %v11599
        %v11649 = vmul.f32 %v11558, %v11603
        %v11650 = vmul.f32 %v11562, %v11599
        %v11651 = vmul.f32 %v11562, %v11603
        %v11652 = vmul.f32 %v11566, %v11599
        %v11653 = vmul.f32 %v11566, %v11603
        %v11654 = vmul.f32 %v11570, %v11599
        %v11655 = vmul.f32 %v11570, %v11603
        %v11656 = vmul.f32 %v11574, %v11599
        %v11657 = vmul.f32 %v11574, %v11603
        %v11658 = vmul.f32 %v11578, %v11599
        %v11659 = vmul.f32 %v11578, %v11603
        %v11660 = vmul.f32 %v11582, %v11599
        %v11661 = vmul.f32 %v11582, %v11603
        %v11662 = vmul.f32 %v11586, %v11599
        %v11663 = vmul.f32 %v11586, %v11603
        %v11664 = vmul.f32 %v11590, %v11599
        %v11665 = vmul.f32 %v11590, %v11603
        %v11666 = vmul.f32 %v11594, %v11599
        %v11667 = vmul.f32 %v11594, %v11603
        %v11668 = vadd.f32 %v11244, %v11604
        %v11669 = vadd.f32 %v11245, %v11605
        %v11670 = vadd.f32 %v11246, %v11606
        %v11671 = vadd.f32 %v11247, %v11607
        %v11672 = vadd.f32 %v11248, %v11608
        %v11673 = vadd.f32 %v11249, %v11609
        %v11674 = vadd.f32 %v11250, %v11610
        %v11675 = vadd.f32 %v11251, %v11611
        %v11676 = vadd.f32 %v11252, %v11612
        %v11677 = vadd.f32 %v11253, %v11613
        %v11678 = vadd.f32 %v11254, %v11614
        %v11679 = vadd.f32 %v11255, %v11615
        %v11680 = vadd.f32 %v11256, %v11616
        %v11681 = vadd.f32 %v11257, %v11617
        %v11682 = vadd.f32 %v11258, %v11618
        %v11683 = vadd.f32 %v11259, %v11619
        %v11684 = vadd.f32 %v11260, %v11620
        %v11685 = vadd.f32 %v11261, %v11621
        %v11686 = vadd.f32 %v11262, %v11622
        %v11687 = vadd.f32 %v11263, %v11623
        %v11688 = vadd.f32 %v11264, %v11624
        %v11689 = vadd.f32 %v11265, %v11625
        %v11690 = vadd.f32 %v11266, %v11626
        %v11691 = vadd.f32 %v11267, %v11627
        %v11692 = vadd.f32 %v11268, %v11628
        %v11693 = vadd.f32 %v11269, %v11629
        %v11694 = vadd.f32 %v11270, %v11630
        %v11695 = vadd.f32 %v11271, %v11631
        %v11696 = vadd.f32 %v11272, %v11632
        %v11697 = vadd.f32 %v11273, %v11633
        %v11698 = vadd.f32 %v11274, %v11634
        %v11699 = vadd.f32 %v11275, %v11635
        %v11700 = vadd.f32 %v11276, %v11636
        %v11701 = vadd.f32 %v11277, %v11637
        %v11702 = vadd.f32 %v11278, %v11638
        %v11703 = vadd.f32 %v11279, %v11639
        %v11704 = vadd.f32 %v11280, %v11640
        %v11705 = vadd.f32 %v11281, %v11641
        %v11706 = vadd.f32 %v11282, %v11642
        %v11707 = vadd.f32 %v11283, %v11643
        %v11708 = vadd.f32 %v11284, %v11644
        %v11709 = vadd.f32 %v11285, %v11645
        %v11710 = vadd.f32 %v11286, %v11646
        %v11711 = vadd.f32 %v11287, %v11647
        %v11712 = vadd.f32 %v11288, %v11648
        %v11713 = vadd.f32 %v11289, %v11649
        %v11714 = vadd.f32 %v11290, %v11650
        %v11715 = vadd.f32 %v11291, %v11651
        %v11716 = vadd.f32 %v11292, %v11652
        %v11717 = vadd.f32 %v11293, %v11653
        %v11718 = vadd.f32 %v11294, %v11654
        %v11719 = vadd.f32 %v11295, %v11655
        %v11720 = vadd.f32 %v11296, %v11656
        %v11721 = vadd.f32 %v11297, %v11657
        %v11722 = vadd.f32 %v11298, %v11658
        %v11723 = vadd.f32 %v11299, %v11659
        %v11724 = vadd.f32 %v11300, %v11660
        %v11725 = vadd.f32 %v11301, %v11661
        %v11726 = vadd.f32 %v11302, %v11662
        %v11727 = vadd.f32 %v11303, %v11663
        %v11728 = vadd.f32 %v11304, %v11664
        %v11729 = vadd.f32 %v11305, %v11665
        %v11730 = vadd.f32 %v11306, %v11666
        %v11731 = vadd.f32 %v11307, %v11667
        %v11732 = vmax.f32 %v11668, %v11669
        %11733 = vmax.xlane.f32.xlu0 %v11732
        %v11734 = vpop.xlane.xlu0 %11733
        %v11735 = vmax.f32 %v11670, %v11671
        %11736 = vmax.xlane.f32.xlu0 %v11735
        %v11737 = vpop.xlane.xlu0 %11736
        %v11738 = vmax.f32 %v11672, %v11673
        %11739 = vmax.xlane.f32.xlu0 %v11738
        %v11740 = vpop.xlane.xlu0 %11739
        %v11741 = vmax.f32 %v11674, %v11675
        %11742 = vmax.xlane.f32.xlu0 %v11741
        %v11743 = vpop.xlane.xlu0 %11742
        %v11744 = vmax.f32 %v11676, %v11677
        %11745 = vmax.xlane.f32.xlu0 %v11744
        %v11746 = vpop.xlane.xlu0 %11745
        %v11747 = vmax.f32 %v11678, %v11679
        %11748 = vmax.xlane.f32.xlu0 %v11747
        %v11749 = vpop.xlane.xlu0 %11748
        %v11750 = vmax.f32 %v11680, %v11681
        %11751 = vmax.xlane.f32.xlu0 %v11750
        %v11752 = vpop.xlane.xlu0 %11751
        %v11753 = vmax.f32 %v11682, %v11683
        %11754 = vmax.xlane.f32.xlu0 %v11753
        %v11755 = vpop.xlane.xlu0 %11754
        %v11756 = vmax.f32 %v11684, %v11685
        %11757 = vmax.xlane.f32.xlu0 %v11756
        %v11758 = vpop.xlane.xlu0 %11757
        %v11759 = vmax.f32 %v11686, %v11687
        %11760 = vmax.xlane.f32.xlu0 %v11759
        %v11761 = vpop.xlane.xlu0 %11760
        %v11762 = vmax.f32 %v11688, %v11689
        %11763 = vmax.xlane.f32.xlu0 %v11762
        %v11764 = vpop.xlane.xlu0 %11763
        %v11765 = vmax.f32 %v11690, %v11691
        %11766 = vmax.xlane.f32.xlu0 %v11765
        %v11767 = vpop.xlane.xlu0 %11766
        %v11768 = vmax.f32 %v11692, %v11693
        %11769 = vmax.xlane.f32.xlu0 %v11768
        %v11770 = vpop.xlane.xlu0 %11769
        %v11771 = vmax.f32 %v11694, %v11695
        %11772 = vmax.xlane.f32.xlu0 %v11771
        %v11773 = vpop.xlane.xlu0 %11772
        %v11774 = vmax.f32 %v11696, %v11697
        %11775 = vmax.xlane.f32.xlu0 %v11774
        %v11776 = vpop.xlane.xlu0 %11775
        %v11777 = vmax.f32 %v11698, %v11699
        %11778 = vmax.xlane.f32.xlu0 %v11777
        %v11779 = vpop.xlane.xlu0 %11778
        %v11780 = vmax.f32 %v11700, %v11701
        %11781 = vmax.xlane.f32.xlu0 %v11780
        %v11782 = vpop.xlane.xlu0 %11781
        %v11783 = vmax.f32 %v11702, %v11703
        %11784 = vmax.xlane.f32.xlu0 %v11783
        %v11785 = vpop.xlane.xlu0 %11784
        %v11786 = vmax.f32 %v11704, %v11705
        %11787 = vmax.xlane.f32.xlu0 %v11786
        %v11788 = vpop.xlane.xlu0 %11787
        %v11789 = vmax.f32 %v11706, %v11707
        %11790 = vmax.xlane.f32.xlu0 %v11789
        %v11791 = vpop.xlane.xlu0 %11790
        %v11792 = vmax.f32 %v11708, %v11709
        %11793 = vmax.xlane.f32.xlu0 %v11792
        %v11794 = vpop.xlane.xlu0 %11793
        %v11795 = vmax.f32 %v11710, %v11711
        %11796 = vmax.xlane.f32.xlu0 %v11795
        %v11797 = vpop.xlane.xlu0 %11796
        %v11798 = vmax.f32 %v11712, %v11713
        %11799 = vmax.xlane.f32.xlu0 %v11798
        %v11800 = vpop.xlane.xlu0 %11799
        %v11801 = vmax.f32 %v11714, %v11715
        %11802 = vmax.xlane.f32.xlu0 %v11801
        %v11803 = vpop.xlane.xlu0 %11802
        %v11804 = vmax.f32 %v11716, %v11717
        %11805 = vmax.xlane.f32.xlu0 %v11804
        %v11806 = vpop.xlane.xlu0 %11805
        %v11807 = vmax.f32 %v11718, %v11719
        %11808 = vmax.xlane.f32.xlu0 %v11807
        %v11809 = vpop.xlane.xlu0 %11808
        %v11810 = vmax.f32 %v11720, %v11721
        %11811 = vmax.xlane.f32.xlu0 %v11810
        %v11812 = vpop.xlane.xlu0 %11811
        %v11813 = vmax.f32 %v11722, %v11723
        %11814 = vmax.xlane.f32.xlu0 %v11813
        %v11815 = vpop.xlane.xlu0 %11814
        %v11816 = vmax.f32 %v11724, %v11725
        %11817 = vmax.xlane.f32.xlu0 %v11816
        %v11818 = vpop.xlane.xlu0 %11817
        %v11819 = vmax.f32 %v11726, %v11727
        %11820 = vmax.xlane.f32.xlu0 %v11819
        %v11821 = vpop.xlane.xlu0 %11820
        %v11822 = vmax.f32 %v11728, %v11729
        %11823 = vmax.xlane.f32.xlu0 %v11822
        %v11824 = vpop.xlane.xlu0 %11823
        %v11825 = vmax.f32 %v11730, %v11731
        %11826 = vmax.xlane.f32.xlu0 %v11825
        %v11827 = vpop.xlane.xlu0 %11826
        %v11828 = vsub.f32 %v11668, %v11734
        %v11829 = vsub.f32 %v11669, %v11734
        %v11830 = vsub.f32 %v11670, %v11737
        %v11831 = vsub.f32 %v11671, %v11737
        %v11832 = vsub.f32 %v11672, %v11740
        %v11833 = vsub.f32 %v11673, %v11740
        %v11834 = vsub.f32 %v11674, %v11743
        %v11835 = vsub.f32 %v11675, %v11743
        %v11836 = vsub.f32 %v11676, %v11746
        %v11837 = vsub.f32 %v11677, %v11746
        %v11838 = vsub.f32 %v11678, %v11749
        %v11839 = vsub.f32 %v11679, %v11749
        %v11840 = vsub.f32 %v11680, %v11752
        %v11841 = vsub.f32 %v11681, %v11752
        %v11842 = vsub.f32 %v11682, %v11755
        %v11843 = vsub.f32 %v11683, %v11755
        %v11844 = vsub.f32 %v11684, %v11758
        %v11845 = vsub.f32 %v11685, %v11758
        %v11846 = vsub.f32 %v11686, %v11761
        %v11847 = vsub.f32 %v11687, %v11761
        %v11848 = vsub.f32 %v11688, %v11764
        %v11849 = vsub.f32 %v11689, %v11764
        %v11850 = vsub.f32 %v11690, %v11767
        %v11851 = vsub.f32 %v11691, %v11767
        %v11852 = vsub.f32 %v11692, %v11770
        %v11853 = vsub.f32 %v11693, %v11770
        %v11854 = vsub.f32 %v11694, %v11773
        %v11855 = vsub.f32 %v11695, %v11773
        %v11856 = vsub.f32 %v11696, %v11776
        %v11857 = vsub.f32 %v11697, %v11776
        %v11858 = vsub.f32 %v11698, %v11779
        %v11859 = vsub.f32 %v11699, %v11779
        %v11860 = vsub.f32 %v11700, %v11782
        %v11861 = vsub.f32 %v11701, %v11782
        %v11862 = vsub.f32 %v11702, %v11785
        %v11863 = vsub.f32 %v11703, %v11785
        %v11864 = vsub.f32 %v11704, %v11788
        %v11865 = vsub.f32 %v11705, %v11788
        %v11866 = vsub.f32 %v11706, %v11791
        %v11867 = vsub.f32 %v11707, %v11791
        %v11868 = vsub.f32 %v11708, %v11794
        %v11869 = vsub.f32 %v11709, %v11794
        %v11870 = vsub.f32 %v11710, %v11797
        %v11871 = vsub.f32 %v11711, %v11797
        %v11872 = vsub.f32 %v11712, %v11800
        %v11873 = vsub.f32 %v11713, %v11800
        %v11874 = vsub.f32 %v11714, %v11803
        %v11875 = vsub.f32 %v11715, %v11803
        %v11876 = vsub.f32 %v11716, %v11806
        %v11877 = vsub.f32 %v11717, %v11806
        %v11878 = vsub.f32 %v11718, %v11809
        %v11879 = vsub.f32 %v11719, %v11809
        %v11880 = vsub.f32 %v11720, %v11812
        %v11881 = vsub.f32 %v11721, %v11812
        %v11882 = vsub.f32 %v11722, %v11815
        %v11883 = vsub.f32 %v11723, %v11815
        %v11884 = vsub.f32 %v11724, %v11818
        %v11885 = vsub.f32 %v11725, %v11818
        %v11886 = vsub.f32 %v11726, %v11821
        %v11887 = vsub.f32 %v11727, %v11821
        %v11888 = vsub.f32 %v11728, %v11824
        %v11889 = vsub.f32 %v11729, %v11824
        %v11890 = vsub.f32 %v11730, %v11827
        %v11891 = vsub.f32 %v11731, %v11827
        %v11892 = vmul.f32 %v11828, 1.442695
        %v11893 = vpow.pop %v11892
        %v11894 = vmul.f32 %v11829, 1.442695
        %v11895 = vpow.pop %v11894
        %v11896 = vmul.f32 %v11830, 1.442695
        %v11897 = vpow.pop %v11896
        %v11898 = vmul.f32 %v11831, 1.442695
        %v11899 = vpow.pop %v11898
        %v11900 = vmul.f32 %v11832, 1.442695
        %v11901 = vpow.pop %v11900
        %v11902 = vmul.f32 %v11833, 1.442695
        %v11903 = vpow.pop %v11902
        %v11904 = vmul.f32 %v11834, 1.442695
        %v11905 = vpow.pop %v11904
        %v11906 = vmul.f32 %v11835, 1.442695
        %v11907 = vpow.pop %v11906
        %v11908 = vmul.f32 %v11836, 1.442695
        %v11909 = vpow.pop %v11908
        %v11910 = vmul.f32 %v11837, 1.442695
        %v11911 = vpow.pop %v11910
        %v11912 = vmul.f32 %v11838, 1.442695
        %v11913 = vpow.pop %v11912
        %v11914 = vmul.f32 %v11839, 1.442695
        %v11915 = vpow.pop %v11914
        %v11916 = vmul.f32 %v11840, 1.442695
        %v11917 = vpow.pop %v11916
        %v11918 = vmul.f32 %v11841, 1.442695
        %v11919 = vpow.pop %v11918
        %v11920 = vmul.f32 %v11842, 1.442695
        %v11921 = vpow.pop %v11920
        %v11922 = vmul.f32 %v11843, 1.442695
        %v11923 = vpow.pop %v11922
        %v11924 = vmul.f32 %v11844, 1.442695
        %v11925 = vpow.pop %v11924
        %v11926 = vmul.f32 %v11845, 1.442695
        %v11927 = vpow.pop %v11926
        %v11928 = vmul.f32 %v11846, 1.442695
        %v11929 = vpow.pop %v11928
        %v11930 = vmul.f32 %v11847, 1.442695
        %v11931 = vpow.pop %v11930
        %v11932 = vmul.f32 %v11848, 1.442695
        %v11933 = vpow.pop %v11932
        %v11934 = vmul.f32 %v11849, 1.442695
        %v11935 = vpow.pop %v11934
        %v11936 = vmul.f32 %v11850, 1.442695
        %v11937 = vpow.pop %v11936
        %v11938 = vmul.f32 %v11851, 1.442695
        %v11939 = vpow.pop %v11938
        %v11940 = vmul.f32 %v11852, 1.442695
        %v11941 = vpow.pop %v11940
        %v11942 = vmul.f32 %v11853, 1.442695
        %v11943 = vpow.pop %v11942
        %v11944 = vmul.f32 %v11854, 1.442695
        %v11945 = vpow.pop %v11944
        %v11946 = vmul.f32 %v11855, 1.442695
        %v11947 = vpow.pop %v11946
        %v11948 = vmul.f32 %v11856, 1.442695
        %v11949 = vpow.pop %v11948
        %v11950 = vmul.f32 %v11857, 1.442695
        %v11951 = vpow.pop %v11950
        %v11952 = vmul.f32 %v11858, 1.442695
        %v11953 = vpow.pop %v11952
        %v11954 = vmul.f32 %v11859, 1.442695
        %v11955 = vpow.pop %v11954
        %v11956 = vmul.f32 %v11860, 1.442695
        %v11957 = vpow.pop %v11956
        %v11958 = vmul.f32 %v11861, 1.442695
        %v11959 = vpow.pop %v11958
        %v11960 = vmul.f32 %v11862, 1.442695
        %v11961 = vpow.pop %v11960
        %v11962 = vmul.f32 %v11863, 1.442695
        %v11963 = vpow.pop %v11962
        %v11964 = vmul.f32 %v11864, 1.442695
        %v11965 = vpow.pop %v11964
        %v11966 = vmul.f32 %v11865, 1.442695
        %v11967 = vpow.pop %v11966
        %v11968 = vmul.f32 %v11866, 1.442695
        %v11969 = vpow.pop %v11968
        %v11970 = vmul.f32 %v11867, 1.442695
        %v11971 = vpow.pop %v11970
        %v11972 = vmul.f32 %v11868, 1.442695
        %v11973 = vpow.pop %v11972
        %v11974 = vmul.f32 %v11869, 1.442695
        %v11975 = vpow.pop %v11974
        %v11976 = vmul.f32 %v11870, 1.442695
        %v11977 = vpow.pop %v11976
        %v11978 = vmul.f32 %v11871, 1.442695
        %v11979 = vpow.pop %v11978
        %v11980 = vmul.f32 %v11872, 1.442695
        %v11981 = vpow.pop %v11980
        %v11982 = vmul.f32 %v11873, 1.442695
        %v11983 = vpow.pop %v11982
        %v11984 = vmul.f32 %v11874, 1.442695
        %v11985 = vpow.pop %v11984
        %v11986 = vmul.f32 %v11875, 1.442695
        %v11987 = vpow.pop %v11986
        %v11988 = vmul.f32 %v11876, 1.442695
        %v11989 = vpow.pop %v11988
        %v11990 = vmul.f32 %v11877, 1.442695
        %v11991 = vpow.pop %v11990
        %v11992 = vmul.f32 %v11878, 1.442695
        %v11993 = vpow.pop %v11992
        %v11994 = vmul.f32 %v11879, 1.442695
        %v11995 = vpow.pop %v11994
        %v11996 = vmul.f32 %v11880, 1.442695
        %v11997 = vpow.pop %v11996
        %v11998 = vmul.f32 %v11881, 1.442695
        %v11999 = vpow.pop %v11998
        %v12000 = vmul.f32 %v11882, 1.442695
        %v12001 = vpow.pop %v12000
        %v12002 = vmul.f32 %v11883, 1.442695
        %v12003 = vpow.pop %v12002
        %v12004 = vmul.f32 %v11884, 1.442695
        %v12005 = vpow.pop %v12004
        %v12006 = vmul.f32 %v11885, 1.442695
        %v12007 = vpow.pop %v12006
        %v12008 = vmul.f32 %v11886, 1.442695
        %v12009 = vpow.pop %v12008
        %v12010 = vmul.f32 %v11887, 1.442695
        %v12011 = vpow.pop %v12010
        %v12012 = vmul.f32 %v11888, 1.442695
        %v12013 = vpow.pop %v12012
        %v12014 = vmul.f32 %v11889, 1.442695
        %v12015 = vpow.pop %v12014
        %v12016 = vmul.f32 %v11890, 1.442695
        %v12017 = vpow.pop %v12016
        %v12018 = vmul.f32 %v11891, 1.442695
        %v12019 = vpow.pop %v12018
        %v12020 = vadd.f32 %v11893, %v11895
        %12021 = vadd.xlane.f32.xlu0 %v12020
        %v12022 = vpop.xlane.xlu0 %12021
        %v12023 = vadd.f32 %v11897, %v11899
        %12024 = vadd.xlane.f32.xlu0 %v12023
        %v12025 = vpop.xlane.xlu0 %12024
        %v12026 = vadd.f32 %v11901, %v11903
        %12027 = vadd.xlane.f32.xlu0 %v12026
        %v12028 = vpop.xlane.xlu0 %12027
        %v12029 = vadd.f32 %v11905, %v11907
        %12030 = vadd.xlane.f32.xlu0 %v12029
        %v12031 = vpop.xlane.xlu0 %12030
        %v12032 = vadd.f32 %v11909, %v11911
        %12033 = vadd.xlane.f32.xlu0 %v12032
        %v12034 = vpop.xlane.xlu0 %12033
        %v12035 = vadd.f32 %v11913, %v11915
        %12036 = vadd.xlane.f32.xlu0 %v12035
        %v12037 = vpop.xlane.xlu0 %12036
        %v12038 = vadd.f32 %v11917, %v11919
        %12039 = vadd.xlane.f32.xlu0 %v12038
        %v12040 = vpop.xlane.xlu0 %12039
        %v12041 = vadd.f32 %v11921, %v11923
        %12042 = vadd.xlane.f32.xlu0 %v12041
        %v12043 = vpop.xlane.xlu0 %12042
        %v12044 = vadd.f32 %v11925, %v11927
        %12045 = vadd.xlane.f32.xlu0 %v12044
        %v12046 = vpop.xlane.xlu0 %12045
        %v12047 = vadd.f32 %v11929, %v11931
        %12048 = vadd.xlane.f32.xlu0 %v12047
        %v12049 = vpop.xlane.xlu0 %12048
        %v12050 = vadd.f32 %v11933, %v11935
        %12051 = vadd.xlane.f32.xlu0 %v12050
        %v12052 = vpop.xlane.xlu0 %12051
        %v12053 = vadd.f32 %v11937, %v11939
        %12054 = vadd.xlane.f32.xlu0 %v12053
        %v12055 = vpop.xlane.xlu0 %12054
        %v12056 = vadd.f32 %v11941, %v11943
        %12057 = vadd.xlane.f32.xlu0 %v12056
        %v12058 = vpop.xlane.xlu0 %12057
        %v12059 = vadd.f32 %v11945, %v11947
        %12060 = vadd.xlane.f32.xlu0 %v12059
        %v12061 = vpop.xlane.xlu0 %12060
        %v12062 = vadd.f32 %v11949, %v11951
        %12063 = vadd.xlane.f32.xlu0 %v12062
        %v12064 = vpop.xlane.xlu0 %12063
        %v12065 = vadd.f32 %v11953, %v11955
        %12066 = vadd.xlane.f32.xlu0 %v12065
        %v12067 = vpop.xlane.xlu0 %12066
        %v12068 = vadd.f32 %v11957, %v11959
        %12069 = vadd.xlane.f32.xlu0 %v12068
        %v12070 = vpop.xlane.xlu0 %12069
        %v12071 = vadd.f32 %v11961, %v11963
        %12072 = vadd.xlane.f32.xlu0 %v12071
        %v12073 = vpop.xlane.xlu0 %12072
        %v12074 = vadd.f32 %v11965, %v11967
        %12075 = vadd.xlane.f32.xlu0 %v12074
        %v12076 = vpop.xlane.xlu0 %12075
        %v12077 = vadd.f32 %v11969, %v11971
        %12078 = vadd.xlane.f32.xlu0 %v12077
        %v12079 = vpop.xlane.xlu0 %12078
        %v12080 = vadd.f32 %v11973, %v11975
        %12081 = vadd.xlane.f32.xlu0 %v12080
        %v12082 = vpop.xlane.xlu0 %12081
        %v12083 = vadd.f32 %v11977, %v11979
        %12084 = vadd.xlane.f32.xlu0 %v12083
        %v12085 = vpop.xlane.xlu0 %12084
        %v12086 = vadd.f32 %v11981, %v11983
        %12087 = vadd.xlane.f32.xlu0 %v12086
        %v12088 = vpop.xlane.xlu0 %12087
        %v12089 = vadd.f32 %v11985, %v11987
        %12090 = vadd.xlane.f32.xlu0 %v12089
        %v12091 = vpop.xlane.xlu0 %12090
        %v12092 = vadd.f32 %v11989, %v11991
        %12093 = vadd.xlane.f32.xlu0 %v12092
        %v12094 = vpop.xlane.xlu0 %12093
        %v12095 = vadd.f32 %v11993, %v11995
        %12096 = vadd.xlane.f32.xlu0 %v12095
        %v12097 = vpop.xlane.xlu0 %12096
        %v12098 = vadd.f32 %v11997, %v11999
        %12099 = vadd.xlane.f32.xlu0 %v12098
        %v12100 = vpop.xlane.xlu0 %12099
        %v12101 = vadd.f32 %v12001, %v12003
        %12102 = vadd.xlane.f32.xlu0 %v12101
        %v12103 = vpop.xlane.xlu0 %12102
        %v12104 = vadd.f32 %v12005, %v12007
        %12105 = vadd.xlane.f32.xlu0 %v12104
        %v12106 = vpop.xlane.xlu0 %12105
        %v12107 = vadd.f32 %v12009, %v12011
        %12108 = vadd.xlane.f32.xlu0 %v12107
        %v12109 = vpop.xlane.xlu0 %12108
        %v12110 = vadd.f32 %v12013, %v12015
        %12111 = vadd.xlane.f32.xlu0 %v12110
        %v12112 = vpop.xlane.xlu0 %12111
        %v12113 = vadd.f32 %v12017, %v12019
        %12114 = vadd.xlane.f32.xlu0 %v12113
        %v12115 = vpop.xlane.xlu0 %12114
        %v12116 = vrcp.pop %v12022
        %v12117 = vrcp.pop %v12025
        %v12118 = vrcp.pop %v12028
        %v12119 = vrcp.pop %v12031
        %v12120 = vrcp.pop %v12034
        %v12121 = vrcp.pop %v12037
        %v12122 = vrcp.pop %v12040
        %v12123 = vrcp.pop %v12043
        %v12124 = vrcp.pop %v12046
        %v12125 = vrcp.pop %v12049
        %v12126 = vrcp.pop %v12052
        %v12127 = vrcp.pop %v12055
        %v12128 = vrcp.pop %v12058
        %v12129 = vrcp.pop %v12061
        %v12130 = vrcp.pop %v12064
        %v12131 = vrcp.pop %v12067
        %v12132 = vrcp.pop %v12070
        %v12133 = vrcp.pop %v12073
        %v12134 = vrcp.pop %v12076
        %v12135 = vrcp.pop %v12079
        %v12136 = vrcp.pop %v12082
        %v12137 = vrcp.pop %v12085
        %v12138 = vrcp.pop %v12088
        %v12139 = vrcp.pop %v12091
        %v12140 = vrcp.pop %v12094
        %v12141 = vrcp.pop %v12097
        %v12142 = vrcp.pop %v12100
        %v12143 = vrcp.pop %v12103
        %v12144 = vrcp.pop %v12106
        %v12145 = vrcp.pop %v12109
        %v12146 = vrcp.pop %v12112
        %v12147 = vrcp.pop %v12115
        %v12148 = vmul.f32 %v11893, %v12116
        %v12149 = vmul.f32 %v11895, %v12116
        %v12150 = vmul.f32 %v11897, %v12117
        %v12151 = vmul.f32 %v11899, %v12117
        %v12152 = vmul.f32 %v11901, %v12118
        %v12153 = vmul.f32 %v11903, %v12118
        %v12154 = vmul.f32 %v11905, %v12119
        %v12155 = vmul.f32 %v11907, %v12119
        %v12156 = vmul.f32 %v11909, %v12120
        %v12157 = vmul.f32 %v11911, %v12120
        %v12158 = vmul.f32 %v11913, %v12121
        %v12159 = vmul.f32 %v11915, %v12121
        %v12160 = vmul.f32 %v11917, %v12122
        %v12161 = vmul.f32 %v11919, %v12122
        %v12162 = vmul.f32 %v11921, %v12123
        %v12163 = vmul.f32 %v11923, %v12123
        %v12164 = vmul.f32 %v11925, %v12124
        %v12165 = vmul.f32 %v11927, %v12124
        %v12166 = vmul.f32 %v11929, %v12125
        %v12167 = vmul.f32 %v11931, %v12125
        %v12168 = vmul.f32 %v11933, %v12126
        %v12169 = vmul.f32 %v11935, %v12126
        %v12170 = vmul.f32 %v11937, %v12127
        %v12171 = vmul.f32 %v11939, %v12127
        %v12172 = vmul.f32 %v11941, %v12128
        %v12173 = vmul.f32 %v11943, %v12128
        %v12174 = vmul.f32 %v11945, %v12129
        %v12175 = vmul.f32 %v11947, %v12129
        %v12176 = vmul.f32 %v11949, %v12130
        %v12177 = vmul.f32 %v11951, %v12130
        %v12178 = vmul.f32 %v11953, %v12131
        %v12179 = vmul.f32 %v11955, %v12131
        %v12180 = vmul.f32 %v11957, %v12132
        %v12181 = vmul.f32 %v11959, %v12132
        %v12182 = vmul.f32 %v11961, %v12133
        %v12183 = vmul.f32 %v11963, %v12133
        %v12184 = vmul.f32 %v11965, %v12134
        %v12185 = vmul.f32 %v11967, %v12134
        %v12186 = vmul.f32 %v11969, %v12135
        %v12187 = vmul.f32 %v11971, %v12135
        %v12188 = vmul.f32 %v11973, %v12136
        %v12189 = vmul.f32 %v11975, %v12136
        %v12190 = vmul.f32 %v11977, %v12137
        %v12191 = vmul.f32 %v11979, %v12137
        %v12192 = vmul.f32 %v11981, %v12138
        %v12193 = vmul.f32 %v11983, %v12138
        %v12194 = vmul.f32 %v11985, %v12139
        %v12195 = vmul.f32 %v11987, %v12139
        %v12196 = vmul.f32 %v11989, %v12140
        %v12197 = vmul.f32 %v11991, %v12140
        %v12198 = vmul.f32 %v11993, %v12141
        %v12199 = vmul.f32 %v11995, %v12141
        %v12200 = vmul.f32 %v11997, %v12142
        %v12201 = vmul.f32 %v11999, %v12142
        %v12202 = vmul.f32 %v12001, %v12143
        %v12203 = vmul.f32 %v12003, %v12143
        %v12204 = vmul.f32 %v12005, %v12144
        %v12205 = vmul.f32 %v12007, %v12144
        %v12206 = vmul.f32 %v12009, %v12145
        %v12207 = vmul.f32 %v12011, %v12145
        %v12208 = vmul.f32 %v12013, %v12146
        %v12209 = vmul.f32 %v12015, %v12146
        %v12210 = vmul.f32 %v12017, %v12147
        %v12211 = vmul.f32 %v12019, %v12147
        %v12212 = vpack.c.bf16 %v12150, %v12148
        %v12213 = vpack.c.bf16 %v12151, %v12149
        %v12214 = vpack.c.bf16 %v12154, %v12152
        %v12215 = vpack.c.bf16 %v12155, %v12153
        %v12216 = vpack.c.bf16 %v12158, %v12156
        %v12217 = vpack.c.bf16 %v12159, %v12157
        %v12218 = vpack.c.bf16 %v12162, %v12160
        %v12219 = vpack.c.bf16 %v12163, %v12161
        %v12220 = vpack.c.bf16 %v12166, %v12164
        %v12221 = vpack.c.bf16 %v12167, %v12165
        %v12222 = vpack.c.bf16 %v12170, %v12168
        %v12223 = vpack.c.bf16 %v12171, %v12169
        %v12224 = vpack.c.bf16 %v12174, %v12172
        %v12225 = vpack.c.bf16 %v12175, %v12173
        %v12226 = vpack.c.bf16 %v12178, %v12176
        %v12227 = vpack.c.bf16 %v12179, %v12177
        %v12228 = vpack.c.bf16 %v12182, %v12180
        %v12229 = vpack.c.bf16 %v12183, %v12181
        %v12230 = vpack.c.bf16 %v12186, %v12184
        %v12231 = vpack.c.bf16 %v12187, %v12185
        %v12232 = vpack.c.bf16 %v12190, %v12188
        %v12233 = vpack.c.bf16 %v12191, %v12189
        %v12234 = vpack.c.bf16 %v12194, %v12192
        %v12235 = vpack.c.bf16 %v12195, %v12193
        %v12236 = vpack.c.bf16 %v12198, %v12196
        %v12237 = vpack.c.bf16 %v12199, %v12197
        %v12238 = vpack.c.bf16 %v12202, %v12200
        %v12239 = vpack.c.bf16 %v12203, %v12201
        %v12240 = vpack.c.bf16 %v12206, %v12204
        %v12241 = vpack.c.bf16 %v12207, %v12205
        %v12242 = vpack.c.bf16 %v12210, %v12208
        %v12243 = vpack.c.bf16 %v12211, %v12209
        %v12244 = vpack.c.bf16 %v10885, %v10884
        %v12245 = vpack.c.bf16 %v10887, %v10886
        %v12246 = vpack.c.bf16 %v10889, %v10888
        %v12247 = vpack.c.bf16 %v10891, %v10890
        %v12248 = vpack.c.bf16 %v10893, %v10892
        %v12249 = vpack.c.bf16 %v10895, %v10894
        %v12250 = vpack.c.bf16 %v10897, %v10896
        %v12251 = vpack.c.bf16 %v10899, %v10898
        %v12252 = vpack.c.bf16 %v10901, %v10900
        %v12253 = vpack.c.bf16 %v10903, %v10902
        %v12254 = vpack.c.bf16 %v10905, %v10904
        %v12255 = vpack.c.bf16 %v10907, %v10906
        %v12256 = vpack.c.bf16 %v10909, %v10908
        %v12257 = vpack.c.bf16 %v10911, %v10910
        %v12258 = vpack.c.bf16 %v10913, %v10912
        %v12259 = vpack.c.bf16 %v10915, %v10914
        %12276 = vrot.lane.b32.xlu0 %v12244, 92
        %v12277 = vpop.permute.xlu0 %12276
        %12278 = vrot.lane.b32.xlu0 %v12245, 92
        %v12279 = vpop.permute.xlu0 %12278
        %12280 = vrot.lane.b32.xlu0 %v12246, 92
        %v12281 = vpop.permute.xlu0 %12280
        %12282 = vrot.lane.b32.xlu0 %v12247, 92
        %v12283 = vpop.permute.xlu0 %12282
        %12284 = vrot.lane.b32.xlu0 %v12248, 92
        %v12285 = vpop.permute.xlu0 %12284
        %12286 = vrot.lane.b32.xlu0 %v12249, 92
        %v12287 = vpop.permute.xlu0 %12286
        %12288 = vrot.lane.b32.xlu0 %v12250, 92
        %v12289 = vpop.permute.xlu0 %12288
        %12290 = vrot.lane.b32.xlu0 %v12251, 92
        %v12291 = vpop.permute.xlu0 %12290
        %12292 = vrot.lane.b32.xlu0 %v12252, 92
        %v12293 = vpop.permute.xlu0 %12292
        %12294 = vrot.lane.b32.xlu0 %v12253, 92
        %v12295 = vpop.permute.xlu0 %12294
        %12296 = vrot.lane.b32.xlu0 %v12254, 92
        %v12297 = vpop.permute.xlu0 %12296
        %12298 = vrot.lane.b32.xlu0 %v12255, 92
        %v12299 = vpop.permute.xlu0 %12298
        %12300 = vrot.lane.b32.xlu0 %v12256, 92
        %v12301 = vpop.permute.xlu0 %12300
        %12302 = vrot.lane.b32.xlu0 %v12257, 92
        %v12303 = vpop.permute.xlu0 %12302
        %12304 = vrot.lane.b32.xlu0 %v12258, 92
        %v12305 = vpop.permute.xlu0 %12304
        %12306 = vrot.lane.b32.xlu0 %v12259, 92
        %v12307 = vpop.permute.xlu0 %12306
        %12324 = vmatprep.subr.bf16.mxu0 0
        %12325 = vmatpush1.bf16.msra.mxu0 %v12291
        %12326 = vmatprep.subr.bf16.mxu0 0
        %12327 = vmatpush1.bf16.msra.mxu0 %v12289
        %12328 = vmatprep.subr.bf16.mxu0 0
        %12329 = vmatpush1.bf16.msra.mxu0 %v12287
        %12330 = vmatprep.subr.bf16.mxu0 0
        %12331 = vmatpush1.bf16.msra.mxu0 %v12285
        %12332 = vmatprep.subr.bf16.mxu0 0
        %12333 = vmatpush1.bf16.msra.mxu0 %v12283
        %12334 = vmatprep.subr.bf16.mxu0 0
        %12335 = vmatpush1.bf16.msra.mxu0 %v12281
        %12336 = vmatprep.subr.bf16.mxu0 0
        %12337 = vmatpush1.bf16.msra.mxu0 %v12279
        %12338 = vmatprep.subr.bf16.mxu0 0
        %12339 = vmatpush1.bf16.msra.mxu0 %v12277
        %12340 = vmatprep.subr.bf16.mxu0 0
        %12341 = vmatpush2.bf16.msra.mxu0 %v12307
        %12342 = vmatprep.subr.bf16.mxu0 0
        %12343 = vmatpush2.bf16.msra.mxu0 %v12305
        %12344 = vmatprep.subr.bf16.mxu0 0
        %12345 = vmatpush2.bf16.msra.mxu0 %v12303
        %12346 = vmatprep.subr.bf16.mxu0 0
        %12347 = vmatpush2.bf16.msra.mxu0 %v12301
        %12348 = vmatprep.subr.bf16.mxu0 0
        %12349 = vmatpush2.bf16.msra.mxu0 %v12299
        %12350 = vmatprep.subr.bf16.mxu0 0
        %12351 = vmatpush2.bf16.msra.mxu0 %v12297
        %12352 = vmatprep.subr.bf16.mxu0 0
        %12353 = vmatpush2.bf16.msra.mxu0 %v12295
        %12354 = vmatprep.subr.bf16.mxu0 0
        %12355 = vmatpush2.bf16.msra.mxu0 %v12293
        %12356 = vmatprep.mubr.bf16.mxu0 %v12213
        %12357 = vmatmul.mubr.bf16.gmra.mxu0 %v12212
        %v12358 = vpop.f32.mrf.mxu0
        %v12359 = vadd.f32 0.0, %v12358
        %v12360 = vpop.f32.mrf.mxu0
        %v12361 = vpop.f32.mrf.mxu0
        %v12362 = vadd.f32 0.0, %v12361
        %v12363 = vpop.f32.mrf.mxu0
        %12364 = vmatprep.mubr.bf16.mxu0 %v12215
        %12365 = vmatmul.mubr.bf16.gmra.mxu0 %v12214
        %v12366 = vpop.f32.mrf.mxu0
        %v12367 = vadd.f32 0.0, %v12366
        %v12368 = vpop.f32.mrf.mxu0
        %v12369 = vpop.f32.mrf.mxu0
        %v12370 = vadd.f32 0.0, %v12369
        %v12371 = vpop.f32.mrf.mxu0
        %12372 = vmatprep.mubr.bf16.mxu0 %v12217
        %12373 = vmatmul.mubr.bf16.gmra.mxu0 %v12216
        %v12374 = vpop.f32.mrf.mxu0
        %v12375 = vadd.f32 0.0, %v12374
        %v12376 = vpop.f32.mrf.mxu0
        %v12377 = vpop.f32.mrf.mxu0
        %v12378 = vadd.f32 0.0, %v12377
        %v12379 = vpop.f32.mrf.mxu0
        %12380 = vmatprep.mubr.bf16.mxu0 %v12219
        %12381 = vmatmul.mubr.bf16.gmra.mxu0 %v12218
        %v12382 = vpop.f32.mrf.mxu0
        %v12383 = vadd.f32 0.0, %v12382
        %v12384 = vpop.f32.mrf.mxu0
        %v12385 = vpop.f32.mrf.mxu0
        %v12386 = vadd.f32 0.0, %v12385
        %v12387 = vpop.f32.mrf.mxu0
        %12388 = vmatprep.mubr.bf16.mxu0 %v12221
        %12389 = vmatmul.mubr.bf16.gmra.mxu0 %v12220
        %v12390 = vpop.f32.mrf.mxu0
        %v12391 = vadd.f32 0.0, %v12390
        %v12392 = vpop.f32.mrf.mxu0
        %v12393 = vpop.f32.mrf.mxu0
        %v12394 = vadd.f32 0.0, %v12393
        %v12395 = vpop.f32.mrf.mxu0
        %12396 = vmatprep.mubr.bf16.mxu0 %v12223
        %12397 = vmatmul.mubr.bf16.gmra.mxu0 %v12222
        %v12398 = vpop.f32.mrf.mxu0
        %v12399 = vadd.f32 0.0, %v12398
        %v12400 = vpop.f32.mrf.mxu0
        %v12401 = vpop.f32.mrf.mxu0
        %v12402 = vadd.f32 0.0, %v12401
        %v12403 = vpop.f32.mrf.mxu0
        %12404 = vmatprep.mubr.bf16.mxu0 %v12225
        %12405 = vmatmul.mubr.bf16.gmra.mxu0 %v12224
        %v12406 = vpop.f32.mrf.mxu0
        %v12407 = vadd.f32 0.0, %v12406
        %v12408 = vpop.f32.mrf.mxu0
        %v12409 = vpop.f32.mrf.mxu0
        %v12410 = vadd.f32 0.0, %v12409
        %v12411 = vpop.f32.mrf.mxu0
        %12412 = vmatprep.mubr.bf16.mxu0 %v12227
        %12413 = vmatmul.mubr.bf16.gmra.mxu0 %v12226
        %v12414 = vpop.f32.mrf.mxu0
        %v12415 = vadd.f32 0.0, %v12414
        %v12416 = vpop.f32.mrf.mxu0
        %v12417 = vpop.f32.mrf.mxu0
        %v12418 = vadd.f32 0.0, %v12417
        %v12419 = vpop.f32.mrf.mxu0
        %12420 = vmatprep.mubr.bf16.mxu0 %v12229
        %12421 = vmatmul.mubr.bf16.gmra.mxu0 %v12228
        %v12422 = vpop.f32.mrf.mxu0
        %v12423 = vadd.f32 0.0, %v12422
        %v12424 = vpop.f32.mrf.mxu0
        %v12425 = vpop.f32.mrf.mxu0
        %v12426 = vadd.f32 0.0, %v12425
        %v12427 = vpop.f32.mrf.mxu0
        %12428 = vmatprep.mubr.bf16.mxu0 %v12231
        %12429 = vmatmul.mubr.bf16.gmra.mxu0 %v12230
        %v12430 = vpop.f32.mrf.mxu0
        %v12431 = vadd.f32 0.0, %v12430
        %v12432 = vpop.f32.mrf.mxu0
        %v12433 = vpop.f32.mrf.mxu0
        %v12434 = vadd.f32 0.0, %v12433
        %v12435 = vpop.f32.mrf.mxu0
        %12436 = vmatprep.mubr.bf16.mxu0 %v12233
        %12437 = vmatmul.mubr.bf16.gmra.mxu0 %v12232
        %v12438 = vpop.f32.mrf.mxu0
        %v12439 = vadd.f32 0.0, %v12438
        %v12440 = vpop.f32.mrf.mxu0
        %v12441 = vpop.f32.mrf.mxu0
        %v12442 = vadd.f32 0.0, %v12441
        %v12443 = vpop.f32.mrf.mxu0
        %12444 = vmatprep.mubr.bf16.mxu0 %v12235
        %12445 = vmatmul.mubr.bf16.gmra.mxu0 %v12234
        %v12446 = vpop.f32.mrf.mxu0
        %v12447 = vadd.f32 0.0, %v12446
        %v12448 = vpop.f32.mrf.mxu0
        %v12449 = vpop.f32.mrf.mxu0
        %v12450 = vadd.f32 0.0, %v12449
        %v12451 = vpop.f32.mrf.mxu0
        %12452 = vmatprep.mubr.bf16.mxu0 %v12237
        %12453 = vmatmul.mubr.bf16.gmra.mxu0 %v12236
        %v12454 = vpop.f32.mrf.mxu0
        %v12455 = vadd.f32 0.0, %v12454
        %v12456 = vpop.f32.mrf.mxu0
        %v12457 = vpop.f32.mrf.mxu0
        %v12458 = vadd.f32 0.0, %v12457
        %v12459 = vpop.f32.mrf.mxu0
        %12460 = vmatprep.mubr.bf16.mxu0 %v12239
        %12461 = vmatmul.mubr.bf16.gmra.mxu0 %v12238
        %v12462 = vpop.f32.mrf.mxu0
        %v12463 = vadd.f32 0.0, %v12462
        %v12464 = vpop.f32.mrf.mxu0
        %v12465 = vpop.f32.mrf.mxu0
        %v12466 = vadd.f32 0.0, %v12465
        %v12467 = vpop.f32.mrf.mxu0
        %12468 = vmatprep.mubr.bf16.mxu0 %v12241
        %12469 = vmatmul.mubr.bf16.gmra.mxu0 %v12240
        %v12470 = vpop.f32.mrf.mxu0
        %v12471 = vadd.f32 0.0, %v12470
        %v12472 = vpop.f32.mrf.mxu0
        %v12473 = vpop.f32.mrf.mxu0
        %v12474 = vadd.f32 0.0, %v12473
        %v12475 = vpop.f32.mrf.mxu0
        %12476 = vmatprep.mubr.bf16.mxu0 %v12243
        %12477 = vmatmul.mubr.bf16.gmra.mxu0 %v12242
        %v12478 = vpop.f32.mrf.mxu0
        %v12479 = vadd.f32 0.0, %v12478
        %v12480 = vpop.f32.mrf.mxu0
        %v12481 = vpop.f32.mrf.mxu0
        %v12482 = vadd.f32 0.0, %v12481
        %v12483 = vpop.f32.mrf.mxu0
        %12484 = vdwg.mxu0
        %v12485 = vpack.c.bf16 %v12362, %v12359
        %v12486 = vpack.c.bf16 %v12370, %v12367
        %v12487 = vpack.c.bf16 %v12378, %v12375
        %v12488 = vpack.c.bf16 %v12386, %v12383
        %v12489 = vpack.c.bf16 %v12394, %v12391
        %v12490 = vpack.c.bf16 %v12402, %v12399
        %v12491 = vpack.c.bf16 %v12410, %v12407
        %v12492 = vpack.c.bf16 %v12418, %v12415
        %v12493 = vpack.c.bf16 %v12426, %v12423
        %v12494 = vpack.c.bf16 %v12434, %v12431
        %v12495 = vpack.c.bf16 %v12442, %v12439
        %v12496 = vpack.c.bf16 %v12450, %v12447
        %v12497 = vpack.c.bf16 %v12458, %v12455
        %v12498 = vpack.c.bf16 %v12466, %v12463
        %v12499 = vpack.c.bf16 %v12474, %v12471
        %v12500 = vpack.c.bf16 %v12482, %v12479
        %v12501 = vld [vmem:[%s5] sm:$0xf]
        %v12502 = vld [vmem:[%s5 + $0x4] sm:$0xf]
        %v12503 = vld [vmem:[%s5 + $0x8] sm:$0xf]
        %v12504 = vld [vmem:[%s5 + $0xc] sm:$0xf]
        %v12505 = vld [vmem:[%s6] sm:$0x1]
        %v12507 = vlaneseq
        %v12508 = vshrl.u32 %v12507, 7
        %v12509 = vsub.s32 0, %v12508
        %v12510 = vrot.slane %v12505, %v12509
        %v12516 = vunpack.c.l.b16 %v12501
        %v12517 = vunpack.c.l.b16 %v12502
        %v12518 = vunpack.c.l.b16 %v12503
        %v12519 = vunpack.c.l.b16 %v12504
        %v12520 = vpack.c.b16 %v12517, %v12516
        %v12521 = vpack.c.b16 %v12519, %v12518
        %v12525 = vsel %vm1476, %v12485, 0
        %v12528 = vsel %vm1476, %v12486, 0
        %v12531 = vsel %vm1476, %v12487, 0
        %v12534 = vsel %vm1476, %v12488, 0
        %v12537 = vsel %vm1476, %v12489, 0
        %v12540 = vsel %vm1476, %v12490, 0
        %v12543 = vsel %vm1476, %v12491, 0
        %v12546 = vsel %vm1476, %v12492, 0
        %v12549 = vsel %vm1476, %v12493, 0
        %v12552 = vsel %vm1476, %v12494, 0
        %v12555 = vsel %vm1476, %v12495, 0
        %v12558 = vsel %vm1476, %v12496, 0
        %v12561 = vsel %vm1476, %v12497, 0
        %v12564 = vsel %vm1476, %v12498, 0
        %v12567 = vsel %vm1476, %v12499, 0
        %v12570 = vsel %vm1476, %v12500, 0
        %12572 = vmatprep.subr.bf16.mxu0 0
        %12573 = vmatpush1.bf16.msra.mxu0 0
        %12574 = vmatprep.subr.bf16.mxu0 0
        %12575 = vmatpush1.bf16.msra.mxu0 0
        %12576 = vmatprep.subr.bf16.mxu0 0
        %12577 = vmatpush1.bf16.msra.mxu0 0
        %12578 = vmatprep.subr.bf16.mxu0 0
        %12579 = vmatpush1.bf16.msra.mxu0 0
        %12580 = vmatprep.subr.bf16.mxu0 0
        %12581 = vmatpush1.bf16.msra.mxu0 0
        %12582 = vmatprep.subr.bf16.mxu0 0
        %12583 = vmatpush1.bf16.msra.mxu0 0
        %12584 = vmatprep.subr.bf16.mxu0 0
        %12585 = vmatpush1.bf16.msra.mxu0 %v12521
        %12586 = vmatprep.subr.bf16.mxu0 0
        %12587 = vmatpush1.bf16.msra.mxu0 %v12520
        %12588 = vmatprep.subr.bf16.mxu0 0
        %12589 = vmatpush2.bf16.msra.mxu0 0
        %12590 = vmatprep.subr.bf16.mxu0 0
        %12591 = vmatpush2.bf16.msra.mxu0 0
        %12592 = vmatprep.subr.bf16.mxu0 0
        %12593 = vmatpush2.bf16.msra.mxu0 0
        %12594 = vmatprep.subr.bf16.mxu0 0
        %12595 = vmatpush2.bf16.msra.mxu0 0
        %12596 = vmatprep.subr.bf16.mxu0 0
        %12597 = vmatpush2.bf16.msra.mxu0 0
        %12598 = vmatprep.subr.bf16.mxu0 0
        %12599 = vmatpush2.bf16.msra.mxu0 0
        %12600 = vmatprep.subr.bf16.mxu0 0
        %12601 = vmatpush2.bf16.msra.mxu0 0
        %12602 = vmatprep.subr.bf16.mxu0 0
        %12603 = vmatpush2.bf16.msra.mxu0 0
        %12604 = vmatprep.mubr.bf16.mxu0 0
        %12605 = vmatmul.mubr.bf16.gmra.mxu0 %v12525
        %v12606 = vpop.f32.mrf.mxu0
        %v12607 = vadd.f32 %v12510, %v12606
        %v12608 = vpop.f32.mrf.mxu0
        %v12609 = vpop.f32.mrf.mxu0
        %v12610 = vadd.f32 %v12510, %v12609
        %v12611 = vpop.f32.mrf.mxu0
        %12612 = vmatprep.mubr.bf16.mxu0 0
        %12613 = vmatmul.mubr.bf16.gmra.mxu0 %v12528
        %v12614 = vpop.f32.mrf.mxu0
        %v12615 = vadd.f32 %v12510, %v12614
        %v12616 = vpop.f32.mrf.mxu0
        %v12617 = vpop.f32.mrf.mxu0
        %v12618 = vadd.f32 %v12510, %v12617
        %v12619 = vpop.f32.mrf.mxu0
        %12620 = vmatprep.mubr.bf16.mxu0 0
        %12621 = vmatmul.mubr.bf16.gmra.mxu0 %v12531
        %v12622 = vpop.f32.mrf.mxu0
        %v12623 = vadd.f32 %v12510, %v12622
        %v12624 = vpop.f32.mrf.mxu0
        %v12625 = vpop.f32.mrf.mxu0
        %v12626 = vadd.f32 %v12510, %v12625
        %v12627 = vpop.f32.mrf.mxu0
        %12628 = vmatprep.mubr.bf16.mxu0 0
        %12629 = vmatmul.mubr.bf16.gmra.mxu0 %v12534
        %v12630 = vpop.f32.mrf.mxu0
        %v12631 = vadd.f32 %v12510, %v12630
        %v12632 = vpop.f32.mrf.mxu0
        %v12633 = vpop.f32.mrf.mxu0
        %v12634 = vadd.f32 %v12510, %v12633
        %v12635 = vpop.f32.mrf.mxu0
        %12636 = vmatprep.mubr.bf16.mxu0 0
        %12637 = vmatmul.mubr.bf16.gmra.mxu0 %v12537
        %v12638 = vpop.f32.mrf.mxu0
        %v12639 = vadd.f32 %v12510, %v12638
        %v12640 = vpop.f32.mrf.mxu0
        %v12641 = vpop.f32.mrf.mxu0
        %v12642 = vadd.f32 %v12510, %v12641
        %v12643 = vpop.f32.mrf.mxu0
        %12644 = vmatprep.mubr.bf16.mxu0 0
        %12645 = vmatmul.mubr.bf16.gmra.mxu0 %v12540
        %v12646 = vpop.f32.mrf.mxu0
        %v12647 = vadd.f32 %v12510, %v12646
        %v12648 = vpop.f32.mrf.mxu0
        %v12649 = vpop.f32.mrf.mxu0
        %v12650 = vadd.f32 %v12510, %v12649
        %v12651 = vpop.f32.mrf.mxu0
        %12652 = vmatprep.mubr.bf16.mxu0 0
        %12653 = vmatmul.mubr.bf16.gmra.mxu0 %v12543
        %v12654 = vpop.f32.mrf.mxu0
        %v12655 = vadd.f32 %v12510, %v12654
        %v12656 = vpop.f32.mrf.mxu0
        %v12657 = vpop.f32.mrf.mxu0
        %v12658 = vadd.f32 %v12510, %v12657
        %v12659 = vpop.f32.mrf.mxu0
        %12660 = vmatprep.mubr.bf16.mxu0 0
        %12661 = vmatmul.mubr.bf16.gmra.mxu0 %v12546
        %v12662 = vpop.f32.mrf.mxu0
        %v12663 = vadd.f32 %v12510, %v12662
        %v12664 = vpop.f32.mrf.mxu0
        %v12665 = vpop.f32.mrf.mxu0
        %v12666 = vadd.f32 %v12510, %v12665
        %v12667 = vpop.f32.mrf.mxu0
        %12668 = vmatprep.mubr.bf16.mxu0 0
        %12669 = vmatmul.mubr.bf16.gmra.mxu0 %v12549
        %v12670 = vpop.f32.mrf.mxu0
        %v12671 = vadd.f32 %v12510, %v12670
        %v12672 = vpop.f32.mrf.mxu0
        %v12673 = vpop.f32.mrf.mxu0
        %v12674 = vadd.f32 %v12510, %v12673
        %v12675 = vpop.f32.mrf.mxu0
        %12676 = vmatprep.mubr.bf16.mxu0 0
        %12677 = vmatmul.mubr.bf16.gmra.mxu0 %v12552
        %v12678 = vpop.f32.mrf.mxu0
        %v12679 = vadd.f32 %v12510, %v12678
        %v12680 = vpop.f32.mrf.mxu0
        %v12681 = vpop.f32.mrf.mxu0
        %v12682 = vadd.f32 %v12510, %v12681
        %v12683 = vpop.f32.mrf.mxu0
        %12684 = vmatprep.mubr.bf16.mxu0 0
        %12685 = vmatmul.mubr.bf16.gmra.mxu0 %v12555
        %v12686 = vpop.f32.mrf.mxu0
        %v12687 = vadd.f32 %v12510, %v12686
        %v12688 = vpop.f32.mrf.mxu0
        %v12689 = vpop.f32.mrf.mxu0
        %v12690 = vadd.f32 %v12510, %v12689
        %v12691 = vpop.f32.mrf.mxu0
        %12692 = vmatprep.mubr.bf16.mxu0 0
        %12693 = vmatmul.mubr.bf16.gmra.mxu0 %v12558
        %v12694 = vpop.f32.mrf.mxu0
        %v12695 = vadd.f32 %v12510, %v12694
        %v12696 = vpop.f32.mrf.mxu0
        %v12697 = vpop.f32.mrf.mxu0
        %v12698 = vadd.f32 %v12510, %v12697
        %v12699 = vpop.f32.mrf.mxu0
        %12700 = vmatprep.mubr.bf16.mxu0 0
        %12701 = vmatmul.mubr.bf16.gmra.mxu0 %v12561
        %v12702 = vpop.f32.mrf.mxu0
        %v12703 = vadd.f32 %v12510, %v12702
        %v12704 = vpop.f32.mrf.mxu0
        %v12705 = vpop.f32.mrf.mxu0
        %v12706 = vadd.f32 %v12510, %v12705
        %v12707 = vpop.f32.mrf.mxu0
        %12708 = vmatprep.mubr.bf16.mxu0 0
        %12709 = vmatmul.mubr.bf16.gmra.mxu0 %v12564
        %v12710 = vpop.f32.mrf.mxu0
        %v12711 = vadd.f32 %v12510, %v12710
        %v12712 = vpop.f32.mrf.mxu0
        %v12713 = vpop.f32.mrf.mxu0
        %v12714 = vadd.f32 %v12510, %v12713
        %v12715 = vpop.f32.mrf.mxu0
        %12716 = vmatprep.mubr.bf16.mxu0 0
        %12717 = vmatmul.mubr.bf16.gmra.mxu0 %v12567
        %v12718 = vpop.f32.mrf.mxu0
        %v12719 = vadd.f32 %v12510, %v12718
        %v12720 = vpop.f32.mrf.mxu0
        %v12721 = vpop.f32.mrf.mxu0
        %v12722 = vadd.f32 %v12510, %v12721
        %v12723 = vpop.f32.mrf.mxu0
        %12724 = vmatprep.mubr.bf16.mxu0 0
        %12725 = vmatmul.mubr.bf16.gmra.mxu0 %v12570
        %v12726 = vpop.f32.mrf.mxu0
        %v12727 = vadd.f32 %v12510, %v12726
        %v12728 = vpop.f32.mrf.mxu0
        %v12729 = vpop.f32.mrf.mxu0
        %v12730 = vadd.f32 %v12510, %v12729
        %v12731 = vpop.f32.mrf.mxu0
        %12732 = vdwg.mxu0
        %v12733 = vadd.f32 %v12607, %v10884
        %v12734 = vadd.f32 %v12610, %v10885
        %v12735 = vadd.f32 %v12615, %v10886
        %v12736 = vadd.f32 %v12618, %v10887
        %v12737 = vadd.f32 %v12623, %v10888
        %v12738 = vadd.f32 %v12626, %v10889
        %v12739 = vadd.f32 %v12631, %v10890
        %v12740 = vadd.f32 %v12634, %v10891
        %v12741 = vadd.f32 %v12639, %v10892
        %v12742 = vadd.f32 %v12642, %v10893
        %v12743 = vadd.f32 %v12647, %v10894
        %v12744 = vadd.f32 %v12650, %v10895
        %v12745 = vadd.f32 %v12655, %v10896
        %v12746 = vadd.f32 %v12658, %v10897
        %v12747 = vadd.f32 %v12663, %v10898
        %v12748 = vadd.f32 %v12666, %v10899
        %v12749 = vadd.f32 %v12671, %v10900
        %v12750 = vadd.f32 %v12674, %v10901
        %v12751 = vadd.f32 %v12679, %v10902
        %v12752 = vadd.f32 %v12682, %v10903
        %v12753 = vadd.f32 %v12687, %v10904
        %v12754 = vadd.f32 %v12690, %v10905
        %v12755 = vadd.f32 %v12695, %v10906
        %v12756 = vadd.f32 %v12698, %v10907
        %v12757 = vadd.f32 %v12703, %v10908
        %v12758 = vadd.f32 %v12706, %v10909
        %v12759 = vadd.f32 %v12711, %v10910
        %v12760 = vadd.f32 %v12714, %v10911
        %v12761 = vadd.f32 %v12719, %v10912
        %v12762 = vadd.f32 %v12722, %v10913
        %v12763 = vadd.f32 %v12727, %v10914
        %v12764 = vadd.f32 %v12730, %v10915
        %v12765 = vadd.f32 %v12733, %v409
        %v12766 = vadd.f32 %v12734, %v410
        %v12767 = vadd.f32 %v12735, %v411
        %v12768 = vadd.f32 %v12736, %v412
        %v12769 = vadd.f32 %v12737, %v413
        %v12770 = vadd.f32 %v12738, %v414
        %v12771 = vadd.f32 %v12739, %v415
        %v12772 = vadd.f32 %v12740, %v416
        %v12773 = vadd.f32 %v12741, %v417
        %v12774 = vadd.f32 %v12742, %v418
        %v12775 = vadd.f32 %v12743, %v419
        %v12776 = vadd.f32 %v12744, %v420
        %v12777 = vadd.f32 %v12745, %v421
        %v12778 = vadd.f32 %v12746, %v422
        %v12779 = vadd.f32 %v12747, %v423
        %v12780 = vadd.f32 %v12748, %v424
        %v12781 = vadd.f32 %v12749, %v425
        %v12782 = vadd.f32 %v12750, %v426
        %v12783 = vadd.f32 %v12751, %v427
        %v12784 = vadd.f32 %v12752, %v428
        %v12785 = vadd.f32 %v12753, %v429
        %v12786 = vadd.f32 %v12754, %v430
        %v12787 = vadd.f32 %v12755, %v431
        %v12788 = vadd.f32 %v12756, %v432
        %v12789 = vadd.f32 %v12757, %v433
        %v12790 = vadd.f32 %v12758, %v434
        %v12791 = vadd.f32 %v12759, %v435
        %v12792 = vadd.f32 %v12760, %v436
        %v12793 = vadd.f32 %v12761, %v437
        %v12794 = vadd.f32 %v12762, %v438
        %v12795 = vadd.f32 %v12763, %v439
        %v12796 = vadd.f32 %v12764, %v440
        %v12797 = vmax.f32 %v12765, 0.0
        %v12798 = vmax.f32 %v12766, 0.0
        %v12799 = vmax.f32 %v12767, 0.0
        %v12800 = vmax.f32 %v12768, 0.0
        %v12801 = vmax.f32 %v12769, 0.0
        %v12802 = vmax.f32 %v12770, 0.0
        %v12803 = vmax.f32 %v12771, 0.0
        %v12804 = vmax.f32 %v12772, 0.0
        %v12805 = vmax.f32 %v12773, 0.0
        %v12806 = vmax.f32 %v12774, 0.0
        %v12807 = vmax.f32 %v12775, 0.0
        %v12808 = vmax.f32 %v12776, 0.0
        %v12809 = vmax.f32 %v12777, 0.0
        %v12810 = vmax.f32 %v12778, 0.0
        %v12811 = vmax.f32 %v12779, 0.0
        %v12812 = vmax.f32 %v12780, 0.0
        %v12813 = vmax.f32 %v12781, 0.0
        %v12814 = vmax.f32 %v12782, 0.0
        %v12815 = vmax.f32 %v12783, 0.0
        %v12816 = vmax.f32 %v12784, 0.0
        %v12817 = vmax.f32 %v12785, 0.0
        %v12818 = vmax.f32 %v12786, 0.0
        %v12819 = vmax.f32 %v12787, 0.0
        %v12820 = vmax.f32 %v12788, 0.0
        %v12821 = vmax.f32 %v12789, 0.0
        %v12822 = vmax.f32 %v12790, 0.0
        %v12823 = vmax.f32 %v12791, 0.0
        %v12824 = vmax.f32 %v12792, 0.0
        %v12825 = vmax.f32 %v12793, 0.0
        %v12826 = vmax.f32 %v12794, 0.0
        %v12827 = vmax.f32 %v12795, 0.0
        %v12828 = vmax.f32 %v12796, 0.0
        %12829 = vst.msk [vmem:[%s296] sm:$0xff] %vm1476, %v12797
        %12830 = vst.msk [vmem:[%s296 + $0x8] sm:$0xff] %vm1476, %v12798
        %12831 = vst.msk [vmem:[%s296 + $0x10] sm:$0xff] %vm1476, %v12799
        %12832 = vst.msk [vmem:[%s296 + $0x18] sm:$0xff] %vm1476, %v12800
        %12833 = vst.msk [vmem:[%s296 + $0x20] sm:$0xff] %vm1476, %v12801
        %12834 = vst.msk [vmem:[%s296 + $0x28] sm:$0xff] %vm1476, %v12802
        %12835 = vst.msk [vmem:[%s296 + $0x30] sm:$0xff] %vm1476, %v12803
        %12836 = vst.msk [vmem:[%s296 + $0x38] sm:$0xff] %vm1476, %v12804
        %12837 = vst.msk [vmem:[%s296 + $0x40] sm:$0xff] %vm1476, %v12805
        %12838 = vst.msk [vmem:[%s296 + $0x48] sm:$0xff] %vm1476, %v12806
        %12839 = vst.msk [vmem:[%s296 + $0x50] sm:$0xff] %vm1476, %v12807
        %12840 = vst.msk [vmem:[%s296 + $0x58] sm:$0xff] %vm1476, %v12808
        %12841 = vst.msk [vmem:[%s296 + $0x60] sm:$0xff] %vm1476, %v12809
        %12842 = vst.msk [vmem:[%s296 + $0x68] sm:$0xff] %vm1476, %v12810
        %12843 = vst.msk [vmem:[%s296 + $0x70] sm:$0xff] %vm1476, %v12811
        %12844 = vst.msk [vmem:[%s296 + $0x78] sm:$0xff] %vm1476, %v12812
        %12845 = vst.msk [vmem:[%s296 + $0x80] sm:$0xff] %vm1476, %v12813
        %12846 = vst.msk [vmem:[%s296 + $0x88] sm:$0xff] %vm1476, %v12814
        %12847 = vst.msk [vmem:[%s296 + $0x90] sm:$0xff] %vm1476, %v12815
        %12848 = vst.msk [vmem:[%s296 + $0x98] sm:$0xff] %vm1476, %v12816
        %12849 = vst.msk [vmem:[%s296 + $0xa0] sm:$0xff] %vm1476, %v12817
        %12850 = vst.msk [vmem:[%s296 + $0xa8] sm:$0xff] %vm1476, %v12818
        %12851 = vst.msk [vmem:[%s296 + $0xb0] sm:$0xff] %vm1476, %v12819
        %12852 = vst.msk [vmem:[%s296 + $0xb8] sm:$0xff] %vm1476, %v12820
        %12853 = vst.msk [vmem:[%s296 + $0xc0] sm:$0xff] %vm1476, %v12821
        %12854 = vst.msk [vmem:[%s296 + $0xc8] sm:$0xff] %vm1476, %v12822
        %12855 = vst.msk [vmem:[%s296 + $0xd0] sm:$0xff] %vm1476, %v12823
        %12856 = vst.msk [vmem:[%s296 + $0xd8] sm:$0xff] %vm1476, %v12824
        %12857 = vst.msk [vmem:[%s296 + $0xe0] sm:$0xff] %vm1476, %v12825
        %12858 = vst.msk [vmem:[%s296 + $0xe8] sm:$0xff] %vm1476, %v12826
        %12859 = vst.msk [vmem:[%s296 + $0xf0] sm:$0xff] %vm1476, %v12827
        %12860 = vst.msk [vmem:[%s296 + $0xf8] sm:$0xff] %vm1476, %v12828
        %s12861 = sand.u32 %s184, 1
        %s12862 = scalar_lea.sflag [#allocation5], %s12861
        %s12863 = sand.u32 %s184, 1
        %s12864 = smul.addr %s12863, 256
        %s12865 = scalar_lea.vmem [#allocation6], %s12864
        // Predicated region
        $region53: #{self_attention_basic_block_nhwc.1} parent=47 // pred_check
          %p12866 = pneg %p194
        $region54: #{self_attention_basic_block_nhwc.1} parent=47 // pred_check_branch
          %12868 = sbr.rel (%p12866) target = $region56
        $region55: #{self_attention_basic_block_nhwc.1} parent=47 // pred_region
          %s12870 = ssub.s32 4096, 4096
          %12871 = vsyncadd %s12862, %s12870
          %s12872 = smul.addr %s24, 32
          %s12873 = smul.addr %s12872, 128
          %s12874 = scalar_lea.hbm %s7, %s12873
          %s12875 = sshll.u32 %s12865, 4
          %s12876 = int_to_ptr.vmem [resolvable:$true] %s12875
          %12881 = dma.vmem_to_hbm [thread:$0]  %s12876, 4096, %s12874, %s12862, 128, 128, 8
        $region56: #{self_attention_basic_block_nhwc.1} parent=47 // pred_fallthru
          _
      $region48: #{self_attention_basic_block_nhwc.1} parent=5 // pred_fallthru
        _
      %p12882 = scmp.le.s32.totalorder 2, %s19
      // Predicated region
      $region57: #{self_attention_basic_block_nhwc.1} parent=5 // pred_check
        %p12883 = pneg %p12882
      $region58: #{self_attention_basic_block_nhwc.1} parent=5 // pred_check_branch
        %12885 = sbr.rel (%p12883) target = $region60
      $region59: #{self_attention_basic_block_nhwc.1} parent=5 // pred_region
        %s12886 = ssub.s32 %s19, 2
        // Predicated region
        $region61: #{self_attention_basic_block_nhwc.1} parent=59 // pred_check
          %p12887 = pneg %p200
        $region62: #{self_attention_basic_block_nhwc.1} parent=59 // pred_check_branch
          %12889 = sbr.rel (%p12887) target = $region64
        $region63: #{self_attention_basic_block_nhwc.1} parent=59 // pred_region
          %s12890 = sand.u32 %s185, 1
          %s12891 = scalar_lea.sflag [#allocation5], %s12890
          %s12892 = sand.u32 %s185, 1
          %s12893 = smul.addr %s12892, 256
          %s12894 = scalar_lea.vmem [#allocation6], %s12893
          %12895 = dma.done %s12891, 4096
        $region64: #{self_attention_basic_block_nhwc.1} parent=59 // pred_fallthru
          _
      $region60: #{self_attention_basic_block_nhwc.1} parent=5 // pred_fallthru
        _
    $region6: #{self_attention_basic_block_nhwc.1} parent=1 // loop_footer
      %s23 = sadd.s32 1, %s19
    $region7: #{self_attention_basic_block_nhwc.1} parent=1 // loop_footer_branch
      %18 = sbr.rel target = $region3
    $region8: #{self_attention_basic_block_nhwc.1} parent=1 // loop_exit
      _
    %12896 = vsyncpa [#allocation4], 1
    %s12897 = scalar_lea.sflag [#allocation4], 1
    %12898 = vsyncpa %s12897, 1
    %12899 = vsyncpa [#allocation5], 1
    %s12900 = scalar_lea.sflag [#allocation5], 1
    %12901 = vsyncpa %s12900, 1

</llo_original>
